<compile_context>
chip_gen: v6e
topology: v6e:2x2x1
jax: 0.10.0
libtpu: 0.0.40
codegen_flags: <defaults>
</compile_context>

<pallas_src>
import numpy as np

import jax
import jax.numpy as jnp
from jax.experimental import pallas as pl
from jax.experimental.pallas import tpu as pltpu

EPS = 1e-5          # nn.BatchNorm2d default eps
NEG_SLOPE = 0.01    # F.leaky_relu default negative_slope
F32 = jnp.float32
LANE = 128
VMEM_LIMIT = 32 * 1024 * 1024


def _vmem_spec():
    # whole array resident in VMEM (all operands here are tiny)
    return pl.BlockSpec(memory_space=pltpu.MemorySpace.VMEM)


# -----------------------------------------------------------------------------
# Host-side (numpy) weight preprocessing: conv / upsample  ->  dense GEMM mats.
# Runs ONCE per parameter set, never inside the jitted forward.
# -----------------------------------------------------------------------------

def _shift_select(n_in, n_out, k):
    # S[i, o] = 1 iff i == o + k   (valid-conv tap selection matrix)
    return (np.arange(n_in)[:, None] == (np.arange(n_out)[None, :] + k)).astype(np.float32)


def _conv3x3_as_matrix(w, h_in, w_in):
    # w: (3, 3, Cin, Cout) -> (Cin*h_in*w_in, Cout*(h_in-2)*(w_in-2)) acting on
    # channel-major flattened NCHW activations.
    w = np.asarray(w, np.float32)
    h_out, w_out = h_in - 2, w_in - 2
    c_in, c_out = w.shape[2], w.shape[3]
    m = np.zeros((c_in * h_in * w_in, c_out * h_out * w_out), np.float32)
    for kh in range(3):
        sh = _shift_select(h_in, h_out, kh)
        for kw in range(3):
            sw = _shift_select(w_in, w_out, kw)
            m += np.kron(w[kh, kw], np.kron(sh, sw))
    return m


def _conv1x1_as_matrix(w, hw):
    # w: (Cin, Cout) -> (Cin*hw, Cout*hw)
    return np.kron(np.asarray(w, np.float32), np.eye(hw, dtype=np.float32))


def _upsample2_as_matrix(c, h, w):
    # nearest-neighbour 2x upsample as a 0/1 matrix (c*h*w, c*4*h*w)
    rh = (np.arange(h)[:, None] == (np.arange(2 * h)[None, :] // 2)).astype(np.float32)
    rw = (np.arange(w)[:, None] == (np.arange(2 * w)[None, :] // 2)).astype(np.float32)
    return np.kron(np.eye(c, dtype=np.float32), np.kron(rh, rw))


# -----------------------------------------------------------------------------
# Single fused Pallas kernel (factory over the static plan; loop unrolled).
# -----------------------------------------------------------------------------

def _make_generator_kernel(nlayers, plan):
    (first_c, first_hw1, first_hw2), layer_plan = plan

    def kernel(*refs):
        nz = nlayers + 1
        z_refs = refs[:nz]
        gb = refs[nz][...]                 # packed (2*n_stages, C_max) gammas/betas
        mat_refs = refs[nz + 1:-1]
        o_ref = refs[-1]

        state = {"mat": 0, "stage": 0}

        def next_mat():
            m = mat_refs[state["mat"]][...]
            state["mat"] += 1
            return m

        def next_gb(c):
            s = state["stage"]
            state["stage"] += 1
            return gb[2 * s:2 * s + 1, :c], gb[2 * s + 1:2 * s + 2, :c]

        def pool_pair(c, hw):
            # (k, c) 0/1 channel-pooling matrix and its (c, k) transpose, built
            # from iota ONCE per unique (c, hw) and reused across BN stages.
            k = c * hw
            r = jax.lax.broadcasted_iota(jnp.int32, (k, c), 0)
            q = jax.lax.broadcasted_iota(jnp.int32, (k, c), 1)
            p_sum = jnp.logical_and(r >= q * hw, r < (q + 1) * hw).astype(F32)
            rt = jax.lax.broadcasted_iota(jnp.int32, (c, k), 1)
            qt = jax.lax.broadcasted_iota(jnp.int32, (c, k), 0)
            p_exp = jnp.logical_and(rt >= qt * hw, rt < (qt + 1) * hw).astype(F32)
            return p_sum, p_exp

        def bn(y, pools, c, hw, lrelu=True):
            # Training-mode BatchNorm2d (+ optional leaky_relu) on channel-major
            # flat data.  Single pass: stacked (2,k) moments GEMM, stacked (2,k)
            # scale/shift expansion GEMM, one fused multiply-add.
            # TODO(synk): running_mean/running_var buffer updates (momentum) of
            # nn.BatchNorm2d are stateful side effects and are not emitted; the
            # forward output does not depend on them in training mode.
            gamma, beta = next_gb(c)
            p_sum, p_exp = pools
            n = y.shape[0]
            count = float(n * hw)
            sq = jnp.concatenate(
                [jnp.sum(y, axis=0, keepdims=True),
                 jnp.sum(y * y, axis=0, keepdims=True)], axis=0)           # (2, k)
            mom = jnp.dot(sq, p_sum, preferred_element_type=F32) / count    # (2, c)
            mean = mom[0:1]
            var = mom[1:2] - mean * mean          # biased variance (training BN)
            scale_c = gamma * jax.lax.rsqrt(var + EPS)
            shift_c = beta - mean * scale_c
            ss = jnp.concatenate([scale_c, shift_c], axis=0)                 # (2, c)
            ssk = jnp.dot(ss, p_exp, preferred_element_type=F32)             # (2, k)
            out = y * ssk[0:1] + ssk[1:2]
            if lrelu:
                out = jnp.where(out > 0, out, NEG_SLOPE * out)
            return out

        def conv_block(x, c, hw1, hw2):
            # Conv_block2D: 3x (conv-as-GEMM + training BN + leaky_relu).
            # Conv biases omitted: a per-channel constant before training-mode
            # BN cancels exactly (it only shifts the batch mean).
            # TODO(synk): if eval-mode BN (running stats) is ever needed, the
            # conv biases must be reinstated and stats read from buffers.
            p1 = pool_pair(c, hw1)
            p2 = pool_pair(c, hw2)
            y = jnp.dot(x, next_mat(), preferred_element_type=F32)
            y = bn(y, p1, c, hw1)
            y = jnp.dot(y, next_mat(), preferred_element_type=F32)
            y = bn(y, p2, c, hw2)
            y = jnp.dot(y, next_mat(), preferred_element_type=F32)
            y = bn(y, p2, c, hw2)
            return y

        # ---- first Conv_block2D ----
        y = conv_block(z_refs[0][...], first_c, first_hw1, first_hw2)

        # ---- generator layers (fully unrolled; nlayers is static) ----
        for i in range(nlayers):
            (cy, hw_y, c_a, hw_a1, hw_a2, c_b, hw_b1, hw_b2) = layer_plan[i]

            # Up_Bn2D: nearest-2x preserves per-channel batch stats and commutes
            # with the per-channel affine, so BN is applied pre-upsample and the
            # replication matrix is folded (host-side) into cb2.conv1's y-part.
            y = bn(y, pool_pair(cy, hw_y), cy, hw_y, lrelu=False)

            # cb1 on the fresh noise input z_{i+1}
            zc = conv_block(z_refs[i + 1][...], c_a, hw_a1, hw_a2)

            # cb2 on concat([up(y), cb1(z)], channel): concat never materialized;
            # conv1's GEMM is split by input-channel group and summed.
            t = (jnp.dot(y, next_mat(), preferred_element_type=F32)
                 + jnp.dot(zc, next_mat(), preferred_element_type=F32))
            pb1 = pool_pair(c_b, hw_b1)
            pb2 = pool_pair(c_b, hw_b2)
            t = bn(t, pb1, c_b, hw_b1)
            t = jnp.dot(t, next_mat(), preferred_element_type=F32)
            t = bn(t, pb2, c_b, hw_b2)
            t = jnp.dot(t, next_mat(), preferred_element_type=F32)
            y = bn(t, pb2, c_b, hw_b2)

        # ---- last 1x1 conv (bias=False); matrix pre-padded to 128 lanes so the
        # single HBM store is lane-dense ----
        o_ref[...] = jnp.dot(y, next_mat(),
                             preferred_element_type=F32).astype(o_ref.dtype)

    return kernel


# -----------------------------------------------------------------------------
# Builder: preprocess weights ONCE, return a jitted forward (single pallas_call)
# -----------------------------------------------------------------------------

def build_generator(params, nlayers, ch_step, z_spatial):
    """z_spatial: list of (H, W) for z[0..nlayers]. Returns fwd(z_list)->NCHW."""
    mats = []
    gb_rows = []
    c_max = (nlayers + 1) * ch_step

    def add_gb_pair(gamma, beta):
        g = np.zeros((c_max,), np.float32)
        b = np.zeros((c_max,), np.float32)
        gv = np.asarray(gamma, np.float32).reshape(-1)
        bv = np.asarray(beta, np.float32).reshape(-1)
        g[:gv.shape[0]] = gv
        b[:bv.shape[0]] = bv
        gb_rows.append(g)
        gb_rows.append(b)

    def add_block_gb(p):
        add_gb_pair(p["g1"], p["be1"])
        add_gb_pair(p["g2"], p["be2"])
        add_gb_pair(p["g3"], p["be3"])

    def block_mats(p, h_in, w_in):
        h1, w1 = h_in - 2, w_in - 2
        h2, w2 = h_in - 4, w_in - 4
        return ([_conv3x3_as_matrix(p["w1"], h_in, w_in),
                 _conv3x3_as_matrix(p["w2"], h1, w1),
                 _conv1x1_as_matrix(np.asarray(p["w3"])[0, 0], h2 * w2)],
                (h1 * w1, h2 * w2), (h2, w2))

    # ---- first Conv_block2D ----
    h0, w0 = z_spatial[0]
    fm, (hw1_f, hw2_f), (hy, wy) = block_mats(params["first"], h0, w0)
    mats += fm
    add_block_gb(params["first"])
    cy = ch_step
    layer_plan = []

    for i in range(nlayers):
        hz, wz = z_spatial[i + 1]
        hu, wu = 2 * hy, 2 * wy
        assert (hz - 4, wz - 4) == (hu, wu), (
            "z[%d] spatial size must make cb1's output match the 2x upsampled y"
            % (i + 1))
        c_b = cy + ch_step

        # Up_Bn gamma/beta (BN applied pre-upsample in the kernel)
        add_gb_pair(params["up_g"][i], params["up_b"][i])

        # cb1 on z_{i+1}
        am, (hw_a1, hw_a2), _ = block_mats(params["cb1"][i], hz, wz)
        mats += am
        add_block_gb(params["cb1"][i])

        # cb2 conv1 split by input-channel group; upsample folded into y-part.
        pb = params["cb2"][i]
        ho1, wo1 = hu - 2, wu - 2
        ho2, wo2 = hu - 4, wu - 4
        m1_full = _conv3x3_as_matrix(pb["w1"], hu, wu)
        split = cy * hu * wu
        u_mat = _upsample2_as_matrix(cy, hy, wy)
        c1y_folded = u_mat @ m1_full[:split]
        c1z = np.ascontiguousarray(m1_full[split:])
        mats += [c1y_folded, c1z,
                 _conv3x3_as_matrix(pb["w2"], ho1, wo1),
                 _conv1x1_as_matrix(np.asarray(pb["w3"])[0, 0], ho2 * wo2)]
        add_block_gb(pb)

        layer_plan.append((cy, hy * wy, ch_step, hw_a1, hw_a2,
                           c_b, ho1 * wo1, ho2 * wo2))
        hy, wy, cy = ho2, wo2, c_b

    # ---- last 1x1 conv (bias=False per spec); zero-pad output lanes to 128 ----
    m_last = _conv1x1_as_matrix(np.asarray(params["last_w"])[0, 0], hy * wy)
    out_real = m_last.shape[1]                                  # 3 * hy * wy
    out_pad = ((out_real + LANE - 1) // LANE) * LANE
    m_last_p = np.zeros((m_last.shape[0], out_pad), np.float32)
    m_last_p[:, :out_real] = m_last
    mats.append(m_last_p)

    plan = ((ch_step, hw1_f, hw2_f), tuple(layer_plan))
    gb = np.stack(gb_rows, axis=0)                              # (2*n_stages, C_max)

    mats_dev = [jnp.asarray(m) for m in mats]
    gb_dev = jnp.asarray(gb)
    kernel = _make_generator_kernel(nlayers, plan)
    h_out, w_out = hy, wy

    @jax.jit
    def forward(z_list, mats_in, gb_in):
        n = z_list[0].shape[0]
        # NCHW -> channel-major flat (N, C*H*W): plain reshape, no transpose.
        z_flat = [z.reshape(z.shape[0], -1).astype(F32) for z in z_list]
        operands = tuple(z_flat) + (gb_in,) + tuple(mats_in)
        out = pl.pallas_call(
            kernel,
            out_shape=jax.ShapeDtypeStruct((n, out_pad), F32),
            in_specs=[_vmem_spec()] * len(operands),
            out_specs=_vmem_spec(),
            compiler_params=pltpu.CompilerParams(vmem_limit_bytes=VMEM_LIMIT),
        )(*operands)
        return out[:, :out_real].reshape(n, 3, h_out, w_out)   # back to NCHW

    return lambda z_list: forward(z_list, mats_dev, gb_dev)


# -----------------------------------------------------------------------------
# Deterministic parameter initialization (conv biases omitted: they cancel
# exactly under the training-mode BatchNorm that follows every conv).
# -----------------------------------------------------------------------------

def _init_conv_block(key, cin, cout):
    k = jax.random.split(key, 9)
    return {
        "w1": 0.1 * jax.random.normal(k[0], (3, 3, cin, cout), F32),
        "g1": 1.0 + 0.1 * jax.random.normal(k[1], (cout,), F32),
        "be1": 0.1 * jax.random.normal(k[2], (cout,), F32),
        "w2": 0.1 * jax.random.normal(k[3], (3, 3, cout, cout), F32),
        "g2": 1.0 + 0.1 * jax.random.normal(k[4], (cout,), F32),
        "be2": 0.1 * jax.random.normal(k[5], (cout,), F32),
        "w3": 0.1 * jax.random.normal(k[6], (1, 1, cout, cout), F32),
        "g3": 1.0 + 0.1 * jax.random.normal(k[7], (cout,), F32),
        "be3": 0.1 * jax.random.normal(k[8], (cout,), F32),
    }


def init_generator_params(key, nlayers, ch_in, ch_step):
    keys = jax.random.split(key, 3 * nlayers + 2)
    params = {"first": _init_conv_block(keys[0], ch_in, ch_step),
              "cb1": [], "cb2": [], "up_g": [], "up_b": []}
    ki = 1
    for i in range(nlayers):
        c_up = (i + 1) * ch_step
        kk = jax.random.split(keys[ki], 2); ki += 1
        params["up_g"].append(1.0 + 0.1 * jax.random.normal(kk[0], (c_up,), F32))
        params["up_b"].append(0.1 * jax.random.normal(kk[1], (c_up,), F32))
        params["cb1"].append(_init_conv_block(keys[ki], ch_in, ch_step)); ki += 1
        params["cb2"].append(_init_conv_block(keys[ki], (i + 2) * ch_step,
                                              (i + 2) * ch_step)); ki += 1
    params["last_w"] = 0.1 * jax.random.normal(
        keys[ki], (1, 1, (nlayers + 1) * ch_step, 3), F32)
    return params


if __name__ == "__main__":
    nlayers, ch_in, ch_step = 2, 3, 2
    batch = 2

    key = jax.random.PRNGKey(0)
    k_params, k_data = jax.random.split(key)
    params = init_generator_params(k_params, nlayers, ch_in, ch_step)

    # Spatial sizes consistent with the forward pass: z[0]=8 -> first block
    # gives 4; each layer upsamples 2x (->8), so z[n+1]=12 makes cb1's output
    # (12-4=8) line up with the concat, and cb2 brings it back to 4.
    spatials = [(8, 8)] + [(12, 12)] * nlayers
    zkeys = jax.random.split(k_data, nlayers + 1)
    z_list = [jax.random.normal(zkeys[i], (batch, ch_in) + spatials[i], F32)
              for i in range(nlayers + 1)]

    fwd = build_generator(params, nlayers, ch_step, spatials)
    out = jax.block_until_ready(fwd(z_list))
    assert out.shape == (batch, 3, 4, 4), out.shape
    print("KERNEL_OK")
</pallas_src>

<mosaic_0001>
module attributes {stable_mosaic.version = 11 : i64} {
  func.func @kernel(%arg0: memref<2x192xf32, #tpu.memory_space<vmem>>, %arg1: memref<2x432xf32, #tpu.memory_space<vmem>>, %arg2: memref<2x432xf32, #tpu.memory_space<vmem>>, %arg3: memref<34x6xf32, #tpu.memory_space<vmem>>, %arg4: memref<192x72xf32, #tpu.memory_space<vmem>>, %arg5: memref<72x32xf32, #tpu.memory_space<vmem>>, %arg6: memref<32x32xf32, #tpu.memory_space<vmem>>, %arg7: memref<432x200xf32, #tpu.memory_space<vmem>>, %arg8: memref<200x128xf32, #tpu.memory_space<vmem>>, %arg9: memref<128x128xf32, #tpu.memory_space<vmem>>, %arg10: memref<32x144xf32, #tpu.memory_space<vmem>>, %arg11: memref<128x144xf32, #tpu.memory_space<vmem>>, %arg12: memref<144x64xf32, #tpu.memory_space<vmem>>, %arg13: memref<64x64xf32, #tpu.memory_space<vmem>>, %arg14: memref<432x200xf32, #tpu.memory_space<vmem>>, %arg15: memref<200x128xf32, #tpu.memory_space<vmem>>, %arg16: memref<128x128xf32, #tpu.memory_space<vmem>>, %arg17: memref<64x216xf32, #tpu.memory_space<vmem>>, %arg18: memref<128x216xf32, #tpu.memory_space<vmem>>, %arg19: memref<216x96xf32, #tpu.memory_space<vmem>>, %arg20: memref<96x96xf32, #tpu.memory_space<vmem>>, %arg21: memref<96x128xf32, #tpu.memory_space<vmem>>, %arg22: memref<2x128xf32, #tpu.memory_space<vmem>>) attributes {dimension_semantics = [], scalar_prefetch = 0 : i64, scratch_operands = 0 : i64, tpu.core_type = #tpu.core_type<tc>} {
    %c0 = arith.constant 0 : index
    %c0_0 = arith.constant 0 : index
    %0 = vector.load %arg3[%c0, %c0_0] : memref<34x6xf32, #tpu.memory_space<vmem>>, vector<34x6xf32>
    %c0_1 = arith.constant 0 : index
    %c0_2 = arith.constant 0 : index
    %1 = vector.load %arg0[%c0_1, %c0_2] : memref<2x192xf32, #tpu.memory_space<vmem>>, vector<2x192xf32>
    %2 = tpu.iota {dimensions = array<i32: 0>} : vector<72x2xi32>
    %3 = tpu.iota {dimensions = array<i32: 1>} : vector<72x2xi32>
    %c36_i32 = arith.constant 36 : i32
    %4 = vector.broadcast %c36_i32 : i32 to vector<72x2xi32>
    %5 = arith.muli %3, %4 : vector<72x2xi32>
    %6 = arith.cmpi sge, %2, %5 : vector<72x2xi32>
    %c1_i32 = arith.constant 1 : i32
    %7 = vector.broadcast %c1_i32 : i32 to vector<72x2xi32>
    %8 = arith.addi %3, %7 : vector<72x2xi32>
    %c36_i32_3 = arith.constant 36 : i32
    %9 = vector.broadcast %c36_i32_3 : i32 to vector<72x2xi32>
    %10 = arith.muli %8, %9 : vector<72x2xi32>
    %11 = arith.cmpi slt, %2, %10 : vector<72x2xi32>
    %12 = arith.andi %6, %11 : vector<72x2xi1>
    %13 = arith.extui %12 : vector<72x2xi1> to vector<72x2xi32>
    %14 = arith.sitofp %13 : vector<72x2xi32> to vector<72x2xf32>
    %15 = tpu.iota {dimensions = array<i32: 1>} : vector<2x72xi32>
    %16 = tpu.iota {dimensions = array<i32: 0>} : vector<2x72xi32>
    %c36_i32_4 = arith.constant 36 : i32
    %17 = vector.broadcast %c36_i32_4 : i32 to vector<2x72xi32>
    %18 = arith.muli %16, %17 : vector<2x72xi32>
    %19 = arith.cmpi sge, %15, %18 : vector<2x72xi32>
    %c1_i32_5 = arith.constant 1 : i32
    %20 = vector.broadcast %c1_i32_5 : i32 to vector<2x72xi32>
    %21 = arith.addi %16, %20 : vector<2x72xi32>
    %c36_i32_6 = arith.constant 36 : i32
    %22 = vector.broadcast %c36_i32_6 : i32 to vector<2x72xi32>
    %23 = arith.muli %21, %22 : vector<2x72xi32>
    %24 = arith.cmpi slt, %15, %23 : vector<2x72xi32>
    %25 = arith.andi %19, %24 : vector<2x72xi1>
    %26 = arith.extui %25 : vector<2x72xi1> to vector<2x72xi32>
    %27 = arith.sitofp %26 : vector<2x72xi32> to vector<2x72xf32>
    %28 = tpu.iota {dimensions = array<i32: 0>} : vector<32x2xi32>
    %29 = tpu.iota {dimensions = array<i32: 1>} : vector<32x2xi32>
    %c16_i32 = arith.constant 16 : i32
    %30 = vector.broadcast %c16_i32 : i32 to vector<32x2xi32>
    %31 = arith.muli %29, %30 : vector<32x2xi32>
    %32 = arith.cmpi sge, %28, %31 : vector<32x2xi32>
    %c1_i32_7 = arith.constant 1 : i32
    %33 = vector.broadcast %c1_i32_7 : i32 to vector<32x2xi32>
    %34 = arith.addi %29, %33 : vector<32x2xi32>
    %c16_i32_8 = arith.constant 16 : i32
    %35 = vector.broadcast %c16_i32_8 : i32 to vector<32x2xi32>
    %36 = arith.muli %34, %35 : vector<32x2xi32>
    %37 = arith.cmpi slt, %28, %36 : vector<32x2xi32>
    %38 = arith.andi %32, %37 : vector<32x2xi1>
    %39 = arith.extui %38 : vector<32x2xi1> to vector<32x2xi32>
    %40 = arith.sitofp %39 : vector<32x2xi32> to vector<32x2xf32>
    %41 = tpu.iota {dimensions = array<i32: 1>} : vector<2x32xi32>
    %42 = tpu.iota {dimensions = array<i32: 0>} : vector<2x32xi32>
    %c16_i32_9 = arith.constant 16 : i32
    %43 = vector.broadcast %c16_i32_9 : i32 to vector<2x32xi32>
    %44 = arith.muli %42, %43 : vector<2x32xi32>
    %45 = arith.cmpi sge, %41, %44 : vector<2x32xi32>
    %c1_i32_10 = arith.constant 1 : i32
    %46 = vector.broadcast %c1_i32_10 : i32 to vector<2x32xi32>
    %47 = arith.addi %42, %46 : vector<2x32xi32>
    %c16_i32_11 = arith.constant 16 : i32
    %48 = vector.broadcast %c16_i32_11 : i32 to vector<2x32xi32>
    %49 = arith.muli %47, %48 : vector<2x32xi32>
    %50 = arith.cmpi slt, %41, %49 : vector<2x32xi32>
    %51 = arith.andi %45, %50 : vector<2x32xi1>
    %52 = arith.extui %51 : vector<2x32xi1> to vector<2x32xi32>
    %53 = arith.sitofp %52 : vector<2x32xi32> to vector<2x32xf32>
    %c0_12 = arith.constant 0 : index
    %c0_13 = arith.constant 0 : index
    %54 = vector.load %arg4[%c0_12, %c0_13] : memref<192x72xf32, #tpu.memory_space<vmem>>, vector<192x72xf32>
    %cst = arith.constant dense<0.000000e+00> : vector<2x72xf32>
    %55 = tpu.matmul %1, %54, %cst {dimension_numbers = #tpu.dot_dimension_numbers<[1], [0], [0], [1], [0, 0, 1, 1], [], []>} : vector<2x192xf32>, vector<192x72xf32>, vector<2x72xf32> -> vector<2x72xf32>
    %56 = vector.extract_strided_slice %0 {offsets = [0, 0], sizes = [1, 2], strides = [1, 1]} : vector<34x6xf32> to vector<1x2xf32>
    %57 = vector.extract_strided_slice %0 {offsets = [1, 0], sizes = [1, 2], strides = [1, 1]} : vector<34x6xf32> to vector<1x2xf32>
    %cst_14 = arith.constant dense<0.000000e+00> : vector<72xf32>
    %58 = vector.multi_reduction <add>, %55, %cst_14 [0] : vector<2x72xf32> to vector<72xf32>
    %59 = vector.shape_cast %58 : vector<72xf32> to vector<1x72xf32>
    %60 = arith.mulf %55, %55 : vector<2x72xf32>
    %cst_15 = arith.constant dense<0.000000e+00> : vector<72xf32>
    %61 = vector.multi_reduction <add>, %60, %cst_15 [0] : vector<2x72xf32> to vector<72xf32>
    %62 = vector.shape_cast %61 : vector<72xf32> to vector<1x72xf32>
    %63 = tpu.concatenate %59, %62 in 0 : vector<1x72xf32>, vector<1x72xf32> -> vector<2x72xf32>
    %cst_16 = arith.constant dense<0.000000e+00> : vector<2x2xf32>
    %64 = tpu.matmul %63, %14, %cst_16 {dimension_numbers = #tpu.dot_dimension_numbers<[1], [0], [0], [1], [0, 0, 1, 1], [], []>} : vector<2x72xf32>, vector<72x2xf32>, vector<2x2xf32> -> vector<2x2xf32>
    %cst_17 = arith.constant 7.200000e+01 : f32
    %65 = vector.broadcast %cst_17 : f32 to vector<2x2xf32>
    %66 = arith.divf %64, %65 : vector<2x2xf32>
    %67 = vector.extract_strided_slice %66 {offsets = [0, 0], sizes = [1, 2], strides = [1, 1]} : vector<2x2xf32> to vector<1x2xf32>
    %68 = vector.extract_strided_slice %66 {offsets = [1, 0], sizes = [1, 2], strides = [1, 1]} : vector<2x2xf32> to vector<1x2xf32>
    %69 = arith.mulf %67, %67 : vector<1x2xf32>
    %70 = arith.subf %68, %69 : vector<1x2xf32>
    %cst_18 = arith.constant 9.99999974E-6 : f32
    %71 = vector.broadcast %cst_18 : f32 to vector<1x2xf32>
    %72 = arith.addf %70, %71 : vector<1x2xf32>
    %73 = math.rsqrt %72 : vector<1x2xf32>
    %74 = arith.mulf %56, %73 : vector<1x2xf32>
    %75 = arith.mulf %67, %74 : vector<1x2xf32>
    %76 = arith.subf %57, %75 : vector<1x2xf32>
    %77 = tpu.concatenate %74, %76 in 0 : vector<1x2xf32>, vector<1x2xf32> -> vector<2x2xf32>
    %cst_19 = arith.constant dense<0.000000e+00> : vector<2x72xf32>
    %78 = tpu.matmul %77, %27, %cst_19 {dimension_numbers = #tpu.dot_dimension_numbers<[1], [0], [0], [1], [0, 0, 1, 1], [], []>} : vector<2x2xf32>, vector<2x72xf32>, vector<2x72xf32> -> vector<2x72xf32>
    %79 = vector.extract_strided_slice %78 {offsets = [0, 0], sizes = [1, 72], strides = [1, 1]} : vector<2x72xf32> to vector<1x72xf32>
    %80 = vector.broadcast %79 : vector<1x72xf32> to vector<2x72xf32>
    %81 = arith.mulf %55, %80 : vector<2x72xf32>
    %82 = vector.extract_strided_slice %78 {offsets = [1, 0], sizes = [1, 72], strides = [1, 1]} : vector<2x72xf32> to vector<1x72xf32>
    %83 = vector.broadcast %82 : vector<1x72xf32> to vector<2x72xf32>
    %84 = arith.addf %81, %83 : vector<2x72xf32>
    %cst_20 = arith.constant 0.000000e+00 : f32
    %85 = vector.broadcast %cst_20 : f32 to vector<2x72xf32>
    %86 = arith.cmpf ogt, %84, %85 : vector<2x72xf32>
    %cst_21 = arith.constant 0.00999999977 : f32
    %87 = vector.broadcast %cst_21 : f32 to vector<2x72xf32>
    %88 = arith.mulf %87, %84 : vector<2x72xf32>
    %89 = arith.select %86, %84, %88 : vector<2x72xi1>, vector<2x72xf32>
    %c0_22 = arith.constant 0 : index
    %c0_23 = arith.constant 0 : index
    %90 = vector.load %arg5[%c0_22, %c0_23] : memref<72x32xf32, #tpu.memory_space<vmem>>, vector<72x32xf32>
    %cst_24 = arith.constant dense<0.000000e+00> : vector<2x32xf32>
    %91 = tpu.matmul %89, %90, %cst_24 {dimension_numbers = #tpu.dot_dimension_numbers<[1], [0], [0], [1], [0, 0, 1, 1], [], []>} : vector<2x72xf32>, vector<72x32xf32>, vector<2x32xf32> -> vector<2x32xf32>
    %92 = vector.extract_strided_slice %0 {offsets = [2, 0], sizes = [1, 2], strides = [1, 1]} : vector<34x6xf32> to vector<1x2xf32>
    %93 = vector.extract_strided_slice %0 {offsets = [3, 0], sizes = [1, 2], strides = [1, 1]} : vector<34x6xf32> to vector<1x2xf32>
    %cst_25 = arith.constant dense<0.000000e+00> : vector<32xf32>
    %94 = vector.multi_reduction <add>, %91, %cst_25 [0] : vector<2x32xf32> to vector<32xf32>
    %95 = vector.shape_cast %94 : vector<32xf32> to vector<1x32xf32>
    %96 = arith.mulf %91, %91 : vector<2x32xf32>
    %cst_26 = arith.constant dense<0.000000e+00> : vector<32xf32>
    %97 = vector.multi_reduction <add>, %96, %cst_26 [0] : vector<2x32xf32> to vector<32xf32>
    %98 = vector.shape_cast %97 : vector<32xf32> to vector<1x32xf32>
    %99 = tpu.concatenate %95, %98 in 0 : vector<1x32xf32>, vector<1x32xf32> -> vector<2x32xf32>
    %cst_27 = arith.constant dense<0.000000e+00> : vector<2x2xf32>
    %100 = tpu.matmul %99, %40, %cst_27 {dimension_numbers = #tpu.dot_dimension_numbers<[1], [0], [0], [1], [0, 0, 1, 1], [], []>} : vector<2x32xf32>, vector<32x2xf32>, vector<2x2xf32> -> vector<2x2xf32>
    %cst_28 = arith.constant 3.200000e+01 : f32
    %101 = vector.broadcast %cst_28 : f32 to vector<2x2xf32>
    %102 = arith.divf %100, %101 : vector<2x2xf32>
    %103 = vector.extract_strided_slice %102 {offsets = [0, 0], sizes = [1, 2], strides = [1, 1]} : vector<2x2xf32> to vector<1x2xf32>
    %104 = vector.extract_strided_slice %102 {offsets = [1, 0], sizes = [1, 2], strides = [1, 1]} : vector<2x2xf32> to vector<1x2xf32>
    %105 = arith.mulf %103, %103 : vector<1x2xf32>
    %106 = arith.subf %104, %105 : vector<1x2xf32>
    %cst_29 = arith.constant 9.99999974E-6 : f32
    %107 = vector.broadcast %cst_29 : f32 to vector<1x2xf32>
    %108 = arith.addf %106, %107 : vector<1x2xf32>
    %109 = math.rsqrt %108 : vector<1x2xf32>
    %110 = arith.mulf %92, %109 : vector<1x2xf32>
    %111 = arith.mulf %103, %110 : vector<1x2xf32>
    %112 = arith.subf %93, %111 : vector<1x2xf32>
    %113 = tpu.concatenate %110, %112 in 0 : vector<1x2xf32>, vector<1x2xf32> -> vector<2x2xf32>
    %cst_30 = arith.constant dense<0.000000e+00> : vector<2x32xf32>
    %114 = tpu.matmul %113, %53, %cst_30 {dimension_numbers = #tpu.dot_dimension_numbers<[1], [0], [0], [1], [0, 0, 1, 1], [], []>} : vector<2x2xf32>, vector<2x32xf32>, vector<2x32xf32> -> vector<2x32xf32>
    %115 = vector.extract_strided_slice %114 {offsets = [0, 0], sizes = [1, 32], strides = [1, 1]} : vector<2x32xf32> to vector<1x32xf32>
    %116 = vector.broadcast %115 : vector<1x32xf32> to vector<2x32xf32>
    %117 = arith.mulf %91, %116 : vector<2x32xf32>
    %118 = vector.extract_strided_slice %114 {offsets = [1, 0], sizes = [1, 32], strides = [1, 1]} : vector<2x32xf32> to vector<1x32xf32>
    %119 = vector.broadcast %118 : vector<1x32xf32> to vector<2x32xf32>
    %120 = arith.addf %117, %119 : vector<2x32xf32>
    %cst_31 = arith.constant 0.000000e+00 : f32
    %121 = vector.broadcast %cst_31 : f32 to vector<2x32xf32>
    %122 = arith.cmpf ogt, %120, %121 : vector<2x32xf32>
    %cst_32 = arith.constant 0.00999999977 : f32
    %123 = vector.broadcast %cst_32 : f32 to vector<2x32xf32>
    %124 = arith.mulf %123, %120 : vector<2x32xf32>
    %125 = arith.select %122, %120, %124 : vector<2x32xi1>, vector<2x32xf32>
    %c0_33 = arith.constant 0 : index
    %c0_34 = arith.constant 0 : index
    %126 = vector.load %arg6[%c0_33, %c0_34] : memref<32x32xf32, #tpu.memory_space<vmem>>, vector<32x32xf32>
    %cst_35 = arith.constant dense<0.000000e+00> : vector<2x32xf32>
    %127 = tpu.matmul %125, %126, %cst_35 {dimension_numbers = #tpu.dot_dimension_numbers<[1], [0], [0], [1], [0, 0, 1, 1], [], []>} : vector<2x32xf32>, vector<32x32xf32>, vector<2x32xf32> -> vector<2x32xf32>
    %128 = vector.extract_strided_slice %0 {offsets = [4, 0], sizes = [1, 2], strides = [1, 1]} : vector<34x6xf32> to vector<1x2xf32>
    %129 = vector.extract_strided_slice %0 {offsets = [5, 0], sizes = [1, 2], strides = [1, 1]} : vector<34x6xf32> to vector<1x2xf32>
    %cst_36 = arith.constant dense<0.000000e+00> : vector<32xf32>
    %130 = vector.multi_reduction <add>, %127, %cst_36 [0] : vector<2x32xf32> to vector<32xf32>
    %131 = vector.shape_cast %130 : vector<32xf32> to vector<1x32xf32>
    %132 = arith.mulf %127, %127 : vector<2x32xf32>
    %cst_37 = arith.constant dense<0.000000e+00> : vector<32xf32>
    %133 = vector.multi_reduction <add>, %132, %cst_37 [0] : vector<2x32xf32> to vector<32xf32>
    %134 = vector.shape_cast %133 : vector<32xf32> to vector<1x32xf32>
    %135 = tpu.concatenate %131, %134 in 0 : vector<1x32xf32>, vector<1x32xf32> -> vector<2x32xf32>
    %cst_38 = arith.constant dense<0.000000e+00> : vector<2x2xf32>
    %136 = tpu.matmul %135, %40, %cst_38 {dimension_numbers = #tpu.dot_dimension_numbers<[1], [0], [0], [1], [0, 0, 1, 1], [], []>} : vector<2x32xf32>, vector<32x2xf32>, vector<2x2xf32> -> vector<2x2xf32>
    %cst_39 = arith.constant 3.200000e+01 : f32
    %137 = vector.broadcast %cst_39 : f32 to vector<2x2xf32>
    %138 = arith.divf %136, %137 : vector<2x2xf32>
    %139 = vector.extract_strided_slice %138 {offsets = [0, 0], sizes = [1, 2], strides = [1, 1]} : vector<2x2xf32> to vector<1x2xf32>
    %140 = vector.extract_strided_slice %138 {offsets = [1, 0], sizes = [1, 2], strides = [1, 1]} : vector<2x2xf32> to vector<1x2xf32>
    %141 = arith.mulf %139, %139 : vector<1x2xf32>
    %142 = arith.subf %140, %141 : vector<1x2xf32>
    %cst_40 = arith.constant 9.99999974E-6 : f32
    %143 = vector.broadcast %cst_40 : f32 to vector<1x2xf32>
    %144 = arith.addf %142, %143 : vector<1x2xf32>
    %145 = math.rsqrt %144 : vector<1x2xf32>
    %146 = arith.mulf %128, %145 : vector<1x2xf32>
    %147 = arith.mulf %139, %146 : vector<1x2xf32>
    %148 = arith.subf %129, %147 : vector<1x2xf32>
    %149 = tpu.concatenate %146, %148 in 0 : vector<1x2xf32>, vector<1x2xf32> -> vector<2x2xf32>
    %cst_41 = arith.constant dense<0.000000e+00> : vector<2x32xf32>
    %150 = tpu.matmul %149, %53, %cst_41 {dimension_numbers = #tpu.dot_dimension_numbers<[1], [0], [0], [1], [0, 0, 1, 1], [], []>} : vector<2x2xf32>, vector<2x32xf32>, vector<2x32xf32> -> vector<2x32xf32>
    %151 = vector.extract_strided_slice %150 {offsets = [0, 0], sizes = [1, 32], strides = [1, 1]} : vector<2x32xf32> to vector<1x32xf32>
    %152 = vector.broadcast %151 : vector<1x32xf32> to vector<2x32xf32>
    %153 = arith.mulf %127, %152 : vector<2x32xf32>
    %154 = vector.extract_strided_slice %150 {offsets = [1, 0], sizes = [1, 32], strides = [1, 1]} : vector<2x32xf32> to vector<1x32xf32>
    %155 = vector.broadcast %154 : vector<1x32xf32> to vector<2x32xf32>
    %156 = arith.addf %153, %155 : vector<2x32xf32>
    %cst_42 = arith.constant 0.000000e+00 : f32
    %157 = vector.broadcast %cst_42 : f32 to vector<2x32xf32>
    %158 = arith.cmpf ogt, %156, %157 : vector<2x32xf32>
    %cst_43 = arith.constant 0.00999999977 : f32
    %159 = vector.broadcast %cst_43 : f32 to vector<2x32xf32>
    %160 = arith.mulf %159, %156 : vector<2x32xf32>
    %161 = arith.select %158, %156, %160 : vector<2x32xi1>, vector<2x32xf32>
    %162 = tpu.iota {dimensions = array<i32: 0>} : vector<32x2xi32>
    %163 = tpu.iota {dimensions = array<i32: 1>} : vector<32x2xi32>
    %c16_i32_44 = arith.constant 16 : i32
    %164 = vector.broadcast %c16_i32_44 : i32 to vector<32x2xi32>
    %165 = arith.muli %163, %164 : vector<32x2xi32>
    %166 = arith.cmpi sge, %162, %165 : vector<32x2xi32>
    %c1_i32_45 = arith.constant 1 : i32
    %167 = vector.broadcast %c1_i32_45 : i32 to vector<32x2xi32>
    %168 = arith.addi %163, %167 : vector<32x2xi32>
    %c16_i32_46 = arith.constant 16 : i32
    %169 = vector.broadcast %c16_i32_46 : i32 to vector<32x2xi32>
    %170 = arith.muli %168, %169 : vector<32x2xi32>
    %171 = arith.cmpi slt, %162, %170 : vector<32x2xi32>
    %172 = arith.andi %166, %171 : vector<32x2xi1>
    %173 = arith.extui %172 : vector<32x2xi1> to vector<32x2xi32>
    %174 = arith.sitofp %173 : vector<32x2xi32> to vector<32x2xf32>
    %175 = tpu.iota {dimensions = array<i32: 1>} : vector<2x32xi32>
    %176 = tpu.iota {dimensions = array<i32: 0>} : vector<2x32xi32>
    %c16_i32_47 = arith.constant 16 : i32
    %177 = vector.broadcast %c16_i32_47 : i32 to vector<2x32xi32>
    %178 = arith.muli %176, %177 : vector<2x32xi32>
    %179 = arith.cmpi sge, %175, %178 : vector<2x32xi32>
    %c1_i32_48 = arith.constant 1 : i32
    %180 = vector.broadcast %c1_i32_48 : i32 to vector<2x32xi32>
    %181 = arith.addi %176, %180 : vector<2x32xi32>
    %c16_i32_49 = arith.constant 16 : i32
    %182 = vector.broadcast %c16_i32_49 : i32 to vector<2x32xi32>
    %183 = arith.muli %181, %182 : vector<2x32xi32>
    %184 = arith.cmpi slt, %175, %183 : vector<2x32xi32>
    %185 = arith.andi %179, %184 : vector<2x32xi1>
    %186 = arith.extui %185 : vector<2x32xi1> to vector<2x32xi32>
    %187 = arith.sitofp %186 : vector<2x32xi32> to vector<2x32xf32>
    %188 = vector.extract_strided_slice %0 {offsets = [6, 0], sizes = [1, 2], strides = [1, 1]} : vector<34x6xf32> to vector<1x2xf32>
    %189 = vector.extract_strided_slice %0 {offsets = [7, 0], sizes = [1, 2], strides = [1, 1]} : vector<34x6xf32> to vector<1x2xf32>
    %cst_50 = arith.constant dense<0.000000e+00> : vector<32xf32>
    %190 = vector.multi_reduction <add>, %161, %cst_50 [0] : vector<2x32xf32> to vector<32xf32>
    %191 = vector.shape_cast %190 : vector<32xf32> to vector<1x32xf32>
    %192 = arith.mulf %161, %161 : vector<2x32xf32>
    %cst_51 = arith.constant dense<0.000000e+00> : vector<32xf32>
    %193 = vector.multi_reduction <add>, %192, %cst_51 [0] : vector<2x32xf32> to vector<32xf32>
    %194 = vector.shape_cast %193 : vector<32xf32> to vector<1x32xf32>
    %195 = tpu.concatenate %191, %194 in 0 : vector<1x32xf32>, vector<1x32xf32> -> vector<2x32xf32>
    %cst_52 = arith.constant dense<0.000000e+00> : vector<2x2xf32>
    %196 = tpu.matmul %195, %174, %cst_52 {dimension_numbers = #tpu.dot_dimension_numbers<[1], [0], [0], [1], [0, 0, 1, 1], [], []>} : vector<2x32xf32>, vector<32x2xf32>, vector<2x2xf32> -> vector<2x2xf32>
    %cst_53 = arith.constant 3.200000e+01 : f32
    %197 = vector.broadcast %cst_53 : f32 to vector<2x2xf32>
    %198 = arith.divf %196, %197 : vector<2x2xf32>
    %199 = vector.extract_strided_slice %198 {offsets = [0, 0], sizes = [1, 2], strides = [1, 1]} : vector<2x2xf32> to vector<1x2xf32>
    %200 = vector.extract_strided_slice %198 {offsets = [1, 0], sizes = [1, 2], strides = [1, 1]} : vector<2x2xf32> to vector<1x2xf32>
    %201 = arith.mulf %199, %199 : vector<1x2xf32>
    %202 = arith.subf %200, %201 : vector<1x2xf32>
    %cst_54 = arith.constant 9.99999974E-6 : f32
    %203 = vector.broadcast %cst_54 : f32 to vector<1x2xf32>
    %204 = arith.addf %202, %203 : vector<1x2xf32>
    %205 = math.rsqrt %204 : vector<1x2xf32>
    %206 = arith.mulf %188, %205 : vector<1x2xf32>
    %207 = arith.mulf %199, %206 : vector<1x2xf32>
    %208 = arith.subf %189, %207 : vector<1x2xf32>
    %209 = tpu.concatenate %206, %208 in 0 : vector<1x2xf32>, vector<1x2xf32> -> vector<2x2xf32>
    %cst_55 = arith.constant dense<0.000000e+00> : vector<2x32xf32>
    %210 = tpu.matmul %209, %187, %cst_55 {dimension_numbers = #tpu.dot_dimension_numbers<[1], [0], [0], [1], [0, 0, 1, 1], [], []>} : vector<2x2xf32>, vector<2x32xf32>, vector<2x32xf32> -> vector<2x32xf32>
    %211 = vector.extract_strided_slice %210 {offsets = [0, 0], sizes = [1, 32], strides = [1, 1]} : vector<2x32xf32> to vector<1x32xf32>
    %212 = vector.broadcast %211 : vector<1x32xf32> to vector<2x32xf32>
    %213 = arith.mulf %161, %212 : vector<2x32xf32>
    %214 = vector.extract_strided_slice %210 {offsets = [1, 0], sizes = [1, 32], strides = [1, 1]} : vector<2x32xf32> to vector<1x32xf32>
    %215 = vector.broadcast %214 : vector<1x32xf32> to vector<2x32xf32>
    %216 = arith.addf %213, %215 : vector<2x32xf32>
    %c0_56 = arith.constant 0 : index
    %c0_57 = arith.constant 0 : index
    %217 = vector.load %arg1[%c0_56, %c0_57] : memref<2x432xf32, #tpu.memory_space<vmem>>, vector<2x432xf32>
    %218 = tpu.iota {dimensions = array<i32: 0>} : vector<200x2xi32>
    %219 = tpu.iota {dimensions = array<i32: 1>} : vector<200x2xi32>
    %c100_i32 = arith.constant 100 : i32
    %220 = vector.broadcast %c100_i32 : i32 to vector<200x2xi32>
    %221 = arith.muli %219, %220 : vector<200x2xi32>
    %222 = arith.cmpi sge, %218, %221 : vector<200x2xi32>
    %c1_i32_58 = arith.constant 1 : i32
    %223 = vector.broadcast %c1_i32_58 : i32 to vector<200x2xi32>
    %224 = arith.addi %219, %223 : vector<200x2xi32>
    %c100_i32_59 = arith.constant 100 : i32
    %225 = vector.broadcast %c100_i32_59 : i32 to vector<200x2xi32>
    %226 = arith.muli %224, %225 : vector<200x2xi32>
    %227 = arith.cmpi slt, %218, %226 : vector<200x2xi32>
    %228 = arith.andi %222, %227 : vector<200x2xi1>
    %229 = arith.extui %228 : vector<200x2xi1> to vector<200x2xi32>
    %230 = arith.sitofp %229 : vector<200x2xi32> to vector<200x2xf32>
    %231 = tpu.iota {dimensions = array<i32: 1>} : vector<2x200xi32>
    %232 = tpu.iota {dimensions = array<i32: 0>} : vector<2x200xi32>
    %c100_i32_60 = arith.constant 100 : i32
    %233 = vector.broadcast %c100_i32_60 : i32 to vector<2x200xi32>
    %234 = arith.muli %232, %233 : vector<2x200xi32>
    %235 = arith.cmpi sge, %231, %234 : vector<2x200xi32>
    %c1_i32_61 = arith.constant 1 : i32
    %236 = vector.broadcast %c1_i32_61 : i32 to vector<2x200xi32>
    %237 = arith.addi %232, %236 : vector<2x200xi32>
    %c100_i32_62 = arith.constant 100 : i32
    %238 = vector.broadcast %c100_i32_62 : i32 to vector<2x200xi32>
    %239 = arith.muli %237, %238 : vector<2x200xi32>
    %240 = arith.cmpi slt, %231, %239 : vector<2x200xi32>
    %241 = arith.andi %235, %240 : vector<2x200xi1>
    %242 = arith.extui %241 : vector<2x200xi1> to vector<2x200xi32>
    %243 = arith.sitofp %242 : vector<2x200xi32> to vector<2x200xf32>
    %244 = tpu.iota {dimensions = array<i32: 0>} : vector<128x2xi32>
    %245 = tpu.iota {dimensions = array<i32: 1>} : vector<128x2xi32>
    %c64_i32 = arith.constant 64 : i32
    %246 = vector.broadcast %c64_i32 : i32 to vector<128x2xi32>
    %247 = arith.muli %245, %246 : vector<128x2xi32>
    %248 = arith.cmpi sge, %244, %247 : vector<128x2xi32>
    %c1_i32_63 = arith.constant 1 : i32
    %249 = vector.broadcast %c1_i32_63 : i32 to vector<128x2xi32>
    %250 = arith.addi %245, %249 : vector<128x2xi32>
    %c64_i32_64 = arith.constant 64 : i32
    %251 = vector.broadcast %c64_i32_64 : i32 to vector<128x2xi32>
    %252 = arith.muli %250, %251 : vector<128x2xi32>
    %253 = arith.cmpi slt, %244, %252 : vector<128x2xi32>
    %254 = arith.andi %248, %253 : vector<128x2xi1>
    %255 = arith.extui %254 : vector<128x2xi1> to vector<128x2xi32>
    %256 = arith.sitofp %255 : vector<128x2xi32> to vector<128x2xf32>
    %257 = tpu.iota {dimensions = array<i32: 1>} : vector<2x128xi32>
    %258 = tpu.iota {dimensions = array<i32: 0>} : vector<2x128xi32>
    %c64_i32_65 = arith.constant 64 : i32
    %259 = vector.broadcast %c64_i32_65 : i32 to vector<2x128xi32>
    %260 = arith.muli %258, %259 : vector<2x128xi32>
    %261 = arith.cmpi sge, %257, %260 : vector<2x128xi32>
    %c1_i32_66 = arith.constant 1 : i32
    %262 = vector.broadcast %c1_i32_66 : i32 to vector<2x128xi32>
    %263 = arith.addi %258, %262 : vector<2x128xi32>
    %c64_i32_67 = arith.constant 64 : i32
    %264 = vector.broadcast %c64_i32_67 : i32 to vector<2x128xi32>
    %265 = arith.muli %263, %264 : vector<2x128xi32>
    %266 = arith.cmpi slt, %257, %265 : vector<2x128xi32>
    %267 = arith.andi %261, %266 : vector<2x128xi1>
    %268 = arith.extui %267 : vector<2x128xi1> to vector<2x128xi32>
    %269 = arith.sitofp %268 : vector<2x128xi32> to vector<2x128xf32>
    %c0_68 = arith.constant 0 : index
    %c0_69 = arith.constant 0 : index
    %270 = vector.load %arg7[%c0_68, %c0_69] : memref<432x200xf32, #tpu.memory_space<vmem>>, vector<432x200xf32>
    %cst_70 = arith.constant dense<0.000000e+00> : vector<2x200xf32>
    %271 = tpu.matmul %217, %270, %cst_70 {dimension_numbers = #tpu.dot_dimension_numbers<[1], [0], [0], [1], [0, 0, 1, 1], [], []>} : vector<2x432xf32>, vector<432x200xf32>, vector<2x200xf32> -> vector<2x200xf32>
    %272 = vector.extract_strided_slice %0 {offsets = [8, 0], sizes = [1, 2], strides = [1, 1]} : vector<34x6xf32> to vector<1x2xf32>
    %273 = vector.extract_strided_slice %0 {offsets = [9, 0], sizes = [1, 2], strides = [1, 1]} : vector<34x6xf32> to vector<1x2xf32>
    %cst_71 = arith.constant dense<0.000000e+00> : vector<200xf32>
    %274 = vector.multi_reduction <add>, %271, %cst_71 [0] : vector<2x200xf32> to vector<200xf32>
    %275 = vector.shape_cast %274 : vector<200xf32> to vector<1x200xf32>
    %276 = arith.mulf %271, %271 : vector<2x200xf32>
    %cst_72 = arith.constant dense<0.000000e+00> : vector<200xf32>
    %277 = vector.multi_reduction <add>, %276, %cst_72 [0] : vector<2x200xf32> to vector<200xf32>
    %278 = vector.shape_cast %277 : vector<200xf32> to vector<1x200xf32>
    %279 = tpu.concatenate %275, %278 in 0 : vector<1x200xf32>, vector<1x200xf32> -> vector<2x200xf32>
    %cst_73 = arith.constant dense<0.000000e+00> : vector<2x2xf32>
    %280 = tpu.matmul %279, %230, %cst_73 {dimension_numbers = #tpu.dot_dimension_numbers<[1], [0], [0], [1], [0, 0, 1, 1], [], []>} : vector<2x200xf32>, vector<200x2xf32>, vector<2x2xf32> -> vector<2x2xf32>
    %cst_74 = arith.constant 2.000000e+02 : f32
    %281 = vector.broadcast %cst_74 : f32 to vector<2x2xf32>
    %282 = arith.divf %280, %281 : vector<2x2xf32>
    %283 = vector.extract_strided_slice %282 {offsets = [0, 0], sizes = [1, 2], strides = [1, 1]} : vector<2x2xf32> to vector<1x2xf32>
    %284 = vector.extract_strided_slice %282 {offsets = [1, 0], sizes = [1, 2], strides = [1, 1]} : vector<2x2xf32> to vector<1x2xf32>
    %285 = arith.mulf %283, %283 : vector<1x2xf32>
    %286 = arith.subf %284, %285 : vector<1x2xf32>
    %cst_75 = arith.constant 9.99999974E-6 : f32
    %287 = vector.broadcast %cst_75 : f32 to vector<1x2xf32>
    %288 = arith.addf %286, %287 : vector<1x2xf32>
    %289 = math.rsqrt %288 : vector<1x2xf32>
    %290 = arith.mulf %272, %289 : vector<1x2xf32>
    %291 = arith.mulf %283, %290 : vector<1x2xf32>
    %292 = arith.subf %273, %291 : vector<1x2xf32>
    %293 = tpu.concatenate %290, %292 in 0 : vector<1x2xf32>, vector<1x2xf32> -> vector<2x2xf32>
    %cst_76 = arith.constant dense<0.000000e+00> : vector<2x200xf32>
    %294 = tpu.matmul %293, %243, %cst_76 {dimension_numbers = #tpu.dot_dimension_numbers<[1], [0], [0], [1], [0, 0, 1, 1], [], []>} : vector<2x2xf32>, vector<2x200xf32>, vector<2x200xf32> -> vector<2x200xf32>
    %295 = vector.extract_strided_slice %294 {offsets = [0, 0], sizes = [1, 200], strides = [1, 1]} : vector<2x200xf32> to vector<1x200xf32>
    %296 = vector.broadcast %295 : vector<1x200xf32> to vector<2x200xf32>
    %297 = arith.mulf %271, %296 : vector<2x200xf32>
    %298 = vector.extract_strided_slice %294 {offsets = [1, 0], sizes = [1, 200], strides = [1, 1]} : vector<2x200xf32> to vector<1x200xf32>
    %299 = vector.broadcast %298 : vector<1x200xf32> to vector<2x200xf32>
    %300 = arith.addf %297, %299 : vector<2x200xf32>
    %cst_77 = arith.constant 0.000000e+00 : f32
    %301 = vector.broadcast %cst_77 : f32 to vector<2x200xf32>
    %302 = arith.cmpf ogt, %300, %301 : vector<2x200xf32>
    %cst_78 = arith.constant 0.00999999977 : f32
    %303 = vector.broadcast %cst_78 : f32 to vector<2x200xf32>
    %304 = arith.mulf %303, %300 : vector<2x200xf32>
    %305 = arith.select %302, %300, %304 : vector<2x200xi1>, vector<2x200xf32>
    %c0_79 = arith.constant 0 : index
    %c0_80 = arith.constant 0 : index
    %306 = vector.load %arg8[%c0_79, %c0_80] : memref<200x128xf32, #tpu.memory_space<vmem>>, vector<200x128xf32>
    %cst_81 = arith.constant dense<0.000000e+00> : vector<2x128xf32>
    %307 = tpu.matmul %305, %306, %cst_81 {dimension_numbers = #tpu.dot_dimension_numbers<[1], [0], [0], [1], [0, 0, 1, 1], [], []>} : vector<2x200xf32>, vector<200x128xf32>, vector<2x128xf32> -> vector<2x128xf32>
    %308 = vector.extract_strided_slice %0 {offsets = [10, 0], sizes = [1, 2], strides = [1, 1]} : vector<34x6xf32> to vector<1x2xf32>
    %309 = vector.extract_strided_slice %0 {offsets = [11, 0], sizes = [1, 2], strides = [1, 1]} : vector<34x6xf32> to vector<1x2xf32>
    %cst_82 = arith.constant dense<0.000000e+00> : vector<128xf32>
    %310 = vector.multi_reduction <add>, %307, %cst_82 [0] : vector<2x128xf32> to vector<128xf32>
    %311 = vector.shape_cast %310 : vector<128xf32> to vector<1x128xf32>
    %312 = arith.mulf %307, %307 : vector<2x128xf32>
    %cst_83 = arith.constant dense<0.000000e+00> : vector<128xf32>
    %313 = vector.multi_reduction <add>, %312, %cst_83 [0] : vector<2x128xf32> to vector<128xf32>
    %314 = vector.shape_cast %313 : vector<128xf32> to vector<1x128xf32>
    %315 = tpu.concatenate %311, %314 in 0 : vector<1x128xf32>, vector<1x128xf32> -> vector<2x128xf32>
    %cst_84 = arith.constant dense<0.000000e+00> : vector<2x2xf32>
    %316 = tpu.matmul %315, %256, %cst_84 {dimension_numbers = #tpu.dot_dimension_numbers<[1], [0], [0], [1], [0, 0, 1, 1], [], []>} : vector<2x128xf32>, vector<128x2xf32>, vector<2x2xf32> -> vector<2x2xf32>
    %cst_85 = arith.constant 1.280000e+02 : f32
    %317 = vector.broadcast %cst_85 : f32 to vector<2x2xf32>
    %318 = arith.divf %316, %317 : vector<2x2xf32>
    %319 = vector.extract_strided_slice %318 {offsets = [0, 0], sizes = [1, 2], strides = [1, 1]} : vector<2x2xf32> to vector<1x2xf32>
    %320 = vector.extract_strided_slice %318 {offsets = [1, 0], sizes = [1, 2], strides = [1, 1]} : vector<2x2xf32> to vector<1x2xf32>
    %321 = arith.mulf %319, %319 : vector<1x2xf32>
    %322 = arith.subf %320, %321 : vector<1x2xf32>
    %cst_86 = arith.constant 9.99999974E-6 : f32
    %323 = vector.broadcast %cst_86 : f32 to vector<1x2xf32>
    %324 = arith.addf %322, %323 : vector<1x2xf32>
    %325 = math.rsqrt %324 : vector<1x2xf32>
    %326 = arith.mulf %308, %325 : vector<1x2xf32>
    %327 = arith.mulf %319, %326 : vector<1x2xf32>
    %328 = arith.subf %309, %327 : vector<1x2xf32>
    %329 = tpu.concatenate %326, %328 in 0 : vector<1x2xf32>, vector<1x2xf32> -> vector<2x2xf32>
    %cst_87 = arith.constant dense<0.000000e+00> : vector<2x128xf32>
    %330 = tpu.matmul %329, %269, %cst_87 {dimension_numbers = #tpu.dot_dimension_numbers<[1], [0], [0], [1], [0, 0, 1, 1], [], []>} : vector<2x2xf32>, vector<2x128xf32>, vector<2x128xf32> -> vector<2x128xf32>
    %331 = vector.extract_strided_slice %330 {offsets = [0, 0], sizes = [1, 128], strides = [1, 1]} : vector<2x128xf32> to vector<1x128xf32>
    %332 = vector.broadcast %331 : vector<1x128xf32> to vector<2x128xf32>
    %333 = arith.mulf %307, %332 : vector<2x128xf32>
    %334 = vector.extract_strided_slice %330 {offsets = [1, 0], sizes = [1, 128], strides = [1, 1]} : vector<2x128xf32> to vector<1x128xf32>
    %335 = vector.broadcast %334 : vector<1x128xf32> to vector<2x128xf32>
    %336 = arith.addf %333, %335 : vector<2x128xf32>
    %cst_88 = arith.constant 0.000000e+00 : f32
    %337 = vector.broadcast %cst_88 : f32 to vector<2x128xf32>
    %338 = arith.cmpf ogt, %336, %337 : vector<2x128xf32>
    %cst_89 = arith.constant 0.00999999977 : f32
    %339 = vector.broadcast %cst_89 : f32 to vector<2x128xf32>
    %340 = arith.mulf %339, %336 : vector<2x128xf32>
    %341 = arith.select %338, %336, %340 : vector<2x128xi1>, vector<2x128xf32>
    %c0_90 = arith.constant 0 : index
    %c0_91 = arith.constant 0 : index
    %342 = vector.load %arg9[%c0_90, %c0_91] : memref<128x128xf32, #tpu.memory_space<vmem>>, vector<128x128xf32>
    %cst_92 = arith.constant dense<0.000000e+00> : vector<2x128xf32>
    %343 = tpu.matmul %341, %342, %cst_92 {dimension_numbers = #tpu.dot_dimension_numbers<[1], [0], [0], [1], [0, 0, 1, 1], [], []>} : vector<2x128xf32>, vector<128x128xf32>, vector<2x128xf32> -> vector<2x128xf32>
    %344 = vector.extract_strided_slice %0 {offsets = [12, 0], sizes = [1, 2], strides = [1, 1]} : vector<34x6xf32> to vector<1x2xf32>
    %345 = vector.extract_strided_slice %0 {offsets = [13, 0], sizes = [1, 2], strides = [1, 1]} : vector<34x6xf32> to vector<1x2xf32>
    %cst_93 = arith.constant dense<0.000000e+00> : vector<128xf32>
    %346 = vector.multi_reduction <add>, %343, %cst_93 [0] : vector<2x128xf32> to vector<128xf32>
    %347 = vector.shape_cast %346 : vector<128xf32> to vector<1x128xf32>
    %348 = arith.mulf %343, %343 : vector<2x128xf32>
    %cst_94 = arith.constant dense<0.000000e+00> : vector<128xf32>
    %349 = vector.multi_reduction <add>, %348, %cst_94 [0] : vector<2x128xf32> to vector<128xf32>
    %350 = vector.shape_cast %349 : vector<128xf32> to vector<1x128xf32>
    %351 = tpu.concatenate %347, %350 in 0 : vector<1x128xf32>, vector<1x128xf32> -> vector<2x128xf32>
    %cst_95 = arith.constant dense<0.000000e+00> : vector<2x2xf32>
    %352 = tpu.matmul %351, %256, %cst_95 {dimension_numbers = #tpu.dot_dimension_numbers<[1], [0], [0], [1], [0, 0, 1, 1], [], []>} : vector<2x128xf32>, vector<128x2xf32>, vector<2x2xf32> -> vector<2x2xf32>
    %cst_96 = arith.constant 1.280000e+02 : f32
    %353 = vector.broadcast %cst_96 : f32 to vector<2x2xf32>
    %354 = arith.divf %352, %353 : vector<2x2xf32>
    %355 = vector.extract_strided_slice %354 {offsets = [0, 0], sizes = [1, 2], strides = [1, 1]} : vector<2x2xf32> to vector<1x2xf32>
    %356 = vector.extract_strided_slice %354 {offsets = [1, 0], sizes = [1, 2], strides = [1, 1]} : vector<2x2xf32> to vector<1x2xf32>
    %357 = arith.mulf %355, %355 : vector<1x2xf32>
    %358 = arith.subf %356, %357 : vector<1x2xf32>
    %cst_97 = arith.constant 9.99999974E-6 : f32
    %359 = vector.broadcast %cst_97 : f32 to vector<1x2xf32>
    %360 = arith.addf %358, %359 : vector<1x2xf32>
    %361 = math.rsqrt %360 : vector<1x2xf32>
    %362 = arith.mulf %344, %361 : vector<1x2xf32>
    %363 = arith.mulf %355, %362 : vector<1x2xf32>
    %364 = arith.subf %345, %363 : vector<1x2xf32>
    %365 = tpu.concatenate %362, %364 in 0 : vector<1x2xf32>, vector<1x2xf32> -> vector<2x2xf32>
    %cst_98 = arith.constant dense<0.000000e+00> : vector<2x128xf32>
    %366 = tpu.matmul %365, %269, %cst_98 {dimension_numbers = #tpu.dot_dimension_numbers<[1], [0], [0], [1], [0, 0, 1, 1], [], []>} : vector<2x2xf32>, vector<2x128xf32>, vector<2x128xf32> -> vector<2x128xf32>
    %367 = vector.extract_strided_slice %366 {offsets = [0, 0], sizes = [1, 128], strides = [1, 1]} : vector<2x128xf32> to vector<1x128xf32>
    %368 = vector.broadcast %367 : vector<1x128xf32> to vector<2x128xf32>
    %369 = arith.mulf %343, %368 : vector<2x128xf32>
    %370 = vector.extract_strided_slice %366 {offsets = [1, 0], sizes = [1, 128], strides = [1, 1]} : vector<2x128xf32> to vector<1x128xf32>
    %371 = vector.broadcast %370 : vector<1x128xf32> to vector<2x128xf32>
    %372 = arith.addf %369, %371 : vector<2x128xf32>
    %cst_99 = arith.constant 0.000000e+00 : f32
    %373 = vector.broadcast %cst_99 : f32 to vector<2x128xf32>
    %374 = arith.cmpf ogt, %372, %373 : vector<2x128xf32>
    %cst_100 = arith.constant 0.00999999977 : f32
    %375 = vector.broadcast %cst_100 : f32 to vector<2x128xf32>
    %376 = arith.mulf %375, %372 : vector<2x128xf32>
    %377 = arith.select %374, %372, %376 : vector<2x128xi1>, vector<2x128xf32>
    %c0_101 = arith.constant 0 : index
    %c0_102 = arith.constant 0 : index
    %378 = vector.load %arg10[%c0_101, %c0_102] : memref<32x144xf32, #tpu.memory_space<vmem>>, vector<32x144xf32>
    %cst_103 = arith.constant dense<0.000000e+00> : vector<2x144xf32>
    %379 = tpu.matmul %216, %378, %cst_103 {dimension_numbers = #tpu.dot_dimension_numbers<[1], [0], [0], [1], [0, 0, 1, 1], [], []>} : vector<2x32xf32>, vector<32x144xf32>, vector<2x144xf32> -> vector<2x144xf32>
    %c0_104 = arith.constant 0 : index
    %c0_105 = arith.constant 0 : index
    %380 = vector.load %arg11[%c0_104, %c0_105] : memref<128x144xf32, #tpu.memory_space<vmem>>, vector<128x144xf32>
    %cst_106 = arith.constant dense<0.000000e+00> : vector<2x144xf32>
    %381 = tpu.matmul %377, %380, %cst_106 {dimension_numbers = #tpu.dot_dimension_numbers<[1], [0], [0], [1], [0, 0, 1, 1], [], []>} : vector<2x128xf32>, vector<128x144xf32>, vector<2x144xf32> -> vector<2x144xf32>
    %382 = arith.addf %379, %381 : vector<2x144xf32>
    %383 = tpu.iota {dimensions = array<i32: 0>} : vector<144x4xi32>
    %384 = tpu.iota {dimensions = array<i32: 1>} : vector<144x4xi32>
    %c36_i32_107 = arith.constant 36 : i32
    %385 = vector.broadcast %c36_i32_107 : i32 to vector<144x4xi32>
    %386 = arith.muli %384, %385 : vector<144x4xi32>
    %387 = arith.cmpi sge, %383, %386 : vector<144x4xi32>
    %c1_i32_108 = arith.constant 1 : i32
    %388 = vector.broadcast %c1_i32_108 : i32 to vector<144x4xi32>
    %389 = arith.addi %384, %388 : vector<144x4xi32>
    %c36_i32_109 = arith.constant 36 : i32
    %390 = vector.broadcast %c36_i32_109 : i32 to vector<144x4xi32>
    %391 = arith.muli %389, %390 : vector<144x4xi32>
    %392 = arith.cmpi slt, %383, %391 : vector<144x4xi32>
    %393 = arith.andi %387, %392 : vector<144x4xi1>
    %394 = arith.extui %393 : vector<144x4xi1> to vector<144x4xi32>
    %395 = arith.sitofp %394 : vector<144x4xi32> to vector<144x4xf32>
    %396 = tpu.iota {dimensions = array<i32: 1>} : vector<4x144xi32>
    %397 = tpu.iota {dimensions = array<i32: 0>} : vector<4x144xi32>
    %c36_i32_110 = arith.constant 36 : i32
    %398 = vector.broadcast %c36_i32_110 : i32 to vector<4x144xi32>
    %399 = arith.muli %397, %398 : vector<4x144xi32>
    %400 = arith.cmpi sge, %396, %399 : vector<4x144xi32>
    %c1_i32_111 = arith.constant 1 : i32
    %401 = vector.broadcast %c1_i32_111 : i32 to vector<4x144xi32>
    %402 = arith.addi %397, %401 : vector<4x144xi32>
    %c36_i32_112 = arith.constant 36 : i32
    %403 = vector.broadcast %c36_i32_112 : i32 to vector<4x144xi32>
    %404 = arith.muli %402, %403 : vector<4x144xi32>
    %405 = arith.cmpi slt, %396, %404 : vector<4x144xi32>
    %406 = arith.andi %400, %405 : vector<4x144xi1>
    %407 = arith.extui %406 : vector<4x144xi1> to vector<4x144xi32>
    %408 = arith.sitofp %407 : vector<4x144xi32> to vector<4x144xf32>
    %409 = tpu.iota {dimensions = array<i32: 0>} : vector<64x4xi32>
    %410 = tpu.iota {dimensions = array<i32: 1>} : vector<64x4xi32>
    %c16_i32_113 = arith.constant 16 : i32
    %411 = vector.broadcast %c16_i32_113 : i32 to vector<64x4xi32>
    %412 = arith.muli %410, %411 : vector<64x4xi32>
    %413 = arith.cmpi sge, %409, %412 : vector<64x4xi32>
    %c1_i32_114 = arith.constant 1 : i32
    %414 = vector.broadcast %c1_i32_114 : i32 to vector<64x4xi32>
    %415 = arith.addi %410, %414 : vector<64x4xi32>
    %c16_i32_115 = arith.constant 16 : i32
    %416 = vector.broadcast %c16_i32_115 : i32 to vector<64x4xi32>
    %417 = arith.muli %415, %416 : vector<64x4xi32>
    %418 = arith.cmpi slt, %409, %417 : vector<64x4xi32>
    %419 = arith.andi %413, %418 : vector<64x4xi1>
    %420 = arith.extui %419 : vector<64x4xi1> to vector<64x4xi32>
    %421 = arith.sitofp %420 : vector<64x4xi32> to vector<64x4xf32>
    %422 = tpu.iota {dimensions = array<i32: 1>} : vector<4x64xi32>
    %423 = tpu.iota {dimensions = array<i32: 0>} : vector<4x64xi32>
    %c16_i32_116 = arith.constant 16 : i32
    %424 = vector.broadcast %c16_i32_116 : i32 to vector<4x64xi32>
    %425 = arith.muli %423, %424 : vector<4x64xi32>
    %426 = arith.cmpi sge, %422, %425 : vector<4x64xi32>
    %c1_i32_117 = arith.constant 1 : i32
    %427 = vector.broadcast %c1_i32_117 : i32 to vector<4x64xi32>
    %428 = arith.addi %423, %427 : vector<4x64xi32>
    %c16_i32_118 = arith.constant 16 : i32
    %429 = vector.broadcast %c16_i32_118 : i32 to vector<4x64xi32>
    %430 = arith.muli %428, %429 : vector<4x64xi32>
    %431 = arith.cmpi slt, %422, %430 : vector<4x64xi32>
    %432 = arith.andi %426, %431 : vector<4x64xi1>
    %433 = arith.extui %432 : vector<4x64xi1> to vector<4x64xi32>
    %434 = arith.sitofp %433 : vector<4x64xi32> to vector<4x64xf32>
    %435 = vector.extract_strided_slice %0 {offsets = [14, 0], sizes = [1, 4], strides = [1, 1]} : vector<34x6xf32> to vector<1x4xf32>
    %436 = vector.extract_strided_slice %0 {offsets = [15, 0], sizes = [1, 4], strides = [1, 1]} : vector<34x6xf32> to vector<1x4xf32>
    %cst_119 = arith.constant dense<0.000000e+00> : vector<144xf32>
    %437 = vector.multi_reduction <add>, %382, %cst_119 [0] : vector<2x144xf32> to vector<144xf32>
    %438 = vector.shape_cast %437 : vector<144xf32> to vector<1x144xf32>
    %439 = arith.mulf %382, %382 : vector<2x144xf32>
    %cst_120 = arith.constant dense<0.000000e+00> : vector<144xf32>
    %440 = vector.multi_reduction <add>, %439, %cst_120 [0] : vector<2x144xf32> to vector<144xf32>
    %441 = vector.shape_cast %440 : vector<144xf32> to vector<1x144xf32>
    %442 = tpu.concatenate %438, %441 in 0 : vector<1x144xf32>, vector<1x144xf32> -> vector<2x144xf32>
    %cst_121 = arith.constant dense<0.000000e+00> : vector<2x4xf32>
    %443 = tpu.matmul %442, %395, %cst_121 {dimension_numbers = #tpu.dot_dimension_numbers<[1], [0], [0], [1], [0, 0, 1, 1], [], []>} : vector<2x144xf32>, vector<144x4xf32>, vector<2x4xf32> -> vector<2x4xf32>
    %cst_122 = arith.constant 7.200000e+01 : f32
    %444 = vector.broadcast %cst_122 : f32 to vector<2x4xf32>
    %445 = arith.divf %443, %444 : vector<2x4xf32>
    %446 = vector.extract_strided_slice %445 {offsets = [0, 0], sizes = [1, 4], strides = [1, 1]} : vector<2x4xf32> to vector<1x4xf32>
    %447 = vector.extract_strided_slice %445 {offsets = [1, 0], sizes = [1, 4], strides = [1, 1]} : vector<2x4xf32> to vector<1x4xf32>
    %448 = arith.mulf %446, %446 : vector<1x4xf32>
    %449 = arith.subf %447, %448 : vector<1x4xf32>
    %cst_123 = arith.constant 9.99999974E-6 : f32
    %450 = vector.broadcast %cst_123 : f32 to vector<1x4xf32>
    %451 = arith.addf %449, %450 : vector<1x4xf32>
    %452 = math.rsqrt %451 : vector<1x4xf32>
    %453 = arith.mulf %435, %452 : vector<1x4xf32>
    %454 = arith.mulf %446, %453 : vector<1x4xf32>
    %455 = arith.subf %436, %454 : vector<1x4xf32>
    %456 = tpu.concatenate %453, %455 in 0 : vector<1x4xf32>, vector<1x4xf32> -> vector<2x4xf32>
    %cst_124 = arith.constant dense<0.000000e+00> : vector<2x144xf32>
    %457 = tpu.matmul %456, %408, %cst_124 {dimension_numbers = #tpu.dot_dimension_numbers<[1], [0], [0], [1], [0, 0, 1, 1], [], []>} : vector<2x4xf32>, vector<4x144xf32>, vector<2x144xf32> -> vector<2x144xf32>
    %458 = vector.extract_strided_slice %457 {offsets = [0, 0], sizes = [1, 144], strides = [1, 1]} : vector<2x144xf32> to vector<1x144xf32>
    %459 = vector.broadcast %458 : vector<1x144xf32> to vector<2x144xf32>
    %460 = arith.mulf %382, %459 : vector<2x144xf32>
    %461 = vector.extract_strided_slice %457 {offsets = [1, 0], sizes = [1, 144], strides = [1, 1]} : vector<2x144xf32> to vector<1x144xf32>
    %462 = vector.broadcast %461 : vector<1x144xf32> to vector<2x144xf32>
    %463 = arith.addf %460, %462 : vector<2x144xf32>
    %cst_125 = arith.constant 0.000000e+00 : f32
    %464 = vector.broadcast %cst_125 : f32 to vector<2x144xf32>
    %465 = arith.cmpf ogt, %463, %464 : vector<2x144xf32>
    %cst_126 = arith.constant 0.00999999977 : f32
    %466 = vector.broadcast %cst_126 : f32 to vector<2x144xf32>
    %467 = arith.mulf %466, %463 : vector<2x144xf32>
    %468 = arith.select %465, %463, %467 : vector<2x144xi1>, vector<2x144xf32>
    %c0_127 = arith.constant 0 : index
    %c0_128 = arith.constant 0 : index
    %469 = vector.load %arg12[%c0_127, %c0_128] : memref<144x64xf32, #tpu.memory_space<vmem>>, vector<144x64xf32>
    %cst_129 = arith.constant dense<0.000000e+00> : vector<2x64xf32>
    %470 = tpu.matmul %468, %469, %cst_129 {dimension_numbers = #tpu.dot_dimension_numbers<[1], [0], [0], [1], [0, 0, 1, 1], [], []>} : vector<2x144xf32>, vector<144x64xf32>, vector<2x64xf32> -> vector<2x64xf32>
    %471 = vector.extract_strided_slice %0 {offsets = [16, 0], sizes = [1, 4], strides = [1, 1]} : vector<34x6xf32> to vector<1x4xf32>
    %472 = vector.extract_strided_slice %0 {offsets = [17, 0], sizes = [1, 4], strides = [1, 1]} : vector<34x6xf32> to vector<1x4xf32>
    %cst_130 = arith.constant dense<0.000000e+00> : vector<64xf32>
    %473 = vector.multi_reduction <add>, %470, %cst_130 [0] : vector<2x64xf32> to vector<64xf32>
    %474 = vector.shape_cast %473 : vector<64xf32> to vector<1x64xf32>
    %475 = arith.mulf %470, %470 : vector<2x64xf32>
    %cst_131 = arith.constant dense<0.000000e+00> : vector<64xf32>
    %476 = vector.multi_reduction <add>, %475, %cst_131 [0] : vector<2x64xf32> to vector<64xf32>
    %477 = vector.shape_cast %476 : vector<64xf32> to vector<1x64xf32>
    %478 = tpu.concatenate %474, %477 in 0 : vector<1x64xf32>, vector<1x64xf32> -> vector<2x64xf32>
    %cst_132 = arith.constant dense<0.000000e+00> : vector<2x4xf32>
    %479 = tpu.matmul %478, %421, %cst_132 {dimension_numbers = #tpu.dot_dimension_numbers<[1], [0], [0], [1], [0, 0, 1, 1], [], []>} : vector<2x64xf32>, vector<64x4xf32>, vector<2x4xf32> -> vector<2x4xf32>
    %cst_133 = arith.constant 3.200000e+01 : f32
    %480 = vector.broadcast %cst_133 : f32 to vector<2x4xf32>
    %481 = arith.divf %479, %480 : vector<2x4xf32>
    %482 = vector.extract_strided_slice %481 {offsets = [0, 0], sizes = [1, 4], strides = [1, 1]} : vector<2x4xf32> to vector<1x4xf32>
    %483 = vector.extract_strided_slice %481 {offsets = [1, 0], sizes = [1, 4], strides = [1, 1]} : vector<2x4xf32> to vector<1x4xf32>
    %484 = arith.mulf %482, %482 : vector<1x4xf32>
    %485 = arith.subf %483, %484 : vector<1x4xf32>
    %cst_134 = arith.constant 9.99999974E-6 : f32
    %486 = vector.broadcast %cst_134 : f32 to vector<1x4xf32>
    %487 = arith.addf %485, %486 : vector<1x4xf32>
    %488 = math.rsqrt %487 : vector<1x4xf32>
    %489 = arith.mulf %471, %488 : vector<1x4xf32>
    %490 = arith.mulf %482, %489 : vector<1x4xf32>
    %491 = arith.subf %472, %490 : vector<1x4xf32>
    %492 = tpu.concatenate %489, %491 in 0 : vector<1x4xf32>, vector<1x4xf32> -> vector<2x4xf32>
    %cst_135 = arith.constant dense<0.000000e+00> : vector<2x64xf32>
    %493 = tpu.matmul %492, %434, %cst_135 {dimension_numbers = #tpu.dot_dimension_numbers<[1], [0], [0], [1], [0, 0, 1, 1], [], []>} : vector<2x4xf32>, vector<4x64xf32>, vector<2x64xf32> -> vector<2x64xf32>
    %494 = vector.extract_strided_slice %493 {offsets = [0, 0], sizes = [1, 64], strides = [1, 1]} : vector<2x64xf32> to vector<1x64xf32>
    %495 = vector.broadcast %494 : vector<1x64xf32> to vector<2x64xf32>
    %496 = arith.mulf %470, %495 : vector<2x64xf32>
    %497 = vector.extract_strided_slice %493 {offsets = [1, 0], sizes = [1, 64], strides = [1, 1]} : vector<2x64xf32> to vector<1x64xf32>
    %498 = vector.broadcast %497 : vector<1x64xf32> to vector<2x64xf32>
    %499 = arith.addf %496, %498 : vector<2x64xf32>
    %cst_136 = arith.constant 0.000000e+00 : f32
    %500 = vector.broadcast %cst_136 : f32 to vector<2x64xf32>
    %501 = arith.cmpf ogt, %499, %500 : vector<2x64xf32>
    %cst_137 = arith.constant 0.00999999977 : f32
    %502 = vector.broadcast %cst_137 : f32 to vector<2x64xf32>
    %503 = arith.mulf %502, %499 : vector<2x64xf32>
    %504 = arith.select %501, %499, %503 : vector<2x64xi1>, vector<2x64xf32>
    %c0_138 = arith.constant 0 : index
    %c0_139 = arith.constant 0 : index
    %505 = vector.load %arg13[%c0_138, %c0_139] : memref<64x64xf32, #tpu.memory_space<vmem>>, vector<64x64xf32>
    %cst_140 = arith.constant dense<0.000000e+00> : vector<2x64xf32>
    %506 = tpu.matmul %504, %505, %cst_140 {dimension_numbers = #tpu.dot_dimension_numbers<[1], [0], [0], [1], [0, 0, 1, 1], [], []>} : vector<2x64xf32>, vector<64x64xf32>, vector<2x64xf32> -> vector<2x64xf32>
    %507 = vector.extract_strided_slice %0 {offsets = [18, 0], sizes = [1, 4], strides = [1, 1]} : vector<34x6xf32> to vector<1x4xf32>
    %508 = vector.extract_strided_slice %0 {offsets = [19, 0], sizes = [1, 4], strides = [1, 1]} : vector<34x6xf32> to vector<1x4xf32>
    %cst_141 = arith.constant dense<0.000000e+00> : vector<64xf32>
    %509 = vector.multi_reduction <add>, %506, %cst_141 [0] : vector<2x64xf32> to vector<64xf32>
    %510 = vector.shape_cast %509 : vector<64xf32> to vector<1x64xf32>
    %511 = arith.mulf %506, %506 : vector<2x64xf32>
    %cst_142 = arith.constant dense<0.000000e+00> : vector<64xf32>
    %512 = vector.multi_reduction <add>, %511, %cst_142 [0] : vector<2x64xf32> to vector<64xf32>
    %513 = vector.shape_cast %512 : vector<64xf32> to vector<1x64xf32>
    %514 = tpu.concatenate %510, %513 in 0 : vector<1x64xf32>, vector<1x64xf32> -> vector<2x64xf32>
    %cst_143 = arith.constant dense<0.000000e+00> : vector<2x4xf32>
    %515 = tpu.matmul %514, %421, %cst_143 {dimension_numbers = #tpu.dot_dimension_numbers<[1], [0], [0], [1], [0, 0, 1, 1], [], []>} : vector<2x64xf32>, vector<64x4xf32>, vector<2x4xf32> -> vector<2x4xf32>
    %cst_144 = arith.constant 3.200000e+01 : f32
    %516 = vector.broadcast %cst_144 : f32 to vector<2x4xf32>
    %517 = arith.divf %515, %516 : vector<2x4xf32>
    %518 = vector.extract_strided_slice %517 {offsets = [0, 0], sizes = [1, 4], strides = [1, 1]} : vector<2x4xf32> to vector<1x4xf32>
    %519 = vector.extract_strided_slice %517 {offsets = [1, 0], sizes = [1, 4], strides = [1, 1]} : vector<2x4xf32> to vector<1x4xf32>
    %520 = arith.mulf %518, %518 : vector<1x4xf32>
    %521 = arith.subf %519, %520 : vector<1x4xf32>
    %cst_145 = arith.constant 9.99999974E-6 : f32
    %522 = vector.broadcast %cst_145 : f32 to vector<1x4xf32>
    %523 = arith.addf %521, %522 : vector<1x4xf32>
    %524 = math.rsqrt %523 : vector<1x4xf32>
    %525 = arith.mulf %507, %524 : vector<1x4xf32>
    %526 = arith.mulf %518, %525 : vector<1x4xf32>
    %527 = arith.subf %508, %526 : vector<1x4xf32>
    %528 = tpu.concatenate %525, %527 in 0 : vector<1x4xf32>, vector<1x4xf32> -> vector<2x4xf32>
    %cst_146 = arith.constant dense<0.000000e+00> : vector<2x64xf32>
    %529 = tpu.matmul %528, %434, %cst_146 {dimension_numbers = #tpu.dot_dimension_numbers<[1], [0], [0], [1], [0, 0, 1, 1], [], []>} : vector<2x4xf32>, vector<4x64xf32>, vector<2x64xf32> -> vector<2x64xf32>
    %530 = vector.extract_strided_slice %529 {offsets = [0, 0], sizes = [1, 64], strides = [1, 1]} : vector<2x64xf32> to vector<1x64xf32>
    %531 = vector.broadcast %530 : vector<1x64xf32> to vector<2x64xf32>
    %532 = arith.mulf %506, %531 : vector<2x64xf32>
    %533 = vector.extract_strided_slice %529 {offsets = [1, 0], sizes = [1, 64], strides = [1, 1]} : vector<2x64xf32> to vector<1x64xf32>
    %534 = vector.broadcast %533 : vector<1x64xf32> to vector<2x64xf32>
    %535 = arith.addf %532, %534 : vector<2x64xf32>
    %cst_147 = arith.constant 0.000000e+00 : f32
    %536 = vector.broadcast %cst_147 : f32 to vector<2x64xf32>
    %537 = arith.cmpf ogt, %535, %536 : vector<2x64xf32>
    %cst_148 = arith.constant 0.00999999977 : f32
    %538 = vector.broadcast %cst_148 : f32 to vector<2x64xf32>
    %539 = arith.mulf %538, %535 : vector<2x64xf32>
    %540 = arith.select %537, %535, %539 : vector<2x64xi1>, vector<2x64xf32>
    %541 = tpu.iota {dimensions = array<i32: 0>} : vector<64x4xi32>
    %542 = tpu.iota {dimensions = array<i32: 1>} : vector<64x4xi32>
    %c16_i32_149 = arith.constant 16 : i32
    %543 = vector.broadcast %c16_i32_149 : i32 to vector<64x4xi32>
    %544 = arith.muli %542, %543 : vector<64x4xi32>
    %545 = arith.cmpi sge, %541, %544 : vector<64x4xi32>
    %c1_i32_150 = arith.constant 1 : i32
    %546 = vector.broadcast %c1_i32_150 : i32 to vector<64x4xi32>
    %547 = arith.addi %542, %546 : vector<64x4xi32>
    %c16_i32_151 = arith.constant 16 : i32
    %548 = vector.broadcast %c16_i32_151 : i32 to vector<64x4xi32>
    %549 = arith.muli %547, %548 : vector<64x4xi32>
    %550 = arith.cmpi slt, %541, %549 : vector<64x4xi32>
    %551 = arith.andi %545, %550 : vector<64x4xi1>
    %552 = arith.extui %551 : vector<64x4xi1> to vector<64x4xi32>
    %553 = arith.sitofp %552 : vector<64x4xi32> to vector<64x4xf32>
    %554 = tpu.iota {dimensions = array<i32: 1>} : vector<4x64xi32>
    %555 = tpu.iota {dimensions = array<i32: 0>} : vector<4x64xi32>
    %c16_i32_152 = arith.constant 16 : i32
    %556 = vector.broadcast %c16_i32_152 : i32 to vector<4x64xi32>
    %557 = arith.muli %555, %556 : vector<4x64xi32>
    %558 = arith.cmpi sge, %554, %557 : vector<4x64xi32>
    %c1_i32_153 = arith.constant 1 : i32
    %559 = vector.broadcast %c1_i32_153 : i32 to vector<4x64xi32>
    %560 = arith.addi %555, %559 : vector<4x64xi32>
    %c16_i32_154 = arith.constant 16 : i32
    %561 = vector.broadcast %c16_i32_154 : i32 to vector<4x64xi32>
    %562 = arith.muli %560, %561 : vector<4x64xi32>
    %563 = arith.cmpi slt, %554, %562 : vector<4x64xi32>
    %564 = arith.andi %558, %563 : vector<4x64xi1>
    %565 = arith.extui %564 : vector<4x64xi1> to vector<4x64xi32>
    %566 = arith.sitofp %565 : vector<4x64xi32> to vector<4x64xf32>
    %567 = vector.extract_strided_slice %0 {offsets = [20, 0], sizes = [1, 4], strides = [1, 1]} : vector<34x6xf32> to vector<1x4xf32>
    %568 = vector.extract_strided_slice %0 {offsets = [21, 0], sizes = [1, 4], strides = [1, 1]} : vector<34x6xf32> to vector<1x4xf32>
    %cst_155 = arith.constant dense<0.000000e+00> : vector<64xf32>
    %569 = vector.multi_reduction <add>, %540, %cst_155 [0] : vector<2x64xf32> to vector<64xf32>
    %570 = vector.shape_cast %569 : vector<64xf32> to vector<1x64xf32>
    %571 = arith.mulf %540, %540 : vector<2x64xf32>
    %cst_156 = arith.constant dense<0.000000e+00> : vector<64xf32>
    %572 = vector.multi_reduction <add>, %571, %cst_156 [0] : vector<2x64xf32> to vector<64xf32>
    %573 = vector.shape_cast %572 : vector<64xf32> to vector<1x64xf32>
    %574 = tpu.concatenate %570, %573 in 0 : vector<1x64xf32>, vector<1x64xf32> -> vector<2x64xf32>
    %cst_157 = arith.constant dense<0.000000e+00> : vector<2x4xf32>
    %575 = tpu.matmul %574, %553, %cst_157 {dimension_numbers = #tpu.dot_dimension_numbers<[1], [0], [0], [1], [0, 0, 1, 1], [], []>} : vector<2x64xf32>, vector<64x4xf32>, vector<2x4xf32> -> vector<2x4xf32>
    %cst_158 = arith.constant 3.200000e+01 : f32
    %576 = vector.broadcast %cst_158 : f32 to vector<2x4xf32>
    %577 = arith.divf %575, %576 : vector<2x4xf32>
    %578 = vector.extract_strided_slice %577 {offsets = [0, 0], sizes = [1, 4], strides = [1, 1]} : vector<2x4xf32> to vector<1x4xf32>
    %579 = vector.extract_strided_slice %577 {offsets = [1, 0], sizes = [1, 4], strides = [1, 1]} : vector<2x4xf32> to vector<1x4xf32>
    %580 = arith.mulf %578, %578 : vector<1x4xf32>
    %581 = arith.subf %579, %580 : vector<1x4xf32>
    %cst_159 = arith.constant 9.99999974E-6 : f32
    %582 = vector.broadcast %cst_159 : f32 to vector<1x4xf32>
    %583 = arith.addf %581, %582 : vector<1x4xf32>
    %584 = math.rsqrt %583 : vector<1x4xf32>
    %585 = arith.mulf %567, %584 : vector<1x4xf32>
    %586 = arith.mulf %578, %585 : vector<1x4xf32>
    %587 = arith.subf %568, %586 : vector<1x4xf32>
    %588 = tpu.concatenate %585, %587 in 0 : vector<1x4xf32>, vector<1x4xf32> -> vector<2x4xf32>
    %cst_160 = arith.constant dense<0.000000e+00> : vector<2x64xf32>
    %589 = tpu.matmul %588, %566, %cst_160 {dimension_numbers = #tpu.dot_dimension_numbers<[1], [0], [0], [1], [0, 0, 1, 1], [], []>} : vector<2x4xf32>, vector<4x64xf32>, vector<2x64xf32> -> vector<2x64xf32>
    %590 = vector.extract_strided_slice %589 {offsets = [0, 0], sizes = [1, 64], strides = [1, 1]} : vector<2x64xf32> to vector<1x64xf32>
    %591 = vector.broadcast %590 : vector<1x64xf32> to vector<2x64xf32>
    %592 = arith.mulf %540, %591 : vector<2x64xf32>
    %593 = vector.extract_strided_slice %589 {offsets = [1, 0], sizes = [1, 64], strides = [1, 1]} : vector<2x64xf32> to vector<1x64xf32>
    %594 = vector.broadcast %593 : vector<1x64xf32> to vector<2x64xf32>
    %595 = arith.addf %592, %594 : vector<2x64xf32>
    %c0_161 = arith.constant 0 : index
    %c0_162 = arith.constant 0 : index
    %596 = vector.load %arg2[%c0_161, %c0_162] : memref<2x432xf32, #tpu.memory_space<vmem>>, vector<2x432xf32>
    %597 = tpu.iota {dimensions = array<i32: 0>} : vector<200x2xi32>
    %598 = tpu.iota {dimensions = array<i32: 1>} : vector<200x2xi32>
    %c100_i32_163 = arith.constant 100 : i32
    %599 = vector.broadcast %c100_i32_163 : i32 to vector<200x2xi32>
    %600 = arith.muli %598, %599 : vector<200x2xi32>
    %601 = arith.cmpi sge, %597, %600 : vector<200x2xi32>
    %c1_i32_164 = arith.constant 1 : i32
    %602 = vector.broadcast %c1_i32_164 : i32 to vector<200x2xi32>
    %603 = arith.addi %598, %602 : vector<200x2xi32>
    %c100_i32_165 = arith.constant 100 : i32
    %604 = vector.broadcast %c100_i32_165 : i32 to vector<200x2xi32>
    %605 = arith.muli %603, %604 : vector<200x2xi32>
    %606 = arith.cmpi slt, %597, %605 : vector<200x2xi32>
    %607 = arith.andi %601, %606 : vector<200x2xi1>
    %608 = arith.extui %607 : vector<200x2xi1> to vector<200x2xi32>
    %609 = arith.sitofp %608 : vector<200x2xi32> to vector<200x2xf32>
    %610 = tpu.iota {dimensions = array<i32: 1>} : vector<2x200xi32>
    %611 = tpu.iota {dimensions = array<i32: 0>} : vector<2x200xi32>
    %c100_i32_166 = arith.constant 100 : i32
    %612 = vector.broadcast %c100_i32_166 : i32 to vector<2x200xi32>
    %613 = arith.muli %611, %612 : vector<2x200xi32>
    %614 = arith.cmpi sge, %610, %613 : vector<2x200xi32>
    %c1_i32_167 = arith.constant 1 : i32
    %615 = vector.broadcast %c1_i32_167 : i32 to vector<2x200xi32>
    %616 = arith.addi %611, %615 : vector<2x200xi32>
    %c100_i32_168 = arith.constant 100 : i32
    %617 = vector.broadcast %c100_i32_168 : i32 to vector<2x200xi32>
    %618 = arith.muli %616, %617 : vector<2x200xi32>
    %619 = arith.cmpi slt, %610, %618 : vector<2x200xi32>
    %620 = arith.andi %614, %619 : vector<2x200xi1>
    %621 = arith.extui %620 : vector<2x200xi1> to vector<2x200xi32>
    %622 = arith.sitofp %621 : vector<2x200xi32> to vector<2x200xf32>
    %623 = tpu.iota {dimensions = array<i32: 0>} : vector<128x2xi32>
    %624 = tpu.iota {dimensions = array<i32: 1>} : vector<128x2xi32>
    %c64_i32_169 = arith.constant 64 : i32
    %625 = vector.broadcast %c64_i32_169 : i32 to vector<128x2xi32>
    %626 = arith.muli %624, %625 : vector<128x2xi32>
    %627 = arith.cmpi sge, %623, %626 : vector<128x2xi32>
    %c1_i32_170 = arith.constant 1 : i32
    %628 = vector.broadcast %c1_i32_170 : i32 to vector<128x2xi32>
    %629 = arith.addi %624, %628 : vector<128x2xi32>
    %c64_i32_171 = arith.constant 64 : i32
    %630 = vector.broadcast %c64_i32_171 : i32 to vector<128x2xi32>
    %631 = arith.muli %629, %630 : vector<128x2xi32>
    %632 = arith.cmpi slt, %623, %631 : vector<128x2xi32>
    %633 = arith.andi %627, %632 : vector<128x2xi1>
    %634 = arith.extui %633 : vector<128x2xi1> to vector<128x2xi32>
    %635 = arith.sitofp %634 : vector<128x2xi32> to vector<128x2xf32>
    %636 = tpu.iota {dimensions = array<i32: 1>} : vector<2x128xi32>
    %637 = tpu.iota {dimensions = array<i32: 0>} : vector<2x128xi32>
    %c64_i32_172 = arith.constant 64 : i32
    %638 = vector.broadcast %c64_i32_172 : i32 to vector<2x128xi32>
    %639 = arith.muli %637, %638 : vector<2x128xi32>
    %640 = arith.cmpi sge, %636, %639 : vector<2x128xi32>
    %c1_i32_173 = arith.constant 1 : i32
    %641 = vector.broadcast %c1_i32_173 : i32 to vector<2x128xi32>
    %642 = arith.addi %637, %641 : vector<2x128xi32>
    %c64_i32_174 = arith.constant 64 : i32
    %643 = vector.broadcast %c64_i32_174 : i32 to vector<2x128xi32>
    %644 = arith.muli %642, %643 : vector<2x128xi32>
    %645 = arith.cmpi slt, %636, %644 : vector<2x128xi32>
    %646 = arith.andi %640, %645 : vector<2x128xi1>
    %647 = arith.extui %646 : vector<2x128xi1> to vector<2x128xi32>
    %648 = arith.sitofp %647 : vector<2x128xi32> to vector<2x128xf32>
    %c0_175 = arith.constant 0 : index
    %c0_176 = arith.constant 0 : index
    %649 = vector.load %arg14[%c0_175, %c0_176] : memref<432x200xf32, #tpu.memory_space<vmem>>, vector<432x200xf32>
    %cst_177 = arith.constant dense<0.000000e+00> : vector<2x200xf32>
    %650 = tpu.matmul %596, %649, %cst_177 {dimension_numbers = #tpu.dot_dimension_numbers<[1], [0], [0], [1], [0, 0, 1, 1], [], []>} : vector<2x432xf32>, vector<432x200xf32>, vector<2x200xf32> -> vector<2x200xf32>
    %651 = vector.extract_strided_slice %0 {offsets = [22, 0], sizes = [1, 2], strides = [1, 1]} : vector<34x6xf32> to vector<1x2xf32>
    %652 = vector.extract_strided_slice %0 {offsets = [23, 0], sizes = [1, 2], strides = [1, 1]} : vector<34x6xf32> to vector<1x2xf32>
    %cst_178 = arith.constant dense<0.000000e+00> : vector<200xf32>
    %653 = vector.multi_reduction <add>, %650, %cst_178 [0] : vector<2x200xf32> to vector<200xf32>
    %654 = vector.shape_cast %653 : vector<200xf32> to vector<1x200xf32>
    %655 = arith.mulf %650, %650 : vector<2x200xf32>
    %cst_179 = arith.constant dense<0.000000e+00> : vector<200xf32>
    %656 = vector.multi_reduction <add>, %655, %cst_179 [0] : vector<2x200xf32> to vector<200xf32>
    %657 = vector.shape_cast %656 : vector<200xf32> to vector<1x200xf32>
    %658 = tpu.concatenate %654, %657 in 0 : vector<1x200xf32>, vector<1x200xf32> -> vector<2x200xf32>
    %cst_180 = arith.constant dense<0.000000e+00> : vector<2x2xf32>
    %659 = tpu.matmul %658, %609, %cst_180 {dimension_numbers = #tpu.dot_dimension_numbers<[1], [0], [0], [1], [0, 0, 1, 1], [], []>} : vector<2x200xf32>, vector<200x2xf32>, vector<2x2xf32> -> vector<2x2xf32>
    %cst_181 = arith.constant 2.000000e+02 : f32
    %660 = vector.broadcast %cst_181 : f32 to vector<2x2xf32>
    %661 = arith.divf %659, %660 : vector<2x2xf32>
    %662 = vector.extract_strided_slice %661 {offsets = [0, 0], sizes = [1, 2], strides = [1, 1]} : vector<2x2xf32> to vector<1x2xf32>
    %663 = vector.extract_strided_slice %661 {offsets = [1, 0], sizes = [1, 2], strides = [1, 1]} : vector<2x2xf32> to vector<1x2xf32>
    %664 = arith.mulf %662, %662 : vector<1x2xf32>
    %665 = arith.subf %663, %664 : vector<1x2xf32>
    %cst_182 = arith.constant 9.99999974E-6 : f32
    %666 = vector.broadcast %cst_182 : f32 to vector<1x2xf32>
    %667 = arith.addf %665, %666 : vector<1x2xf32>
    %668 = math.rsqrt %667 : vector<1x2xf32>
    %669 = arith.mulf %651, %668 : vector<1x2xf32>
    %670 = arith.mulf %662, %669 : vector<1x2xf32>
    %671 = arith.subf %652, %670 : vector<1x2xf32>
    %672 = tpu.concatenate %669, %671 in 0 : vector<1x2xf32>, vector<1x2xf32> -> vector<2x2xf32>
    %cst_183 = arith.constant dense<0.000000e+00> : vector<2x200xf32>
    %673 = tpu.matmul %672, %622, %cst_183 {dimension_numbers = #tpu.dot_dimension_numbers<[1], [0], [0], [1], [0, 0, 1, 1], [], []>} : vector<2x2xf32>, vector<2x200xf32>, vector<2x200xf32> -> vector<2x200xf32>
    %674 = vector.extract_strided_slice %673 {offsets = [0, 0], sizes = [1, 200], strides = [1, 1]} : vector<2x200xf32> to vector<1x200xf32>
    %675 = vector.broadcast %674 : vector<1x200xf32> to vector<2x200xf32>
    %676 = arith.mulf %650, %675 : vector<2x200xf32>
    %677 = vector.extract_strided_slice %673 {offsets = [1, 0], sizes = [1, 200], strides = [1, 1]} : vector<2x200xf32> to vector<1x200xf32>
    %678 = vector.broadcast %677 : vector<1x200xf32> to vector<2x200xf32>
    %679 = arith.addf %676, %678 : vector<2x200xf32>
    %cst_184 = arith.constant 0.000000e+00 : f32
    %680 = vector.broadcast %cst_184 : f32 to vector<2x200xf32>
    %681 = arith.cmpf ogt, %679, %680 : vector<2x200xf32>
    %cst_185 = arith.constant 0.00999999977 : f32
    %682 = vector.broadcast %cst_185 : f32 to vector<2x200xf32>
    %683 = arith.mulf %682, %679 : vector<2x200xf32>
    %684 = arith.select %681, %679, %683 : vector<2x200xi1>, vector<2x200xf32>
    %c0_186 = arith.constant 0 : index
    %c0_187 = arith.constant 0 : index
    %685 = vector.load %arg15[%c0_186, %c0_187] : memref<200x128xf32, #tpu.memory_space<vmem>>, vector<200x128xf32>
    %cst_188 = arith.constant dense<0.000000e+00> : vector<2x128xf32>
    %686 = tpu.matmul %684, %685, %cst_188 {dimension_numbers = #tpu.dot_dimension_numbers<[1], [0], [0], [1], [0, 0, 1, 1], [], []>} : vector<2x200xf32>, vector<200x128xf32>, vector<2x128xf32> -> vector<2x128xf32>
    %687 = vector.extract_strided_slice %0 {offsets = [24, 0], sizes = [1, 2], strides = [1, 1]} : vector<34x6xf32> to vector<1x2xf32>
    %688 = vector.extract_strided_slice %0 {offsets = [25, 0], sizes = [1, 2], strides = [1, 1]} : vector<34x6xf32> to vector<1x2xf32>
    %cst_189 = arith.constant dense<0.000000e+00> : vector<128xf32>
    %689 = vector.multi_reduction <add>, %686, %cst_189 [0] : vector<2x128xf32> to vector<128xf32>
    %690 = vector.shape_cast %689 : vector<128xf32> to vector<1x128xf32>
    %691 = arith.mulf %686, %686 : vector<2x128xf32>
    %cst_190 = arith.constant dense<0.000000e+00> : vector<128xf32>
    %692 = vector.multi_reduction <add>, %691, %cst_190 [0] : vector<2x128xf32> to vector<128xf32>
    %693 = vector.shape_cast %692 : vector<128xf32> to vector<1x128xf32>
    %694 = tpu.concatenate %690, %693 in 0 : vector<1x128xf32>, vector<1x128xf32> -> vector<2x128xf32>
    %cst_191 = arith.constant dense<0.000000e+00> : vector<2x2xf32>
    %695 = tpu.matmul %694, %635, %cst_191 {dimension_numbers = #tpu.dot_dimension_numbers<[1], [0], [0], [1], [0, 0, 1, 1], [], []>} : vector<2x128xf32>, vector<128x2xf32>, vector<2x2xf32> -> vector<2x2xf32>
    %cst_192 = arith.constant 1.280000e+02 : f32
    %696 = vector.broadcast %cst_192 : f32 to vector<2x2xf32>
    %697 = arith.divf %695, %696 : vector<2x2xf32>
    %698 = vector.extract_strided_slice %697 {offsets = [0, 0], sizes = [1, 2], strides = [1, 1]} : vector<2x2xf32> to vector<1x2xf32>
    %699 = vector.extract_strided_slice %697 {offsets = [1, 0], sizes = [1, 2], strides = [1, 1]} : vector<2x2xf32> to vector<1x2xf32>
    %700 = arith.mulf %698, %698 : vector<1x2xf32>
    %701 = arith.subf %699, %700 : vector<1x2xf32>
    %cst_193 = arith.constant 9.99999974E-6 : f32
    %702 = vector.broadcast %cst_193 : f32 to vector<1x2xf32>
    %703 = arith.addf %701, %702 : vector<1x2xf32>
    %704 = math.rsqrt %703 : vector<1x2xf32>
    %705 = arith.mulf %687, %704 : vector<1x2xf32>
    %706 = arith.mulf %698, %705 : vector<1x2xf32>
    %707 = arith.subf %688, %706 : vector<1x2xf32>
    %708 = tpu.concatenate %705, %707 in 0 : vector<1x2xf32>, vector<1x2xf32> -> vector<2x2xf32>
    %cst_194 = arith.constant dense<0.000000e+00> : vector<2x128xf32>
    %709 = tpu.matmul %708, %648, %cst_194 {dimension_numbers = #tpu.dot_dimension_numbers<[1], [0], [0], [1], [0, 0, 1, 1], [], []>} : vector<2x2xf32>, vector<2x128xf32>, vector<2x128xf32> -> vector<2x128xf32>
    %710 = vector.extract_strided_slice %709 {offsets = [0, 0], sizes = [1, 128], strides = [1, 1]} : vector<2x128xf32> to vector<1x128xf32>
    %711 = vector.broadcast %710 : vector<1x128xf32> to vector<2x128xf32>
    %712 = arith.mulf %686, %711 : vector<2x128xf32>
    %713 = vector.extract_strided_slice %709 {offsets = [1, 0], sizes = [1, 128], strides = [1, 1]} : vector<2x128xf32> to vector<1x128xf32>
    %714 = vector.broadcast %713 : vector<1x128xf32> to vector<2x128xf32>
    %715 = arith.addf %712, %714 : vector<2x128xf32>
    %cst_195 = arith.constant 0.000000e+00 : f32
    %716 = vector.broadcast %cst_195 : f32 to vector<2x128xf32>
    %717 = arith.cmpf ogt, %715, %716 : vector<2x128xf32>
    %cst_196 = arith.constant 0.00999999977 : f32
    %718 = vector.broadcast %cst_196 : f32 to vector<2x128xf32>
    %719 = arith.mulf %718, %715 : vector<2x128xf32>
    %720 = arith.select %717, %715, %719 : vector<2x128xi1>, vector<2x128xf32>
    %c0_197 = arith.constant 0 : index
    %c0_198 = arith.constant 0 : index
    %721 = vector.load %arg16[%c0_197, %c0_198] : memref<128x128xf32, #tpu.memory_space<vmem>>, vector<128x128xf32>
    %cst_199 = arith.constant dense<0.000000e+00> : vector<2x128xf32>
    %722 = tpu.matmul %720, %721, %cst_199 {dimension_numbers = #tpu.dot_dimension_numbers<[1], [0], [0], [1], [0, 0, 1, 1], [], []>} : vector<2x128xf32>, vector<128x128xf32>, vector<2x128xf32> -> vector<2x128xf32>
    %723 = vector.extract_strided_slice %0 {offsets = [26, 0], sizes = [1, 2], strides = [1, 1]} : vector<34x6xf32> to vector<1x2xf32>
    %724 = vector.extract_strided_slice %0 {offsets = [27, 0], sizes = [1, 2], strides = [1, 1]} : vector<34x6xf32> to vector<1x2xf32>
    %cst_200 = arith.constant dense<0.000000e+00> : vector<128xf32>
    %725 = vector.multi_reduction <add>, %722, %cst_200 [0] : vector<2x128xf32> to vector<128xf32>
    %726 = vector.shape_cast %725 : vector<128xf32> to vector<1x128xf32>
    %727 = arith.mulf %722, %722 : vector<2x128xf32>
    %cst_201 = arith.constant dense<0.000000e+00> : vector<128xf32>
    %728 = vector.multi_reduction <add>, %727, %cst_201 [0] : vector<2x128xf32> to vector<128xf32>
    %729 = vector.shape_cast %728 : vector<128xf32> to vector<1x128xf32>
    %730 = tpu.concatenate %726, %729 in 0 : vector<1x128xf32>, vector<1x128xf32> -> vector<2x128xf32>
    %cst_202 = arith.constant dense<0.000000e+00> : vector<2x2xf32>
    %731 = tpu.matmul %730, %635, %cst_202 {dimension_numbers = #tpu.dot_dimension_numbers<[1], [0], [0], [1], [0, 0, 1, 1], [], []>} : vector<2x128xf32>, vector<128x2xf32>, vector<2x2xf32> -> vector<2x2xf32>
    %cst_203 = arith.constant 1.280000e+02 : f32
    %732 = vector.broadcast %cst_203 : f32 to vector<2x2xf32>
    %733 = arith.divf %731, %732 : vector<2x2xf32>
    %734 = vector.extract_strided_slice %733 {offsets = [0, 0], sizes = [1, 2], strides = [1, 1]} : vector<2x2xf32> to vector<1x2xf32>
    %735 = vector.extract_strided_slice %733 {offsets = [1, 0], sizes = [1, 2], strides = [1, 1]} : vector<2x2xf32> to vector<1x2xf32>
    %736 = arith.mulf %734, %734 : vector<1x2xf32>
    %737 = arith.subf %735, %736 : vector<1x2xf32>
    %cst_204 = arith.constant 9.99999974E-6 : f32
    %738 = vector.broadcast %cst_204 : f32 to vector<1x2xf32>
    %739 = arith.addf %737, %738 : vector<1x2xf32>
    %740 = math.rsqrt %739 : vector<1x2xf32>
    %741 = arith.mulf %723, %740 : vector<1x2xf32>
    %742 = arith.mulf %734, %741 : vector<1x2xf32>
    %743 = arith.subf %724, %742 : vector<1x2xf32>
    %744 = tpu.concatenate %741, %743 in 0 : vector<1x2xf32>, vector<1x2xf32> -> vector<2x2xf32>
    %cst_205 = arith.constant dense<0.000000e+00> : vector<2x128xf32>
    %745 = tpu.matmul %744, %648, %cst_205 {dimension_numbers = #tpu.dot_dimension_numbers<[1], [0], [0], [1], [0, 0, 1, 1], [], []>} : vector<2x2xf32>, vector<2x128xf32>, vector<2x128xf32> -> vector<2x128xf32>
    %746 = vector.extract_strided_slice %745 {offsets = [0, 0], sizes = [1, 128], strides = [1, 1]} : vector<2x128xf32> to vector<1x128xf32>
    %747 = vector.broadcast %746 : vector<1x128xf32> to vector<2x128xf32>
    %748 = arith.mulf %722, %747 : vector<2x128xf32>
    %749 = vector.extract_strided_slice %745 {offsets = [1, 0], sizes = [1, 128], strides = [1, 1]} : vector<2x128xf32> to vector<1x128xf32>
    %750 = vector.broadcast %749 : vector<1x128xf32> to vector<2x128xf32>
    %751 = arith.addf %748, %750 : vector<2x128xf32>
    %cst_206 = arith.constant 0.000000e+00 : f32
    %752 = vector.broadcast %cst_206 : f32 to vector<2x128xf32>
    %753 = arith.cmpf ogt, %751, %752 : vector<2x128xf32>
    %cst_207 = arith.constant 0.00999999977 : f32
    %754 = vector.broadcast %cst_207 : f32 to vector<2x128xf32>
    %755 = arith.mulf %754, %751 : vector<2x128xf32>
    %756 = arith.select %753, %751, %755 : vector<2x128xi1>, vector<2x128xf32>
    %c0_208 = arith.constant 0 : index
    %c0_209 = arith.constant 0 : index
    %757 = vector.load %arg17[%c0_208, %c0_209] : memref<64x216xf32, #tpu.memory_space<vmem>>, vector<64x216xf32>
    %cst_210 = arith.constant dense<0.000000e+00> : vector<2x216xf32>
    %758 = tpu.matmul %595, %757, %cst_210 {dimension_numbers = #tpu.dot_dimension_numbers<[1], [0], [0], [1], [0, 0, 1, 1], [], []>} : vector<2x64xf32>, vector<64x216xf32>, vector<2x216xf32> -> vector<2x216xf32>
    %c0_211 = arith.constant 0 : index
    %c0_212 = arith.constant 0 : index
    %759 = vector.load %arg18[%c0_211, %c0_212] : memref<128x216xf32, #tpu.memory_space<vmem>>, vector<128x216xf32>
    %cst_213 = arith.constant dense<0.000000e+00> : vector<2x216xf32>
    %760 = tpu.matmul %756, %759, %cst_213 {dimension_numbers = #tpu.dot_dimension_numbers<[1], [0], [0], [1], [0, 0, 1, 1], [], []>} : vector<2x128xf32>, vector<128x216xf32>, vector<2x216xf32> -> vector<2x216xf32>
    %761 = arith.addf %758, %760 : vector<2x216xf32>
    %762 = tpu.iota {dimensions = array<i32: 0>} : vector<216x6xi32>
    %763 = tpu.iota {dimensions = array<i32: 1>} : vector<216x6xi32>
    %c36_i32_214 = arith.constant 36 : i32
    %764 = vector.broadcast %c36_i32_214 : i32 to vector<216x6xi32>
    %765 = arith.muli %763, %764 : vector<216x6xi32>
    %766 = arith.cmpi sge, %762, %765 : vector<216x6xi32>
    %c1_i32_215 = arith.constant 1 : i32
    %767 = vector.broadcast %c1_i32_215 : i32 to vector<216x6xi32>
    %768 = arith.addi %763, %767 : vector<216x6xi32>
    %c36_i32_216 = arith.constant 36 : i32
    %769 = vector.broadcast %c36_i32_216 : i32 to vector<216x6xi32>
    %770 = arith.muli %768, %769 : vector<216x6xi32>
    %771 = arith.cmpi slt, %762, %770 : vector<216x6xi32>
    %772 = arith.andi %766, %771 : vector<216x6xi1>
    %773 = arith.extui %772 : vector<216x6xi1> to vector<216x6xi32>
    %774 = arith.sitofp %773 : vector<216x6xi32> to vector<216x6xf32>
    %775 = tpu.iota {dimensions = array<i32: 1>} : vector<6x216xi32>
    %776 = tpu.iota {dimensions = array<i32: 0>} : vector<6x216xi32>
    %c36_i32_217 = arith.constant 36 : i32
    %777 = vector.broadcast %c36_i32_217 : i32 to vector<6x216xi32>
    %778 = arith.muli %776, %777 : vector<6x216xi32>
    %779 = arith.cmpi sge, %775, %778 : vector<6x216xi32>
    %c1_i32_218 = arith.constant 1 : i32
    %780 = vector.broadcast %c1_i32_218 : i32 to vector<6x216xi32>
    %781 = arith.addi %776, %780 : vector<6x216xi32>
    %c36_i32_219 = arith.constant 36 : i32
    %782 = vector.broadcast %c36_i32_219 : i32 to vector<6x216xi32>
    %783 = arith.muli %781, %782 : vector<6x216xi32>
    %784 = arith.cmpi slt, %775, %783 : vector<6x216xi32>
    %785 = arith.andi %779, %784 : vector<6x216xi1>
    %786 = arith.extui %785 : vector<6x216xi1> to vector<6x216xi32>
    %787 = arith.sitofp %786 : vector<6x216xi32> to vector<6x216xf32>
    %788 = tpu.iota {dimensions = array<i32: 0>} : vector<96x6xi32>
    %789 = tpu.iota {dimensions = array<i32: 1>} : vector<96x6xi32>
    %c16_i32_220 = arith.constant 16 : i32
    %790 = vector.broadcast %c16_i32_220 : i32 to vector<96x6xi32>
    %791 = arith.muli %789, %790 : vector<96x6xi32>
    %792 = arith.cmpi sge, %788, %791 : vector<96x6xi32>
    %c1_i32_221 = arith.constant 1 : i32
    %793 = vector.broadcast %c1_i32_221 : i32 to vector<96x6xi32>
    %794 = arith.addi %789, %793 : vector<96x6xi32>
    %c16_i32_222 = arith.constant 16 : i32
    %795 = vector.broadcast %c16_i32_222 : i32 to vector<96x6xi32>
    %796 = arith.muli %794, %795 : vector<96x6xi32>
    %797 = arith.cmpi slt, %788, %796 : vector<96x6xi32>
    %798 = arith.andi %792, %797 : vector<96x6xi1>
    %799 = arith.extui %798 : vector<96x6xi1> to vector<96x6xi32>
    %800 = arith.sitofp %799 : vector<96x6xi32> to vector<96x6xf32>
    %801 = tpu.iota {dimensions = array<i32: 1>} : vector<6x96xi32>
    %802 = tpu.iota {dimensions = array<i32: 0>} : vector<6x96xi32>
    %c16_i32_223 = arith.constant 16 : i32
    %803 = vector.broadcast %c16_i32_223 : i32 to vector<6x96xi32>
    %804 = arith.muli %802, %803 : vector<6x96xi32>
    %805 = arith.cmpi sge, %801, %804 : vector<6x96xi32>
    %c1_i32_224 = arith.constant 1 : i32
    %806 = vector.broadcast %c1_i32_224 : i32 to vector<6x96xi32>
    %807 = arith.addi %802, %806 : vector<6x96xi32>
    %c16_i32_225 = arith.constant 16 : i32
    %808 = vector.broadcast %c16_i32_225 : i32 to vector<6x96xi32>
    %809 = arith.muli %807, %808 : vector<6x96xi32>
    %810 = arith.cmpi slt, %801, %809 : vector<6x96xi32>
    %811 = arith.andi %805, %810 : vector<6x96xi1>
    %812 = arith.extui %811 : vector<6x96xi1> to vector<6x96xi32>
    %813 = arith.sitofp %812 : vector<6x96xi32> to vector<6x96xf32>
    %814 = vector.extract_strided_slice %0 {offsets = [28, 0], sizes = [1, 6], strides = [1, 1]} : vector<34x6xf32> to vector<1x6xf32>
    %815 = vector.extract_strided_slice %0 {offsets = [29, 0], sizes = [1, 6], strides = [1, 1]} : vector<34x6xf32> to vector<1x6xf32>
    %cst_226 = arith.constant dense<0.000000e+00> : vector<216xf32>
    %816 = vector.multi_reduction <add>, %761, %cst_226 [0] : vector<2x216xf32> to vector<216xf32>
    %817 = vector.shape_cast %816 : vector<216xf32> to vector<1x216xf32>
    %818 = arith.mulf %761, %761 : vector<2x216xf32>
    %cst_227 = arith.constant dense<0.000000e+00> : vector<216xf32>
    %819 = vector.multi_reduction <add>, %818, %cst_227 [0] : vector<2x216xf32> to vector<216xf32>
    %820 = vector.shape_cast %819 : vector<216xf32> to vector<1x216xf32>
    %821 = tpu.concatenate %817, %820 in 0 : vector<1x216xf32>, vector<1x216xf32> -> vector<2x216xf32>
    %cst_228 = arith.constant dense<0.000000e+00> : vector<2x6xf32>
    %822 = tpu.matmul %821, %774, %cst_228 {dimension_numbers = #tpu.dot_dimension_numbers<[1], [0], [0], [1], [0, 0, 1, 1], [], []>} : vector<2x216xf32>, vector<216x6xf32>, vector<2x6xf32> -> vector<2x6xf32>
    %cst_229 = arith.constant 7.200000e+01 : f32
    %823 = vector.broadcast %cst_229 : f32 to vector<2x6xf32>
    %824 = arith.divf %822, %823 : vector<2x6xf32>
    %825 = vector.extract_strided_slice %824 {offsets = [0, 0], sizes = [1, 6], strides = [1, 1]} : vector<2x6xf32> to vector<1x6xf32>
    %826 = vector.extract_strided_slice %824 {offsets = [1, 0], sizes = [1, 6], strides = [1, 1]} : vector<2x6xf32> to vector<1x6xf32>
    %827 = arith.mulf %825, %825 : vector<1x6xf32>
    %828 = arith.subf %826, %827 : vector<1x6xf32>
    %cst_230 = arith.constant 9.99999974E-6 : f32
    %829 = vector.broadcast %cst_230 : f32 to vector<1x6xf32>
    %830 = arith.addf %828, %829 : vector<1x6xf32>
    %831 = math.rsqrt %830 : vector<1x6xf32>
    %832 = arith.mulf %814, %831 : vector<1x6xf32>
    %833 = arith.mulf %825, %832 : vector<1x6xf32>
    %834 = arith.subf %815, %833 : vector<1x6xf32>
    %835 = tpu.concatenate %832, %834 in 0 : vector<1x6xf32>, vector<1x6xf32> -> vector<2x6xf32>
    %cst_231 = arith.constant dense<0.000000e+00> : vector<2x216xf32>
    %836 = tpu.matmul %835, %787, %cst_231 {dimension_numbers = #tpu.dot_dimension_numbers<[1], [0], [0], [1], [0, 0, 1, 1], [], []>} : vector<2x6xf32>, vector<6x216xf32>, vector<2x216xf32> -> vector<2x216xf32>
    %837 = vector.extract_strided_slice %836 {offsets = [0, 0], sizes = [1, 216], strides = [1, 1]} : vector<2x216xf32> to vector<1x216xf32>
    %838 = vector.broadcast %837 : vector<1x216xf32> to vector<2x216xf32>
    %839 = arith.mulf %761, %838 : vector<2x216xf32>
    %840 = vector.extract_strided_slice %836 {offsets = [1, 0], sizes = [1, 216], strides = [1, 1]} : vector<2x216xf32> to vector<1x216xf32>
    %841 = vector.broadcast %840 : vector<1x216xf32> to vector<2x216xf32>
    %842 = arith.addf %839, %841 : vector<2x216xf32>
    %cst_232 = arith.constant 0.000000e+00 : f32
    %843 = vector.broadcast %cst_232 : f32 to vector<2x216xf32>
    %844 = arith.cmpf ogt, %842, %843 : vector<2x216xf32>
    %cst_233 = arith.constant 0.00999999977 : f32
    %845 = vector.broadcast %cst_233 : f32 to vector<2x216xf32>
    %846 = arith.mulf %845, %842 : vector<2x216xf32>
    %847 = arith.select %844, %842, %846 : vector<2x216xi1>, vector<2x216xf32>
    %c0_234 = arith.constant 0 : index
    %c0_235 = arith.constant 0 : index
    %848 = vector.load %arg19[%c0_234, %c0_235] : memref<216x96xf32, #tpu.memory_space<vmem>>, vector<216x96xf32>
    %cst_236 = arith.constant dense<0.000000e+00> : vector<2x96xf32>
    %849 = tpu.matmul %847, %848, %cst_236 {dimension_numbers = #tpu.dot_dimension_numbers<[1], [0], [0], [1], [0, 0, 1, 1], [], []>} : vector<2x216xf32>, vector<216x96xf32>, vector<2x96xf32> -> vector<2x96xf32>
    %850 = vector.extract_strided_slice %0 {offsets = [30, 0], sizes = [1, 6], strides = [1, 1]} : vector<34x6xf32> to vector<1x6xf32>
    %851 = vector.extract_strided_slice %0 {offsets = [31, 0], sizes = [1, 6], strides = [1, 1]} : vector<34x6xf32> to vector<1x6xf32>
    %cst_237 = arith.constant dense<0.000000e+00> : vector<96xf32>
    %852 = vector.multi_reduction <add>, %849, %cst_237 [0] : vector<2x96xf32> to vector<96xf32>
    %853 = vector.shape_cast %852 : vector<96xf32> to vector<1x96xf32>
    %854 = arith.mulf %849, %849 : vector<2x96xf32>
    %cst_238 = arith.constant dense<0.000000e+00> : vector<96xf32>
    %855 = vector.multi_reduction <add>, %854, %cst_238 [0] : vector<2x96xf32> to vector<96xf32>
    %856 = vector.shape_cast %855 : vector<96xf32> to vector<1x96xf32>
    %857 = tpu.concatenate %853, %856 in 0 : vector<1x96xf32>, vector<1x96xf32> -> vector<2x96xf32>
    %cst_239 = arith.constant dense<0.000000e+00> : vector<2x6xf32>
    %858 = tpu.matmul %857, %800, %cst_239 {dimension_numbers = #tpu.dot_dimension_numbers<[1], [0], [0], [1], [0, 0, 1, 1], [], []>} : vector<2x96xf32>, vector<96x6xf32>, vector<2x6xf32> -> vector<2x6xf32>
    %cst_240 = arith.constant 3.200000e+01 : f32
    %859 = vector.broadcast %cst_240 : f32 to vector<2x6xf32>
    %860 = arith.divf %858, %859 : vector<2x6xf32>
    %861 = vector.extract_strided_slice %860 {offsets = [0, 0], sizes = [1, 6], strides = [1, 1]} : vector<2x6xf32> to vector<1x6xf32>
    %862 = vector.extract_strided_slice %860 {offsets = [1, 0], sizes = [1, 6], strides = [1, 1]} : vector<2x6xf32> to vector<1x6xf32>
    %863 = arith.mulf %861, %861 : vector<1x6xf32>
    %864 = arith.subf %862, %863 : vector<1x6xf32>
    %cst_241 = arith.constant 9.99999974E-6 : f32
    %865 = vector.broadcast %cst_241 : f32 to vector<1x6xf32>
    %866 = arith.addf %864, %865 : vector<1x6xf32>
    %867 = math.rsqrt %866 : vector<1x6xf32>
    %868 = arith.mulf %850, %867 : vector<1x6xf32>
    %869 = arith.mulf %861, %868 : vector<1x6xf32>
    %870 = arith.subf %851, %869 : vector<1x6xf32>
    %871 = tpu.concatenate %868, %870 in 0 : vector<1x6xf32>, vector<1x6xf32> -> vector<2x6xf32>
    %cst_242 = arith.constant dense<0.000000e+00> : vector<2x96xf32>
    %872 = tpu.matmul %871, %813, %cst_242 {dimension_numbers = #tpu.dot_dimension_numbers<[1], [0], [0], [1], [0, 0, 1, 1], [], []>} : vector<2x6xf32>, vector<6x96xf32>, vector<2x96xf32> -> vector<2x96xf32>
    %873 = vector.extract_strided_slice %872 {offsets = [0, 0], sizes = [1, 96], strides = [1, 1]} : vector<2x96xf32> to vector<1x96xf32>
    %874 = vector.broadcast %873 : vector<1x96xf32> to vector<2x96xf32>
    %875 = arith.mulf %849, %874 : vector<2x96xf32>
    %876 = vector.extract_strided_slice %872 {offsets = [1, 0], sizes = [1, 96], strides = [1, 1]} : vector<2x96xf32> to vector<1x96xf32>
    %877 = vector.broadcast %876 : vector<1x96xf32> to vector<2x96xf32>
    %878 = arith.addf %875, %877 : vector<2x96xf32>
    %cst_243 = arith.constant 0.000000e+00 : f32
    %879 = vector.broadcast %cst_243 : f32 to vector<2x96xf32>
    %880 = arith.cmpf ogt, %878, %879 : vector<2x96xf32>
    %cst_244 = arith.constant 0.00999999977 : f32
    %881 = vector.broadcast %cst_244 : f32 to vector<2x96xf32>
    %882 = arith.mulf %881, %878 : vector<2x96xf32>
    %883 = arith.select %880, %878, %882 : vector<2x96xi1>, vector<2x96xf32>
    %c0_245 = arith.constant 0 : index
    %c0_246 = arith.constant 0 : index
    %884 = vector.load %arg20[%c0_245, %c0_246] : memref<96x96xf32, #tpu.memory_space<vmem>>, vector<96x96xf32>
    %cst_247 = arith.constant dense<0.000000e+00> : vector<2x96xf32>
    %885 = tpu.matmul %883, %884, %cst_247 {dimension_numbers = #tpu.dot_dimension_numbers<[1], [0], [0], [1], [0, 0, 1, 1], [], []>} : vector<2x96xf32>, vector<96x96xf32>, vector<2x96xf32> -> vector<2x96xf32>
    %886 = vector.extract_strided_slice %0 {offsets = [32, 0], sizes = [1, 6], strides = [1, 1]} : vector<34x6xf32> to vector<1x6xf32>
    %887 = vector.extract_strided_slice %0 {offsets = [33, 0], sizes = [1, 6], strides = [1, 1]} : vector<34x6xf32> to vector<1x6xf32>
    %cst_248 = arith.constant dense<0.000000e+00> : vector<96xf32>
    %888 = vector.multi_reduction <add>, %885, %cst_248 [0] : vector<2x96xf32> to vector<96xf32>
    %889 = vector.shape_cast %888 : vector<96xf32> to vector<1x96xf32>
    %890 = arith.mulf %885, %885 : vector<2x96xf32>
    %cst_249 = arith.constant dense<0.000000e+00> : vector<96xf32>
    %891 = vector.multi_reduction <add>, %890, %cst_249 [0] : vector<2x96xf32> to vector<96xf32>
    %892 = vector.shape_cast %891 : vector<96xf32> to vector<1x96xf32>
    %893 = tpu.concatenate %889, %892 in 0 : vector<1x96xf32>, vector<1x96xf32> -> vector<2x96xf32>
    %cst_250 = arith.constant dense<0.000000e+00> : vector<2x6xf32>
    %894 = tpu.matmul %893, %800, %cst_250 {dimension_numbers = #tpu.dot_dimension_numbers<[1], [0], [0], [1], [0, 0, 1, 1], [], []>} : vector<2x96xf32>, vector<96x6xf32>, vector<2x6xf32> -> vector<2x6xf32>
    %cst_251 = arith.constant 3.200000e+01 : f32
    %895 = vector.broadcast %cst_251 : f32 to vector<2x6xf32>
    %896 = arith.divf %894, %895 : vector<2x6xf32>
    %897 = vector.extract_strided_slice %896 {offsets = [0, 0], sizes = [1, 6], strides = [1, 1]} : vector<2x6xf32> to vector<1x6xf32>
    %898 = vector.extract_strided_slice %896 {offsets = [1, 0], sizes = [1, 6], strides = [1, 1]} : vector<2x6xf32> to vector<1x6xf32>
    %899 = arith.mulf %897, %897 : vector<1x6xf32>
    %900 = arith.subf %898, %899 : vector<1x6xf32>
    %cst_252 = arith.constant 9.99999974E-6 : f32
    %901 = vector.broadcast %cst_252 : f32 to vector<1x6xf32>
    %902 = arith.addf %900, %901 : vector<1x6xf32>
    %903 = math.rsqrt %902 : vector<1x6xf32>
    %904 = arith.mulf %886, %903 : vector<1x6xf32>
    %905 = arith.mulf %897, %904 : vector<1x6xf32>
    %906 = arith.subf %887, %905 : vector<1x6xf32>
    %907 = tpu.concatenate %904, %906 in 0 : vector<1x6xf32>, vector<1x6xf32> -> vector<2x6xf32>
    %cst_253 = arith.constant dense<0.000000e+00> : vector<2x96xf32>
    %908 = tpu.matmul %907, %813, %cst_253 {dimension_numbers = #tpu.dot_dimension_numbers<[1], [0], [0], [1], [0, 0, 1, 1], [], []>} : vector<2x6xf32>, vector<6x96xf32>, vector<2x96xf32> -> vector<2x96xf32>
    %909 = vector.extract_strided_slice %908 {offsets = [0, 0], sizes = [1, 96], strides = [1, 1]} : vector<2x96xf32> to vector<1x96xf32>
    %910 = vector.broadcast %909 : vector<1x96xf32> to vector<2x96xf32>
    %911 = arith.mulf %885, %910 : vector<2x96xf32>
    %912 = vector.extract_strided_slice %908 {offsets = [1, 0], sizes = [1, 96], strides = [1, 1]} : vector<2x96xf32> to vector<1x96xf32>
    %913 = vector.broadcast %912 : vector<1x96xf32> to vector<2x96xf32>
    %914 = arith.addf %911, %913 : vector<2x96xf32>
    %cst_254 = arith.constant 0.000000e+00 : f32
    %915 = vector.broadcast %cst_254 : f32 to vector<2x96xf32>
    %916 = arith.cmpf ogt, %914, %915 : vector<2x96xf32>
    %cst_255 = arith.constant 0.00999999977 : f32
    %917 = vector.broadcast %cst_255 : f32 to vector<2x96xf32>
    %918 = arith.mulf %917, %914 : vector<2x96xf32>
    %919 = arith.select %916, %914, %918 : vector<2x96xi1>, vector<2x96xf32>
    %c0_256 = arith.constant 0 : index
    %c0_257 = arith.constant 0 : index
    %920 = vector.load %arg21[%c0_256, %c0_257] : memref<96x128xf32, #tpu.memory_space<vmem>>, vector<96x128xf32>
    %cst_258 = arith.constant dense<0.000000e+00> : vector<2x128xf32>
    %921 = tpu.matmul %919, %920, %cst_258 {dimension_numbers = #tpu.dot_dimension_numbers<[1], [0], [0], [1], [0, 0, 1, 1], [], []>} : vector<2x96xf32>, vector<96x128xf32>, vector<2x128xf32> -> vector<2x128xf32>
    %c0_259 = arith.constant 0 : index
    %c0_260 = arith.constant 0 : index
    %922 = vector.load %arg22[%c0_259, %c0_260] : memref<2x128xf32, #tpu.memory_space<vmem>>, vector<2x128xf32>
    tpu.vector_store %arg22[%c0_259, %c0_260], %921 {strides = array<i32>} : memref<2x128xf32, #tpu.memory_space<vmem>>, vector<2x128xf32>,
    return
  }
}

</mosaic_0001>

<llo_original>
// kernel: forward.1
$region0: #{forward.1}
  #allocation0 [shape = 'u32[]', space=smem, size = 0x4, offset = 0x4, fixed_abs, tag = 'smem constant byte address 0x4 - core index']
  #allocation1 [shape = 'u32[144,128]{1,0:T(1,128)}', space=vmem, size = 0x12000, scoped, tag = 'internal scratch']
  %s0 = inlined_call_operand.vmem [shape: f32[2,192], index: 0, kind: input, shape index: {}]
  %s1 = inlined_call_operand.vmem [shape: f32[2,432], index: 1, kind: input, shape index: {}]
  %s2 = inlined_call_operand.vmem [shape: f32[2,432], index: 2, kind: input, shape index: {}]
  %s3 = inlined_call_operand.vmem [shape: f32[34,6], index: 3, kind: input, shape index: {}]
  %s4 = inlined_call_operand.vmem [shape: f32[192,72], index: 4, kind: input, shape index: {}]
  %s5 = inlined_call_operand.vmem [shape: f32[72,32], index: 5, kind: input, shape index: {}]
  %s6 = inlined_call_operand.vmem [shape: f32[32,32], index: 6, kind: input, shape index: {}]
  %s7 = inlined_call_operand.vmem [shape: f32[432,200], index: 7, kind: input, shape index: {}]
  %s8 = inlined_call_operand.vmem [shape: f32[200,128], index: 8, kind: input, shape index: {}]
  %s9 = inlined_call_operand.vmem [shape: f32[128,128], index: 9, kind: input, shape index: {}]
  %s10 = inlined_call_operand.vmem [shape: f32[32,144], index: 10, kind: input, shape index: {}]
  %s11 = inlined_call_operand.vmem [shape: f32[128,144], index: 11, kind: input, shape index: {}]
  %s12 = inlined_call_operand.vmem [shape: f32[144,64], index: 12, kind: input, shape index: {}]
  %s13 = inlined_call_operand.vmem [shape: f32[64,64], index: 13, kind: input, shape index: {}]
  %s14 = inlined_call_operand.vmem [shape: f32[432,200], index: 14, kind: input, shape index: {}]
  %s15 = inlined_call_operand.vmem [shape: f32[200,128], index: 15, kind: input, shape index: {}]
  %s16 = inlined_call_operand.vmem [shape: f32[128,128], index: 16, kind: input, shape index: {}]
  %s17 = inlined_call_operand.vmem [shape: f32[64,216], index: 17, kind: input, shape index: {}]
  %s18 = inlined_call_operand.vmem [shape: f32[128,216], index: 18, kind: input, shape index: {}]
  %s19 = inlined_call_operand.vmem [shape: f32[216,96], index: 19, kind: input, shape index: {}]
  %s20 = inlined_call_operand.vmem [shape: f32[96,96], index: 20, kind: input, shape index: {}]
  %s21 = inlined_call_operand.vmem [shape: f32[96,128], index: 21, kind: input, shape index: {}]
  %s22 = inlined_call_operand.vmem [shape: f32[2,128], index: 22, kind: output, shape index: {}]
  %s23 = sld [smem:[#allocation0]]
  $region98: #{forward.1} parent=0
    _
  %s25 = ssub.s32 1, %s23
  %s26 = scalar_select 0, %s25, %s23
  // Predicated region
  $region2: #{forward.1} parent=0 // pred_check
    _
  $region3: #{forward.1} parent=0 // pred_check_branch
    %28 = sbr.rel (0) target = $region5
  $region4: #{forward.1} parent=0 // pred_region
    _
  $region5: #{forward.1} parent=0 // pred_fallthru
    _
  // Predicated region
  $region6: #{forward.1} parent=0 // pred_check
    _
  $region7: #{forward.1} parent=0 // pred_check_branch
    %30 = sbr.rel (0) target = $region9
  $region8: #{forward.1} parent=0 // pred_region
    _
  $region9: #{forward.1} parent=0 // pred_fallthru
    _
  // Predicated region
  $region10: #{forward.1} parent=0 // pred_check
    _
  $region11: #{forward.1} parent=0 // pred_check_branch
    %32 = sbr.rel (0) target = $region13
  $region12: #{forward.1} parent=0 // pred_region
    _
  $region13: #{forward.1} parent=0 // pred_fallthru
    _
  // Predicated region
  $region14: #{forward.1} parent=0 // pred_check
    _
  $region15: #{forward.1} parent=0 // pred_check_branch
    %34 = sbr.rel (0) target = $region17
  $region16: #{forward.1} parent=0 // pred_region
    _
  $region17: #{forward.1} parent=0 // pred_fallthru
    _
  // Predicated region
  $region18: #{forward.1} parent=0 // pred_check
    _
  $region19: #{forward.1} parent=0 // pred_check_branch
    %36 = sbr.rel (0) target = $region21
  $region20: #{forward.1} parent=0 // pred_region
    _
  $region21: #{forward.1} parent=0 // pred_fallthru
    _
  // Predicated region
  $region22: #{forward.1} parent=0 // pred_check
    _
  $region23: #{forward.1} parent=0 // pred_check_branch
    %38 = sbr.rel (0) target = $region25
  $region24: #{forward.1} parent=0 // pred_region
    _
  $region25: #{forward.1} parent=0 // pred_fallthru
    _
  // Predicated region
  $region26: #{forward.1} parent=0 // pred_check
    _
  $region27: #{forward.1} parent=0 // pred_check_branch
    %40 = sbr.rel (0) target = $region29
  $region28: #{forward.1} parent=0 // pred_region
    _
  $region29: #{forward.1} parent=0 // pred_fallthru
    _
  // Predicated region
  $region30: #{forward.1} parent=0 // pred_check
    _
  $region31: #{forward.1} parent=0 // pred_check_branch
    %42 = sbr.rel (0) target = $region33
  $region32: #{forward.1} parent=0 // pred_region
    _
  $region33: #{forward.1} parent=0 // pred_fallthru
    _
  // Predicated region
  $region34: #{forward.1} parent=0 // pred_check
    _
  $region35: #{forward.1} parent=0 // pred_check_branch
    %44 = sbr.rel (0) target = $region37
  $region36: #{forward.1} parent=0 // pred_region
    _
  $region37: #{forward.1} parent=0 // pred_fallthru
    _
  // Predicated region
  $region38: #{forward.1} parent=0 // pred_check
    _
  $region39: #{forward.1} parent=0 // pred_check_branch
    %46 = sbr.rel (0) target = $region41
  $region40: #{forward.1} parent=0 // pred_region
    _
  $region41: #{forward.1} parent=0 // pred_fallthru
    _
  // Predicated region
  $region42: #{forward.1} parent=0 // pred_check
    _
  $region43: #{forward.1} parent=0 // pred_check_branch
    %48 = sbr.rel (0) target = $region45
  $region44: #{forward.1} parent=0 // pred_region
    _
  $region45: #{forward.1} parent=0 // pred_fallthru
    _
  // Predicated region
  $region46: #{forward.1} parent=0 // pred_check
    _
  $region47: #{forward.1} parent=0 // pred_check_branch
    %50 = sbr.rel (0) target = $region49
  $region48: #{forward.1} parent=0 // pred_region
    _
  $region49: #{forward.1} parent=0 // pred_fallthru
    _
  // Predicated region
  $region50: #{forward.1} parent=0 // pred_check
    _
  $region51: #{forward.1} parent=0 // pred_check_branch
    %52 = sbr.rel (0) target = $region53
  $region52: #{forward.1} parent=0 // pred_region
    _
  $region53: #{forward.1} parent=0 // pred_fallthru
    _
  // Predicated region
  $region54: #{forward.1} parent=0 // pred_check
    _
  $region55: #{forward.1} parent=0 // pred_check_branch
    %54 = sbr.rel (0) target = $region57
  $region56: #{forward.1} parent=0 // pred_region
    _
  $region57: #{forward.1} parent=0 // pred_fallthru
    _
  // Predicated region
  $region58: #{forward.1} parent=0 // pred_check
    _
  $region59: #{forward.1} parent=0 // pred_check_branch
    %56 = sbr.rel (0) target = $region61
  $region60: #{forward.1} parent=0 // pred_region
    _
  $region61: #{forward.1} parent=0 // pred_fallthru
    _
  // Predicated region
  $region62: #{forward.1} parent=0 // pred_check
    _
  $region63: #{forward.1} parent=0 // pred_check_branch
    %58 = sbr.rel (0) target = $region65
  $region64: #{forward.1} parent=0 // pred_region
    _
  $region65: #{forward.1} parent=0 // pred_fallthru
    _
  // Predicated region
  $region66: #{forward.1} parent=0 // pred_check
    _
  $region67: #{forward.1} parent=0 // pred_check_branch
    %60 = sbr.rel (0) target = $region69
  $region68: #{forward.1} parent=0 // pred_region
    _
  $region69: #{forward.1} parent=0 // pred_fallthru
    _
  // Predicated region
  $region70: #{forward.1} parent=0 // pred_check
    _
  $region71: #{forward.1} parent=0 // pred_check_branch
    %62 = sbr.rel (0) target = $region73
  $region72: #{forward.1} parent=0 // pred_region
    _
  $region73: #{forward.1} parent=0 // pred_fallthru
    _
  // Predicated region
  $region74: #{forward.1} parent=0 // pred_check
    _
  $region75: #{forward.1} parent=0 // pred_check_branch
    %64 = sbr.rel (0) target = $region77
  $region76: #{forward.1} parent=0 // pred_region
    _
  $region77: #{forward.1} parent=0 // pred_fallthru
    _
  // Predicated region
  $region78: #{forward.1} parent=0 // pred_check
    _
  $region79: #{forward.1} parent=0 // pred_check_branch
    %66 = sbr.rel (0) target = $region81
  $region80: #{forward.1} parent=0 // pred_region
    _
  $region81: #{forward.1} parent=0 // pred_fallthru
    _
  // Predicated region
  $region82: #{forward.1} parent=0 // pred_check
    _
  $region83: #{forward.1} parent=0 // pred_check_branch
    %68 = sbr.rel (0) target = $region85
  $region84: #{forward.1} parent=0 // pred_region
    _
  $region85: #{forward.1} parent=0 // pred_fallthru
    _
  // Predicated region
  $region86: #{forward.1} parent=0 // pred_check
    _
  $region87: #{forward.1} parent=0 // pred_check_branch
    %70 = sbr.rel (0) target = $region89
  $region88: #{forward.1} parent=0 // pred_region
    _
  $region89: #{forward.1} parent=0 // pred_fallthru
    _
  %v71 = vld [vmem:[%s3] sm:$0xff]
  %v72 = vld [vmem:[%s3 + $0x8] sm:$0xff]
  %v73 = vld [vmem:[%s3 + $0x10] sm:$0xff]
  %v74 = vld [vmem:[%s3 + $0x18] sm:$0xff]
  %v75 = vld [vmem:[%s3 + $0x20] sm:$0x3]
  %v76 = vld [vmem:[%s0] sm:$0xf]
  %v77 = vlaneseq
  %v78 = vshrl.u32 %v77, 7
  %v79 = vadd.s32 %v78, 8
  %v80 = vadd.s32 %v78, 16
  %v81 = vadd.s32 %v78, 24
  %v82 = vadd.s32 %v78, 32
  %v83 = vadd.s32 %v78, 40
  %v84 = vadd.s32 %v78, 48
  %v85 = vadd.s32 %v78, 56
  %v86 = vadd.s32 %v78, 64
  %v87 = vlaneseq
  %v88 = vand.u32 %v87, 127
  %v89 = vmul.u32 %v88, 36
  %vm90 = vcmp.ge.s32.totalorder %v78, %v89
  %vm91 = vcmp.ge.s32.totalorder %v79, %v89
  %vm92 = vcmp.ge.s32.totalorder %v80, %v89
  %vm93 = vcmp.ge.s32.totalorder %v81, %v89
  %vm94 = vcmp.ge.s32.totalorder %v82, %v89
  %vm95 = vcmp.ge.s32.totalorder %v83, %v89
  %vm96 = vcmp.ge.s32.totalorder %v84, %v89
  %vm97 = vcmp.ge.s32.totalorder %v85, %v89
  %vm98 = vcmp.ge.s32.totalorder %v86, %v89
  %v99 = vadd.s32 %v88, 1
  %v100 = vmul.u32 %v99, 36
  %vm101 = vcmp.lt.s32.totalorder %v78, %v100
  %vm102 = vcmp.lt.s32.totalorder %v79, %v100
  %vm103 = vcmp.lt.s32.totalorder %v80, %v100
  %vm104 = vcmp.lt.s32.totalorder %v81, %v100
  %vm105 = vcmp.lt.s32.totalorder %v82, %v100
  %vm106 = vcmp.lt.s32.totalorder %v83, %v100
  %vm107 = vcmp.lt.s32.totalorder %v84, %v100
  %vm108 = vcmp.lt.s32.totalorder %v85, %v100
  %vm109 = vcmp.lt.s32.totalorder %v86, %v100
  %vm110 = vmand %vm90, %vm101
  %vm111 = vmand %vm91, %vm102
  %vm112 = vmand %vm92, %vm103
  %vm113 = vmand %vm93, %vm104
  %vm114 = vmand %vm94, %vm105
  %vm115 = vmand %vm95, %vm106
  %vm116 = vmand %vm96, %vm107
  %vm117 = vmand %vm97, %vm108
  %vm118 = vmand %vm98, %vm109
  %v119 = vsel %vm110, 1, 0
  %v120 = vsel %vm111, 1, 0
  %v121 = vsel %vm112, 1, 0
  %v122 = vsel %vm113, 1, 0
  %v123 = vsel %vm114, 1, 0
  %v124 = vsel %vm115, 1, 0
  %v125 = vsel %vm116, 1, 0
  %v126 = vsel %vm117, 1, 0
  %v127 = vsel %vm118, 1, 0
  %v128 = vcvt.s32.f32 %v119
  %v129 = vcvt.s32.f32 %v120
  %v130 = vcvt.s32.f32 %v121
  %v131 = vcvt.s32.f32 %v122
  %v132 = vcvt.s32.f32 %v123
  %v133 = vcvt.s32.f32 %v124
  %v134 = vcvt.s32.f32 %v125
  %v135 = vcvt.s32.f32 %v126
  %v136 = vcvt.s32.f32 %v127
  %v137 = vmul.u32 %v78, 36
  %vm138 = vcmp.ge.s32.totalorder %v88, %v137
  %v139 = vadd.s32 %v78, 1
  %v140 = vmul.u32 %v139, 36
  %vm141 = vcmp.lt.s32.totalorder %v88, %v140
  %vm142 = vmand %vm138, %vm141
  %v143 = vsel %vm142, 1, 0
  %v144 = vcvt.s32.f32 %v143
  %v145 = vmul.u32 %v88, 16
  %vm146 = vcmp.ge.s32.totalorder %v78, %v145
  %vm147 = vcmp.ge.s32.totalorder %v79, %v145
  %vm148 = vcmp.ge.s32.totalorder %v80, %v145
  %vm149 = vcmp.ge.s32.totalorder %v81, %v145
  %v150 = vmul.u32 %v99, 16
  %vm151 = vcmp.lt.s32.totalorder %v78, %v150
  %vm152 = vcmp.lt.s32.totalorder %v79, %v150
  %vm153 = vcmp.lt.s32.totalorder %v80, %v150
  %vm154 = vcmp.lt.s32.totalorder %v81, %v150
  %vm155 = vmand %vm146, %vm151
  %vm156 = vmand %vm147, %vm152
  %vm157 = vmand %vm148, %vm153
  %vm158 = vmand %vm149, %vm154
  %v159 = vsel %vm155, 1, 0
  %v160 = vsel %vm156, 1, 0
  %v161 = vsel %vm157, 1, 0
  %v162 = vsel %vm158, 1, 0
  %v163 = vcvt.s32.f32 %v159
  %v164 = vcvt.s32.f32 %v160
  %v165 = vcvt.s32.f32 %v161
  %v166 = vcvt.s32.f32 %v162
  %v167 = vmul.u32 %v78, 16
  %vm168 = vcmp.ge.s32.totalorder %v88, %v167
  %v169 = vmul.u32 %v139, 16
  %vm170 = vcmp.lt.s32.totalorder %v88, %v169
  %vm171 = vmand %vm168, %vm170
  %v172 = vsel %vm171, 1, 0
  %v173 = vcvt.s32.f32 %v172
  %v174 = vld [vmem:[%s4] sm:$0xff]
  %v175 = vld [vmem:[%s4 + $0x8] sm:$0xff]
  %v176 = vld [vmem:[%s4 + $0x10] sm:$0xff]
  %v177 = vld [vmem:[%s4 + $0x18] sm:$0xff]
  %v178 = vld [vmem:[%s4 + $0x20] sm:$0xff]
  %v179 = vld [vmem:[%s4 + $0x28] sm:$0xff]
  %v180 = vld [vmem:[%s4 + $0x30] sm:$0xff]
  %v181 = vld [vmem:[%s4 + $0x38] sm:$0xff]
  %v182 = vld [vmem:[%s4 + $0x40] sm:$0xff]
  %v183 = vld [vmem:[%s4 + $0x48] sm:$0xff]
  %v184 = vld [vmem:[%s4 + $0x50] sm:$0xff]
  %v185 = vld [vmem:[%s4 + $0x58] sm:$0xff]
  %v186 = vld [vmem:[%s4 + $0x60] sm:$0xff]
  %v187 = vld [vmem:[%s4 + $0x68] sm:$0xff]
  %v188 = vld [vmem:[%s4 + $0x70] sm:$0xff]
  %v189 = vld [vmem:[%s4 + $0x78] sm:$0xff]
  %v190 = vld [vmem:[%s4 + $0x80] sm:$0xff]
  %v191 = vld [vmem:[%s4 + $0x88] sm:$0xff]
  %v192 = vld [vmem:[%s4 + $0x90] sm:$0xff]
  %v193 = vld [vmem:[%s4 + $0x98] sm:$0xff]
  %v194 = vld [vmem:[%s4 + $0xa0] sm:$0xff]
  %v195 = vld [vmem:[%s4 + $0xa8] sm:$0xff]
  %v196 = vld [vmem:[%s4 + $0xb0] sm:$0xff]
  %v197 = vld [vmem:[%s4 + $0xb8] sm:$0xff]
  %v200 = vunpack.c.l.s4 1983009808
  %v201 = vunpack.c.0.s8 %v200
  %v202 = vlaneseq
  %v203 = vshrl.u32 %v202, 7
  %v204 = vsub.s32 %v201, %v203
  %v205 = vrot.slane %v76, %v204
  %v206 = vcombine.high %v205, %v205
  %vm208 = vcmask 523264
  %v209 = vsel %vm208, %v206, 0
  %211 = vmatprep.subr.mxu0 0.0
  %212 = vmatpush1.msra.mxu0 %v189
  %213 = vmatprep.subr.mxu0 0.0
  %214 = vmatpush1.msra.mxu0 %v188
  %215 = vmatprep.subr.mxu0 0.0
  %216 = vmatpush1.msra.mxu0 %v187
  %217 = vmatprep.subr.mxu0 0.0
  %218 = vmatpush1.msra.mxu0 %v186
  %219 = vmatprep.subr.mxu0 0.0
  %220 = vmatpush1.msra.mxu0 %v185
  %221 = vmatprep.subr.mxu0 0.0
  %222 = vmatpush1.msra.mxu0 %v184
  %223 = vmatprep.subr.mxu0 0.0
  %224 = vmatpush1.msra.mxu0 %v183
  %225 = vmatprep.subr.mxu0 0.0
  %226 = vmatpush1.msra.mxu0 %v182
  %227 = vmatprep.subr.mxu0 0.0
  %228 = vmatpush1.msra.mxu0 %v181
  %229 = vmatprep.subr.mxu0 0.0
  %230 = vmatpush1.msra.mxu0 %v180
  %231 = vmatprep.subr.mxu0 0.0
  %232 = vmatpush1.msra.mxu0 %v179
  %233 = vmatprep.subr.mxu0 0.0
  %234 = vmatpush1.msra.mxu0 %v178
  %235 = vmatprep.subr.mxu0 0.0
  %236 = vmatpush1.msra.mxu0 %v177
  %237 = vmatprep.subr.mxu0 0.0
  %238 = vmatpush1.msra.mxu0 %v176
  %239 = vmatprep.subr.mxu0 0.0
  %240 = vmatpush1.msra.mxu0 %v175
  %241 = vmatprep.subr.mxu0 0.0
  %242 = vmatpush1.msra.mxu0 %v174
  %243 = vmatprep.subr.mxu0 0.0
  %244 = vmatpush2.msra.mxu0 0.0
  %245 = vmatprep.subr.mxu0 0.0
  %246 = vmatpush2.msra.mxu0 0.0
  %247 = vmatprep.subr.mxu0 0.0
  %248 = vmatpush2.msra.mxu0 0.0
  %249 = vmatprep.subr.mxu0 0.0
  %250 = vmatpush2.msra.mxu0 0.0
  %251 = vmatprep.subr.mxu0 0.0
  %252 = vmatpush2.msra.mxu0 0.0
  %253 = vmatprep.subr.mxu0 0.0
  %254 = vmatpush2.msra.mxu0 0.0
  %255 = vmatprep.subr.mxu0 0.0
  %256 = vmatpush2.msra.mxu0 0.0
  %257 = vmatprep.subr.mxu0 0.0
  %258 = vmatpush2.msra.mxu0 0.0
  %259 = vmatprep.subr.mxu0 0.0
  %260 = vmatpush2.msra.mxu0 %v197
  %261 = vmatprep.subr.mxu0 0.0
  %262 = vmatpush2.msra.mxu0 %v196
  %263 = vmatprep.subr.mxu0 0.0
  %264 = vmatpush2.msra.mxu0 %v195
  %265 = vmatprep.subr.mxu0 0.0
  %266 = vmatpush2.msra.mxu0 %v194
  %267 = vmatprep.subr.mxu0 0.0
  %268 = vmatpush2.msra.mxu0 %v193
  %269 = vmatprep.subr.mxu0 0.0
  %270 = vmatpush2.msra.mxu0 %v192
  %271 = vmatprep.subr.mxu0 0.0
  %272 = vmatpush2.msra.mxu0 %v191
  %273 = vmatprep.subr.mxu0 0.0
  %274 = vmatpush2.msra.mxu0 %v190
  %275 = vmatprep.mubr.f32.mxu0 %v209
  %276 = vmatmul.mubr.f32.gmra.mxu0 %v205
  %v277 = vpop.f32.mrf.mxu0
  %v278 = vadd.f32 0.0, %v277
  %v279 = vpop.f32.mrf.mxu0
  %280 = vdwg.mxu0
  %vm281 = vcmask 582656
  %v282 = vsel %vm281, %v278, 0.0
  %v283 = vrot.slane %v282, 4
  %v284 = vadd.f32 %v282, %v283
  %v285 = vrot.slane %v284, 2
  %v286 = vadd.f32 %v284, %v285
  %v287 = vrot.slane %v286, 1
  %v288 = vadd.f32 %v286, %v287
  %v289 = vmul.f32 %v278, %v278
  %v290 = vsel %vm281, %v289, 0.0
  %v291 = vrot.slane %v290, 4
  %v292 = vadd.f32 %v290, %v291
  %v293 = vrot.slane %v292, 2
  %v294 = vadd.f32 %v292, %v293
  %v295 = vrot.slane %v294, 1
  %v296 = vadd.f32 %v294, %v295
  %vm297 = vcmask 1040384
  %v298 = vsel %vm297, %v288, %v296
  %vm299 = vcmask 588800
  %v301 = vsel %vm299, %v298, 0
  %303 = vmatprep.subr.mxu0 0.0
  %304 = vmatpush1.msra.mxu0 0.0
  %305 = vmatprep.subr.mxu0 0.0
  %306 = vmatpush1.msra.mxu0 0.0
  %307 = vmatprep.subr.mxu0 0.0
  %308 = vmatpush1.msra.mxu0 0.0
  %309 = vmatprep.subr.mxu0 0.0
  %310 = vmatpush1.msra.mxu0 0.0
  %311 = vmatprep.subr.mxu0 0.0
  %312 = vmatpush1.msra.mxu0 0.0
  %313 = vmatprep.subr.mxu0 0.0
  %314 = vmatpush1.msra.mxu0 0.0
  %315 = vmatprep.subr.mxu0 0.0
  %316 = vmatpush1.msra.mxu0 0.0
  %317 = vmatprep.subr.mxu0 0.0
  %318 = vmatpush1.msra.mxu0 %v136
  %319 = vmatprep.subr.mxu0 0.0
  %320 = vmatpush1.msra.mxu0 %v135
  %321 = vmatprep.subr.mxu0 0.0
  %322 = vmatpush1.msra.mxu0 %v134
  %323 = vmatprep.subr.mxu0 0.0
  %324 = vmatpush1.msra.mxu0 %v133
  %325 = vmatprep.subr.mxu0 0.0
  %326 = vmatpush1.msra.mxu0 %v132
  %327 = vmatprep.subr.mxu0 0.0
  %328 = vmatpush1.msra.mxu0 %v131
  %329 = vmatprep.subr.mxu0 0.0
  %330 = vmatpush1.msra.mxu0 %v130
  %331 = vmatprep.subr.mxu0 0.0
  %332 = vmatpush1.msra.mxu0 %v129
  %333 = vmatprep.subr.mxu0 0.0
  %334 = vmatpush1.msra.mxu0 %v128
  %335 = vmatprep.subr.mxu0 0.0
  %336 = vmatpush2.msra.mxu0 0.0
  %337 = vmatprep.subr.mxu0 0.0
  %338 = vmatpush2.msra.mxu0 0.0
  %339 = vmatprep.subr.mxu0 0.0
  %340 = vmatpush2.msra.mxu0 0.0
  %341 = vmatprep.subr.mxu0 0.0
  %342 = vmatpush2.msra.mxu0 0.0
  %343 = vmatprep.subr.mxu0 0.0
  %344 = vmatpush2.msra.mxu0 0.0
  %345 = vmatprep.subr.mxu0 0.0
  %346 = vmatpush2.msra.mxu0 0.0
  %347 = vmatprep.subr.mxu0 0.0
  %348 = vmatpush2.msra.mxu0 0.0
  %349 = vmatprep.subr.mxu0 0.0
  %350 = vmatpush2.msra.mxu0 0.0
  %351 = vmatprep.subr.mxu0 0.0
  %352 = vmatpush2.msra.mxu0 0.0
  %353 = vmatprep.subr.mxu0 0.0
  %354 = vmatpush2.msra.mxu0 0.0
  %355 = vmatprep.subr.mxu0 0.0
  %356 = vmatpush2.msra.mxu0 0.0
  %357 = vmatprep.subr.mxu0 0.0
  %358 = vmatpush2.msra.mxu0 0.0
  %359 = vmatprep.subr.mxu0 0.0
  %360 = vmatpush2.msra.mxu0 0.0
  %361 = vmatprep.subr.mxu0 0.0
  %362 = vmatpush2.msra.mxu0 0.0
  %363 = vmatprep.subr.mxu0 0.0
  %364 = vmatpush2.msra.mxu0 0.0
  %365 = vmatprep.subr.mxu0 0.0
  %366 = vmatpush2.msra.mxu0 0.0
  %367 = vmatprep.mubr.f32.mxu0 0.0
  %368 = vmatmul.mubr.f32.gmra.mxu0 %v301
  %v369 = vpop.f32.mrf.mxu0
  %v370 = vadd.f32 0.0, %v369
  %v371 = vpop.f32.mrf.mxu0
  %372 = vdwg.mxu0
  %v373 = vrcp.pop 72.0
  %v374 = vmul.f32 %v370, %v373
  %v375 = vmul.f32 %v374, %v374
  %v377 = vrot.slane %v375, 7
  %v379 = vsub.f32 %v374, %v377
  %v380 = vadd.f32 %v379, 1e-05
  %v381 = vrsqrt.pop %v380
  %v383 = vrot.slane %v381, 1
  %v385 = vmul.f32 %v71, %v383
  %v386 = vmul.f32 %v374, %v385
  %v388 = vrot.slane %v386, 7
  %v390 = vsub.f32 %v71, %v388
  %v391 = vsel %vm297, %v385, %v390
  %vm392 = vcmask 15360
  %v394 = vsel %vm392, %v391, 0
  %vm396 = vcmask 1041408
  %v398 = vsel %vm396, %v144, 0
  %400 = vmatprep.subr.mxu0 0.0
  %401 = vmatpush1.msra.mxu0 0.0
  %402 = vmatprep.subr.mxu0 0.0
  %403 = vmatpush1.msra.mxu0 0.0
  %404 = vmatprep.subr.mxu0 0.0
  %405 = vmatpush1.msra.mxu0 0.0
  %406 = vmatprep.subr.mxu0 0.0
  %407 = vmatpush1.msra.mxu0 0.0
  %408 = vmatprep.subr.mxu0 0.0
  %409 = vmatpush1.msra.mxu0 0.0
  %410 = vmatprep.subr.mxu0 0.0
  %411 = vmatpush1.msra.mxu0 0.0
  %412 = vmatprep.subr.mxu0 0.0
  %413 = vmatpush1.msra.mxu0 0.0
  %414 = vmatprep.subr.mxu0 0.0
  %415 = vmatpush1.msra.mxu0 0.0
  %416 = vmatprep.subr.mxu0 0.0
  %417 = vmatpush1.msra.mxu0 0.0
  %418 = vmatprep.subr.mxu0 0.0
  %419 = vmatpush1.msra.mxu0 0.0
  %420 = vmatprep.subr.mxu0 0.0
  %421 = vmatpush1.msra.mxu0 0.0
  %422 = vmatprep.subr.mxu0 0.0
  %423 = vmatpush1.msra.mxu0 0.0
  %424 = vmatprep.subr.mxu0 0.0
  %425 = vmatpush1.msra.mxu0 0.0
  %426 = vmatprep.subr.mxu0 0.0
  %427 = vmatpush1.msra.mxu0 0.0
  %428 = vmatprep.subr.mxu0 0.0
  %429 = vmatpush1.msra.mxu0 0.0
  %430 = vmatprep.subr.mxu0 0.0
  %431 = vmatpush1.msra.mxu0 %v398
  %432 = vmatprep.subr.mxu0 0.0
  %433 = vmatpush2.msra.mxu0 0.0
  %434 = vmatprep.subr.mxu0 0.0
  %435 = vmatpush2.msra.mxu0 0.0
  %436 = vmatprep.subr.mxu0 0.0
  %437 = vmatpush2.msra.mxu0 0.0
  %438 = vmatprep.subr.mxu0 0.0
  %439 = vmatpush2.msra.mxu0 0.0
  %440 = vmatprep.subr.mxu0 0.0
  %441 = vmatpush2.msra.mxu0 0.0
  %442 = vmatprep.subr.mxu0 0.0
  %443 = vmatpush2.msra.mxu0 0.0
  %444 = vmatprep.subr.mxu0 0.0
  %445 = vmatpush2.msra.mxu0 0.0
  %446 = vmatprep.subr.mxu0 0.0
  %447 = vmatpush2.msra.mxu0 0.0
  %448 = vmatprep.subr.mxu0 0.0
  %449 = vmatpush2.msra.mxu0 0.0
  %450 = vmatprep.subr.mxu0 0.0
  %451 = vmatpush2.msra.mxu0 0.0
  %452 = vmatprep.subr.mxu0 0.0
  %453 = vmatpush2.msra.mxu0 0.0
  %454 = vmatprep.subr.mxu0 0.0
  %455 = vmatpush2.msra.mxu0 0.0
  %456 = vmatprep.subr.mxu0 0.0
  %457 = vmatpush2.msra.mxu0 0.0
  %458 = vmatprep.subr.mxu0 0.0
  %459 = vmatpush2.msra.mxu0 0.0
  %460 = vmatprep.subr.mxu0 0.0
  %461 = vmatpush2.msra.mxu0 0.0
  %462 = vmatprep.subr.mxu0 0.0
  %463 = vmatpush2.msra.mxu0 0.0
  %464 = vmatprep.mubr.f32.mxu0 0.0
  %465 = vmatmul.mubr.f32.gmra.mxu0 %v394
  %v466 = vpop.f32.mrf.mxu0
  %v467 = vadd.f32 0.0, %v466
  %v468 = vpop.f32.mrf.mxu0
  %469 = vdwg.mxu0
  %v470 = vlaneseq
  %v471 = vshrl.u32 %v470, 7
  %v472 = vsub.s32 0, %v471
  %v473 = vrot.slane %v467, %v472
  %v474 = vmul.f32 %v278, %v473
  %v475 = vlaneseq
  %v476 = vshrl.u32 %v475, 7
  %v477 = vsub.s32 1, %v476
  %v478 = vrot.slane %v467, %v477
  %v479 = vadd.f32 %v474, %v478
  %vm480 = vcmp.gt.f32.partialorder %v479, 0.0
  %v481 = vmul.f32 %v479, 0.01
  %v482 = vsel %vm480, %v479, %v481
  %v483 = vld [vmem:[%s5] sm:$0xff]
  %v484 = vld [vmem:[%s5 + $0x8] sm:$0xff]
  %v485 = vld [vmem:[%s5 + $0x10] sm:$0xff]
  %v486 = vld [vmem:[%s5 + $0x18] sm:$0xff]
  %v487 = vld [vmem:[%s5 + $0x20] sm:$0xff]
  %v488 = vld [vmem:[%s5 + $0x28] sm:$0xff]
  %v489 = vld [vmem:[%s5 + $0x30] sm:$0xff]
  %v490 = vld [vmem:[%s5 + $0x38] sm:$0xff]
  %v491 = vld [vmem:[%s5 + $0x40] sm:$0xff]
  %v493 = vsel %vm299, %v482, 0
  %495 = vmatprep.subr.mxu0 0.0
  %496 = vmatpush1.msra.mxu0 0.0
  %497 = vmatprep.subr.mxu0 0.0
  %498 = vmatpush1.msra.mxu0 0.0
  %499 = vmatprep.subr.mxu0 0.0
  %500 = vmatpush1.msra.mxu0 0.0
  %501 = vmatprep.subr.mxu0 0.0
  %502 = vmatpush1.msra.mxu0 0.0
  %503 = vmatprep.subr.mxu0 0.0
  %504 = vmatpush1.msra.mxu0 0.0
  %505 = vmatprep.subr.mxu0 0.0
  %506 = vmatpush1.msra.mxu0 0.0
  %507 = vmatprep.subr.mxu0 0.0
  %508 = vmatpush1.msra.mxu0 0.0
  %509 = vmatprep.subr.mxu0 0.0
  %510 = vmatpush1.msra.mxu0 %v491
  %511 = vmatprep.subr.mxu0 0.0
  %512 = vmatpush1.msra.mxu0 %v490
  %513 = vmatprep.subr.mxu0 0.0
  %514 = vmatpush1.msra.mxu0 %v489
  %515 = vmatprep.subr.mxu0 0.0
  %516 = vmatpush1.msra.mxu0 %v488
  %517 = vmatprep.subr.mxu0 0.0
  %518 = vmatpush1.msra.mxu0 %v487
  %519 = vmatprep.subr.mxu0 0.0
  %520 = vmatpush1.msra.mxu0 %v486
  %521 = vmatprep.subr.mxu0 0.0
  %522 = vmatpush1.msra.mxu0 %v485
  %523 = vmatprep.subr.mxu0 0.0
  %524 = vmatpush1.msra.mxu0 %v484
  %525 = vmatprep.subr.mxu0 0.0
  %526 = vmatpush1.msra.mxu0 %v483
  %527 = vmatprep.subr.mxu0 0.0
  %528 = vmatpush2.msra.mxu0 0.0
  %529 = vmatprep.subr.mxu0 0.0
  %530 = vmatpush2.msra.mxu0 0.0
  %531 = vmatprep.subr.mxu0 0.0
  %532 = vmatpush2.msra.mxu0 0.0
  %533 = vmatprep.subr.mxu0 0.0
  %534 = vmatpush2.msra.mxu0 0.0
  %535 = vmatprep.subr.mxu0 0.0
  %536 = vmatpush2.msra.mxu0 0.0
  %537 = vmatprep.subr.mxu0 0.0
  %538 = vmatpush2.msra.mxu0 0.0
  %539 = vmatprep.subr.mxu0 0.0
  %540 = vmatpush2.msra.mxu0 0.0
  %541 = vmatprep.subr.mxu0 0.0
  %542 = vmatpush2.msra.mxu0 0.0
  %543 = vmatprep.subr.mxu0 0.0
  %544 = vmatpush2.msra.mxu0 0.0
  %545 = vmatprep.subr.mxu0 0.0
  %546 = vmatpush2.msra.mxu0 0.0
  %547 = vmatprep.subr.mxu0 0.0
  %548 = vmatpush2.msra.mxu0 0.0
  %549 = vmatprep.subr.mxu0 0.0
  %550 = vmatpush2.msra.mxu0 0.0
  %551 = vmatprep.subr.mxu0 0.0
  %552 = vmatpush2.msra.mxu0 0.0
  %553 = vmatprep.subr.mxu0 0.0
  %554 = vmatpush2.msra.mxu0 0.0
  %555 = vmatprep.subr.mxu0 0.0
  %556 = vmatpush2.msra.mxu0 0.0
  %557 = vmatprep.subr.mxu0 0.0
  %558 = vmatpush2.msra.mxu0 0.0
  %559 = vmatprep.mubr.f32.mxu0 0.0
  %560 = vmatmul.mubr.f32.gmra.mxu0 %v493
  %v561 = vpop.f32.mrf.mxu0
  %v562 = vadd.f32 0.0, %v561
  %v563 = vpop.f32.mrf.mxu0
  %564 = vdwg.mxu0
  %vm565 = vcmask 254976
  %v566 = vsel %vm565, %v562, 0.0
  %v567 = vrot.slane %v566, 4
  %v568 = vadd.f32 %v566, %v567
  %v569 = vrot.slane %v568, 2
  %v570 = vadd.f32 %v568, %v569
  %v571 = vrot.slane %v570, 1
  %v572 = vadd.f32 %v570, %v571
  %v573 = vmul.f32 %v562, %v562
  %v574 = vsel %vm565, %v573, 0.0
  %v575 = vrot.slane %v574, 4
  %v576 = vadd.f32 %v574, %v575
  %v577 = vrot.slane %v576, 2
  %v578 = vadd.f32 %v576, %v577
  %v579 = vrot.slane %v578, 1
  %v580 = vadd.f32 %v578, %v579
  %v581 = vsel %vm297, %v572, %v580
  %vm582 = vcmask 261120
  %v584 = vsel %vm582, %v581, 0
  %586 = vmatprep.subr.mxu0 0.0
  %587 = vmatpush1.msra.mxu0 0.0
  %588 = vmatprep.subr.mxu0 0.0
  %589 = vmatpush1.msra.mxu0 0.0
  %590 = vmatprep.subr.mxu0 0.0
  %591 = vmatpush1.msra.mxu0 0.0
  %592 = vmatprep.subr.mxu0 0.0
  %593 = vmatpush1.msra.mxu0 0.0
  %594 = vmatprep.subr.mxu0 0.0
  %595 = vmatpush1.msra.mxu0 0.0
  %596 = vmatprep.subr.mxu0 0.0
  %597 = vmatpush1.msra.mxu0 0.0
  %598 = vmatprep.subr.mxu0 0.0
  %599 = vmatpush1.msra.mxu0 0.0
  %600 = vmatprep.subr.mxu0 0.0
  %601 = vmatpush1.msra.mxu0 0.0
  %602 = vmatprep.subr.mxu0 0.0
  %603 = vmatpush1.msra.mxu0 0.0
  %604 = vmatprep.subr.mxu0 0.0
  %605 = vmatpush1.msra.mxu0 0.0
  %606 = vmatprep.subr.mxu0 0.0
  %607 = vmatpush1.msra.mxu0 0.0
  %608 = vmatprep.subr.mxu0 0.0
  %609 = vmatpush1.msra.mxu0 0.0
  %610 = vmatprep.subr.mxu0 0.0
  %611 = vmatpush1.msra.mxu0 %v166
  %612 = vmatprep.subr.mxu0 0.0
  %613 = vmatpush1.msra.mxu0 %v165
  %614 = vmatprep.subr.mxu0 0.0
  %615 = vmatpush1.msra.mxu0 %v164
  %616 = vmatprep.subr.mxu0 0.0
  %617 = vmatpush1.msra.mxu0 %v163
  %618 = vmatprep.subr.mxu0 0.0
  %619 = vmatpush2.msra.mxu0 0.0
  %620 = vmatprep.subr.mxu0 0.0
  %621 = vmatpush2.msra.mxu0 0.0
  %622 = vmatprep.subr.mxu0 0.0
  %623 = vmatpush2.msra.mxu0 0.0
  %624 = vmatprep.subr.mxu0 0.0
  %625 = vmatpush2.msra.mxu0 0.0
  %626 = vmatprep.subr.mxu0 0.0
  %627 = vmatpush2.msra.mxu0 0.0
  %628 = vmatprep.subr.mxu0 0.0
  %629 = vmatpush2.msra.mxu0 0.0
  %630 = vmatprep.subr.mxu0 0.0
  %631 = vmatpush2.msra.mxu0 0.0
  %632 = vmatprep.subr.mxu0 0.0
  %633 = vmatpush2.msra.mxu0 0.0
  %634 = vmatprep.subr.mxu0 0.0
  %635 = vmatpush2.msra.mxu0 0.0
  %636 = vmatprep.subr.mxu0 0.0
  %637 = vmatpush2.msra.mxu0 0.0
  %638 = vmatprep.subr.mxu0 0.0
  %639 = vmatpush2.msra.mxu0 0.0
  %640 = vmatprep.subr.mxu0 0.0
  %641 = vmatpush2.msra.mxu0 0.0
  %642 = vmatprep.subr.mxu0 0.0
  %643 = vmatpush2.msra.mxu0 0.0
  %644 = vmatprep.subr.mxu0 0.0
  %645 = vmatpush2.msra.mxu0 0.0
  %646 = vmatprep.subr.mxu0 0.0
  %647 = vmatpush2.msra.mxu0 0.0
  %648 = vmatprep.subr.mxu0 0.0
  %649 = vmatpush2.msra.mxu0 0.0
  %650 = vmatprep.mubr.f32.mxu0 0.0
  %651 = vmatmul.mubr.f32.gmra.mxu0 %v584
  %v652 = vpop.f32.mrf.mxu0
  %v653 = vadd.f32 0.0, %v652
  %v654 = vpop.f32.mrf.mxu0
  %655 = vdwg.mxu0
  %v656 = vrcp.pop 32.0
  %v657 = vmul.f32 %v653, %v656
  %v658 = vmul.f32 %v657, %v657
  %v660 = vrot.slane %v658, 7
  %v662 = vsub.f32 %v657, %v660
  %v663 = vadd.f32 %v662, 1e-05
  %v664 = vrsqrt.pop %v663
  %v666 = vrot.slane %v664, 7
  %v668 = vmul.f32 %v71, %v666
  %v670 = vrot.slane %v668, 2
  %v672 = vmul.f32 %v657, %v670
  %v674 = vrot.slane %v672, 5
  %v676 = vsub.f32 %v71, %v674
  %v678 = vrot.slane %v676, 2
  %v680 = vsel %vm297, %v670, %v678
  %v682 = vsel %vm392, %v680, 0
  %v685 = vsel %vm396, %v173, 0
  %687 = vmatprep.subr.mxu0 0.0
  %688 = vmatpush1.msra.mxu0 0.0
  %689 = vmatprep.subr.mxu0 0.0
  %690 = vmatpush1.msra.mxu0 0.0
  %691 = vmatprep.subr.mxu0 0.0
  %692 = vmatpush1.msra.mxu0 0.0
  %693 = vmatprep.subr.mxu0 0.0
  %694 = vmatpush1.msra.mxu0 0.0
  %695 = vmatprep.subr.mxu0 0.0
  %696 = vmatpush1.msra.mxu0 0.0
  %697 = vmatprep.subr.mxu0 0.0
  %698 = vmatpush1.msra.mxu0 0.0
  %699 = vmatprep.subr.mxu0 0.0
  %700 = vmatpush1.msra.mxu0 0.0
  %701 = vmatprep.subr.mxu0 0.0
  %702 = vmatpush1.msra.mxu0 0.0
  %703 = vmatprep.subr.mxu0 0.0
  %704 = vmatpush1.msra.mxu0 0.0
  %705 = vmatprep.subr.mxu0 0.0
  %706 = vmatpush1.msra.mxu0 0.0
  %707 = vmatprep.subr.mxu0 0.0
  %708 = vmatpush1.msra.mxu0 0.0
  %709 = vmatprep.subr.mxu0 0.0
  %710 = vmatpush1.msra.mxu0 0.0
  %711 = vmatprep.subr.mxu0 0.0
  %712 = vmatpush1.msra.mxu0 0.0
  %713 = vmatprep.subr.mxu0 0.0
  %714 = vmatpush1.msra.mxu0 0.0
  %715 = vmatprep.subr.mxu0 0.0
  %716 = vmatpush1.msra.mxu0 0.0
  %717 = vmatprep.subr.mxu0 0.0
  %718 = vmatpush1.msra.mxu0 %v685
  %719 = vmatprep.subr.mxu0 0.0
  %720 = vmatpush2.msra.mxu0 0.0
  %721 = vmatprep.subr.mxu0 0.0
  %722 = vmatpush2.msra.mxu0 0.0
  %723 = vmatprep.subr.mxu0 0.0
  %724 = vmatpush2.msra.mxu0 0.0
  %725 = vmatprep.subr.mxu0 0.0
  %726 = vmatpush2.msra.mxu0 0.0
  %727 = vmatprep.subr.mxu0 0.0
  %728 = vmatpush2.msra.mxu0 0.0
  %729 = vmatprep.subr.mxu0 0.0
  %730 = vmatpush2.msra.mxu0 0.0
  %731 = vmatprep.subr.mxu0 0.0
  %732 = vmatpush2.msra.mxu0 0.0
  %733 = vmatprep.subr.mxu0 0.0
  %734 = vmatpush2.msra.mxu0 0.0
  %735 = vmatprep.subr.mxu0 0.0
  %736 = vmatpush2.msra.mxu0 0.0
  %737 = vmatprep.subr.mxu0 0.0
  %738 = vmatpush2.msra.mxu0 0.0
  %739 = vmatprep.subr.mxu0 0.0
  %740 = vmatpush2.msra.mxu0 0.0
  %741 = vmatprep.subr.mxu0 0.0
  %742 = vmatpush2.msra.mxu0 0.0
  %743 = vmatprep.subr.mxu0 0.0
  %744 = vmatpush2.msra.mxu0 0.0
  %745 = vmatprep.subr.mxu0 0.0
  %746 = vmatpush2.msra.mxu0 0.0
  %747 = vmatprep.subr.mxu0 0.0
  %748 = vmatpush2.msra.mxu0 0.0
  %749 = vmatprep.subr.mxu0 0.0
  %750 = vmatpush2.msra.mxu0 0.0
  %751 = vmatprep.mubr.f32.mxu0 0.0
  %752 = vmatmul.mubr.f32.gmra.mxu0 %v682
  %v753 = vpop.f32.mrf.mxu0
  %v754 = vadd.f32 0.0, %v753
  %v755 = vpop.f32.mrf.mxu0
  %756 = vdwg.mxu0
  %v757 = vlaneseq
  %v758 = vshrl.u32 %v757, 7
  %v759 = vsub.s32 0, %v758
  %v760 = vrot.slane %v754, %v759
  %v761 = vmul.f32 %v562, %v760
  %v762 = vlaneseq
  %v763 = vshrl.u32 %v762, 7
  %v764 = vsub.s32 1, %v763
  %v765 = vrot.slane %v754, %v764
  %v766 = vadd.f32 %v761, %v765
  %vm767 = vcmp.gt.f32.partialorder %v766, 0.0
  %v768 = vmul.f32 %v766, 0.01
  %v769 = vsel %vm767, %v766, %v768
  %v770 = vld [vmem:[%s6] sm:$0xff]
  %v771 = vld [vmem:[%s6 + $0x8] sm:$0xff]
  %v772 = vld [vmem:[%s6 + $0x10] sm:$0xff]
  %v773 = vld [vmem:[%s6 + $0x18] sm:$0xff]
  %v775 = vsel %vm582, %v769, 0
  %777 = vmatprep.subr.mxu0 0.0
  %778 = vmatpush1.msra.mxu0 0.0
  %779 = vmatprep.subr.mxu0 0.0
  %780 = vmatpush1.msra.mxu0 0.0
  %781 = vmatprep.subr.mxu0 0.0
  %782 = vmatpush1.msra.mxu0 0.0
  %783 = vmatprep.subr.mxu0 0.0
  %784 = vmatpush1.msra.mxu0 0.0
  %785 = vmatprep.subr.mxu0 0.0
  %786 = vmatpush1.msra.mxu0 0.0
  %787 = vmatprep.subr.mxu0 0.0
  %788 = vmatpush1.msra.mxu0 0.0
  %789 = vmatprep.subr.mxu0 0.0
  %790 = vmatpush1.msra.mxu0 0.0
  %791 = vmatprep.subr.mxu0 0.0
  %792 = vmatpush1.msra.mxu0 0.0
  %793 = vmatprep.subr.mxu0 0.0
  %794 = vmatpush1.msra.mxu0 0.0
  %795 = vmatprep.subr.mxu0 0.0
  %796 = vmatpush1.msra.mxu0 0.0
  %797 = vmatprep.subr.mxu0 0.0
  %798 = vmatpush1.msra.mxu0 0.0
  %799 = vmatprep.subr.mxu0 0.0
  %800 = vmatpush1.msra.mxu0 0.0
  %801 = vmatprep.subr.mxu0 0.0
  %802 = vmatpush1.msra.mxu0 %v773
  %803 = vmatprep.subr.mxu0 0.0
  %804 = vmatpush1.msra.mxu0 %v772
  %805 = vmatprep.subr.mxu0 0.0
  %806 = vmatpush1.msra.mxu0 %v771
  %807 = vmatprep.subr.mxu0 0.0
  %808 = vmatpush1.msra.mxu0 %v770
  %809 = vmatprep.subr.mxu0 0.0
  %810 = vmatpush2.msra.mxu0 0.0
  %811 = vmatprep.subr.mxu0 0.0
  %812 = vmatpush2.msra.mxu0 0.0
  %813 = vmatprep.subr.mxu0 0.0
  %814 = vmatpush2.msra.mxu0 0.0
  %815 = vmatprep.subr.mxu0 0.0
  %816 = vmatpush2.msra.mxu0 0.0
  %817 = vmatprep.subr.mxu0 0.0
  %818 = vmatpush2.msra.mxu0 0.0
  %819 = vmatprep.subr.mxu0 0.0
  %820 = vmatpush2.msra.mxu0 0.0
  %821 = vmatprep.subr.mxu0 0.0
  %822 = vmatpush2.msra.mxu0 0.0
  %823 = vmatprep.subr.mxu0 0.0
  %824 = vmatpush2.msra.mxu0 0.0
  %825 = vmatprep.subr.mxu0 0.0
  %826 = vmatpush2.msra.mxu0 0.0
  %827 = vmatprep.subr.mxu0 0.0
  %828 = vmatpush2.msra.mxu0 0.0
  %829 = vmatprep.subr.mxu0 0.0
  %830 = vmatpush2.msra.mxu0 0.0
  %831 = vmatprep.subr.mxu0 0.0
  %832 = vmatpush2.msra.mxu0 0.0
  %833 = vmatprep.subr.mxu0 0.0
  %834 = vmatpush2.msra.mxu0 0.0
  %835 = vmatprep.subr.mxu0 0.0
  %836 = vmatpush2.msra.mxu0 0.0
  %837 = vmatprep.subr.mxu0 0.0
  %838 = vmatpush2.msra.mxu0 0.0
  %839 = vmatprep.subr.mxu0 0.0
  %840 = vmatpush2.msra.mxu0 0.0
  %841 = vmatprep.mubr.f32.mxu0 0.0
  %842 = vmatmul.mubr.f32.gmra.mxu0 %v775
  %v843 = vpop.f32.mrf.mxu0
  %v844 = vadd.f32 0.0, %v843
  %v845 = vpop.f32.mrf.mxu0
  %846 = vdwg.mxu0
  %v847 = vsel %vm565, %v844, 0.0
  %v848 = vrot.slane %v847, 4
  %v849 = vadd.f32 %v847, %v848
  %v850 = vrot.slane %v849, 2
  %v851 = vadd.f32 %v849, %v850
  %v852 = vrot.slane %v851, 1
  %v853 = vadd.f32 %v851, %v852
  %v854 = vmul.f32 %v844, %v844
  %v855 = vsel %vm565, %v854, 0.0
  %v856 = vrot.slane %v855, 4
  %v857 = vadd.f32 %v855, %v856
  %v858 = vrot.slane %v857, 2
  %v859 = vadd.f32 %v857, %v858
  %v860 = vrot.slane %v859, 1
  %v861 = vadd.f32 %v859, %v860
  %v862 = vsel %vm297, %v853, %v861
  %v864 = vsel %vm582, %v862, 0
  %866 = vmatprep.subr.mxu0 0.0
  %867 = vmatpush1.msra.mxu0 0.0
  %868 = vmatprep.subr.mxu0 0.0
  %869 = vmatpush1.msra.mxu0 0.0
  %870 = vmatprep.subr.mxu0 0.0
  %871 = vmatpush1.msra.mxu0 0.0
  %872 = vmatprep.subr.mxu0 0.0
  %873 = vmatpush1.msra.mxu0 0.0
  %874 = vmatprep.subr.mxu0 0.0
  %875 = vmatpush1.msra.mxu0 0.0
  %876 = vmatprep.subr.mxu0 0.0
  %877 = vmatpush1.msra.mxu0 0.0
  %878 = vmatprep.subr.mxu0 0.0
  %879 = vmatpush1.msra.mxu0 0.0
  %880 = vmatprep.subr.mxu0 0.0
  %881 = vmatpush1.msra.mxu0 0.0
  %882 = vmatprep.subr.mxu0 0.0
  %883 = vmatpush1.msra.mxu0 0.0
  %884 = vmatprep.subr.mxu0 0.0
  %885 = vmatpush1.msra.mxu0 0.0
  %886 = vmatprep.subr.mxu0 0.0
  %887 = vmatpush1.msra.mxu0 0.0
  %888 = vmatprep.subr.mxu0 0.0
  %889 = vmatpush1.msra.mxu0 0.0
  %890 = vmatprep.subr.mxu0 0.0
  %891 = vmatpush1.msra.mxu0 %v166
  %892 = vmatprep.subr.mxu0 0.0
  %893 = vmatpush1.msra.mxu0 %v165
  %894 = vmatprep.subr.mxu0 0.0
  %895 = vmatpush1.msra.mxu0 %v164
  %896 = vmatprep.subr.mxu0 0.0
  %897 = vmatpush1.msra.mxu0 %v163
  %898 = vmatprep.subr.mxu0 0.0
  %899 = vmatpush2.msra.mxu0 0.0
  %900 = vmatprep.subr.mxu0 0.0
  %901 = vmatpush2.msra.mxu0 0.0
  %902 = vmatprep.subr.mxu0 0.0
  %903 = vmatpush2.msra.mxu0 0.0
  %904 = vmatprep.subr.mxu0 0.0
  %905 = vmatpush2.msra.mxu0 0.0
  %906 = vmatprep.subr.mxu0 0.0
  %907 = vmatpush2.msra.mxu0 0.0
  %908 = vmatprep.subr.mxu0 0.0
  %909 = vmatpush2.msra.mxu0 0.0
  %910 = vmatprep.subr.mxu0 0.0
  %911 = vmatpush2.msra.mxu0 0.0
  %912 = vmatprep.subr.mxu0 0.0
  %913 = vmatpush2.msra.mxu0 0.0
  %914 = vmatprep.subr.mxu0 0.0
  %915 = vmatpush2.msra.mxu0 0.0
  %916 = vmatprep.subr.mxu0 0.0
  %917 = vmatpush2.msra.mxu0 0.0
  %918 = vmatprep.subr.mxu0 0.0
  %919 = vmatpush2.msra.mxu0 0.0
  %920 = vmatprep.subr.mxu0 0.0
  %921 = vmatpush2.msra.mxu0 0.0
  %922 = vmatprep.subr.mxu0 0.0
  %923 = vmatpush2.msra.mxu0 0.0
  %924 = vmatprep.subr.mxu0 0.0
  %925 = vmatpush2.msra.mxu0 0.0
  %926 = vmatprep.subr.mxu0 0.0
  %927 = vmatpush2.msra.mxu0 0.0
  %928 = vmatprep.subr.mxu0 0.0
  %929 = vmatpush2.msra.mxu0 0.0
  %930 = vmatprep.mubr.f32.mxu0 0.0
  %931 = vmatmul.mubr.f32.gmra.mxu0 %v864
  %v932 = vpop.f32.mrf.mxu0
  %v933 = vadd.f32 0.0, %v932
  %v934 = vpop.f32.mrf.mxu0
  %935 = vdwg.mxu0
  %v936 = vmul.f32 %v933, %v656
  %v937 = vmul.f32 %v936, %v936
  %v939 = vrot.slane %v937, 7
  %v941 = vsub.f32 %v936, %v939
  %v942 = vadd.f32 %v941, 1e-05
  %v943 = vrsqrt.pop %v942
  %v945 = vrot.slane %v943, 5
  %v947 = vmul.f32 %v71, %v945
  %v949 = vrot.slane %v947, 4
  %v951 = vmul.f32 %v936, %v949
  %v953 = vrot.slane %v951, 3
  %v955 = vsub.f32 %v71, %v953
  %v957 = vrot.slane %v955, 4
  %v959 = vsel %vm297, %v949, %v957
  %v961 = vsel %vm392, %v959, 0
  %963 = vmatprep.subr.mxu0 0.0
  %964 = vmatpush1.msra.mxu0 0.0
  %965 = vmatprep.subr.mxu0 0.0
  %966 = vmatpush1.msra.mxu0 0.0
  %967 = vmatprep.subr.mxu0 0.0
  %968 = vmatpush1.msra.mxu0 0.0
  %969 = vmatprep.subr.mxu0 0.0
  %970 = vmatpush1.msra.mxu0 0.0
  %971 = vmatprep.subr.mxu0 0.0
  %972 = vmatpush1.msra.mxu0 0.0
  %973 = vmatprep.subr.mxu0 0.0
  %974 = vmatpush1.msra.mxu0 0.0
  %975 = vmatprep.subr.mxu0 0.0
  %976 = vmatpush1.msra.mxu0 0.0
  %977 = vmatprep.subr.mxu0 0.0
  %978 = vmatpush1.msra.mxu0 0.0
  %979 = vmatprep.subr.mxu0 0.0
  %980 = vmatpush1.msra.mxu0 0.0
  %981 = vmatprep.subr.mxu0 0.0
  %982 = vmatpush1.msra.mxu0 0.0
  %983 = vmatprep.subr.mxu0 0.0
  %984 = vmatpush1.msra.mxu0 0.0
  %985 = vmatprep.subr.mxu0 0.0
  %986 = vmatpush1.msra.mxu0 0.0
  %987 = vmatprep.subr.mxu0 0.0
  %988 = vmatpush1.msra.mxu0 0.0
  %989 = vmatprep.subr.mxu0 0.0
  %990 = vmatpush1.msra.mxu0 0.0
  %991 = vmatprep.subr.mxu0 0.0
  %992 = vmatpush1.msra.mxu0 0.0
  %993 = vmatprep.subr.mxu0 0.0
  %994 = vmatpush1.msra.mxu0 %v685
  %995 = vmatprep.subr.mxu0 0.0
  %996 = vmatpush2.msra.mxu0 0.0
  %997 = vmatprep.subr.mxu0 0.0
  %998 = vmatpush2.msra.mxu0 0.0
  %999 = vmatprep.subr.mxu0 0.0
  %1000 = vmatpush2.msra.mxu0 0.0
  %1001 = vmatprep.subr.mxu0 0.0
  %1002 = vmatpush2.msra.mxu0 0.0
  %1003 = vmatprep.subr.mxu0 0.0
  %1004 = vmatpush2.msra.mxu0 0.0
  %1005 = vmatprep.subr.mxu0 0.0
  %1006 = vmatpush2.msra.mxu0 0.0
  %1007 = vmatprep.subr.mxu0 0.0
  %1008 = vmatpush2.msra.mxu0 0.0
  %1009 = vmatprep.subr.mxu0 0.0
  %1010 = vmatpush2.msra.mxu0 0.0
  %1011 = vmatprep.subr.mxu0 0.0
  %1012 = vmatpush2.msra.mxu0 0.0
  %1013 = vmatprep.subr.mxu0 0.0
  %1014 = vmatpush2.msra.mxu0 0.0
  %1015 = vmatprep.subr.mxu0 0.0
  %1016 = vmatpush2.msra.mxu0 0.0
  %1017 = vmatprep.subr.mxu0 0.0
  %1018 = vmatpush2.msra.mxu0 0.0
  %1019 = vmatprep.subr.mxu0 0.0
  %1020 = vmatpush2.msra.mxu0 0.0
  %1021 = vmatprep.subr.mxu0 0.0
  %1022 = vmatpush2.msra.mxu0 0.0
  %1023 = vmatprep.subr.mxu0 0.0
  %1024 = vmatpush2.msra.mxu0 0.0
  %1025 = vmatprep.subr.mxu0 0.0
  %1026 = vmatpush2.msra.mxu0 0.0
  %1027 = vmatprep.mubr.f32.mxu0 0.0
  %1028 = vmatmul.mubr.f32.gmra.mxu0 %v961
  %v1029 = vpop.f32.mrf.mxu0
  %v1030 = vadd.f32 0.0, %v1029
  %v1031 = vpop.f32.mrf.mxu0
  %1032 = vdwg.mxu0
  %v1033 = vlaneseq
  %v1034 = vshrl.u32 %v1033, 7
  %v1035 = vsub.s32 0, %v1034
  %v1036 = vrot.slane %v1030, %v1035
  %v1037 = vmul.f32 %v844, %v1036
  %v1038 = vlaneseq
  %v1039 = vshrl.u32 %v1038, 7
  %v1040 = vsub.s32 1, %v1039
  %v1041 = vrot.slane %v1030, %v1040
  %v1042 = vadd.f32 %v1037, %v1041
  %vm1043 = vcmp.gt.f32.partialorder %v1042, 0.0
  %v1044 = vmul.f32 %v1042, 0.01
  %v1045 = vsel %vm1043, %v1042, %v1044
  %v1046 = vsel %vm565, %v1045, 0.0
  %v1047 = vrot.slane %v1046, 4
  %v1048 = vadd.f32 %v1046, %v1047
  %v1049 = vrot.slane %v1048, 2
  %v1050 = vadd.f32 %v1048, %v1049
  %v1051 = vrot.slane %v1050, 1
  %v1052 = vadd.f32 %v1050, %v1051
  %v1053 = vmul.f32 %v1045, %v1045
  %v1054 = vsel %vm565, %v1053, 0.0
  %v1055 = vrot.slane %v1054, 4
  %v1056 = vadd.f32 %v1054, %v1055
  %v1057 = vrot.slane %v1056, 2
  %v1058 = vadd.f32 %v1056, %v1057
  %v1059 = vrot.slane %v1058, 1
  %v1060 = vadd.f32 %v1058, %v1059
  %v1061 = vsel %vm297, %v1052, %v1060
  %v1063 = vsel %vm582, %v1061, 0
  %1065 = vmatprep.subr.mxu0 0.0
  %1066 = vmatpush1.msra.mxu0 0.0
  %1067 = vmatprep.subr.mxu0 0.0
  %1068 = vmatpush1.msra.mxu0 0.0
  %1069 = vmatprep.subr.mxu0 0.0
  %1070 = vmatpush1.msra.mxu0 0.0
  %1071 = vmatprep.subr.mxu0 0.0
  %1072 = vmatpush1.msra.mxu0 0.0
  %1073 = vmatprep.subr.mxu0 0.0
  %1074 = vmatpush1.msra.mxu0 0.0
  %1075 = vmatprep.subr.mxu0 0.0
  %1076 = vmatpush1.msra.mxu0 0.0
  %1077 = vmatprep.subr.mxu0 0.0
  %1078 = vmatpush1.msra.mxu0 0.0
  %1079 = vmatprep.subr.mxu0 0.0
  %1080 = vmatpush1.msra.mxu0 0.0
  %1081 = vmatprep.subr.mxu0 0.0
  %1082 = vmatpush1.msra.mxu0 0.0
  %1083 = vmatprep.subr.mxu0 0.0
  %1084 = vmatpush1.msra.mxu0 0.0
  %1085 = vmatprep.subr.mxu0 0.0
  %1086 = vmatpush1.msra.mxu0 0.0
  %1087 = vmatprep.subr.mxu0 0.0
  %1088 = vmatpush1.msra.mxu0 0.0
  %1089 = vmatprep.subr.mxu0 0.0
  %1090 = vmatpush1.msra.mxu0 %v166
  %1091 = vmatprep.subr.mxu0 0.0
  %1092 = vmatpush1.msra.mxu0 %v165
  %1093 = vmatprep.subr.mxu0 0.0
  %1094 = vmatpush1.msra.mxu0 %v164
  %1095 = vmatprep.subr.mxu0 0.0
  %1096 = vmatpush1.msra.mxu0 %v163
  %1097 = vmatprep.subr.mxu0 0.0
  %1098 = vmatpush2.msra.mxu0 0.0
  %1099 = vmatprep.subr.mxu0 0.0
  %1100 = vmatpush2.msra.mxu0 0.0
  %1101 = vmatprep.subr.mxu0 0.0
  %1102 = vmatpush2.msra.mxu0 0.0
  %1103 = vmatprep.subr.mxu0 0.0
  %1104 = vmatpush2.msra.mxu0 0.0
  %1105 = vmatprep.subr.mxu0 0.0
  %1106 = vmatpush2.msra.mxu0 0.0
  %1107 = vmatprep.subr.mxu0 0.0
  %1108 = vmatpush2.msra.mxu0 0.0
  %1109 = vmatprep.subr.mxu0 0.0
  %1110 = vmatpush2.msra.mxu0 0.0
  %1111 = vmatprep.subr.mxu0 0.0
  %1112 = vmatpush2.msra.mxu0 0.0
  %1113 = vmatprep.subr.mxu0 0.0
  %1114 = vmatpush2.msra.mxu0 0.0
  %1115 = vmatprep.subr.mxu0 0.0
  %1116 = vmatpush2.msra.mxu0 0.0
  %1117 = vmatprep.subr.mxu0 0.0
  %1118 = vmatpush2.msra.mxu0 0.0
  %1119 = vmatprep.subr.mxu0 0.0
  %1120 = vmatpush2.msra.mxu0 0.0
  %1121 = vmatprep.subr.mxu0 0.0
  %1122 = vmatpush2.msra.mxu0 0.0
  %1123 = vmatprep.subr.mxu0 0.0
  %1124 = vmatpush2.msra.mxu0 0.0
  %1125 = vmatprep.subr.mxu0 0.0
  %1126 = vmatpush2.msra.mxu0 0.0
  %1127 = vmatprep.subr.mxu0 0.0
  %1128 = vmatpush2.msra.mxu0 0.0
  %1129 = vmatprep.mubr.f32.mxu0 0.0
  %1130 = vmatmul.mubr.f32.gmra.mxu0 %v1063
  %v1131 = vpop.f32.mrf.mxu0
  %v1132 = vadd.f32 0.0, %v1131
  %v1133 = vpop.f32.mrf.mxu0
  %1134 = vdwg.mxu0
  %v1135 = vmul.f32 %v1132, %v656
  %v1136 = vmul.f32 %v1135, %v1135
  %v1138 = vrot.slane %v1136, 7
  %v1140 = vsub.f32 %v1135, %v1138
  %v1141 = vadd.f32 %v1140, 1e-05
  %v1142 = vrsqrt.pop %v1141
  %v1144 = vrot.slane %v1142, 3
  %v1146 = vmul.f32 %v71, %v1144
  %v1148 = vrot.slane %v1146, 6
  %v1150 = vmul.f32 %v1135, %v1148
  %v1152 = vrot.slane %v1150, 1
  %v1154 = vsub.f32 %v71, %v1152
  %v1156 = vrot.slane %v1154, 6
  %v1158 = vsel %vm297, %v1148, %v1156
  %v1160 = vsel %vm392, %v1158, 0
  %1162 = vmatprep.subr.mxu0 0.0
  %1163 = vmatpush1.msra.mxu0 0.0
  %1164 = vmatprep.subr.mxu0 0.0
  %1165 = vmatpush1.msra.mxu0 0.0
  %1166 = vmatprep.subr.mxu0 0.0
  %1167 = vmatpush1.msra.mxu0 0.0
  %1168 = vmatprep.subr.mxu0 0.0
  %1169 = vmatpush1.msra.mxu0 0.0
  %1170 = vmatprep.subr.mxu0 0.0
  %1171 = vmatpush1.msra.mxu0 0.0
  %1172 = vmatprep.subr.mxu0 0.0
  %1173 = vmatpush1.msra.mxu0 0.0
  %1174 = vmatprep.subr.mxu0 0.0
  %1175 = vmatpush1.msra.mxu0 0.0
  %1176 = vmatprep.subr.mxu0 0.0
  %1177 = vmatpush1.msra.mxu0 0.0
  %1178 = vmatprep.subr.mxu0 0.0
  %1179 = vmatpush1.msra.mxu0 0.0
  %1180 = vmatprep.subr.mxu0 0.0
  %1181 = vmatpush1.msra.mxu0 0.0
  %1182 = vmatprep.subr.mxu0 0.0
  %1183 = vmatpush1.msra.mxu0 0.0
  %1184 = vmatprep.subr.mxu0 0.0
  %1185 = vmatpush1.msra.mxu0 0.0
  %1186 = vmatprep.subr.mxu0 0.0
  %1187 = vmatpush1.msra.mxu0 0.0
  %1188 = vmatprep.subr.mxu0 0.0
  %1189 = vmatpush1.msra.mxu0 0.0
  %1190 = vmatprep.subr.mxu0 0.0
  %1191 = vmatpush1.msra.mxu0 0.0
  %1192 = vmatprep.subr.mxu0 0.0
  %1193 = vmatpush1.msra.mxu0 %v685
  %1194 = vmatprep.subr.mxu0 0.0
  %1195 = vmatpush2.msra.mxu0 0.0
  %1196 = vmatprep.subr.mxu0 0.0
  %1197 = vmatpush2.msra.mxu0 0.0
  %1198 = vmatprep.subr.mxu0 0.0
  %1199 = vmatpush2.msra.mxu0 0.0
  %1200 = vmatprep.subr.mxu0 0.0
  %1201 = vmatpush2.msra.mxu0 0.0
  %1202 = vmatprep.subr.mxu0 0.0
  %1203 = vmatpush2.msra.mxu0 0.0
  %1204 = vmatprep.subr.mxu0 0.0
  %1205 = vmatpush2.msra.mxu0 0.0
  %1206 = vmatprep.subr.mxu0 0.0
  %1207 = vmatpush2.msra.mxu0 0.0
  %1208 = vmatprep.subr.mxu0 0.0
  %1209 = vmatpush2.msra.mxu0 0.0
  %1210 = vmatprep.subr.mxu0 0.0
  %1211 = vmatpush2.msra.mxu0 0.0
  %1212 = vmatprep.subr.mxu0 0.0
  %1213 = vmatpush2.msra.mxu0 0.0
  %1214 = vmatprep.subr.mxu0 0.0
  %1215 = vmatpush2.msra.mxu0 0.0
  %1216 = vmatprep.subr.mxu0 0.0
  %1217 = vmatpush2.msra.mxu0 0.0
  %1218 = vmatprep.subr.mxu0 0.0
  %1219 = vmatpush2.msra.mxu0 0.0
  %1220 = vmatprep.subr.mxu0 0.0
  %1221 = vmatpush2.msra.mxu0 0.0
  %1222 = vmatprep.subr.mxu0 0.0
  %1223 = vmatpush2.msra.mxu0 0.0
  %1224 = vmatprep.subr.mxu0 0.0
  %1225 = vmatpush2.msra.mxu0 0.0
  %1226 = vmatprep.mubr.f32.mxu0 0.0
  %1227 = vmatmul.mubr.f32.gmra.mxu0 %v1160
  %v1228 = vpop.f32.mrf.mxu0
  %v1229 = vadd.f32 0.0, %v1228
  %v1230 = vpop.f32.mrf.mxu0
  %1231 = vdwg.mxu0
  %v1232 = vlaneseq
  %v1233 = vshrl.u32 %v1232, 7
  %v1234 = vsub.s32 0, %v1233
  %v1235 = vrot.slane %v1229, %v1234
  %v1236 = vmul.f32 %v1045, %v1235
  %v1237 = vlaneseq
  %v1238 = vshrl.u32 %v1237, 7
  %v1239 = vsub.s32 1, %v1238
  %v1240 = vrot.slane %v1229, %v1239
  %v1241 = vadd.f32 %v1236, %v1240
  %v1242 = vld [vmem:[%s1] sm:$0xff]
  %v1243 = vadd.s32 %v78, 72
  %v1244 = vadd.s32 %v78, 80
  %v1245 = vadd.s32 %v78, 88
  %v1246 = vadd.s32 %v78, 96
  %v1247 = vadd.s32 %v78, 104
  %v1248 = vadd.s32 %v78, 112
  %v1249 = vadd.s32 %v78, 120
  %v1250 = vadd.s32 %v78, 128
  %v1251 = vadd.s32 %v78, 136
  %v1252 = vadd.s32 %v78, 144
  %v1253 = vadd.s32 %v78, 152
  %v1254 = vadd.s32 %v78, 160
  %v1255 = vadd.s32 %v78, 168
  %v1256 = vadd.s32 %v78, 176
  %v1257 = vadd.s32 %v78, 184
  %v1258 = vadd.s32 %v78, 192
  %v1259 = vmul.u32 %v88, 100
  %vm1260 = vcmp.ge.s32.totalorder %v78, %v1259
  %vm1261 = vcmp.ge.s32.totalorder %v79, %v1259
  %vm1262 = vcmp.ge.s32.totalorder %v80, %v1259
  %vm1263 = vcmp.ge.s32.totalorder %v81, %v1259
  %vm1264 = vcmp.ge.s32.totalorder %v82, %v1259
  %vm1265 = vcmp.ge.s32.totalorder %v83, %v1259
  %vm1266 = vcmp.ge.s32.totalorder %v84, %v1259
  %vm1267 = vcmp.ge.s32.totalorder %v85, %v1259
  %vm1268 = vcmp.ge.s32.totalorder %v86, %v1259
  %vm1269 = vcmp.ge.s32.totalorder %v1243, %v1259
  %vm1270 = vcmp.ge.s32.totalorder %v1244, %v1259
  %vm1271 = vcmp.ge.s32.totalorder %v1245, %v1259
  %vm1272 = vcmp.ge.s32.totalorder %v1246, %v1259
  %vm1273 = vcmp.ge.s32.totalorder %v1247, %v1259
  %vm1274 = vcmp.ge.s32.totalorder %v1248, %v1259
  %vm1275 = vcmp.ge.s32.totalorder %v1249, %v1259
  %vm1276 = vcmp.ge.s32.totalorder %v1250, %v1259
  %vm1277 = vcmp.ge.s32.totalorder %v1251, %v1259
  %vm1278 = vcmp.ge.s32.totalorder %v1252, %v1259
  %vm1279 = vcmp.ge.s32.totalorder %v1253, %v1259
  %vm1280 = vcmp.ge.s32.totalorder %v1254, %v1259
  %vm1281 = vcmp.ge.s32.totalorder %v1255, %v1259
  %vm1282 = vcmp.ge.s32.totalorder %v1256, %v1259
  %vm1283 = vcmp.ge.s32.totalorder %v1257, %v1259
  %vm1284 = vcmp.ge.s32.totalorder %v1258, %v1259
  %v1285 = vmul.u32 %v99, 100
  %vm1286 = vcmp.lt.s32.totalorder %v78, %v1285
  %vm1287 = vcmp.lt.s32.totalorder %v79, %v1285
  %vm1288 = vcmp.lt.s32.totalorder %v80, %v1285
  %vm1289 = vcmp.lt.s32.totalorder %v81, %v1285
  %vm1290 = vcmp.lt.s32.totalorder %v82, %v1285
  %vm1291 = vcmp.lt.s32.totalorder %v83, %v1285
  %vm1292 = vcmp.lt.s32.totalorder %v84, %v1285
  %vm1293 = vcmp.lt.s32.totalorder %v85, %v1285
  %vm1294 = vcmp.lt.s32.totalorder %v86, %v1285
  %vm1295 = vcmp.lt.s32.totalorder %v1243, %v1285
  %vm1296 = vcmp.lt.s32.totalorder %v1244, %v1285
  %vm1297 = vcmp.lt.s32.totalorder %v1245, %v1285
  %vm1298 = vcmp.lt.s32.totalorder %v1246, %v1285
  %vm1299 = vcmp.lt.s32.totalorder %v1247, %v1285
  %vm1300 = vcmp.lt.s32.totalorder %v1248, %v1285
  %vm1301 = vcmp.lt.s32.totalorder %v1249, %v1285
  %vm1302 = vcmp.lt.s32.totalorder %v1250, %v1285
  %vm1303 = vcmp.lt.s32.totalorder %v1251, %v1285
  %vm1304 = vcmp.lt.s32.totalorder %v1252, %v1285
  %vm1305 = vcmp.lt.s32.totalorder %v1253, %v1285
  %vm1306 = vcmp.lt.s32.totalorder %v1254, %v1285
  %vm1307 = vcmp.lt.s32.totalorder %v1255, %v1285
  %vm1308 = vcmp.lt.s32.totalorder %v1256, %v1285
  %vm1309 = vcmp.lt.s32.totalorder %v1257, %v1285
  %vm1310 = vcmp.lt.s32.totalorder %v1258, %v1285
  %vm1311 = vmand %vm1260, %vm1286
  %vm1312 = vmand %vm1261, %vm1287
  %vm1313 = vmand %vm1262, %vm1288
  %vm1314 = vmand %vm1263, %vm1289
  %vm1315 = vmand %vm1264, %vm1290
  %vm1316 = vmand %vm1265, %vm1291
  %vm1317 = vmand %vm1266, %vm1292
  %vm1318 = vmand %vm1267, %vm1293
  %vm1319 = vmand %vm1268, %vm1294
  %vm1320 = vmand %vm1269, %vm1295
  %vm1321 = vmand %vm1270, %vm1296
  %vm1322 = vmand %vm1271, %vm1297
  %vm1323 = vmand %vm1272, %vm1298
  %vm1324 = vmand %vm1273, %vm1299
  %vm1325 = vmand %vm1274, %vm1300
  %vm1326 = vmand %vm1275, %vm1301
  %vm1327 = vmand %vm1276, %vm1302
  %vm1328 = vmand %vm1277, %vm1303
  %vm1329 = vmand %vm1278, %vm1304
  %vm1330 = vmand %vm1279, %vm1305
  %vm1331 = vmand %vm1280, %vm1306
  %vm1332 = vmand %vm1281, %vm1307
  %vm1333 = vmand %vm1282, %vm1308
  %vm1334 = vmand %vm1283, %vm1309
  %vm1335 = vmand %vm1284, %vm1310
  %v1336 = vsel %vm1311, 1, 0
  %v1337 = vsel %vm1312, 1, 0
  %v1338 = vsel %vm1313, 1, 0
  %v1339 = vsel %vm1314, 1, 0
  %v1340 = vsel %vm1315, 1, 0
  %v1341 = vsel %vm1316, 1, 0
  %v1342 = vsel %vm1317, 1, 0
  %v1343 = vsel %vm1318, 1, 0
  %v1344 = vsel %vm1319, 1, 0
  %v1345 = vsel %vm1320, 1, 0
  %v1346 = vsel %vm1321, 1, 0
  %v1347 = vsel %vm1322, 1, 0
  %v1348 = vsel %vm1323, 1, 0
  %v1349 = vsel %vm1324, 1, 0
  %v1350 = vsel %vm1325, 1, 0
  %v1351 = vsel %vm1326, 1, 0
  %v1352 = vsel %vm1327, 1, 0
  %v1353 = vsel %vm1328, 1, 0
  %v1354 = vsel %vm1329, 1, 0
  %v1355 = vsel %vm1330, 1, 0
  %v1356 = vsel %vm1331, 1, 0
  %v1357 = vsel %vm1332, 1, 0
  %v1358 = vsel %vm1333, 1, 0
  %v1359 = vsel %vm1334, 1, 0
  %v1360 = vsel %vm1335, 1, 0
  %v1361 = vcvt.s32.f32 %v1336
  %v1362 = vcvt.s32.f32 %v1337
  %v1363 = vcvt.s32.f32 %v1338
  %v1364 = vcvt.s32.f32 %v1339
  %v1365 = vcvt.s32.f32 %v1340
  %v1366 = vcvt.s32.f32 %v1341
  %v1367 = vcvt.s32.f32 %v1342
  %v1368 = vcvt.s32.f32 %v1343
  %v1369 = vcvt.s32.f32 %v1344
  %v1370 = vcvt.s32.f32 %v1345
  %v1371 = vcvt.s32.f32 %v1346
  %v1372 = vcvt.s32.f32 %v1347
  %v1373 = vcvt.s32.f32 %v1348
  %v1374 = vcvt.s32.f32 %v1349
  %v1375 = vcvt.s32.f32 %v1350
  %v1376 = vcvt.s32.f32 %v1351
  %v1377 = vcvt.s32.f32 %v1352
  %v1378 = vcvt.s32.f32 %v1353
  %v1379 = vcvt.s32.f32 %v1354
  %v1380 = vcvt.s32.f32 %v1355
  %v1381 = vcvt.s32.f32 %v1356
  %v1382 = vcvt.s32.f32 %v1357
  %v1383 = vcvt.s32.f32 %v1358
  %v1384 = vcvt.s32.f32 %v1359
  %v1385 = vcvt.s32.f32 %v1360
  %v1386 = vadd.s32 %v88, 128
  %v1387 = vmul.u32 %v78, 100
  %vm1388 = vcmp.ge.s32.totalorder %v88, %v1387
  %vm1389 = vcmp.ge.s32.totalorder %v1386, %v1387
  %v1390 = vmul.u32 %v139, 100
  %vm1391 = vcmp.lt.s32.totalorder %v88, %v1390
  %vm1392 = vcmp.lt.s32.totalorder %v1386, %v1390
  %vm1393 = vmand %vm1388, %vm1391
  %vm1394 = vmand %vm1389, %vm1392
  %v1395 = vsel %vm1393, 1, 0
  %v1396 = vsel %vm1394, 1, 0
  %v1397 = vcvt.s32.f32 %v1395
  %v1398 = vcvt.s32.f32 %v1396
  %v1399 = vmul.u32 %v88, 64
  %vm1400 = vcmp.ge.s32.totalorder %v78, %v1399
  %vm1401 = vcmp.ge.s32.totalorder %v79, %v1399
  %vm1402 = vcmp.ge.s32.totalorder %v80, %v1399
  %vm1403 = vcmp.ge.s32.totalorder %v81, %v1399
  %vm1404 = vcmp.ge.s32.totalorder %v82, %v1399
  %vm1405 = vcmp.ge.s32.totalorder %v83, %v1399
  %vm1406 = vcmp.ge.s32.totalorder %v84, %v1399
  %vm1407 = vcmp.ge.s32.totalorder %v85, %v1399
  %vm1408 = vcmp.ge.s32.totalorder %v86, %v1399
  %vm1409 = vcmp.ge.s32.totalorder %v1243, %v1399
  %vm1410 = vcmp.ge.s32.totalorder %v1244, %v1399
  %vm1411 = vcmp.ge.s32.totalorder %v1245, %v1399
  %vm1412 = vcmp.ge.s32.totalorder %v1246, %v1399
  %vm1413 = vcmp.ge.s32.totalorder %v1247, %v1399
  %vm1414 = vcmp.ge.s32.totalorder %v1248, %v1399
  %vm1415 = vcmp.ge.s32.totalorder %v1249, %v1399
  %v1416 = vmul.u32 %v99, 64
  %vm1417 = vcmp.lt.s32.totalorder %v78, %v1416
  %vm1418 = vcmp.lt.s32.totalorder %v79, %v1416
  %vm1419 = vcmp.lt.s32.totalorder %v80, %v1416
  %vm1420 = vcmp.lt.s32.totalorder %v81, %v1416
  %vm1421 = vcmp.lt.s32.totalorder %v82, %v1416
  %vm1422 = vcmp.lt.s32.totalorder %v83, %v1416
  %vm1423 = vcmp.lt.s32.totalorder %v84, %v1416
  %vm1424 = vcmp.lt.s32.totalorder %v85, %v1416
  %vm1425 = vcmp.lt.s32.totalorder %v86, %v1416
  %vm1426 = vcmp.lt.s32.totalorder %v1243, %v1416
  %vm1427 = vcmp.lt.s32.totalorder %v1244, %v1416
  %vm1428 = vcmp.lt.s32.totalorder %v1245, %v1416
  %vm1429 = vcmp.lt.s32.totalorder %v1246, %v1416
  %vm1430 = vcmp.lt.s32.totalorder %v1247, %v1416
  %vm1431 = vcmp.lt.s32.totalorder %v1248, %v1416
  %vm1432 = vcmp.lt.s32.totalorder %v1249, %v1416
  %vm1433 = vmand %vm1400, %vm1417
  %vm1434 = vmand %vm1401, %vm1418
  %vm1435 = vmand %vm1402, %vm1419
  %vm1436 = vmand %vm1403, %vm1420
  %vm1437 = vmand %vm1404, %vm1421
  %vm1438 = vmand %vm1405, %vm1422
  %vm1439 = vmand %vm1406, %vm1423
  %vm1440 = vmand %vm1407, %vm1424
  %vm1441 = vmand %vm1408, %vm1425
  %vm1442 = vmand %vm1409, %vm1426
  %vm1443 = vmand %vm1410, %vm1427
  %vm1444 = vmand %vm1411, %vm1428
  %vm1445 = vmand %vm1412, %vm1429
  %vm1446 = vmand %vm1413, %vm1430
  %vm1447 = vmand %vm1414, %vm1431
  %vm1448 = vmand %vm1415, %vm1432
  %v1449 = vsel %vm1433, 1, 0
  %v1450 = vsel %vm1434, 1, 0
  %v1451 = vsel %vm1435, 1, 0
  %v1452 = vsel %vm1436, 1, 0
  %v1453 = vsel %vm1437, 1, 0
  %v1454 = vsel %vm1438, 1, 0
  %v1455 = vsel %vm1439, 1, 0
  %v1456 = vsel %vm1440, 1, 0
  %v1457 = vsel %vm1441, 1, 0
  %v1458 = vsel %vm1442, 1, 0
  %v1459 = vsel %vm1443, 1, 0
  %v1460 = vsel %vm1444, 1, 0
  %v1461 = vsel %vm1445, 1, 0
  %v1462 = vsel %vm1446, 1, 0
  %v1463 = vsel %vm1447, 1, 0
  %v1464 = vsel %vm1448, 1, 0
  %v1465 = vcvt.s32.f32 %v1449
  %v1466 = vcvt.s32.f32 %v1450
  %v1467 = vcvt.s32.f32 %v1451
  %v1468 = vcvt.s32.f32 %v1452
  %v1469 = vcvt.s32.f32 %v1453
  %v1470 = vcvt.s32.f32 %v1454
  %v1471 = vcvt.s32.f32 %v1455
  %v1472 = vcvt.s32.f32 %v1456
  %v1473 = vcvt.s32.f32 %v1457
  %v1474 = vcvt.s32.f32 %v1458
  %v1475 = vcvt.s32.f32 %v1459
  %v1476 = vcvt.s32.f32 %v1460
  %v1477 = vcvt.s32.f32 %v1461
  %v1478 = vcvt.s32.f32 %v1462
  %v1479 = vcvt.s32.f32 %v1463
  %v1480 = vcvt.s32.f32 %v1464
  %v1481 = vmul.u32 %v78, 64
  %vm1482 = vcmp.ge.s32.totalorder %v88, %v1481
  %v1483 = vmul.u32 %v139, 64
  %vm1484 = vcmp.lt.s32.totalorder %v88, %v1483
  %vm1485 = vmand %vm1482, %vm1484
  %v1486 = vsel %vm1485, 1, 0
  %v1487 = vcvt.s32.f32 %v1486
  %v1488 = vld [vmem:[%s7] sm:$0xff]
  %v1489 = vld [vmem:[%s7 + $0x8] sm:$0xff]
  %v1490 = vld [vmem:[%s7 + $0x10] sm:$0xff]
  %v1491 = vld [vmem:[%s7 + $0x18] sm:$0xff]
  %v1492 = vld [vmem:[%s7 + $0x20] sm:$0xff]
  %v1493 = vld [vmem:[%s7 + $0x28] sm:$0xff]
  %v1494 = vld [vmem:[%s7 + $0x30] sm:$0xff]
  %v1495 = vld [vmem:[%s7 + $0x38] sm:$0xff]
  %v1496 = vld [vmem:[%s7 + $0x40] sm:$0xff]
  %v1497 = vld [vmem:[%s7 + $0x48] sm:$0xff]
  %v1498 = vld [vmem:[%s7 + $0x50] sm:$0xff]
  %v1499 = vld [vmem:[%s7 + $0x58] sm:$0xff]
  %v1500 = vld [vmem:[%s7 + $0x60] sm:$0xff]
  %v1501 = vld [vmem:[%s7 + $0x68] sm:$0xff]
  %v1502 = vld [vmem:[%s7 + $0x70] sm:$0xff]
  %v1503 = vld [vmem:[%s7 + $0x78] sm:$0xff]
  %v1504 = vld [vmem:[%s7 + $0x80] sm:$0xff]
  %v1505 = vld [vmem:[%s7 + $0x88] sm:$0xff]
  %v1506 = vld [vmem:[%s7 + $0x90] sm:$0xff]
  %v1507 = vld [vmem:[%s7 + $0x98] sm:$0xff]
  %v1508 = vld [vmem:[%s7 + $0xa0] sm:$0xff]
  %v1509 = vld [vmem:[%s7 + $0xa8] sm:$0xff]
  %v1510 = vld [vmem:[%s7 + $0xb0] sm:$0xff]
  %v1511 = vld [vmem:[%s7 + $0xb8] sm:$0xff]
  %v1512 = vld [vmem:[%s7 + $0xc0] sm:$0xff]
  %v1513 = vld [vmem:[%s7 + $0xc8] sm:$0xff]
  %v1514 = vld [vmem:[%s7 + $0xd0] sm:$0xff]
  %v1515 = vld [vmem:[%s7 + $0xd8] sm:$0xff]
  %v1516 = vld [vmem:[%s7 + $0xe0] sm:$0xff]
  %v1517 = vld [vmem:[%s7 + $0xe8] sm:$0xff]
  %v1518 = vld [vmem:[%s7 + $0xf0] sm:$0xff]
  %v1519 = vld [vmem:[%s7 + $0xf8] sm:$0xff]
  %v1520 = vld [vmem:[%s7 + $0x100] sm:$0xff]
  %v1521 = vld [vmem:[%s7 + $0x108] sm:$0xff]
  %v1522 = vld [vmem:[%s7 + $0x110] sm:$0xff]
  %v1523 = vld [vmem:[%s7 + $0x118] sm:$0xff]
  %v1524 = vld [vmem:[%s7 + $0x120] sm:$0xff]
  %v1525 = vld [vmem:[%s7 + $0x128] sm:$0xff]
  %v1526 = vld [vmem:[%s7 + $0x130] sm:$0xff]
  %v1527 = vld [vmem:[%s7 + $0x138] sm:$0xff]
  %v1528 = vld [vmem:[%s7 + $0x140] sm:$0xff]
  %v1529 = vld [vmem:[%s7 + $0x148] sm:$0xff]
  %v1530 = vld [vmem:[%s7 + $0x150] sm:$0xff]
  %v1531 = vld [vmem:[%s7 + $0x158] sm:$0xff]
  %v1532 = vld [vmem:[%s7 + $0x160] sm:$0xff]
  %v1533 = vld [vmem:[%s7 + $0x168] sm:$0xff]
  %v1534 = vld [vmem:[%s7 + $0x170] sm:$0xff]
  %v1535 = vld [vmem:[%s7 + $0x178] sm:$0xff]
  %v1536 = vld [vmem:[%s7 + $0x180] sm:$0xff]
  %v1537 = vld [vmem:[%s7 + $0x188] sm:$0xff]
  %v1538 = vld [vmem:[%s7 + $0x190] sm:$0xff]
  %v1539 = vld [vmem:[%s7 + $0x198] sm:$0xff]
  %v1540 = vld [vmem:[%s7 + $0x1a0] sm:$0xff]
  %v1541 = vld [vmem:[%s7 + $0x1a8] sm:$0xff]
  %v1542 = vld [vmem:[%s7 + $0x1b0] sm:$0xff]
  %v1543 = vld [vmem:[%s7 + $0x1b8] sm:$0xff]
  %v1544 = vld [vmem:[%s7 + $0x1c0] sm:$0xff]
  %v1545 = vld [vmem:[%s7 + $0x1c8] sm:$0xff]
  %v1546 = vld [vmem:[%s7 + $0x1d0] sm:$0xff]
  %v1547 = vld [vmem:[%s7 + $0x1d8] sm:$0xff]
  %v1548 = vld [vmem:[%s7 + $0x1e0] sm:$0xff]
  %v1549 = vld [vmem:[%s7 + $0x1e8] sm:$0xff]
  %v1550 = vld [vmem:[%s7 + $0x1f0] sm:$0xff]
  %v1551 = vld [vmem:[%s7 + $0x1f8] sm:$0xff]
  %v1552 = vld [vmem:[%s7 + $0x200] sm:$0xff]
  %v1553 = vld [vmem:[%s7 + $0x208] sm:$0xff]
  %v1554 = vld [vmem:[%s7 + $0x210] sm:$0xff]
  %v1555 = vld [vmem:[%s7 + $0x218] sm:$0xff]
  %v1556 = vld [vmem:[%s7 + $0x220] sm:$0xff]
  %v1557 = vld [vmem:[%s7 + $0x228] sm:$0xff]
  %v1558 = vld [vmem:[%s7 + $0x230] sm:$0xff]
  %v1559 = vld [vmem:[%s7 + $0x238] sm:$0xff]
  %v1560 = vld [vmem:[%s7 + $0x240] sm:$0xff]
  %v1561 = vld [vmem:[%s7 + $0x248] sm:$0xff]
  %v1562 = vld [vmem:[%s7 + $0x250] sm:$0xff]
  %v1563 = vld [vmem:[%s7 + $0x258] sm:$0xff]
  %v1564 = vld [vmem:[%s7 + $0x260] sm:$0xff]
  %v1565 = vld [vmem:[%s7 + $0x268] sm:$0xff]
  %v1566 = vld [vmem:[%s7 + $0x270] sm:$0xff]
  %v1567 = vld [vmem:[%s7 + $0x278] sm:$0xff]
  %v1568 = vld [vmem:[%s7 + $0x280] sm:$0xff]
  %v1569 = vld [vmem:[%s7 + $0x288] sm:$0xff]
  %v1570 = vld [vmem:[%s7 + $0x290] sm:$0xff]
  %v1571 = vld [vmem:[%s7 + $0x298] sm:$0xff]
  %v1572 = vld [vmem:[%s7 + $0x2a0] sm:$0xff]
  %v1573 = vld [vmem:[%s7 + $0x2a8] sm:$0xff]
  %v1574 = vld [vmem:[%s7 + $0x2b0] sm:$0xff]
  %v1575 = vld [vmem:[%s7 + $0x2b8] sm:$0xff]
  %v1576 = vld [vmem:[%s7 + $0x2c0] sm:$0xff]
  %v1577 = vld [vmem:[%s7 + $0x2c8] sm:$0xff]
  %v1578 = vld [vmem:[%s7 + $0x2d0] sm:$0xff]
  %v1579 = vld [vmem:[%s7 + $0x2d8] sm:$0xff]
  %v1580 = vld [vmem:[%s7 + $0x2e0] sm:$0xff]
  %v1581 = vld [vmem:[%s7 + $0x2e8] sm:$0xff]
  %v1582 = vld [vmem:[%s7 + $0x2f0] sm:$0xff]
  %v1583 = vld [vmem:[%s7 + $0x2f8] sm:$0xff]
  %v1584 = vld [vmem:[%s7 + $0x300] sm:$0xff]
  %v1585 = vld [vmem:[%s7 + $0x308] sm:$0xff]
  %v1586 = vld [vmem:[%s7 + $0x310] sm:$0xff]
  %v1587 = vld [vmem:[%s7 + $0x318] sm:$0xff]
  %v1588 = vld [vmem:[%s7 + $0x320] sm:$0xff]
  %v1589 = vld [vmem:[%s7 + $0x328] sm:$0xff]
  %v1590 = vld [vmem:[%s7 + $0x330] sm:$0xff]
  %v1591 = vld [vmem:[%s7 + $0x338] sm:$0xff]
  %v1592 = vld [vmem:[%s7 + $0x340] sm:$0xff]
  %v1593 = vld [vmem:[%s7 + $0x348] sm:$0xff]
  %v1594 = vld [vmem:[%s7 + $0x350] sm:$0xff]
  %v1595 = vld [vmem:[%s7 + $0x358] sm:$0xff]
  %v1597 = vcombine.high %v1242, %v1242
  %v1599 = vunpack.c.l.s4 1983009808
  %v1600 = vunpack.c.0.s8 %v1599
  %v1601 = vlaneseq
  %v1602 = vshrl.u32 %v1601, 7
  %v1603 = vsub.s32 %v1600, %v1602
  %v1604 = vrot.slane %v1242, %v1603
  %v1606 = vunpack.c.l.s4 1983009808
  %v1607 = vunpack.c.0.s8 %v1606
  %v1608 = vlaneseq
  %v1609 = vshrl.u32 %v1608, 7
  %v1610 = vsub.s32 %v1607, %v1609
  %v1611 = vrot.slane %v1597, %v1610
  %v1612 = vcombine.high %v1604, %v1604
  %v1613 = vcombine.high %v1611, %v1611
  %vm1617 = vcmask 392192
  %v1618 = vsel %vm1617, %v1613, 0
  %1620 = vmatprep.subr.mxu0 %v1519
  %1621 = vmatpush1.msra.mxu0 %v1518
  %1622 = vmatprep.subr.mxu0 %v1517
  %1623 = vmatpush1.msra.mxu0 %v1516
  %1624 = vmatprep.subr.mxu0 %v1515
  %1625 = vmatpush1.msra.mxu0 %v1514
  %1626 = vmatprep.subr.mxu0 %v1513
  %1627 = vmatpush1.msra.mxu0 %v1512
  %1628 = vmatprep.subr.mxu0 %v1511
  %1629 = vmatpush1.msra.mxu0 %v1510
  %1630 = vmatprep.subr.mxu0 %v1509
  %1631 = vmatpush1.msra.mxu0 %v1508
  %1632 = vmatprep.subr.mxu0 %v1507
  %1633 = vmatpush1.msra.mxu0 %v1506
  %1634 = vmatprep.subr.mxu0 %v1505
  %1635 = vmatpush1.msra.mxu0 %v1504
  %1636 = vmatprep.subr.mxu0 %v1503
  %1637 = vmatpush1.msra.mxu0 %v1502
  %1638 = vmatprep.subr.mxu0 %v1501
  %1639 = vmatpush1.msra.mxu0 %v1500
  %1640 = vmatprep.subr.mxu0 %v1499
  %1641 = vmatpush1.msra.mxu0 %v1498
  %1642 = vmatprep.subr.mxu0 %v1497
  %1643 = vmatpush1.msra.mxu0 %v1496
  %1644 = vmatprep.subr.mxu0 %v1495
  %1645 = vmatpush1.msra.mxu0 %v1494
  %1646 = vmatprep.subr.mxu0 %v1493
  %1647 = vmatpush1.msra.mxu0 %v1492
  %1648 = vmatprep.subr.mxu0 %v1491
  %1649 = vmatpush1.msra.mxu0 %v1490
  %1650 = vmatprep.subr.mxu0 %v1489
  %1651 = vmatpush1.msra.mxu0 %v1488
  %1652 = vmatprep.subr.mxu0 %v1551
  %1653 = vmatpush2.msra.mxu0 %v1550
  %1654 = vmatprep.subr.mxu0 %v1549
  %1655 = vmatpush2.msra.mxu0 %v1548
  %1656 = vmatprep.subr.mxu0 %v1547
  %1657 = vmatpush2.msra.mxu0 %v1546
  %1658 = vmatprep.subr.mxu0 %v1545
  %1659 = vmatpush2.msra.mxu0 %v1544
  %1660 = vmatprep.subr.mxu0 %v1543
  %1661 = vmatpush2.msra.mxu0 %v1542
  %1662 = vmatprep.subr.mxu0 %v1541
  %1663 = vmatpush2.msra.mxu0 %v1540
  %1664 = vmatprep.subr.mxu0 %v1539
  %1665 = vmatpush2.msra.mxu0 %v1538
  %1666 = vmatprep.subr.mxu0 %v1537
  %1667 = vmatpush2.msra.mxu0 %v1536
  %1668 = vmatprep.subr.mxu0 %v1535
  %1669 = vmatpush2.msra.mxu0 %v1534
  %1670 = vmatprep.subr.mxu0 %v1533
  %1671 = vmatpush2.msra.mxu0 %v1532
  %1672 = vmatprep.subr.mxu0 %v1531
  %1673 = vmatpush2.msra.mxu0 %v1530
  %1674 = vmatprep.subr.mxu0 %v1529
  %1675 = vmatpush2.msra.mxu0 %v1528
  %1676 = vmatprep.subr.mxu0 %v1527
  %1677 = vmatpush2.msra.mxu0 %v1526
  %1678 = vmatprep.subr.mxu0 %v1525
  %1679 = vmatpush2.msra.mxu0 %v1524
  %1680 = vmatprep.subr.mxu0 %v1523
  %1681 = vmatpush2.msra.mxu0 %v1522
  %1682 = vmatprep.subr.mxu0 %v1521
  %1683 = vmatpush2.msra.mxu0 %v1520
  %1684 = vmatprep.mubr.f32.mxu0 %v1612
  %1685 = vmatmul.mubr.f32.gmra.mxu0 %v1604
  %v1686 = vpop.f32.mrf.mxu0
  %v1687 = vadd.f32 0.0, %v1686
  %v1688 = vpop.f32.mrf.mxu0
  %v1689 = vadd.f32 0.0, %v1688
  %1690 = vdwg.mxu0
  %1691 = vmatprep.subr.mxu0 %v1583
  %1692 = vmatpush1.msra.mxu0 %v1582
  %1693 = vmatprep.subr.mxu0 %v1581
  %1694 = vmatpush1.msra.mxu0 %v1580
  %1695 = vmatprep.subr.mxu0 %v1579
  %1696 = vmatpush1.msra.mxu0 %v1578
  %1697 = vmatprep.subr.mxu0 %v1577
  %1698 = vmatpush1.msra.mxu0 %v1576
  %1699 = vmatprep.subr.mxu0 %v1575
  %1700 = vmatpush1.msra.mxu0 %v1574
  %1701 = vmatprep.subr.mxu0 %v1573
  %1702 = vmatpush1.msra.mxu0 %v1572
  %1703 = vmatprep.subr.mxu0 %v1571
  %1704 = vmatpush1.msra.mxu0 %v1570
  %1705 = vmatprep.subr.mxu0 %v1569
  %1706 = vmatpush1.msra.mxu0 %v1568
  %1707 = vmatprep.subr.mxu0 %v1567
  %1708 = vmatpush1.msra.mxu0 %v1566
  %1709 = vmatprep.subr.mxu0 %v1565
  %1710 = vmatpush1.msra.mxu0 %v1564
  %1711 = vmatprep.subr.mxu0 %v1563
  %1712 = vmatpush1.msra.mxu0 %v1562
  %1713 = vmatprep.subr.mxu0 %v1561
  %1714 = vmatpush1.msra.mxu0 %v1560
  %1715 = vmatprep.subr.mxu0 %v1559
  %1716 = vmatpush1.msra.mxu0 %v1558
  %1717 = vmatprep.subr.mxu0 %v1557
  %1718 = vmatpush1.msra.mxu0 %v1556
  %1719 = vmatprep.subr.mxu0 %v1555
  %1720 = vmatpush1.msra.mxu0 %v1554
  %1721 = vmatprep.subr.mxu0 %v1553
  %1722 = vmatpush1.msra.mxu0 %v1552
  %1723 = vmatprep.subr.mxu0 0.0
  %1724 = vmatpush2.msra.mxu0 0.0
  %1725 = vmatprep.subr.mxu0 0.0
  %1726 = vmatpush2.msra.mxu0 0.0
  %1727 = vmatprep.subr.mxu0 0.0
  %1728 = vmatpush2.msra.mxu0 0.0
  %1729 = vmatprep.subr.mxu0 0.0
  %1730 = vmatpush2.msra.mxu0 0.0
  %1731 = vmatprep.subr.mxu0 0.0
  %1732 = vmatpush2.msra.mxu0 0.0
  %1733 = vmatprep.subr.mxu0 0.0
  %1734 = vmatpush2.msra.mxu0 0.0
  %1735 = vmatprep.subr.mxu0 0.0
  %1736 = vmatpush2.msra.mxu0 0.0
  %1737 = vmatprep.subr.mxu0 0.0
  %1738 = vmatpush2.msra.mxu0 0.0
  %1739 = vmatprep.subr.mxu0 0.0
  %1740 = vmatpush2.msra.mxu0 0.0
  %1741 = vmatprep.subr.mxu0 0.0
  %1742 = vmatpush2.msra.mxu0 0.0
  %1743 = vmatprep.subr.mxu0 %v1595
  %1744 = vmatpush2.msra.mxu0 %v1594
  %1745 = vmatprep.subr.mxu0 %v1593
  %1746 = vmatpush2.msra.mxu0 %v1592
  %1747 = vmatprep.subr.mxu0 %v1591
  %1748 = vmatpush2.msra.mxu0 %v1590
  %1749 = vmatprep.subr.mxu0 %v1589
  %1750 = vmatpush2.msra.mxu0 %v1588
  %1751 = vmatprep.subr.mxu0 %v1587
  %1752 = vmatpush2.msra.mxu0 %v1586
  %1753 = vmatprep.subr.mxu0 %v1585
  %1754 = vmatpush2.msra.mxu0 %v1584
  %1755 = vmatprep.mubr.f32.mxu0 %v1618
  %1756 = vmatmul.mubr.f32.gmra.mxu0 %v1611
  %v1757 = vpop.f32.mrf.mxu0
  %v1758 = vadd.f32 %v1687, %v1757
  %v1759 = vpop.f32.mrf.mxu0
  %v1760 = vadd.f32 %v1689, %v1759
  %1761 = vdwg.mxu0
  %v1762 = vsel %vm396, %v1758, 0.0
  %v1763 = vrot.slane %v1762, 4
  %v1764 = vadd.f32 %v1762, %v1763
  %v1765 = vrot.slane %v1764, 2
  %v1766 = vadd.f32 %v1764, %v1765
  %v1767 = vrot.slane %v1766, 1
  %v1768 = vadd.f32 %v1766, %v1767
  %v1769 = vsel %vm281, %v1760, 0.0
  %v1770 = vrot.slane %v1769, 4
  %v1771 = vadd.f32 %v1769, %v1770
  %v1772 = vrot.slane %v1771, 2
  %v1773 = vadd.f32 %v1771, %v1772
  %v1774 = vrot.slane %v1773, 1
  %v1775 = vadd.f32 %v1773, %v1774
  %v1776 = vmul.f32 %v1758, %v1758
  %v1777 = vmul.f32 %v1760, %v1760
  %v1778 = vsel %vm396, %v1776, 0.0
  %v1779 = vrot.slane %v1778, 4
  %v1780 = vadd.f32 %v1778, %v1779
  %v1781 = vrot.slane %v1780, 2
  %v1782 = vadd.f32 %v1780, %v1781
  %v1783 = vrot.slane %v1782, 1
  %v1784 = vadd.f32 %v1782, %v1783
  %v1785 = vsel %vm281, %v1777, 0.0
  %v1786 = vrot.slane %v1785, 4
  %v1787 = vadd.f32 %v1785, %v1786
  %v1788 = vrot.slane %v1787, 2
  %v1789 = vadd.f32 %v1787, %v1788
  %v1790 = vrot.slane %v1789, 1
  %v1791 = vadd.f32 %v1789, %v1790
  %v1792 = vsel %vm297, %v1768, %v1784
  %v1793 = vsel %vm297, %v1775, %v1791
  %v1795 = vsel %vm299, %v1793, 0
  %1797 = vmatprep.subr.mxu0 0.0
  %1798 = vmatpush1.msra.mxu0 %v1376
  %1799 = vmatprep.subr.mxu0 0.0
  %1800 = vmatpush1.msra.mxu0 %v1375
  %1801 = vmatprep.subr.mxu0 0.0
  %1802 = vmatpush1.msra.mxu0 %v1374
  %1803 = vmatprep.subr.mxu0 0.0
  %1804 = vmatpush1.msra.mxu0 %v1373
  %1805 = vmatprep.subr.mxu0 0.0
  %1806 = vmatpush1.msra.mxu0 %v1372
  %1807 = vmatprep.subr.mxu0 0.0
  %1808 = vmatpush1.msra.mxu0 %v1371
  %1809 = vmatprep.subr.mxu0 0.0
  %1810 = vmatpush1.msra.mxu0 %v1370
  %1811 = vmatprep.subr.mxu0 0.0
  %1812 = vmatpush1.msra.mxu0 %v1369
  %1813 = vmatprep.subr.mxu0 0.0
  %1814 = vmatpush1.msra.mxu0 %v1368
  %1815 = vmatprep.subr.mxu0 0.0
  %1816 = vmatpush1.msra.mxu0 %v1367
  %1817 = vmatprep.subr.mxu0 0.0
  %1818 = vmatpush1.msra.mxu0 %v1366
  %1819 = vmatprep.subr.mxu0 0.0
  %1820 = vmatpush1.msra.mxu0 %v1365
  %1821 = vmatprep.subr.mxu0 0.0
  %1822 = vmatpush1.msra.mxu0 %v1364
  %1823 = vmatprep.subr.mxu0 0.0
  %1824 = vmatpush1.msra.mxu0 %v1363
  %1825 = vmatprep.subr.mxu0 0.0
  %1826 = vmatpush1.msra.mxu0 %v1362
  %1827 = vmatprep.subr.mxu0 0.0
  %1828 = vmatpush1.msra.mxu0 %v1361
  %1829 = vmatprep.subr.mxu0 0.0
  %1830 = vmatpush2.msra.mxu0 0.0
  %1831 = vmatprep.subr.mxu0 0.0
  %1832 = vmatpush2.msra.mxu0 0.0
  %1833 = vmatprep.subr.mxu0 0.0
  %1834 = vmatpush2.msra.mxu0 0.0
  %1835 = vmatprep.subr.mxu0 0.0
  %1836 = vmatpush2.msra.mxu0 0.0
  %1837 = vmatprep.subr.mxu0 0.0
  %1838 = vmatpush2.msra.mxu0 0.0
  %1839 = vmatprep.subr.mxu0 0.0
  %1840 = vmatpush2.msra.mxu0 0.0
  %1841 = vmatprep.subr.mxu0 0.0
  %1842 = vmatpush2.msra.mxu0 0.0
  %1843 = vmatprep.subr.mxu0 0.0
  %1844 = vmatpush2.msra.mxu0 %v1385
  %1845 = vmatprep.subr.mxu0 0.0
  %1846 = vmatpush2.msra.mxu0 %v1384
  %1847 = vmatprep.subr.mxu0 0.0
  %1848 = vmatpush2.msra.mxu0 %v1383
  %1849 = vmatprep.subr.mxu0 0.0
  %1850 = vmatpush2.msra.mxu0 %v1382
  %1851 = vmatprep.subr.mxu0 0.0
  %1852 = vmatpush2.msra.mxu0 %v1381
  %1853 = vmatprep.subr.mxu0 0.0
  %1854 = vmatpush2.msra.mxu0 %v1380
  %1855 = vmatprep.subr.mxu0 0.0
  %1856 = vmatpush2.msra.mxu0 %v1379
  %1857 = vmatprep.subr.mxu0 0.0
  %1858 = vmatpush2.msra.mxu0 %v1378
  %1859 = vmatprep.subr.mxu0 0.0
  %1860 = vmatpush2.msra.mxu0 %v1377
  %1861 = vmatprep.mubr.f32.mxu0 %v1795
  %1862 = vmatmul.mubr.f32.gmra.mxu0 %v1792
  %v1863 = vpop.f32.mrf.mxu0
  %v1864 = vadd.f32 0.0, %v1863
  %v1865 = vpop.f32.mrf.mxu0
  %1866 = vdwg.mxu0
  %v1867 = vrcp.pop 200.0
  %v1868 = vmul.f32 %v1864, %v1867
  %v1869 = vmul.f32 %v1868, %v1868
  %v1871 = vrot.slane %v1869, 7
  %v1873 = vsub.f32 %v1868, %v1871
  %v1874 = vadd.f32 %v1873, 1e-05
  %v1875 = vrsqrt.pop %v1874
  %v1877 = vrot.slane %v1875, 1
  %v1879 = vmul.f32 %v72, %v1877
  %v1880 = vmul.f32 %v1868, %v1879
  %v1882 = vrot.slane %v1880, 7
  %v1884 = vsub.f32 %v72, %v1882
  %v1885 = vsel %vm297, %v1879, %v1884
  %v1887 = vsel %vm392, %v1885, 0
  %v1890 = vsel %vm396, %v1397, 0
  %v1893 = vsel %vm396, %v1398, 0
  %1895 = vmatprep.subr.mxu0 0.0
  %1896 = vmatpush1.msra.mxu0 0.0
  %1897 = vmatprep.subr.mxu0 0.0
  %1898 = vmatpush1.msra.mxu0 0.0
  %1899 = vmatprep.subr.mxu0 0.0
  %1900 = vmatpush1.msra.mxu0 0.0
  %1901 = vmatprep.subr.mxu0 0.0
  %1902 = vmatpush1.msra.mxu0 0.0
  %1903 = vmatprep.subr.mxu0 0.0
  %1904 = vmatpush1.msra.mxu0 0.0
  %1905 = vmatprep.subr.mxu0 0.0
  %1906 = vmatpush1.msra.mxu0 0.0
  %1907 = vmatprep.subr.mxu0 0.0
  %1908 = vmatpush1.msra.mxu0 0.0
  %1909 = vmatprep.subr.mxu0 0.0
  %1910 = vmatpush1.msra.mxu0 0.0
  %1911 = vmatprep.subr.mxu0 0.0
  %1912 = vmatpush1.msra.mxu0 0.0
  %1913 = vmatprep.subr.mxu0 0.0
  %1914 = vmatpush1.msra.mxu0 0.0
  %1915 = vmatprep.subr.mxu0 0.0
  %1916 = vmatpush1.msra.mxu0 0.0
  %1917 = vmatprep.subr.mxu0 0.0
  %1918 = vmatpush1.msra.mxu0 0.0
  %1919 = vmatprep.subr.mxu0 0.0
  %1920 = vmatpush1.msra.mxu0 0.0
  %1921 = vmatprep.subr.mxu0 0.0
  %1922 = vmatpush1.msra.mxu0 0.0
  %1923 = vmatprep.subr.mxu0 0.0
  %1924 = vmatpush1.msra.mxu0 0.0
  %1925 = vmatprep.subr.mxu0 %v1893
  %1926 = vmatpush1.msra.mxu0 %v1890
  %1927 = vmatprep.subr.mxu0 0.0
  %1928 = vmatpush2.msra.mxu0 0.0
  %1929 = vmatprep.subr.mxu0 0.0
  %1930 = vmatpush2.msra.mxu0 0.0
  %1931 = vmatprep.subr.mxu0 0.0
  %1932 = vmatpush2.msra.mxu0 0.0
  %1933 = vmatprep.subr.mxu0 0.0
  %1934 = vmatpush2.msra.mxu0 0.0
  %1935 = vmatprep.subr.mxu0 0.0
  %1936 = vmatpush2.msra.mxu0 0.0
  %1937 = vmatprep.subr.mxu0 0.0
  %1938 = vmatpush2.msra.mxu0 0.0
  %1939 = vmatprep.subr.mxu0 0.0
  %1940 = vmatpush2.msra.mxu0 0.0
  %1941 = vmatprep.subr.mxu0 0.0
  %1942 = vmatpush2.msra.mxu0 0.0
  %1943 = vmatprep.subr.mxu0 0.0
  %1944 = vmatpush2.msra.mxu0 0.0
  %1945 = vmatprep.subr.mxu0 0.0
  %1946 = vmatpush2.msra.mxu0 0.0
  %1947 = vmatprep.subr.mxu0 0.0
  %1948 = vmatpush2.msra.mxu0 0.0
  %1949 = vmatprep.subr.mxu0 0.0
  %1950 = vmatpush2.msra.mxu0 0.0
  %1951 = vmatprep.subr.mxu0 0.0
  %1952 = vmatpush2.msra.mxu0 0.0
  %1953 = vmatprep.subr.mxu0 0.0
  %1954 = vmatpush2.msra.mxu0 0.0
  %1955 = vmatprep.subr.mxu0 0.0
  %1956 = vmatpush2.msra.mxu0 0.0
  %1957 = vmatprep.subr.mxu0 0.0
  %1958 = vmatpush2.msra.mxu0 0.0
  %1959 = vmatprep.mubr.f32.mxu0 0.0
  %1960 = vmatmul.mubr.f32.gmra.mxu0 %v1887
  %v1961 = vpop.f32.mrf.mxu0
  %v1962 = vadd.f32 0.0, %v1961
  %v1963 = vpop.f32.mrf.mxu0
  %v1964 = vadd.f32 0.0, %v1963
  %1965 = vdwg.mxu0
  %v1966 = vlaneseq
  %v1967 = vshrl.u32 %v1966, 7
  %v1968 = vsub.s32 0, %v1967
  %v1969 = vrot.slane %v1962, %v1968
  %v1970 = vlaneseq
  %v1971 = vshrl.u32 %v1970, 7
  %v1972 = vsub.s32 0, %v1971
  %v1973 = vrot.slane %v1964, %v1972
  %v1974 = vmul.f32 %v1758, %v1969
  %v1975 = vmul.f32 %v1760, %v1973
  %v1976 = vlaneseq
  %v1977 = vshrl.u32 %v1976, 7
  %v1978 = vsub.s32 1, %v1977
  %v1979 = vrot.slane %v1962, %v1978
  %v1980 = vlaneseq
  %v1981 = vshrl.u32 %v1980, 7
  %v1982 = vsub.s32 1, %v1981
  %v1983 = vrot.slane %v1964, %v1982
  %v1984 = vadd.f32 %v1974, %v1979
  %v1985 = vadd.f32 %v1975, %v1983
  %vm1986 = vcmp.gt.f32.partialorder %v1984, 0.0
  %vm1987 = vcmp.gt.f32.partialorder %v1985, 0.0
  %v1988 = vmul.f32 %v1984, 0.01
  %v1989 = vmul.f32 %v1985, 0.01
  %v1990 = vsel %vm1986, %v1984, %v1988
  %v1991 = vsel %vm1987, %v1985, %v1989
  %v1992 = vld [vmem:[%s8] sm:$0xff]
  %v1993 = vld [vmem:[%s8 + $0x8] sm:$0xff]
  %v1994 = vld [vmem:[%s8 + $0x10] sm:$0xff]
  %v1995 = vld [vmem:[%s8 + $0x18] sm:$0xff]
  %v1996 = vld [vmem:[%s8 + $0x20] sm:$0xff]
  %v1997 = vld [vmem:[%s8 + $0x28] sm:$0xff]
  %v1998 = vld [vmem:[%s8 + $0x30] sm:$0xff]
  %v1999 = vld [vmem:[%s8 + $0x38] sm:$0xff]
  %v2000 = vld [vmem:[%s8 + $0x40] sm:$0xff]
  %v2001 = vld [vmem:[%s8 + $0x48] sm:$0xff]
  %v2002 = vld [vmem:[%s8 + $0x50] sm:$0xff]
  %v2003 = vld [vmem:[%s8 + $0x58] sm:$0xff]
  %v2004 = vld [vmem:[%s8 + $0x60] sm:$0xff]
  %v2005 = vld [vmem:[%s8 + $0x68] sm:$0xff]
  %v2006 = vld [vmem:[%s8 + $0x70] sm:$0xff]
  %v2007 = vld [vmem:[%s8 + $0x78] sm:$0xff]
  %v2008 = vld [vmem:[%s8 + $0x80] sm:$0xff]
  %v2009 = vld [vmem:[%s8 + $0x88] sm:$0xff]
  %v2010 = vld [vmem:[%s8 + $0x90] sm:$0xff]
  %v2011 = vld [vmem:[%s8 + $0x98] sm:$0xff]
  %v2012 = vld [vmem:[%s8 + $0xa0] sm:$0xff]
  %v2013 = vld [vmem:[%s8 + $0xa8] sm:$0xff]
  %v2014 = vld [vmem:[%s8 + $0xb0] sm:$0xff]
  %v2015 = vld [vmem:[%s8 + $0xb8] sm:$0xff]
  %v2016 = vld [vmem:[%s8 + $0xc0] sm:$0xff]
  %v2018 = vsel %vm299, %v1991, 0
  %2020 = vmatprep.subr.mxu0 0.0
  %2021 = vmatpush1.msra.mxu0 %v2007
  %2022 = vmatprep.subr.mxu0 0.0
  %2023 = vmatpush1.msra.mxu0 %v2006
  %2024 = vmatprep.subr.mxu0 0.0
  %2025 = vmatpush1.msra.mxu0 %v2005
  %2026 = vmatprep.subr.mxu0 0.0
  %2027 = vmatpush1.msra.mxu0 %v2004
  %2028 = vmatprep.subr.mxu0 0.0
  %2029 = vmatpush1.msra.mxu0 %v2003
  %2030 = vmatprep.subr.mxu0 0.0
  %2031 = vmatpush1.msra.mxu0 %v2002
  %2032 = vmatprep.subr.mxu0 0.0
  %2033 = vmatpush1.msra.mxu0 %v2001
  %2034 = vmatprep.subr.mxu0 0.0
  %2035 = vmatpush1.msra.mxu0 %v2000
  %2036 = vmatprep.subr.mxu0 0.0
  %2037 = vmatpush1.msra.mxu0 %v1999
  %2038 = vmatprep.subr.mxu0 0.0
  %2039 = vmatpush1.msra.mxu0 %v1998
  %2040 = vmatprep.subr.mxu0 0.0
  %2041 = vmatpush1.msra.mxu0 %v1997
  %2042 = vmatprep.subr.mxu0 0.0
  %2043 = vmatpush1.msra.mxu0 %v1996
  %2044 = vmatprep.subr.mxu0 0.0
  %2045 = vmatpush1.msra.mxu0 %v1995
  %2046 = vmatprep.subr.mxu0 0.0
  %2047 = vmatpush1.msra.mxu0 %v1994
  %2048 = vmatprep.subr.mxu0 0.0
  %2049 = vmatpush1.msra.mxu0 %v1993
  %2050 = vmatprep.subr.mxu0 0.0
  %2051 = vmatpush1.msra.mxu0 %v1992
  %2052 = vmatprep.subr.mxu0 0.0
  %2053 = vmatpush2.msra.mxu0 0.0
  %2054 = vmatprep.subr.mxu0 0.0
  %2055 = vmatpush2.msra.mxu0 0.0
  %2056 = vmatprep.subr.mxu0 0.0
  %2057 = vmatpush2.msra.mxu0 0.0
  %2058 = vmatprep.subr.mxu0 0.0
  %2059 = vmatpush2.msra.mxu0 0.0
  %2060 = vmatprep.subr.mxu0 0.0
  %2061 = vmatpush2.msra.mxu0 0.0
  %2062 = vmatprep.subr.mxu0 0.0
  %2063 = vmatpush2.msra.mxu0 0.0
  %2064 = vmatprep.subr.mxu0 0.0
  %2065 = vmatpush2.msra.mxu0 0.0
  %2066 = vmatprep.subr.mxu0 0.0
  %2067 = vmatpush2.msra.mxu0 %v2016
  %2068 = vmatprep.subr.mxu0 0.0
  %2069 = vmatpush2.msra.mxu0 %v2015
  %2070 = vmatprep.subr.mxu0 0.0
  %2071 = vmatpush2.msra.mxu0 %v2014
  %2072 = vmatprep.subr.mxu0 0.0
  %2073 = vmatpush2.msra.mxu0 %v2013
  %2074 = vmatprep.subr.mxu0 0.0
  %2075 = vmatpush2.msra.mxu0 %v2012
  %2076 = vmatprep.subr.mxu0 0.0
  %2077 = vmatpush2.msra.mxu0 %v2011
  %2078 = vmatprep.subr.mxu0 0.0
  %2079 = vmatpush2.msra.mxu0 %v2010
  %2080 = vmatprep.subr.mxu0 0.0
  %2081 = vmatpush2.msra.mxu0 %v2009
  %2082 = vmatprep.subr.mxu0 0.0
  %2083 = vmatpush2.msra.mxu0 %v2008
  %2084 = vmatprep.mubr.f32.mxu0 %v2018
  %2085 = vmatmul.mubr.f32.gmra.mxu0 %v1990
  %v2086 = vpop.f32.mrf.mxu0
  %v2087 = vadd.f32 0.0, %v2086
  %v2088 = vpop.f32.mrf.mxu0
  %2089 = vdwg.mxu0
  %v2090 = vsel %vm396, %v2087, 0.0
  %v2091 = vrot.slane %v2090, 4
  %v2092 = vadd.f32 %v2090, %v2091
  %v2093 = vrot.slane %v2092, 2
  %v2094 = vadd.f32 %v2092, %v2093
  %v2095 = vrot.slane %v2094, 1
  %v2096 = vadd.f32 %v2094, %v2095
  %v2097 = vmul.f32 %v2087, %v2087
  %v2098 = vsel %vm396, %v2097, 0.0
  %v2099 = vrot.slane %v2098, 4
  %v2100 = vadd.f32 %v2098, %v2099
  %v2101 = vrot.slane %v2100, 2
  %v2102 = vadd.f32 %v2100, %v2101
  %v2103 = vrot.slane %v2102, 1
  %v2104 = vadd.f32 %v2102, %v2103
  %v2105 = vsel %vm297, %v2096, %v2104
  %2106 = vmatprep.subr.mxu0 0.0
  %2107 = vmatpush1.msra.mxu0 %v1480
  %2108 = vmatprep.subr.mxu0 0.0
  %2109 = vmatpush1.msra.mxu0 %v1479
  %2110 = vmatprep.subr.mxu0 0.0
  %2111 = vmatpush1.msra.mxu0 %v1478
  %2112 = vmatprep.subr.mxu0 0.0
  %2113 = vmatpush1.msra.mxu0 %v1477
  %2114 = vmatprep.subr.mxu0 0.0
  %2115 = vmatpush1.msra.mxu0 %v1476
  %2116 = vmatprep.subr.mxu0 0.0
  %2117 = vmatpush1.msra.mxu0 %v1475
  %2118 = vmatprep.subr.mxu0 0.0
  %2119 = vmatpush1.msra.mxu0 %v1474
  %2120 = vmatprep.subr.mxu0 0.0
  %2121 = vmatpush1.msra.mxu0 %v1473
  %2122 = vmatprep.subr.mxu0 0.0
  %2123 = vmatpush1.msra.mxu0 %v1472
  %2124 = vmatprep.subr.mxu0 0.0
  %2125 = vmatpush1.msra.mxu0 %v1471
  %2126 = vmatprep.subr.mxu0 0.0
  %2127 = vmatpush1.msra.mxu0 %v1470
  %2128 = vmatprep.subr.mxu0 0.0
  %2129 = vmatpush1.msra.mxu0 %v1469
  %2130 = vmatprep.subr.mxu0 0.0
  %2131 = vmatpush1.msra.mxu0 %v1468
  %2132 = vmatprep.subr.mxu0 0.0
  %2133 = vmatpush1.msra.mxu0 %v1467
  %2134 = vmatprep.subr.mxu0 0.0
  %2135 = vmatpush1.msra.mxu0 %v1466
  %2136 = vmatprep.subr.mxu0 0.0
  %2137 = vmatpush1.msra.mxu0 %v1465
  %2138 = vmatprep.subr.mxu0 0.0
  %2139 = vmatpush2.msra.mxu0 0.0
  %2140 = vmatprep.subr.mxu0 0.0
  %2141 = vmatpush2.msra.mxu0 0.0
  %2142 = vmatprep.subr.mxu0 0.0
  %2143 = vmatpush2.msra.mxu0 0.0
  %2144 = vmatprep.subr.mxu0 0.0
  %2145 = vmatpush2.msra.mxu0 0.0
  %2146 = vmatprep.subr.mxu0 0.0
  %2147 = vmatpush2.msra.mxu0 0.0
  %2148 = vmatprep.subr.mxu0 0.0
  %2149 = vmatpush2.msra.mxu0 0.0
  %2150 = vmatprep.subr.mxu0 0.0
  %2151 = vmatpush2.msra.mxu0 0.0
  %2152 = vmatprep.subr.mxu0 0.0
  %2153 = vmatpush2.msra.mxu0 0.0
  %2154 = vmatprep.subr.mxu0 0.0
  %2155 = vmatpush2.msra.mxu0 0.0
  %2156 = vmatprep.subr.mxu0 0.0
  %2157 = vmatpush2.msra.mxu0 0.0
  %2158 = vmatprep.subr.mxu0 0.0
  %2159 = vmatpush2.msra.mxu0 0.0
  %2160 = vmatprep.subr.mxu0 0.0
  %2161 = vmatpush2.msra.mxu0 0.0
  %2162 = vmatprep.subr.mxu0 0.0
  %2163 = vmatpush2.msra.mxu0 0.0
  %2164 = vmatprep.subr.mxu0 0.0
  %2165 = vmatpush2.msra.mxu0 0.0
  %2166 = vmatprep.subr.mxu0 0.0
  %2167 = vmatpush2.msra.mxu0 0.0
  %2168 = vmatprep.subr.mxu0 0.0
  %2169 = vmatpush2.msra.mxu0 0.0
  %2170 = vmatprep.mubr.f32.mxu0 0.0
  %2171 = vmatmul.mubr.f32.gmra.mxu0 %v2105
  %v2172 = vpop.f32.mrf.mxu0
  %v2173 = vadd.f32 0.0, %v2172
  %v2174 = vpop.f32.mrf.mxu0
  %2175 = vdwg.mxu0
  %v2176 = vrcp.pop 128.0
  %v2177 = vmul.f32 %v2173, %v2176
  %v2178 = vmul.f32 %v2177, %v2177
  %v2180 = vrot.slane %v2178, 7
  %v2182 = vsub.f32 %v2177, %v2180
  %v2183 = vadd.f32 %v2182, 1e-05
  %v2184 = vrsqrt.pop %v2183
  %v2186 = vrot.slane %v2184, 7
  %v2188 = vmul.f32 %v72, %v2186
  %v2190 = vrot.slane %v2188, 2
  %v2192 = vmul.f32 %v2177, %v2190
  %v2194 = vrot.slane %v2192, 5
  %v2196 = vsub.f32 %v72, %v2194
  %v2198 = vrot.slane %v2196, 2
  %v2200 = vsel %vm297, %v2190, %v2198
  %v2202 = vsel %vm392, %v2200, 0
  %v2205 = vsel %vm396, %v1487, 0
  %2207 = vmatprep.subr.mxu0 0.0
  %2208 = vmatpush1.msra.mxu0 0.0
  %2209 = vmatprep.subr.mxu0 0.0
  %2210 = vmatpush1.msra.mxu0 0.0
  %2211 = vmatprep.subr.mxu0 0.0
  %2212 = vmatpush1.msra.mxu0 0.0
  %2213 = vmatprep.subr.mxu0 0.0
  %2214 = vmatpush1.msra.mxu0 0.0
  %2215 = vmatprep.subr.mxu0 0.0
  %2216 = vmatpush1.msra.mxu0 0.0
  %2217 = vmatprep.subr.mxu0 0.0
  %2218 = vmatpush1.msra.mxu0 0.0
  %2219 = vmatprep.subr.mxu0 0.0
  %2220 = vmatpush1.msra.mxu0 0.0
  %2221 = vmatprep.subr.mxu0 0.0
  %2222 = vmatpush1.msra.mxu0 0.0
  %2223 = vmatprep.subr.mxu0 0.0
  %2224 = vmatpush1.msra.mxu0 0.0
  %2225 = vmatprep.subr.mxu0 0.0
  %2226 = vmatpush1.msra.mxu0 0.0
  %2227 = vmatprep.subr.mxu0 0.0
  %2228 = vmatpush1.msra.mxu0 0.0
  %2229 = vmatprep.subr.mxu0 0.0
  %2230 = vmatpush1.msra.mxu0 0.0
  %2231 = vmatprep.subr.mxu0 0.0
  %2232 = vmatpush1.msra.mxu0 0.0
  %2233 = vmatprep.subr.mxu0 0.0
  %2234 = vmatpush1.msra.mxu0 0.0
  %2235 = vmatprep.subr.mxu0 0.0
  %2236 = vmatpush1.msra.mxu0 0.0
  %2237 = vmatprep.subr.mxu0 0.0
  %2238 = vmatpush1.msra.mxu0 %v2205
  %2239 = vmatprep.subr.mxu0 0.0
  %2240 = vmatpush2.msra.mxu0 0.0
  %2241 = vmatprep.subr.mxu0 0.0
  %2242 = vmatpush2.msra.mxu0 0.0
  %2243 = vmatprep.subr.mxu0 0.0
  %2244 = vmatpush2.msra.mxu0 0.0
  %2245 = vmatprep.subr.mxu0 0.0
  %2246 = vmatpush2.msra.mxu0 0.0
  %2247 = vmatprep.subr.mxu0 0.0
  %2248 = vmatpush2.msra.mxu0 0.0
  %2249 = vmatprep.subr.mxu0 0.0
  %2250 = vmatpush2.msra.mxu0 0.0
  %2251 = vmatprep.subr.mxu0 0.0
  %2252 = vmatpush2.msra.mxu0 0.0
  %2253 = vmatprep.subr.mxu0 0.0
  %2254 = vmatpush2.msra.mxu0 0.0
  %2255 = vmatprep.subr.mxu0 0.0
  %2256 = vmatpush2.msra.mxu0 0.0
  %2257 = vmatprep.subr.mxu0 0.0
  %2258 = vmatpush2.msra.mxu0 0.0
  %2259 = vmatprep.subr.mxu0 0.0
  %2260 = vmatpush2.msra.mxu0 0.0
  %2261 = vmatprep.subr.mxu0 0.0
  %2262 = vmatpush2.msra.mxu0 0.0
  %2263 = vmatprep.subr.mxu0 0.0
  %2264 = vmatpush2.msra.mxu0 0.0
  %2265 = vmatprep.subr.mxu0 0.0
  %2266 = vmatpush2.msra.mxu0 0.0
  %2267 = vmatprep.subr.mxu0 0.0
  %2268 = vmatpush2.msra.mxu0 0.0
  %2269 = vmatprep.subr.mxu0 0.0
  %2270 = vmatpush2.msra.mxu0 0.0
  %2271 = vmatprep.mubr.f32.mxu0 0.0
  %2272 = vmatmul.mubr.f32.gmra.mxu0 %v2202
  %v2273 = vpop.f32.mrf.mxu0
  %v2274 = vadd.f32 0.0, %v2273
  %v2275 = vpop.f32.mrf.mxu0
  %2276 = vdwg.mxu0
  %v2277 = vlaneseq
  %v2278 = vshrl.u32 %v2277, 7
  %v2279 = vsub.s32 0, %v2278
  %v2280 = vrot.slane %v2274, %v2279
  %v2281 = vmul.f32 %v2087, %v2280
  %v2282 = vlaneseq
  %v2283 = vshrl.u32 %v2282, 7
  %v2284 = vsub.s32 1, %v2283
  %v2285 = vrot.slane %v2274, %v2284
  %v2286 = vadd.f32 %v2281, %v2285
  %vm2287 = vcmp.gt.f32.partialorder %v2286, 0.0
  %v2288 = vmul.f32 %v2286, 0.01
  %v2289 = vsel %vm2287, %v2286, %v2288
  %v2290 = vld [vmem:[%s9] sm:$0xff]
  %v2291 = vld [vmem:[%s9 + $0x8] sm:$0xff]
  %v2292 = vld [vmem:[%s9 + $0x10] sm:$0xff]
  %v2293 = vld [vmem:[%s9 + $0x18] sm:$0xff]
  %v2294 = vld [vmem:[%s9 + $0x20] sm:$0xff]
  %v2295 = vld [vmem:[%s9 + $0x28] sm:$0xff]
  %v2296 = vld [vmem:[%s9 + $0x30] sm:$0xff]
  %v2297 = vld [vmem:[%s9 + $0x38] sm:$0xff]
  %v2298 = vld [vmem:[%s9 + $0x40] sm:$0xff]
  %v2299 = vld [vmem:[%s9 + $0x48] sm:$0xff]
  %v2300 = vld [vmem:[%s9 + $0x50] sm:$0xff]
  %v2301 = vld [vmem:[%s9 + $0x58] sm:$0xff]
  %v2302 = vld [vmem:[%s9 + $0x60] sm:$0xff]
  %v2303 = vld [vmem:[%s9 + $0x68] sm:$0xff]
  %v2304 = vld [vmem:[%s9 + $0x70] sm:$0xff]
  %v2305 = vld [vmem:[%s9 + $0x78] sm:$0xff]
  %2306 = vmatprep.subr.mxu0 0.0
  %2307 = vmatpush1.msra.mxu0 %v2305
  %2308 = vmatprep.subr.mxu0 0.0
  %2309 = vmatpush1.msra.mxu0 %v2304
  %2310 = vmatprep.subr.mxu0 0.0
  %2311 = vmatpush1.msra.mxu0 %v2303
  %2312 = vmatprep.subr.mxu0 0.0
  %2313 = vmatpush1.msra.mxu0 %v2302
  %2314 = vmatprep.subr.mxu0 0.0
  %2315 = vmatpush1.msra.mxu0 %v2301
  %2316 = vmatprep.subr.mxu0 0.0
  %2317 = vmatpush1.msra.mxu0 %v2300
  %2318 = vmatprep.subr.mxu0 0.0
  %2319 = vmatpush1.msra.mxu0 %v2299
  %2320 = vmatprep.subr.mxu0 0.0
  %2321 = vmatpush1.msra.mxu0 %v2298
  %2322 = vmatprep.subr.mxu0 0.0
  %2323 = vmatpush1.msra.mxu0 %v2297
  %2324 = vmatprep.subr.mxu0 0.0
  %2325 = vmatpush1.msra.mxu0 %v2296
  %2326 = vmatprep.subr.mxu0 0.0
  %2327 = vmatpush1.msra.mxu0 %v2295
  %2328 = vmatprep.subr.mxu0 0.0
  %2329 = vmatpush1.msra.mxu0 %v2294
  %2330 = vmatprep.subr.mxu0 0.0
  %2331 = vmatpush1.msra.mxu0 %v2293
  %2332 = vmatprep.subr.mxu0 0.0
  %2333 = vmatpush1.msra.mxu0 %v2292
  %2334 = vmatprep.subr.mxu0 0.0
  %2335 = vmatpush1.msra.mxu0 %v2291
  %2336 = vmatprep.subr.mxu0 0.0
  %2337 = vmatpush1.msra.mxu0 %v2290
  %2338 = vmatprep.subr.mxu0 0.0
  %2339 = vmatpush2.msra.mxu0 0.0
  %2340 = vmatprep.subr.mxu0 0.0
  %2341 = vmatpush2.msra.mxu0 0.0
  %2342 = vmatprep.subr.mxu0 0.0
  %2343 = vmatpush2.msra.mxu0 0.0
  %2344 = vmatprep.subr.mxu0 0.0
  %2345 = vmatpush2.msra.mxu0 0.0
  %2346 = vmatprep.subr.mxu0 0.0
  %2347 = vmatpush2.msra.mxu0 0.0
  %2348 = vmatprep.subr.mxu0 0.0
  %2349 = vmatpush2.msra.mxu0 0.0
  %2350 = vmatprep.subr.mxu0 0.0
  %2351 = vmatpush2.msra.mxu0 0.0
  %2352 = vmatprep.subr.mxu0 0.0
  %2353 = vmatpush2.msra.mxu0 0.0
  %2354 = vmatprep.subr.mxu0 0.0
  %2355 = vmatpush2.msra.mxu0 0.0
  %2356 = vmatprep.subr.mxu0 0.0
  %2357 = vmatpush2.msra.mxu0 0.0
  %2358 = vmatprep.subr.mxu0 0.0
  %2359 = vmatpush2.msra.mxu0 0.0
  %2360 = vmatprep.subr.mxu0 0.0
  %2361 = vmatpush2.msra.mxu0 0.0
  %2362 = vmatprep.subr.mxu0 0.0
  %2363 = vmatpush2.msra.mxu0 0.0
  %2364 = vmatprep.subr.mxu0 0.0
  %2365 = vmatpush2.msra.mxu0 0.0
  %2366 = vmatprep.subr.mxu0 0.0
  %2367 = vmatpush2.msra.mxu0 0.0
  %2368 = vmatprep.subr.mxu0 0.0
  %2369 = vmatpush2.msra.mxu0 0.0
  %2370 = vmatprep.mubr.f32.mxu0 0.0
  %2371 = vmatmul.mubr.f32.gmra.mxu0 %v2289
  %v2372 = vpop.f32.mrf.mxu0
  %v2373 = vadd.f32 0.0, %v2372
  %v2374 = vpop.f32.mrf.mxu0
  %2375 = vdwg.mxu0
  %v2376 = vsel %vm396, %v2373, 0.0
  %v2377 = vrot.slane %v2376, 4
  %v2378 = vadd.f32 %v2376, %v2377
  %v2379 = vrot.slane %v2378, 2
  %v2380 = vadd.f32 %v2378, %v2379
  %v2381 = vrot.slane %v2380, 1
  %v2382 = vadd.f32 %v2380, %v2381
  %v2383 = vmul.f32 %v2373, %v2373
  %v2384 = vsel %vm396, %v2383, 0.0
  %v2385 = vrot.slane %v2384, 4
  %v2386 = vadd.f32 %v2384, %v2385
  %v2387 = vrot.slane %v2386, 2
  %v2388 = vadd.f32 %v2386, %v2387
  %v2389 = vrot.slane %v2388, 1
  %v2390 = vadd.f32 %v2388, %v2389
  %v2391 = vsel %vm297, %v2382, %v2390
  %2392 = vmatprep.subr.mxu0 0.0
  %2393 = vmatpush1.msra.mxu0 %v1480
  %2394 = vmatprep.subr.mxu0 0.0
  %2395 = vmatpush1.msra.mxu0 %v1479
  %2396 = vmatprep.subr.mxu0 0.0
  %2397 = vmatpush1.msra.mxu0 %v1478
  %2398 = vmatprep.subr.mxu0 0.0
  %2399 = vmatpush1.msra.mxu0 %v1477
  %2400 = vmatprep.subr.mxu0 0.0
  %2401 = vmatpush1.msra.mxu0 %v1476
  %2402 = vmatprep.subr.mxu0 0.0
  %2403 = vmatpush1.msra.mxu0 %v1475
  %2404 = vmatprep.subr.mxu0 0.0
  %2405 = vmatpush1.msra.mxu0 %v1474
  %2406 = vmatprep.subr.mxu0 0.0
  %2407 = vmatpush1.msra.mxu0 %v1473
  %2408 = vmatprep.subr.mxu0 0.0
  %2409 = vmatpush1.msra.mxu0 %v1472
  %2410 = vmatprep.subr.mxu0 0.0
  %2411 = vmatpush1.msra.mxu0 %v1471
  %2412 = vmatprep.subr.mxu0 0.0
  %2413 = vmatpush1.msra.mxu0 %v1470
  %2414 = vmatprep.subr.mxu0 0.0
  %2415 = vmatpush1.msra.mxu0 %v1469
  %2416 = vmatprep.subr.mxu0 0.0
  %2417 = vmatpush1.msra.mxu0 %v1468
  %2418 = vmatprep.subr.mxu0 0.0
  %2419 = vmatpush1.msra.mxu0 %v1467
  %2420 = vmatprep.subr.mxu0 0.0
  %2421 = vmatpush1.msra.mxu0 %v1466
  %2422 = vmatprep.subr.mxu0 0.0
  %2423 = vmatpush1.msra.mxu0 %v1465
  %2424 = vmatprep.subr.mxu0 0.0
  %2425 = vmatpush2.msra.mxu0 0.0
  %2426 = vmatprep.subr.mxu0 0.0
  %2427 = vmatpush2.msra.mxu0 0.0
  %2428 = vmatprep.subr.mxu0 0.0
  %2429 = vmatpush2.msra.mxu0 0.0
  %2430 = vmatprep.subr.mxu0 0.0
  %2431 = vmatpush2.msra.mxu0 0.0
  %2432 = vmatprep.subr.mxu0 0.0
  %2433 = vmatpush2.msra.mxu0 0.0
  %2434 = vmatprep.subr.mxu0 0.0
  %2435 = vmatpush2.msra.mxu0 0.0
  %2436 = vmatprep.subr.mxu0 0.0
  %2437 = vmatpush2.msra.mxu0 0.0
  %2438 = vmatprep.subr.mxu0 0.0
  %2439 = vmatpush2.msra.mxu0 0.0
  %2440 = vmatprep.subr.mxu0 0.0
  %2441 = vmatpush2.msra.mxu0 0.0
  %2442 = vmatprep.subr.mxu0 0.0
  %2443 = vmatpush2.msra.mxu0 0.0
  %2444 = vmatprep.subr.mxu0 0.0
  %2445 = vmatpush2.msra.mxu0 0.0
  %2446 = vmatprep.subr.mxu0 0.0
  %2447 = vmatpush2.msra.mxu0 0.0
  %2448 = vmatprep.subr.mxu0 0.0
  %2449 = vmatpush2.msra.mxu0 0.0
  %2450 = vmatprep.subr.mxu0 0.0
  %2451 = vmatpush2.msra.mxu0 0.0
  %2452 = vmatprep.subr.mxu0 0.0
  %2453 = vmatpush2.msra.mxu0 0.0
  %2454 = vmatprep.subr.mxu0 0.0
  %2455 = vmatpush2.msra.mxu0 0.0
  %2456 = vmatprep.mubr.f32.mxu0 0.0
  %2457 = vmatmul.mubr.f32.gmra.mxu0 %v2391
  %v2458 = vpop.f32.mrf.mxu0
  %v2459 = vadd.f32 0.0, %v2458
  %v2460 = vpop.f32.mrf.mxu0
  %2461 = vdwg.mxu0
  %v2462 = vmul.f32 %v2459, %v2176
  %v2463 = vmul.f32 %v2462, %v2462
  %v2465 = vrot.slane %v2463, 7
  %v2467 = vsub.f32 %v2462, %v2465
  %v2468 = vadd.f32 %v2467, 1e-05
  %v2469 = vrsqrt.pop %v2468
  %v2471 = vrot.slane %v2469, 5
  %v2473 = vmul.f32 %v72, %v2471
  %v2475 = vrot.slane %v2473, 4
  %v2477 = vmul.f32 %v2462, %v2475
  %v2479 = vrot.slane %v2477, 3
  %v2481 = vsub.f32 %v72, %v2479
  %v2483 = vrot.slane %v2481, 4
  %v2485 = vsel %vm297, %v2475, %v2483
  %v2487 = vsel %vm392, %v2485, 0
  %2489 = vmatprep.subr.mxu0 0.0
  %2490 = vmatpush1.msra.mxu0 0.0
  %2491 = vmatprep.subr.mxu0 0.0
  %2492 = vmatpush1.msra.mxu0 0.0
  %2493 = vmatprep.subr.mxu0 0.0
  %2494 = vmatpush1.msra.mxu0 0.0
  %2495 = vmatprep.subr.mxu0 0.0
  %2496 = vmatpush1.msra.mxu0 0.0
  %2497 = vmatprep.subr.mxu0 0.0
  %2498 = vmatpush1.msra.mxu0 0.0
  %2499 = vmatprep.subr.mxu0 0.0
  %2500 = vmatpush1.msra.mxu0 0.0
  %2501 = vmatprep.subr.mxu0 0.0
  %2502 = vmatpush1.msra.mxu0 0.0
  %2503 = vmatprep.subr.mxu0 0.0
  %2504 = vmatpush1.msra.mxu0 0.0
  %2505 = vmatprep.subr.mxu0 0.0
  %2506 = vmatpush1.msra.mxu0 0.0
  %2507 = vmatprep.subr.mxu0 0.0
  %2508 = vmatpush1.msra.mxu0 0.0
  %2509 = vmatprep.subr.mxu0 0.0
  %2510 = vmatpush1.msra.mxu0 0.0
  %2511 = vmatprep.subr.mxu0 0.0
  %2512 = vmatpush1.msra.mxu0 0.0
  %2513 = vmatprep.subr.mxu0 0.0
  %2514 = vmatpush1.msra.mxu0 0.0
  %2515 = vmatprep.subr.mxu0 0.0
  %2516 = vmatpush1.msra.mxu0 0.0
  %2517 = vmatprep.subr.mxu0 0.0
  %2518 = vmatpush1.msra.mxu0 0.0
  %2519 = vmatprep.subr.mxu0 0.0
  %2520 = vmatpush1.msra.mxu0 %v2205
  %2521 = vmatprep.subr.mxu0 0.0
  %2522 = vmatpush2.msra.mxu0 0.0
  %2523 = vmatprep.subr.mxu0 0.0
  %2524 = vmatpush2.msra.mxu0 0.0
  %2525 = vmatprep.subr.mxu0 0.0
  %2526 = vmatpush2.msra.mxu0 0.0
  %2527 = vmatprep.subr.mxu0 0.0
  %2528 = vmatpush2.msra.mxu0 0.0
  %2529 = vmatprep.subr.mxu0 0.0
  %2530 = vmatpush2.msra.mxu0 0.0
  %2531 = vmatprep.subr.mxu0 0.0
  %2532 = vmatpush2.msra.mxu0 0.0
  %2533 = vmatprep.subr.mxu0 0.0
  %2534 = vmatpush2.msra.mxu0 0.0
  %2535 = vmatprep.subr.mxu0 0.0
  %2536 = vmatpush2.msra.mxu0 0.0
  %2537 = vmatprep.subr.mxu0 0.0
  %2538 = vmatpush2.msra.mxu0 0.0
  %2539 = vmatprep.subr.mxu0 0.0
  %2540 = vmatpush2.msra.mxu0 0.0
  %2541 = vmatprep.subr.mxu0 0.0
  %2542 = vmatpush2.msra.mxu0 0.0
  %2543 = vmatprep.subr.mxu0 0.0
  %2544 = vmatpush2.msra.mxu0 0.0
  %2545 = vmatprep.subr.mxu0 0.0
  %2546 = vmatpush2.msra.mxu0 0.0
  %2547 = vmatprep.subr.mxu0 0.0
  %2548 = vmatpush2.msra.mxu0 0.0
  %2549 = vmatprep.subr.mxu0 0.0
  %2550 = vmatpush2.msra.mxu0 0.0
  %2551 = vmatprep.subr.mxu0 0.0
  %2552 = vmatpush2.msra.mxu0 0.0
  %2553 = vmatprep.mubr.f32.mxu0 0.0
  %2554 = vmatmul.mubr.f32.gmra.mxu0 %v2487
  %v2555 = vpop.f32.mrf.mxu0
  %v2556 = vadd.f32 0.0, %v2555
  %v2557 = vpop.f32.mrf.mxu0
  %2558 = vdwg.mxu0
  %v2559 = vlaneseq
  %v2560 = vshrl.u32 %v2559, 7
  %v2561 = vsub.s32 0, %v2560
  %v2562 = vrot.slane %v2556, %v2561
  %v2563 = vmul.f32 %v2373, %v2562
  %v2564 = vlaneseq
  %v2565 = vshrl.u32 %v2564, 7
  %v2566 = vsub.s32 1, %v2565
  %v2567 = vrot.slane %v2556, %v2566
  %v2568 = vadd.f32 %v2563, %v2567
  %vm2569 = vcmp.gt.f32.partialorder %v2568, 0.0
  %v2570 = vmul.f32 %v2568, 0.01
  %v2571 = vsel %vm2569, %v2568, %v2570
  %v2572 = vld [vmem:[%s10] sm:$0xff]
  %v2573 = vld [vmem:[%s10 + $0x8] sm:$0xff]
  %v2574 = vld [vmem:[%s10 + $0x10] sm:$0xff]
  %v2575 = vld [vmem:[%s10 + $0x18] sm:$0xff]
  %v2576 = vld [vmem:[%s10 + $0x20] sm:$0xff]
  %v2577 = vld [vmem:[%s10 + $0x28] sm:$0xff]
  %v2578 = vld [vmem:[%s10 + $0x30] sm:$0xff]
  %v2579 = vld [vmem:[%s10 + $0x38] sm:$0xff]
  %v2580 = vld [vmem:[%s11] sm:$0xff]
  %v2581 = vld [vmem:[%s11 + $0x8] sm:$0xff]
  %v2582 = vld [vmem:[%s11 + $0x10] sm:$0xff]
  %v2583 = vld [vmem:[%s11 + $0x18] sm:$0xff]
  %v2584 = vld [vmem:[%s11 + $0x20] sm:$0xff]
  %v2585 = vld [vmem:[%s11 + $0x28] sm:$0xff]
  %v2586 = vld [vmem:[%s11 + $0x30] sm:$0xff]
  %v2587 = vld [vmem:[%s11 + $0x38] sm:$0xff]
  %v2588 = vld [vmem:[%s11 + $0x40] sm:$0xff]
  %v2589 = vld [vmem:[%s11 + $0x48] sm:$0xff]
  %v2590 = vld [vmem:[%s11 + $0x50] sm:$0xff]
  %v2591 = vld [vmem:[%s11 + $0x58] sm:$0xff]
  %v2592 = vld [vmem:[%s11 + $0x60] sm:$0xff]
  %v2593 = vld [vmem:[%s11 + $0x68] sm:$0xff]
  %v2594 = vld [vmem:[%s11 + $0x70] sm:$0xff]
  %v2595 = vld [vmem:[%s11 + $0x78] sm:$0xff]
  %v2596 = vld [vmem:[%s11 + $0x80] sm:$0xff]
  %v2597 = vld [vmem:[%s11 + $0x88] sm:$0xff]
  %v2598 = vld [vmem:[%s11 + $0x90] sm:$0xff]
  %v2599 = vld [vmem:[%s11 + $0x98] sm:$0xff]
  %v2600 = vld [vmem:[%s11 + $0xa0] sm:$0xff]
  %v2601 = vld [vmem:[%s11 + $0xa8] sm:$0xff]
  %v2602 = vld [vmem:[%s11 + $0xb0] sm:$0xff]
  %v2603 = vld [vmem:[%s11 + $0xb8] sm:$0xff]
  %v2604 = vld [vmem:[%s11 + $0xc0] sm:$0xff]
  %v2605 = vld [vmem:[%s11 + $0xc8] sm:$0xff]
  %v2606 = vld [vmem:[%s11 + $0xd0] sm:$0xff]
  %v2607 = vld [vmem:[%s11 + $0xd8] sm:$0xff]
  %v2608 = vld [vmem:[%s11 + $0xe0] sm:$0xff]
  %v2609 = vld [vmem:[%s11 + $0xe8] sm:$0xff]
  %v2610 = vld [vmem:[%s11 + $0xf0] sm:$0xff]
  %v2611 = vld [vmem:[%s11 + $0xf8] sm:$0xff]
  %2612 = vmatprep.subr.mxu0 %v2611
  %2613 = vmatpush1.msra.mxu0 %v2610
  %2614 = vmatprep.subr.mxu0 %v2609
  %2615 = vmatpush1.msra.mxu0 %v2608
  %2616 = vmatprep.subr.mxu0 %v2607
  %2617 = vmatpush1.msra.mxu0 %v2606
  %2618 = vmatprep.subr.mxu0 %v2605
  %2619 = vmatpush1.msra.mxu0 %v2604
  %2620 = vmatprep.subr.mxu0 %v2603
  %2621 = vmatpush1.msra.mxu0 %v2602
  %2622 = vmatprep.subr.mxu0 %v2601
  %2623 = vmatpush1.msra.mxu0 %v2600
  %2624 = vmatprep.subr.mxu0 %v2599
  %2625 = vmatpush1.msra.mxu0 %v2598
  %2626 = vmatprep.subr.mxu0 %v2597
  %2627 = vmatpush1.msra.mxu0 %v2596
  %2628 = vmatprep.subr.mxu0 %v2595
  %2629 = vmatpush1.msra.mxu0 %v2594
  %2630 = vmatprep.subr.mxu0 %v2593
  %2631 = vmatpush1.msra.mxu0 %v2592
  %2632 = vmatprep.subr.mxu0 %v2591
  %2633 = vmatpush1.msra.mxu0 %v2590
  %2634 = vmatprep.subr.mxu0 %v2589
  %2635 = vmatpush1.msra.mxu0 %v2588
  %2636 = vmatprep.subr.mxu0 %v2587
  %2637 = vmatpush1.msra.mxu0 %v2586
  %2638 = vmatprep.subr.mxu0 %v2585
  %2639 = vmatpush1.msra.mxu0 %v2584
  %2640 = vmatprep.subr.mxu0 %v2583
  %2641 = vmatpush1.msra.mxu0 %v2582
  %2642 = vmatprep.subr.mxu0 %v2581
  %2643 = vmatpush1.msra.mxu0 %v2580
  %2644 = vmatprep.subr.mxu0 0.0
  %2645 = vmatpush2.msra.mxu0 0.0
  %2646 = vmatprep.subr.mxu0 0.0
  %2647 = vmatpush2.msra.mxu0 0.0
  %2648 = vmatprep.subr.mxu0 0.0
  %2649 = vmatpush2.msra.mxu0 0.0
  %2650 = vmatprep.subr.mxu0 0.0
  %2651 = vmatpush2.msra.mxu0 0.0
  %2652 = vmatprep.subr.mxu0 0.0
  %2653 = vmatpush2.msra.mxu0 0.0
  %2654 = vmatprep.subr.mxu0 0.0
  %2655 = vmatpush2.msra.mxu0 0.0
  %2656 = vmatprep.subr.mxu0 0.0
  %2657 = vmatpush2.msra.mxu0 0.0
  %2658 = vmatprep.subr.mxu0 0.0
  %2659 = vmatpush2.msra.mxu0 0.0
  %2660 = vmatprep.subr.mxu0 0.0
  %2661 = vmatpush2.msra.mxu0 0.0
  %2662 = vmatprep.subr.mxu0 0.0
  %2663 = vmatpush2.msra.mxu0 0.0
  %2664 = vmatprep.subr.mxu0 0.0
  %2665 = vmatpush2.msra.mxu0 0.0
  %2666 = vmatprep.subr.mxu0 0.0
  %2667 = vmatpush2.msra.mxu0 0.0
  %2668 = vmatprep.subr.mxu0 0.0
  %2669 = vmatpush2.msra.mxu0 0.0
  %2670 = vmatprep.subr.mxu0 0.0
  %2671 = vmatpush2.msra.mxu0 0.0
  %2672 = vmatprep.subr.mxu0 0.0
  %2673 = vmatpush2.msra.mxu0 0.0
  %2674 = vmatprep.subr.mxu0 0.0
  %2675 = vmatpush2.msra.mxu0 0.0
  %2676 = vmatprep.mubr.f32.mxu0 0.0
  %2677 = vmatmul.mubr.f32.gmra.mxu0 %v2571
  %v2678 = vpop.f32.mrf.mxu0
  %v2679 = vadd.f32 0.0, %v2678
  %v2680 = vpop.f32.mrf.mxu0
  %v2681 = vadd.f32 0.0, %v2680
  %2682 = vdwg.mxu0
  %v2684 = vsel %vm582, %v1241, 0
  %2686 = vmatprep.subr.mxu0 0.0
  %2687 = vmatpush1.msra.mxu0 0.0
  %2688 = vmatprep.subr.mxu0 0.0
  %2689 = vmatpush1.msra.mxu0 0.0
  %2690 = vmatprep.subr.mxu0 0.0
  %2691 = vmatpush1.msra.mxu0 0.0
  %2692 = vmatprep.subr.mxu0 0.0
  %2693 = vmatpush1.msra.mxu0 0.0
  %2694 = vmatprep.subr.mxu0 0.0
  %2695 = vmatpush1.msra.mxu0 0.0
  %2696 = vmatprep.subr.mxu0 0.0
  %2697 = vmatpush1.msra.mxu0 0.0
  %2698 = vmatprep.subr.mxu0 0.0
  %2699 = vmatpush1.msra.mxu0 0.0
  %2700 = vmatprep.subr.mxu0 0.0
  %2701 = vmatpush1.msra.mxu0 0.0
  %2702 = vmatprep.subr.mxu0 0.0
  %2703 = vmatpush1.msra.mxu0 0.0
  %2704 = vmatprep.subr.mxu0 0.0
  %2705 = vmatpush1.msra.mxu0 0.0
  %2706 = vmatprep.subr.mxu0 0.0
  %2707 = vmatpush1.msra.mxu0 0.0
  %2708 = vmatprep.subr.mxu0 0.0
  %2709 = vmatpush1.msra.mxu0 0.0
  %2710 = vmatprep.subr.mxu0 %v2579
  %2711 = vmatpush1.msra.mxu0 %v2578
  %2712 = vmatprep.subr.mxu0 %v2577
  %2713 = vmatpush1.msra.mxu0 %v2576
  %2714 = vmatprep.subr.mxu0 %v2575
  %2715 = vmatpush1.msra.mxu0 %v2574
  %2716 = vmatprep.subr.mxu0 %v2573
  %2717 = vmatpush1.msra.mxu0 %v2572
  %2718 = vmatprep.subr.mxu0 0.0
  %2719 = vmatpush2.msra.mxu0 0.0
  %2720 = vmatprep.subr.mxu0 0.0
  %2721 = vmatpush2.msra.mxu0 0.0
  %2722 = vmatprep.subr.mxu0 0.0
  %2723 = vmatpush2.msra.mxu0 0.0
  %2724 = vmatprep.subr.mxu0 0.0
  %2725 = vmatpush2.msra.mxu0 0.0
  %2726 = vmatprep.subr.mxu0 0.0
  %2727 = vmatpush2.msra.mxu0 0.0
  %2728 = vmatprep.subr.mxu0 0.0
  %2729 = vmatpush2.msra.mxu0 0.0
  %2730 = vmatprep.subr.mxu0 0.0
  %2731 = vmatpush2.msra.mxu0 0.0
  %2732 = vmatprep.subr.mxu0 0.0
  %2733 = vmatpush2.msra.mxu0 0.0
  %2734 = vmatprep.subr.mxu0 0.0
  %2735 = vmatpush2.msra.mxu0 0.0
  %2736 = vmatprep.subr.mxu0 0.0
  %2737 = vmatpush2.msra.mxu0 0.0
  %2738 = vmatprep.subr.mxu0 0.0
  %2739 = vmatpush2.msra.mxu0 0.0
  %2740 = vmatprep.subr.mxu0 0.0
  %2741 = vmatpush2.msra.mxu0 0.0
  %2742 = vmatprep.subr.mxu0 0.0
  %2743 = vmatpush2.msra.mxu0 0.0
  %2744 = vmatprep.subr.mxu0 0.0
  %2745 = vmatpush2.msra.mxu0 0.0
  %2746 = vmatprep.subr.mxu0 0.0
  %2747 = vmatpush2.msra.mxu0 0.0
  %2748 = vmatprep.subr.mxu0 0.0
  %2749 = vmatpush2.msra.mxu0 0.0
  %2750 = vmatprep.mubr.f32.mxu0 0.0
  %2751 = vmatmul.mubr.f32.gmra.mxu0 %v2684
  %v2752 = vpop.f32.mrf.mxu0
  %v2753 = vadd.f32 %v2679, %v2752
  %v2754 = vpop.f32.mrf.mxu0
  %v2755 = vadd.f32 %v2681, %v2754
  %2756 = vdwg.mxu0
  %vm2757 = vcmp.ge.s32.totalorder %v1243, %v89
  %vm2758 = vcmp.ge.s32.totalorder %v1244, %v89
  %vm2759 = vcmp.ge.s32.totalorder %v1245, %v89
  %vm2760 = vcmp.ge.s32.totalorder %v1246, %v89
  %vm2761 = vcmp.ge.s32.totalorder %v1247, %v89
  %vm2762 = vcmp.ge.s32.totalorder %v1248, %v89
  %vm2763 = vcmp.ge.s32.totalorder %v1249, %v89
  %vm2764 = vcmp.ge.s32.totalorder %v1250, %v89
  %vm2765 = vcmp.ge.s32.totalorder %v1251, %v89
  %vm2766 = vcmp.lt.s32.totalorder %v1243, %v100
  %vm2767 = vcmp.lt.s32.totalorder %v1244, %v100
  %vm2768 = vcmp.lt.s32.totalorder %v1245, %v100
  %vm2769 = vcmp.lt.s32.totalorder %v1246, %v100
  %vm2770 = vcmp.lt.s32.totalorder %v1247, %v100
  %vm2771 = vcmp.lt.s32.totalorder %v1248, %v100
  %vm2772 = vcmp.lt.s32.totalorder %v1249, %v100
  %vm2773 = vcmp.lt.s32.totalorder %v1250, %v100
  %vm2774 = vcmp.lt.s32.totalorder %v1251, %v100
  %vm2775 = vmand %vm2757, %vm2766
  %vm2776 = vmand %vm2758, %vm2767
  %vm2777 = vmand %vm2759, %vm2768
  %vm2778 = vmand %vm2760, %vm2769
  %vm2779 = vmand %vm2761, %vm2770
  %vm2780 = vmand %vm2762, %vm2771
  %vm2781 = vmand %vm2763, %vm2772
  %vm2782 = vmand %vm2764, %vm2773
  %vm2783 = vmand %vm2765, %vm2774
  %v2784 = vsel %vm2775, 1, 0
  %v2785 = vsel %vm2776, 1, 0
  %v2786 = vsel %vm2777, 1, 0
  %v2787 = vsel %vm2778, 1, 0
  %v2788 = vsel %vm2779, 1, 0
  %v2789 = vsel %vm2780, 1, 0
  %v2790 = vsel %vm2781, 1, 0
  %v2791 = vsel %vm2782, 1, 0
  %v2792 = vsel %vm2783, 1, 0
  %v2793 = vcvt.s32.f32 %v2784
  %v2794 = vcvt.s32.f32 %v2785
  %v2795 = vcvt.s32.f32 %v2786
  %v2796 = vcvt.s32.f32 %v2787
  %v2797 = vcvt.s32.f32 %v2788
  %v2798 = vcvt.s32.f32 %v2789
  %v2799 = vcvt.s32.f32 %v2790
  %v2800 = vcvt.s32.f32 %v2791
  %v2801 = vcvt.s32.f32 %v2792
  %vm2802 = vcmp.ge.s32.totalorder %v1386, %v137
  %vm2803 = vcmp.lt.s32.totalorder %v1386, %v140
  %vm2804 = vmand %vm2802, %vm2803
  %v2805 = vsel %vm2804, 1, 0
  %v2806 = vcvt.s32.f32 %v2805
  %vm2807 = vcmp.ge.s32.totalorder %v82, %v145
  %vm2808 = vcmp.ge.s32.totalorder %v83, %v145
  %vm2809 = vcmp.ge.s32.totalorder %v84, %v145
  %vm2810 = vcmp.ge.s32.totalorder %v85, %v145
  %vm2811 = vcmp.lt.s32.totalorder %v82, %v150
  %vm2812 = vcmp.lt.s32.totalorder %v83, %v150
  %vm2813 = vcmp.lt.s32.totalorder %v84, %v150
  %vm2814 = vcmp.lt.s32.totalorder %v85, %v150
  %vm2815 = vmand %vm2807, %vm2811
  %vm2816 = vmand %vm2808, %vm2812
  %vm2817 = vmand %vm2809, %vm2813
  %vm2818 = vmand %vm2810, %vm2814
  %v2819 = vsel %vm2815, 1, 0
  %v2820 = vsel %vm2816, 1, 0
  %v2821 = vsel %vm2817, 1, 0
  %v2822 = vsel %vm2818, 1, 0
  %v2823 = vcvt.s32.f32 %v2819
  %v2824 = vcvt.s32.f32 %v2820
  %v2825 = vcvt.s32.f32 %v2821
  %v2826 = vcvt.s32.f32 %v2822
  %v2827 = vsel %vm396, %v2753, 0.0
  %v2828 = vrot.slane %v2827, 4
  %v2829 = vadd.f32 %v2827, %v2828
  %v2830 = vrot.slane %v2829, 2
  %v2831 = vadd.f32 %v2829, %v2830
  %v2832 = vrot.slane %v2831, 1
  %v2833 = vadd.f32 %v2831, %v2832
  %vm2834 = vcmask 123904
  %v2835 = vsel %vm2834, %v2755, 0.0
  %v2836 = vrot.slane %v2835, 4
  %v2837 = vadd.f32 %v2835, %v2836
  %v2838 = vrot.slane %v2837, 2
  %v2839 = vadd.f32 %v2837, %v2838
  %v2840 = vrot.slane %v2839, 1
  %v2841 = vadd.f32 %v2839, %v2840
  %v2842 = vmul.f32 %v2753, %v2753
  %v2843 = vmul.f32 %v2755, %v2755
  %v2844 = vsel %vm396, %v2842, 0.0
  %v2845 = vrot.slane %v2844, 4
  %v2846 = vadd.f32 %v2844, %v2845
  %v2847 = vrot.slane %v2846, 2
  %v2848 = vadd.f32 %v2846, %v2847
  %v2849 = vrot.slane %v2848, 1
  %v2850 = vadd.f32 %v2848, %v2849
  %v2851 = vsel %vm2834, %v2843, 0.0
  %v2852 = vrot.slane %v2851, 4
  %v2853 = vadd.f32 %v2851, %v2852
  %v2854 = vrot.slane %v2853, 2
  %v2855 = vadd.f32 %v2853, %v2854
  %v2856 = vrot.slane %v2855, 1
  %v2857 = vadd.f32 %v2855, %v2856
  %v2858 = vsel %vm297, %v2833, %v2850
  %v2859 = vsel %vm297, %v2841, %v2857
  %vm2860 = vcmask 130048
  %v2862 = vsel %vm2860, %v2859, 0
  %2864 = vmatprep.subr.mxu0 0.0
  %2865 = vmatpush1.msra.mxu0 %v2799
  %2866 = vmatprep.subr.mxu0 0.0
  %2867 = vmatpush1.msra.mxu0 %v2798
  %2868 = vmatprep.subr.mxu0 0.0
  %2869 = vmatpush1.msra.mxu0 %v2797
  %2870 = vmatprep.subr.mxu0 0.0
  %2871 = vmatpush1.msra.mxu0 %v2796
  %2872 = vmatprep.subr.mxu0 0.0
  %2873 = vmatpush1.msra.mxu0 %v2795
  %2874 = vmatprep.subr.mxu0 0.0
  %2875 = vmatpush1.msra.mxu0 %v2794
  %2876 = vmatprep.subr.mxu0 0.0
  %2877 = vmatpush1.msra.mxu0 %v2793
  %2878 = vmatprep.subr.mxu0 0.0
  %2879 = vmatpush1.msra.mxu0 %v136
  %2880 = vmatprep.subr.mxu0 0.0
  %2881 = vmatpush1.msra.mxu0 %v135
  %2882 = vmatprep.subr.mxu0 0.0
  %2883 = vmatpush1.msra.mxu0 %v134
  %2884 = vmatprep.subr.mxu0 0.0
  %2885 = vmatpush1.msra.mxu0 %v133
  %2886 = vmatprep.subr.mxu0 0.0
  %2887 = vmatpush1.msra.mxu0 %v132
  %2888 = vmatprep.subr.mxu0 0.0
  %2889 = vmatpush1.msra.mxu0 %v131
  %2890 = vmatprep.subr.mxu0 0.0
  %2891 = vmatpush1.msra.mxu0 %v130
  %2892 = vmatprep.subr.mxu0 0.0
  %2893 = vmatpush1.msra.mxu0 %v129
  %2894 = vmatprep.subr.mxu0 0.0
  %2895 = vmatpush1.msra.mxu0 %v128
  %2896 = vmatprep.subr.mxu0 0.0
  %2897 = vmatpush2.msra.mxu0 0.0
  %2898 = vmatprep.subr.mxu0 0.0
  %2899 = vmatpush2.msra.mxu0 0.0
  %2900 = vmatprep.subr.mxu0 0.0
  %2901 = vmatpush2.msra.mxu0 0.0
  %2902 = vmatprep.subr.mxu0 0.0
  %2903 = vmatpush2.msra.mxu0 0.0
  %2904 = vmatprep.subr.mxu0 0.0
  %2905 = vmatpush2.msra.mxu0 0.0
  %2906 = vmatprep.subr.mxu0 0.0
  %2907 = vmatpush2.msra.mxu0 0.0
  %2908 = vmatprep.subr.mxu0 0.0
  %2909 = vmatpush2.msra.mxu0 0.0
  %2910 = vmatprep.subr.mxu0 0.0
  %2911 = vmatpush2.msra.mxu0 0.0
  %2912 = vmatprep.subr.mxu0 0.0
  %2913 = vmatpush2.msra.mxu0 0.0
  %2914 = vmatprep.subr.mxu0 0.0
  %2915 = vmatpush2.msra.mxu0 0.0
  %2916 = vmatprep.subr.mxu0 0.0
  %2917 = vmatpush2.msra.mxu0 0.0
  %2918 = vmatprep.subr.mxu0 0.0
  %2919 = vmatpush2.msra.mxu0 0.0
  %2920 = vmatprep.subr.mxu0 0.0
  %2921 = vmatpush2.msra.mxu0 0.0
  %2922 = vmatprep.subr.mxu0 0.0
  %2923 = vmatpush2.msra.mxu0 0.0
  %2924 = vmatprep.subr.mxu0 0.0
  %2925 = vmatpush2.msra.mxu0 %v2801
  %2926 = vmatprep.subr.mxu0 0.0
  %2927 = vmatpush2.msra.mxu0 %v2800
  %2928 = vmatprep.mubr.f32.mxu0 %v2862
  %2929 = vmatmul.mubr.f32.gmra.mxu0 %v2858
  %v2930 = vpop.f32.mrf.mxu0
  %v2931 = vadd.f32 0.0, %v2930
  %v2932 = vpop.f32.mrf.mxu0
  %2933 = vdwg.mxu0
  %v2934 = vmul.f32 %v2931, %v373
  %v2935 = vmul.f32 %v2934, %v2934
  %v2937 = vrot.slane %v2935, 7
  %v2939 = vsub.f32 %v2934, %v2937
  %v2940 = vadd.f32 %v2939, 1e-05
  %v2941 = vrsqrt.pop %v2940
  %v2943 = vrot.slane %v2941, 3
  %v2945 = vmul.f32 %v72, %v2943
  %v2947 = vrot.slane %v2945, 6
  %v2949 = vmul.f32 %v2934, %v2947
  %v2951 = vrot.slane %v2949, 1
  %v2953 = vsub.f32 %v72, %v2951
  %v2955 = vrot.slane %v2953, 6
  %v2957 = vsel %vm297, %v2947, %v2955
  %vm2958 = vcmask 31744
  %v2960 = vsel %vm2958, %v2957, 0
  %vm2962 = vcmask 1043456
  %v2963 = vsel %vm2962, %v144, 0
  %v2966 = vsel %vm2962, %v2806, 0
  %2968 = vmatprep.subr.mxu0 0.0
  %2969 = vmatpush1.msra.mxu0 0.0
  %2970 = vmatprep.subr.mxu0 0.0
  %2971 = vmatpush1.msra.mxu0 0.0
  %2972 = vmatprep.subr.mxu0 0.0
  %2973 = vmatpush1.msra.mxu0 0.0
  %2974 = vmatprep.subr.mxu0 0.0
  %2975 = vmatpush1.msra.mxu0 0.0
  %2976 = vmatprep.subr.mxu0 0.0
  %2977 = vmatpush1.msra.mxu0 0.0
  %2978 = vmatprep.subr.mxu0 0.0
  %2979 = vmatpush1.msra.mxu0 0.0
  %2980 = vmatprep.subr.mxu0 0.0
  %2981 = vmatpush1.msra.mxu0 0.0
  %2982 = vmatprep.subr.mxu0 0.0
  %2983 = vmatpush1.msra.mxu0 0.0
  %2984 = vmatprep.subr.mxu0 0.0
  %2985 = vmatpush1.msra.mxu0 0.0
  %2986 = vmatprep.subr.mxu0 0.0
  %2987 = vmatpush1.msra.mxu0 0.0
  %2988 = vmatprep.subr.mxu0 0.0
  %2989 = vmatpush1.msra.mxu0 0.0
  %2990 = vmatprep.subr.mxu0 0.0
  %2991 = vmatpush1.msra.mxu0 0.0
  %2992 = vmatprep.subr.mxu0 0.0
  %2993 = vmatpush1.msra.mxu0 0.0
  %2994 = vmatprep.subr.mxu0 0.0
  %2995 = vmatpush1.msra.mxu0 0.0
  %2996 = vmatprep.subr.mxu0 0.0
  %2997 = vmatpush1.msra.mxu0 0.0
  %2998 = vmatprep.subr.mxu0 %v2966
  %2999 = vmatpush1.msra.mxu0 %v2963
  %3000 = vmatprep.subr.mxu0 0.0
  %3001 = vmatpush2.msra.mxu0 0.0
  %3002 = vmatprep.subr.mxu0 0.0
  %3003 = vmatpush2.msra.mxu0 0.0
  %3004 = vmatprep.subr.mxu0 0.0
  %3005 = vmatpush2.msra.mxu0 0.0
  %3006 = vmatprep.subr.mxu0 0.0
  %3007 = vmatpush2.msra.mxu0 0.0
  %3008 = vmatprep.subr.mxu0 0.0
  %3009 = vmatpush2.msra.mxu0 0.0
  %3010 = vmatprep.subr.mxu0 0.0
  %3011 = vmatpush2.msra.mxu0 0.0
  %3012 = vmatprep.subr.mxu0 0.0
  %3013 = vmatpush2.msra.mxu0 0.0
  %3014 = vmatprep.subr.mxu0 0.0
  %3015 = vmatpush2.msra.mxu0 0.0
  %3016 = vmatprep.subr.mxu0 0.0
  %3017 = vmatpush2.msra.mxu0 0.0
  %3018 = vmatprep.subr.mxu0 0.0
  %3019 = vmatpush2.msra.mxu0 0.0
  %3020 = vmatprep.subr.mxu0 0.0
  %3021 = vmatpush2.msra.mxu0 0.0
  %3022 = vmatprep.subr.mxu0 0.0
  %3023 = vmatpush2.msra.mxu0 0.0
  %3024 = vmatprep.subr.mxu0 0.0
  %3025 = vmatpush2.msra.mxu0 0.0
  %3026 = vmatprep.subr.mxu0 0.0
  %3027 = vmatpush2.msra.mxu0 0.0
  %3028 = vmatprep.subr.mxu0 0.0
  %3029 = vmatpush2.msra.mxu0 0.0
  %3030 = vmatprep.subr.mxu0 0.0
  %3031 = vmatpush2.msra.mxu0 0.0
  %3032 = vmatprep.mubr.f32.mxu0 0.0
  %3033 = vmatmul.mubr.f32.gmra.mxu0 %v2960
  %v3034 = vpop.f32.mrf.mxu0
  %v3035 = vadd.f32 0.0, %v3034
  %v3036 = vpop.f32.mrf.mxu0
  %v3037 = vadd.f32 0.0, %v3036
  %3038 = vdwg.mxu0
  %v3039 = vlaneseq
  %v3040 = vshrl.u32 %v3039, 7
  %v3041 = vsub.s32 0, %v3040
  %v3042 = vrot.slane %v3035, %v3041
  %v3043 = vlaneseq
  %v3044 = vshrl.u32 %v3043, 7
  %v3045 = vsub.s32 0, %v3044
  %v3046 = vrot.slane %v3037, %v3045
  %v3047 = vmul.f32 %v2753, %v3042
  %v3048 = vmul.f32 %v2755, %v3046
  %v3049 = vlaneseq
  %v3050 = vshrl.u32 %v3049, 7
  %v3051 = vsub.s32 1, %v3050
  %v3052 = vrot.slane %v3035, %v3051
  %v3053 = vlaneseq
  %v3054 = vshrl.u32 %v3053, 7
  %v3055 = vsub.s32 1, %v3054
  %v3056 = vrot.slane %v3037, %v3055
  %v3057 = vadd.f32 %v3047, %v3052
  %v3058 = vadd.f32 %v3048, %v3056
  %vm3059 = vcmp.gt.f32.partialorder %v3057, 0.0
  %vm3060 = vcmp.gt.f32.partialorder %v3058, 0.0
  %v3061 = vmul.f32 %v3057, 0.01
  %v3062 = vmul.f32 %v3058, 0.01
  %v3063 = vsel %vm3059, %v3057, %v3061
  %v3064 = vsel %vm3060, %v3058, %v3062
  %v3065 = vld [vmem:[%s12] sm:$0xff]
  %v3066 = vld [vmem:[%s12 + $0x8] sm:$0xff]
  %v3067 = vld [vmem:[%s12 + $0x10] sm:$0xff]
  %v3068 = vld [vmem:[%s12 + $0x18] sm:$0xff]
  %v3069 = vld [vmem:[%s12 + $0x20] sm:$0xff]
  %v3070 = vld [vmem:[%s12 + $0x28] sm:$0xff]
  %v3071 = vld [vmem:[%s12 + $0x30] sm:$0xff]
  %v3072 = vld [vmem:[%s12 + $0x38] sm:$0xff]
  %v3073 = vld [vmem:[%s12 + $0x40] sm:$0xff]
  %v3074 = vld [vmem:[%s12 + $0x48] sm:$0xff]
  %v3075 = vld [vmem:[%s12 + $0x50] sm:$0xff]
  %v3076 = vld [vmem:[%s12 + $0x58] sm:$0xff]
  %v3077 = vld [vmem:[%s12 + $0x60] sm:$0xff]
  %v3078 = vld [vmem:[%s12 + $0x68] sm:$0xff]
  %v3079 = vld [vmem:[%s12 + $0x70] sm:$0xff]
  %v3080 = vld [vmem:[%s12 + $0x78] sm:$0xff]
  %v3081 = vld [vmem:[%s12 + $0x80] sm:$0xff]
  %v3082 = vld [vmem:[%s12 + $0x88] sm:$0xff]
  %v3084 = vsel %vm2860, %v3064, 0
  %3086 = vmatprep.subr.mxu0 0.0
  %3087 = vmatpush1.msra.mxu0 %v3080
  %3088 = vmatprep.subr.mxu0 0.0
  %3089 = vmatpush1.msra.mxu0 %v3079
  %3090 = vmatprep.subr.mxu0 0.0
  %3091 = vmatpush1.msra.mxu0 %v3078
  %3092 = vmatprep.subr.mxu0 0.0
  %3093 = vmatpush1.msra.mxu0 %v3077
  %3094 = vmatprep.subr.mxu0 0.0
  %3095 = vmatpush1.msra.mxu0 %v3076
  %3096 = vmatprep.subr.mxu0 0.0
  %3097 = vmatpush1.msra.mxu0 %v3075
  %3098 = vmatprep.subr.mxu0 0.0
  %3099 = vmatpush1.msra.mxu0 %v3074
  %3100 = vmatprep.subr.mxu0 0.0
  %3101 = vmatpush1.msra.mxu0 %v3073
  %3102 = vmatprep.subr.mxu0 0.0
  %3103 = vmatpush1.msra.mxu0 %v3072
  %3104 = vmatprep.subr.mxu0 0.0
  %3105 = vmatpush1.msra.mxu0 %v3071
  %3106 = vmatprep.subr.mxu0 0.0
  %3107 = vmatpush1.msra.mxu0 %v3070
  %3108 = vmatprep.subr.mxu0 0.0
  %3109 = vmatpush1.msra.mxu0 %v3069
  %3110 = vmatprep.subr.mxu0 0.0
  %3111 = vmatpush1.msra.mxu0 %v3068
  %3112 = vmatprep.subr.mxu0 0.0
  %3113 = vmatpush1.msra.mxu0 %v3067
  %3114 = vmatprep.subr.mxu0 0.0
  %3115 = vmatpush1.msra.mxu0 %v3066
  %3116 = vmatprep.subr.mxu0 0.0
  %3117 = vmatpush1.msra.mxu0 %v3065
  %3118 = vmatprep.subr.mxu0 0.0
  %3119 = vmatpush2.msra.mxu0 0.0
  %3120 = vmatprep.subr.mxu0 0.0
  %3121 = vmatpush2.msra.mxu0 0.0
  %3122 = vmatprep.subr.mxu0 0.0
  %3123 = vmatpush2.msra.mxu0 0.0
  %3124 = vmatprep.subr.mxu0 0.0
  %3125 = vmatpush2.msra.mxu0 0.0
  %3126 = vmatprep.subr.mxu0 0.0
  %3127 = vmatpush2.msra.mxu0 0.0
  %3128 = vmatprep.subr.mxu0 0.0
  %3129 = vmatpush2.msra.mxu0 0.0
  %3130 = vmatprep.subr.mxu0 0.0
  %3131 = vmatpush2.msra.mxu0 0.0
  %3132 = vmatprep.subr.mxu0 0.0
  %3133 = vmatpush2.msra.mxu0 0.0
  %3134 = vmatprep.subr.mxu0 0.0
  %3135 = vmatpush2.msra.mxu0 0.0
  %3136 = vmatprep.subr.mxu0 0.0
  %3137 = vmatpush2.msra.mxu0 0.0
  %3138 = vmatprep.subr.mxu0 0.0
  %3139 = vmatpush2.msra.mxu0 0.0
  %3140 = vmatprep.subr.mxu0 0.0
  %3141 = vmatpush2.msra.mxu0 0.0
  %3142 = vmatprep.subr.mxu0 0.0
  %3143 = vmatpush2.msra.mxu0 0.0
  %3144 = vmatprep.subr.mxu0 0.0
  %3145 = vmatpush2.msra.mxu0 0.0
  %3146 = vmatprep.subr.mxu0 0.0
  %3147 = vmatpush2.msra.mxu0 %v3082
  %3148 = vmatprep.subr.mxu0 0.0
  %3149 = vmatpush2.msra.mxu0 %v3081
  %3150 = vmatprep.mubr.f32.mxu0 %v3084
  %3151 = vmatmul.mubr.f32.gmra.mxu0 %v3063
  %v3152 = vpop.f32.mrf.mxu0
  %v3153 = vadd.f32 0.0, %v3152
  %v3154 = vpop.f32.mrf.mxu0
  %3155 = vdwg.mxu0
  %vm3156 = vcmask 517120
  %v3157 = vsel %vm3156, %v3153, 0.0
  %v3158 = vrot.slane %v3157, 4
  %v3159 = vadd.f32 %v3157, %v3158
  %v3160 = vrot.slane %v3159, 2
  %v3161 = vadd.f32 %v3159, %v3160
  %v3162 = vrot.slane %v3161, 1
  %v3163 = vadd.f32 %v3161, %v3162
  %v3164 = vmul.f32 %v3153, %v3153
  %v3165 = vsel %vm3156, %v3164, 0.0
  %v3166 = vrot.slane %v3165, 4
  %v3167 = vadd.f32 %v3165, %v3166
  %v3168 = vrot.slane %v3167, 2
  %v3169 = vadd.f32 %v3167, %v3168
  %v3170 = vrot.slane %v3169, 1
  %v3171 = vadd.f32 %v3169, %v3170
  %v3172 = vsel %vm297, %v3163, %v3171
  %v3174 = vsel %vm208, %v3172, 0
  %3176 = vmatprep.subr.mxu0 0.0
  %3177 = vmatpush1.msra.mxu0 0.0
  %3178 = vmatprep.subr.mxu0 0.0
  %3179 = vmatpush1.msra.mxu0 0.0
  %3180 = vmatprep.subr.mxu0 0.0
  %3181 = vmatpush1.msra.mxu0 0.0
  %3182 = vmatprep.subr.mxu0 0.0
  %3183 = vmatpush1.msra.mxu0 0.0
  %3184 = vmatprep.subr.mxu0 0.0
  %3185 = vmatpush1.msra.mxu0 0.0
  %3186 = vmatprep.subr.mxu0 0.0
  %3187 = vmatpush1.msra.mxu0 0.0
  %3188 = vmatprep.subr.mxu0 0.0
  %3189 = vmatpush1.msra.mxu0 0.0
  %3190 = vmatprep.subr.mxu0 0.0
  %3191 = vmatpush1.msra.mxu0 0.0
  %3192 = vmatprep.subr.mxu0 0.0
  %3193 = vmatpush1.msra.mxu0 %v2826
  %3194 = vmatprep.subr.mxu0 0.0
  %3195 = vmatpush1.msra.mxu0 %v2825
  %3196 = vmatprep.subr.mxu0 0.0
  %3197 = vmatpush1.msra.mxu0 %v2824
  %3198 = vmatprep.subr.mxu0 0.0
  %3199 = vmatpush1.msra.mxu0 %v2823
  %3200 = vmatprep.subr.mxu0 0.0
  %3201 = vmatpush1.msra.mxu0 %v166
  %3202 = vmatprep.subr.mxu0 0.0
  %3203 = vmatpush1.msra.mxu0 %v165
  %3204 = vmatprep.subr.mxu0 0.0
  %3205 = vmatpush1.msra.mxu0 %v164
  %3206 = vmatprep.subr.mxu0 0.0
  %3207 = vmatpush1.msra.mxu0 %v163
  %3208 = vmatprep.subr.mxu0 0.0
  %3209 = vmatpush2.msra.mxu0 0.0
  %3210 = vmatprep.subr.mxu0 0.0
  %3211 = vmatpush2.msra.mxu0 0.0
  %3212 = vmatprep.subr.mxu0 0.0
  %3213 = vmatpush2.msra.mxu0 0.0
  %3214 = vmatprep.subr.mxu0 0.0
  %3215 = vmatpush2.msra.mxu0 0.0
  %3216 = vmatprep.subr.mxu0 0.0
  %3217 = vmatpush2.msra.mxu0 0.0
  %3218 = vmatprep.subr.mxu0 0.0
  %3219 = vmatpush2.msra.mxu0 0.0
  %3220 = vmatprep.subr.mxu0 0.0
  %3221 = vmatpush2.msra.mxu0 0.0
  %3222 = vmatprep.subr.mxu0 0.0
  %3223 = vmatpush2.msra.mxu0 0.0
  %3224 = vmatprep.subr.mxu0 0.0
  %3225 = vmatpush2.msra.mxu0 0.0
  %3226 = vmatprep.subr.mxu0 0.0
  %3227 = vmatpush2.msra.mxu0 0.0
  %3228 = vmatprep.subr.mxu0 0.0
  %3229 = vmatpush2.msra.mxu0 0.0
  %3230 = vmatprep.subr.mxu0 0.0
  %3231 = vmatpush2.msra.mxu0 0.0
  %3232 = vmatprep.subr.mxu0 0.0
  %3233 = vmatpush2.msra.mxu0 0.0
  %3234 = vmatprep.subr.mxu0 0.0
  %3235 = vmatpush2.msra.mxu0 0.0
  %3236 = vmatprep.subr.mxu0 0.0
  %3237 = vmatpush2.msra.mxu0 0.0
  %3238 = vmatprep.subr.mxu0 0.0
  %3239 = vmatpush2.msra.mxu0 0.0
  %3240 = vmatprep.mubr.f32.mxu0 0.0
  %3241 = vmatmul.mubr.f32.gmra.mxu0 %v3174
  %v3242 = vpop.f32.mrf.mxu0
  %v3243 = vadd.f32 0.0, %v3242
  %v3244 = vpop.f32.mrf.mxu0
  %3245 = vdwg.mxu0
  %v3246 = vmul.f32 %v3243, %v656
  %v3247 = vmul.f32 %v3246, %v3246
  %v3249 = vrot.slane %v3247, 7
  %v3251 = vsub.f32 %v3246, %v3249
  %v3252 = vadd.f32 %v3251, 1e-05
  %v3253 = vrsqrt.pop %v3252
  %v3255 = vrot.slane %v3253, 1
  %v3257 = vmul.f32 %v73, %v3255
  %v3258 = vmul.f32 %v3246, %v3257
  %v3260 = vrot.slane %v3258, 7
  %v3262 = vsub.f32 %v73, %v3260
  %v3263 = vsel %vm297, %v3257, %v3262
  %v3265 = vsel %vm2958, %v3263, 0
  %v3267 = vsel %vm2962, %v173, 0
  %3269 = vmatprep.subr.mxu0 0.0
  %3270 = vmatpush1.msra.mxu0 0.0
  %3271 = vmatprep.subr.mxu0 0.0
  %3272 = vmatpush1.msra.mxu0 0.0
  %3273 = vmatprep.subr.mxu0 0.0
  %3274 = vmatpush1.msra.mxu0 0.0
  %3275 = vmatprep.subr.mxu0 0.0
  %3276 = vmatpush1.msra.mxu0 0.0
  %3277 = vmatprep.subr.mxu0 0.0
  %3278 = vmatpush1.msra.mxu0 0.0
  %3279 = vmatprep.subr.mxu0 0.0
  %3280 = vmatpush1.msra.mxu0 0.0
  %3281 = vmatprep.subr.mxu0 0.0
  %3282 = vmatpush1.msra.mxu0 0.0
  %3283 = vmatprep.subr.mxu0 0.0
  %3284 = vmatpush1.msra.mxu0 0.0
  %3285 = vmatprep.subr.mxu0 0.0
  %3286 = vmatpush1.msra.mxu0 0.0
  %3287 = vmatprep.subr.mxu0 0.0
  %3288 = vmatpush1.msra.mxu0 0.0
  %3289 = vmatprep.subr.mxu0 0.0
  %3290 = vmatpush1.msra.mxu0 0.0
  %3291 = vmatprep.subr.mxu0 0.0
  %3292 = vmatpush1.msra.mxu0 0.0
  %3293 = vmatprep.subr.mxu0 0.0
  %3294 = vmatpush1.msra.mxu0 0.0
  %3295 = vmatprep.subr.mxu0 0.0
  %3296 = vmatpush1.msra.mxu0 0.0
  %3297 = vmatprep.subr.mxu0 0.0
  %3298 = vmatpush1.msra.mxu0 0.0
  %3299 = vmatprep.subr.mxu0 0.0
  %3300 = vmatpush1.msra.mxu0 %v3267
  %3301 = vmatprep.subr.mxu0 0.0
  %3302 = vmatpush2.msra.mxu0 0.0
  %3303 = vmatprep.subr.mxu0 0.0
  %3304 = vmatpush2.msra.mxu0 0.0
  %3305 = vmatprep.subr.mxu0 0.0
  %3306 = vmatpush2.msra.mxu0 0.0
  %3307 = vmatprep.subr.mxu0 0.0
  %3308 = vmatpush2.msra.mxu0 0.0
  %3309 = vmatprep.subr.mxu0 0.0
  %3310 = vmatpush2.msra.mxu0 0.0
  %3311 = vmatprep.subr.mxu0 0.0
  %3312 = vmatpush2.msra.mxu0 0.0
  %3313 = vmatprep.subr.mxu0 0.0
  %3314 = vmatpush2.msra.mxu0 0.0
  %3315 = vmatprep.subr.mxu0 0.0
  %3316 = vmatpush2.msra.mxu0 0.0
  %3317 = vmatprep.subr.mxu0 0.0
  %3318 = vmatpush2.msra.mxu0 0.0
  %3319 = vmatprep.subr.mxu0 0.0
  %3320 = vmatpush2.msra.mxu0 0.0
  %3321 = vmatprep.subr.mxu0 0.0
  %3322 = vmatpush2.msra.mxu0 0.0
  %3323 = vmatprep.subr.mxu0 0.0
  %3324 = vmatpush2.msra.mxu0 0.0
  %3325 = vmatprep.subr.mxu0 0.0
  %3326 = vmatpush2.msra.mxu0 0.0
  %3327 = vmatprep.subr.mxu0 0.0
  %3328 = vmatpush2.msra.mxu0 0.0
  %3329 = vmatprep.subr.mxu0 0.0
  %3330 = vmatpush2.msra.mxu0 0.0
  %3331 = vmatprep.subr.mxu0 0.0
  %3332 = vmatpush2.msra.mxu0 0.0
  %3333 = vmatprep.mubr.f32.mxu0 0.0
  %3334 = vmatmul.mubr.f32.gmra.mxu0 %v3265
  %v3335 = vpop.f32.mrf.mxu0
  %v3336 = vadd.f32 0.0, %v3335
  %v3337 = vpop.f32.mrf.mxu0
  %3338 = vdwg.mxu0
  %v3339 = vlaneseq
  %v3340 = vshrl.u32 %v3339, 7
  %v3341 = vsub.s32 0, %v3340
  %v3342 = vrot.slane %v3336, %v3341
  %v3343 = vmul.f32 %v3153, %v3342
  %v3344 = vlaneseq
  %v3345 = vshrl.u32 %v3344, 7
  %v3346 = vsub.s32 1, %v3345
  %v3347 = vrot.slane %v3336, %v3346
  %v3348 = vadd.f32 %v3343, %v3347
  %vm3349 = vcmp.gt.f32.partialorder %v3348, 0.0
  %v3350 = vmul.f32 %v3348, 0.01
  %v3351 = vsel %vm3349, %v3348, %v3350
  %v3352 = vld [vmem:[%s13] sm:$0xff]
  %v3353 = vld [vmem:[%s13 + $0x8] sm:$0xff]
  %v3354 = vld [vmem:[%s13 + $0x10] sm:$0xff]
  %v3355 = vld [vmem:[%s13 + $0x18] sm:$0xff]
  %v3356 = vld [vmem:[%s13 + $0x20] sm:$0xff]
  %v3357 = vld [vmem:[%s13 + $0x28] sm:$0xff]
  %v3358 = vld [vmem:[%s13 + $0x30] sm:$0xff]
  %v3359 = vld [vmem:[%s13 + $0x38] sm:$0xff]
  %v3361 = vsel %vm208, %v3351, 0
  %3363 = vmatprep.subr.mxu0 0.0
  %3364 = vmatpush1.msra.mxu0 0.0
  %3365 = vmatprep.subr.mxu0 0.0
  %3366 = vmatpush1.msra.mxu0 0.0
  %3367 = vmatprep.subr.mxu0 0.0
  %3368 = vmatpush1.msra.mxu0 0.0
  %3369 = vmatprep.subr.mxu0 0.0
  %3370 = vmatpush1.msra.mxu0 0.0
  %3371 = vmatprep.subr.mxu0 0.0
  %3372 = vmatpush1.msra.mxu0 0.0
  %3373 = vmatprep.subr.mxu0 0.0
  %3374 = vmatpush1.msra.mxu0 0.0
  %3375 = vmatprep.subr.mxu0 0.0
  %3376 = vmatpush1.msra.mxu0 0.0
  %3377 = vmatprep.subr.mxu0 0.0
  %3378 = vmatpush1.msra.mxu0 0.0
  %3379 = vmatprep.subr.mxu0 0.0
  %3380 = vmatpush1.msra.mxu0 %v3359
  %3381 = vmatprep.subr.mxu0 0.0
  %3382 = vmatpush1.msra.mxu0 %v3358
  %3383 = vmatprep.subr.mxu0 0.0
  %3384 = vmatpush1.msra.mxu0 %v3357
  %3385 = vmatprep.subr.mxu0 0.0
  %3386 = vmatpush1.msra.mxu0 %v3356
  %3387 = vmatprep.subr.mxu0 0.0
  %3388 = vmatpush1.msra.mxu0 %v3355
  %3389 = vmatprep.subr.mxu0 0.0
  %3390 = vmatpush1.msra.mxu0 %v3354
  %3391 = vmatprep.subr.mxu0 0.0
  %3392 = vmatpush1.msra.mxu0 %v3353
  %3393 = vmatprep.subr.mxu0 0.0
  %3394 = vmatpush1.msra.mxu0 %v3352
  %3395 = vmatprep.subr.mxu0 0.0
  %3396 = vmatpush2.msra.mxu0 0.0
  %3397 = vmatprep.subr.mxu0 0.0
  %3398 = vmatpush2.msra.mxu0 0.0
  %3399 = vmatprep.subr.mxu0 0.0
  %3400 = vmatpush2.msra.mxu0 0.0
  %3401 = vmatprep.subr.mxu0 0.0
  %3402 = vmatpush2.msra.mxu0 0.0
  %3403 = vmatprep.subr.mxu0 0.0
  %3404 = vmatpush2.msra.mxu0 0.0
  %3405 = vmatprep.subr.mxu0 0.0
  %3406 = vmatpush2.msra.mxu0 0.0
  %3407 = vmatprep.subr.mxu0 0.0
  %3408 = vmatpush2.msra.mxu0 0.0
  %3409 = vmatprep.subr.mxu0 0.0
  %3410 = vmatpush2.msra.mxu0 0.0
  %3411 = vmatprep.subr.mxu0 0.0
  %3412 = vmatpush2.msra.mxu0 0.0
  %3413 = vmatprep.subr.mxu0 0.0
  %3414 = vmatpush2.msra.mxu0 0.0
  %3415 = vmatprep.subr.mxu0 0.0
  %3416 = vmatpush2.msra.mxu0 0.0
  %3417 = vmatprep.subr.mxu0 0.0
  %3418 = vmatpush2.msra.mxu0 0.0
  %3419 = vmatprep.subr.mxu0 0.0
  %3420 = vmatpush2.msra.mxu0 0.0
  %3421 = vmatprep.subr.mxu0 0.0
  %3422 = vmatpush2.msra.mxu0 0.0
  %3423 = vmatprep.subr.mxu0 0.0
  %3424 = vmatpush2.msra.mxu0 0.0
  %3425 = vmatprep.subr.mxu0 0.0
  %3426 = vmatpush2.msra.mxu0 0.0
  %3427 = vmatprep.mubr.f32.mxu0 0.0
  %3428 = vmatmul.mubr.f32.gmra.mxu0 %v3361
  %v3429 = vpop.f32.mrf.mxu0
  %v3430 = vadd.f32 0.0, %v3429
  %v3431 = vpop.f32.mrf.mxu0
  %3432 = vdwg.mxu0
  %v3433 = vsel %vm3156, %v3430, 0.0
  %v3434 = vrot.slane %v3433, 4
  %v3435 = vadd.f32 %v3433, %v3434
  %v3436 = vrot.slane %v3435, 2
  %v3437 = vadd.f32 %v3435, %v3436
  %v3438 = vrot.slane %v3437, 1
  %v3439 = vadd.f32 %v3437, %v3438
  %v3440 = vmul.f32 %v3430, %v3430
  %v3441 = vsel %vm3156, %v3440, 0.0
  %v3442 = vrot.slane %v3441, 4
  %v3443 = vadd.f32 %v3441, %v3442
  %v3444 = vrot.slane %v3443, 2
  %v3445 = vadd.f32 %v3443, %v3444
  %v3446 = vrot.slane %v3445, 1
  %v3447 = vadd.f32 %v3445, %v3446
  %v3448 = vsel %vm297, %v3439, %v3447
  %v3450 = vsel %vm208, %v3448, 0
  %3452 = vmatprep.subr.mxu0 0.0
  %3453 = vmatpush1.msra.mxu0 0.0
  %3454 = vmatprep.subr.mxu0 0.0
  %3455 = vmatpush1.msra.mxu0 0.0
  %3456 = vmatprep.subr.mxu0 0.0
  %3457 = vmatpush1.msra.mxu0 0.0
  %3458 = vmatprep.subr.mxu0 0.0
  %3459 = vmatpush1.msra.mxu0 0.0
  %3460 = vmatprep.subr.mxu0 0.0
  %3461 = vmatpush1.msra.mxu0 0.0
  %3462 = vmatprep.subr.mxu0 0.0
  %3463 = vmatpush1.msra.mxu0 0.0
  %3464 = vmatprep.subr.mxu0 0.0
  %3465 = vmatpush1.msra.mxu0 0.0
  %3466 = vmatprep.subr.mxu0 0.0
  %3467 = vmatpush1.msra.mxu0 0.0
  %3468 = vmatprep.subr.mxu0 0.0
  %3469 = vmatpush1.msra.mxu0 %v2826
  %3470 = vmatprep.subr.mxu0 0.0
  %3471 = vmatpush1.msra.mxu0 %v2825
  %3472 = vmatprep.subr.mxu0 0.0
  %3473 = vmatpush1.msra.mxu0 %v2824
  %3474 = vmatprep.subr.mxu0 0.0
  %3475 = vmatpush1.msra.mxu0 %v2823
  %3476 = vmatprep.subr.mxu0 0.0
  %3477 = vmatpush1.msra.mxu0 %v166
  %3478 = vmatprep.subr.mxu0 0.0
  %3479 = vmatpush1.msra.mxu0 %v165
  %3480 = vmatprep.subr.mxu0 0.0
  %3481 = vmatpush1.msra.mxu0 %v164
  %3482 = vmatprep.subr.mxu0 0.0
  %3483 = vmatpush1.msra.mxu0 %v163
  %3484 = vmatprep.subr.mxu0 0.0
  %3485 = vmatpush2.msra.mxu0 0.0
  %3486 = vmatprep.subr.mxu0 0.0
  %3487 = vmatpush2.msra.mxu0 0.0
  %3488 = vmatprep.subr.mxu0 0.0
  %3489 = vmatpush2.msra.mxu0 0.0
  %3490 = vmatprep.subr.mxu0 0.0
  %3491 = vmatpush2.msra.mxu0 0.0
  %3492 = vmatprep.subr.mxu0 0.0
  %3493 = vmatpush2.msra.mxu0 0.0
  %3494 = vmatprep.subr.mxu0 0.0
  %3495 = vmatpush2.msra.mxu0 0.0
  %3496 = vmatprep.subr.mxu0 0.0
  %3497 = vmatpush2.msra.mxu0 0.0
  %3498 = vmatprep.subr.mxu0 0.0
  %3499 = vmatpush2.msra.mxu0 0.0
  %3500 = vmatprep.subr.mxu0 0.0
  %3501 = vmatpush2.msra.mxu0 0.0
  %3502 = vmatprep.subr.mxu0 0.0
  %3503 = vmatpush2.msra.mxu0 0.0
  %3504 = vmatprep.subr.mxu0 0.0
  %3505 = vmatpush2.msra.mxu0 0.0
  %3506 = vmatprep.subr.mxu0 0.0
  %3507 = vmatpush2.msra.mxu0 0.0
  %3508 = vmatprep.subr.mxu0 0.0
  %3509 = vmatpush2.msra.mxu0 0.0
  %3510 = vmatprep.subr.mxu0 0.0
  %3511 = vmatpush2.msra.mxu0 0.0
  %3512 = vmatprep.subr.mxu0 0.0
  %3513 = vmatpush2.msra.mxu0 0.0
  %3514 = vmatprep.subr.mxu0 0.0
  %3515 = vmatpush2.msra.mxu0 0.0
  %3516 = vmatprep.mubr.f32.mxu0 0.0
  %3517 = vmatmul.mubr.f32.gmra.mxu0 %v3450
  %v3518 = vpop.f32.mrf.mxu0
  %v3519 = vadd.f32 0.0, %v3518
  %v3520 = vpop.f32.mrf.mxu0
  %3521 = vdwg.mxu0
  %v3522 = vmul.f32 %v3519, %v656
  %v3523 = vmul.f32 %v3522, %v3522
  %v3525 = vrot.slane %v3523, 7
  %v3527 = vsub.f32 %v3522, %v3525
  %v3528 = vadd.f32 %v3527, 1e-05
  %v3529 = vrsqrt.pop %v3528
  %v3531 = vrot.slane %v3529, 7
  %v3533 = vmul.f32 %v73, %v3531
  %v3535 = vrot.slane %v3533, 2
  %v3537 = vmul.f32 %v3522, %v3535
  %v3539 = vrot.slane %v3537, 5
  %v3541 = vsub.f32 %v73, %v3539
  %v3543 = vrot.slane %v3541, 2
  %v3545 = vsel %vm297, %v3535, %v3543
  %v3547 = vsel %vm2958, %v3545, 0
  %3549 = vmatprep.subr.mxu0 0.0
  %3550 = vmatpush1.msra.mxu0 0.0
  %3551 = vmatprep.subr.mxu0 0.0
  %3552 = vmatpush1.msra.mxu0 0.0
  %3553 = vmatprep.subr.mxu0 0.0
  %3554 = vmatpush1.msra.mxu0 0.0
  %3555 = vmatprep.subr.mxu0 0.0
  %3556 = vmatpush1.msra.mxu0 0.0
  %3557 = vmatprep.subr.mxu0 0.0
  %3558 = vmatpush1.msra.mxu0 0.0
  %3559 = vmatprep.subr.mxu0 0.0
  %3560 = vmatpush1.msra.mxu0 0.0
  %3561 = vmatprep.subr.mxu0 0.0
  %3562 = vmatpush1.msra.mxu0 0.0
  %3563 = vmatprep.subr.mxu0 0.0
  %3564 = vmatpush1.msra.mxu0 0.0
  %3565 = vmatprep.subr.mxu0 0.0
  %3566 = vmatpush1.msra.mxu0 0.0
  %3567 = vmatprep.subr.mxu0 0.0
  %3568 = vmatpush1.msra.mxu0 0.0
  %3569 = vmatprep.subr.mxu0 0.0
  %3570 = vmatpush1.msra.mxu0 0.0
  %3571 = vmatprep.subr.mxu0 0.0
  %3572 = vmatpush1.msra.mxu0 0.0
  %3573 = vmatprep.subr.mxu0 0.0
  %3574 = vmatpush1.msra.mxu0 0.0
  %3575 = vmatprep.subr.mxu0 0.0
  %3576 = vmatpush1.msra.mxu0 0.0
  %3577 = vmatprep.subr.mxu0 0.0
  %3578 = vmatpush1.msra.mxu0 0.0
  %3579 = vmatprep.subr.mxu0 0.0
  %3580 = vmatpush1.msra.mxu0 %v3267
  %3581 = vmatprep.subr.mxu0 0.0
  %3582 = vmatpush2.msra.mxu0 0.0
  %3583 = vmatprep.subr.mxu0 0.0
  %3584 = vmatpush2.msra.mxu0 0.0
  %3585 = vmatprep.subr.mxu0 0.0
  %3586 = vmatpush2.msra.mxu0 0.0
  %3587 = vmatprep.subr.mxu0 0.0
  %3588 = vmatpush2.msra.mxu0 0.0
  %3589 = vmatprep.subr.mxu0 0.0
  %3590 = vmatpush2.msra.mxu0 0.0
  %3591 = vmatprep.subr.mxu0 0.0
  %3592 = vmatpush2.msra.mxu0 0.0
  %3593 = vmatprep.subr.mxu0 0.0
  %3594 = vmatpush2.msra.mxu0 0.0
  %3595 = vmatprep.subr.mxu0 0.0
  %3596 = vmatpush2.msra.mxu0 0.0
  %3597 = vmatprep.subr.mxu0 0.0
  %3598 = vmatpush2.msra.mxu0 0.0
  %3599 = vmatprep.subr.mxu0 0.0
  %3600 = vmatpush2.msra.mxu0 0.0
  %3601 = vmatprep.subr.mxu0 0.0
  %3602 = vmatpush2.msra.mxu0 0.0
  %3603 = vmatprep.subr.mxu0 0.0
  %3604 = vmatpush2.msra.mxu0 0.0
  %3605 = vmatprep.subr.mxu0 0.0
  %3606 = vmatpush2.msra.mxu0 0.0
  %3607 = vmatprep.subr.mxu0 0.0
  %3608 = vmatpush2.msra.mxu0 0.0
  %3609 = vmatprep.subr.mxu0 0.0
  %3610 = vmatpush2.msra.mxu0 0.0
  %3611 = vmatprep.subr.mxu0 0.0
  %3612 = vmatpush2.msra.mxu0 0.0
  %3613 = vmatprep.mubr.f32.mxu0 0.0
  %3614 = vmatmul.mubr.f32.gmra.mxu0 %v3547
  %v3615 = vpop.f32.mrf.mxu0
  %v3616 = vadd.f32 0.0, %v3615
  %v3617 = vpop.f32.mrf.mxu0
  %3618 = vdwg.mxu0
  %v3619 = vlaneseq
  %v3620 = vshrl.u32 %v3619, 7
  %v3621 = vsub.s32 0, %v3620
  %v3622 = vrot.slane %v3616, %v3621
  %v3623 = vmul.f32 %v3430, %v3622
  %v3624 = vlaneseq
  %v3625 = vshrl.u32 %v3624, 7
  %v3626 = vsub.s32 1, %v3625
  %v3627 = vrot.slane %v3616, %v3626
  %v3628 = vadd.f32 %v3623, %v3627
  %vm3629 = vcmp.gt.f32.partialorder %v3628, 0.0
  %v3630 = vmul.f32 %v3628, 0.01
  %v3631 = vsel %vm3629, %v3628, %v3630
  %v3632 = vsel %vm3156, %v3631, 0.0
  %v3633 = vrot.slane %v3632, 4
  %v3634 = vadd.f32 %v3632, %v3633
  %v3635 = vrot.slane %v3634, 2
  %v3636 = vadd.f32 %v3634, %v3635
  %v3637 = vrot.slane %v3636, 1
  %v3638 = vadd.f32 %v3636, %v3637
  %v3639 = vmul.f32 %v3631, %v3631
  %v3640 = vsel %vm3156, %v3639, 0.0
  %v3641 = vrot.slane %v3640, 4
  %v3642 = vadd.f32 %v3640, %v3641
  %v3643 = vrot.slane %v3642, 2
  %v3644 = vadd.f32 %v3642, %v3643
  %v3645 = vrot.slane %v3644, 1
  %v3646 = vadd.f32 %v3644, %v3645
  %v3647 = vsel %vm297, %v3638, %v3646
  %v3649 = vsel %vm208, %v3647, 0
  %3651 = vmatprep.subr.mxu0 0.0
  %3652 = vmatpush1.msra.mxu0 0.0
  %3653 = vmatprep.subr.mxu0 0.0
  %3654 = vmatpush1.msra.mxu0 0.0
  %3655 = vmatprep.subr.mxu0 0.0
  %3656 = vmatpush1.msra.mxu0 0.0
  %3657 = vmatprep.subr.mxu0 0.0
  %3658 = vmatpush1.msra.mxu0 0.0
  %3659 = vmatprep.subr.mxu0 0.0
  %3660 = vmatpush1.msra.mxu0 0.0
  %3661 = vmatprep.subr.mxu0 0.0
  %3662 = vmatpush1.msra.mxu0 0.0
  %3663 = vmatprep.subr.mxu0 0.0
  %3664 = vmatpush1.msra.mxu0 0.0
  %3665 = vmatprep.subr.mxu0 0.0
  %3666 = vmatpush1.msra.mxu0 0.0
  %3667 = vmatprep.subr.mxu0 0.0
  %3668 = vmatpush1.msra.mxu0 %v2826
  %3669 = vmatprep.subr.mxu0 0.0
  %3670 = vmatpush1.msra.mxu0 %v2825
  %3671 = vmatprep.subr.mxu0 0.0
  %3672 = vmatpush1.msra.mxu0 %v2824
  %3673 = vmatprep.subr.mxu0 0.0
  %3674 = vmatpush1.msra.mxu0 %v2823
  %3675 = vmatprep.subr.mxu0 0.0
  %3676 = vmatpush1.msra.mxu0 %v166
  %3677 = vmatprep.subr.mxu0 0.0
  %3678 = vmatpush1.msra.mxu0 %v165
  %3679 = vmatprep.subr.mxu0 0.0
  %3680 = vmatpush1.msra.mxu0 %v164
  %3681 = vmatprep.subr.mxu0 0.0
  %3682 = vmatpush1.msra.mxu0 %v163
  %3683 = vmatprep.subr.mxu0 0.0
  %3684 = vmatpush2.msra.mxu0 0.0
  %3685 = vmatprep.subr.mxu0 0.0
  %3686 = vmatpush2.msra.mxu0 0.0
  %3687 = vmatprep.subr.mxu0 0.0
  %3688 = vmatpush2.msra.mxu0 0.0
  %3689 = vmatprep.subr.mxu0 0.0
  %3690 = vmatpush2.msra.mxu0 0.0
  %3691 = vmatprep.subr.mxu0 0.0
  %3692 = vmatpush2.msra.mxu0 0.0
  %3693 = vmatprep.subr.mxu0 0.0
  %3694 = vmatpush2.msra.mxu0 0.0
  %3695 = vmatprep.subr.mxu0 0.0
  %3696 = vmatpush2.msra.mxu0 0.0
  %3697 = vmatprep.subr.mxu0 0.0
  %3698 = vmatpush2.msra.mxu0 0.0
  %3699 = vmatprep.subr.mxu0 0.0
  %3700 = vmatpush2.msra.mxu0 0.0
  %3701 = vmatprep.subr.mxu0 0.0
  %3702 = vmatpush2.msra.mxu0 0.0
  %3703 = vmatprep.subr.mxu0 0.0
  %3704 = vmatpush2.msra.mxu0 0.0
  %3705 = vmatprep.subr.mxu0 0.0
  %3706 = vmatpush2.msra.mxu0 0.0
  %3707 = vmatprep.subr.mxu0 0.0
  %3708 = vmatpush2.msra.mxu0 0.0
  %3709 = vmatprep.subr.mxu0 0.0
  %3710 = vmatpush2.msra.mxu0 0.0
  %3711 = vmatprep.subr.mxu0 0.0
  %3712 = vmatpush2.msra.mxu0 0.0
  %3713 = vmatprep.subr.mxu0 0.0
  %3714 = vmatpush2.msra.mxu0 0.0
  %3715 = vmatprep.mubr.f32.mxu0 0.0
  %3716 = vmatmul.mubr.f32.gmra.mxu0 %v3649
  %v3717 = vpop.f32.mrf.mxu0
  %v3718 = vadd.f32 0.0, %v3717
  %v3719 = vpop.f32.mrf.mxu0
  %3720 = vdwg.mxu0
  %v3721 = vmul.f32 %v3718, %v656
  %v3722 = vmul.f32 %v3721, %v3721
  %v3724 = vrot.slane %v3722, 7
  %v3726 = vsub.f32 %v3721, %v3724
  %v3727 = vadd.f32 %v3726, 1e-05
  %v3728 = vrsqrt.pop %v3727
  %v3730 = vrot.slane %v3728, 5
  %v3732 = vmul.f32 %v73, %v3730
  %v3734 = vrot.slane %v3732, 4
  %v3736 = vmul.f32 %v3721, %v3734
  %v3738 = vrot.slane %v3736, 3
  %v3740 = vsub.f32 %v73, %v3738
  %v3742 = vrot.slane %v3740, 4
  %v3744 = vsel %vm297, %v3734, %v3742
  %v3746 = vsel %vm2958, %v3744, 0
  %3748 = vmatprep.subr.mxu0 0.0
  %3749 = vmatpush1.msra.mxu0 0.0
  %3750 = vmatprep.subr.mxu0 0.0
  %3751 = vmatpush1.msra.mxu0 0.0
  %3752 = vmatprep.subr.mxu0 0.0
  %3753 = vmatpush1.msra.mxu0 0.0
  %3754 = vmatprep.subr.mxu0 0.0
  %3755 = vmatpush1.msra.mxu0 0.0
  %3756 = vmatprep.subr.mxu0 0.0
  %3757 = vmatpush1.msra.mxu0 0.0
  %3758 = vmatprep.subr.mxu0 0.0
  %3759 = vmatpush1.msra.mxu0 0.0
  %3760 = vmatprep.subr.mxu0 0.0
  %3761 = vmatpush1.msra.mxu0 0.0
  %3762 = vmatprep.subr.mxu0 0.0
  %3763 = vmatpush1.msra.mxu0 0.0
  %3764 = vmatprep.subr.mxu0 0.0
  %3765 = vmatpush1.msra.mxu0 0.0
  %3766 = vmatprep.subr.mxu0 0.0
  %3767 = vmatpush1.msra.mxu0 0.0
  %3768 = vmatprep.subr.mxu0 0.0
  %3769 = vmatpush1.msra.mxu0 0.0
  %3770 = vmatprep.subr.mxu0 0.0
  %3771 = vmatpush1.msra.mxu0 0.0
  %3772 = vmatprep.subr.mxu0 0.0
  %3773 = vmatpush1.msra.mxu0 0.0
  %3774 = vmatprep.subr.mxu0 0.0
  %3775 = vmatpush1.msra.mxu0 0.0
  %3776 = vmatprep.subr.mxu0 0.0
  %3777 = vmatpush1.msra.mxu0 0.0
  %3778 = vmatprep.subr.mxu0 0.0
  %3779 = vmatpush1.msra.mxu0 %v3267
  %3780 = vmatprep.subr.mxu0 0.0
  %3781 = vmatpush2.msra.mxu0 0.0
  %3782 = vmatprep.subr.mxu0 0.0
  %3783 = vmatpush2.msra.mxu0 0.0
  %3784 = vmatprep.subr.mxu0 0.0
  %3785 = vmatpush2.msra.mxu0 0.0
  %3786 = vmatprep.subr.mxu0 0.0
  %3787 = vmatpush2.msra.mxu0 0.0
  %3788 = vmatprep.subr.mxu0 0.0
  %3789 = vmatpush2.msra.mxu0 0.0
  %3790 = vmatprep.subr.mxu0 0.0
  %3791 = vmatpush2.msra.mxu0 0.0
  %3792 = vmatprep.subr.mxu0 0.0
  %3793 = vmatpush2.msra.mxu0 0.0
  %3794 = vmatprep.subr.mxu0 0.0
  %3795 = vmatpush2.msra.mxu0 0.0
  %3796 = vmatprep.subr.mxu0 0.0
  %3797 = vmatpush2.msra.mxu0 0.0
  %3798 = vmatprep.subr.mxu0 0.0
  %3799 = vmatpush2.msra.mxu0 0.0
  %3800 = vmatprep.subr.mxu0 0.0
  %3801 = vmatpush2.msra.mxu0 0.0
  %3802 = vmatprep.subr.mxu0 0.0
  %3803 = vmatpush2.msra.mxu0 0.0
  %3804 = vmatprep.subr.mxu0 0.0
  %3805 = vmatpush2.msra.mxu0 0.0
  %3806 = vmatprep.subr.mxu0 0.0
  %3807 = vmatpush2.msra.mxu0 0.0
  %3808 = vmatprep.subr.mxu0 0.0
  %3809 = vmatpush2.msra.mxu0 0.0
  %3810 = vmatprep.subr.mxu0 0.0
  %3811 = vmatpush2.msra.mxu0 0.0
  %3812 = vmatprep.mubr.f32.mxu0 0.0
  %3813 = vmatmul.mubr.f32.gmra.mxu0 %v3746
  %v3814 = vpop.f32.mrf.mxu0
  %v3815 = vadd.f32 0.0, %v3814
  %v3816 = vpop.f32.mrf.mxu0
  %3817 = vdwg.mxu0
  %v3818 = vlaneseq
  %v3819 = vshrl.u32 %v3818, 7
  %v3820 = vsub.s32 0, %v3819
  %v3821 = vrot.slane %v3815, %v3820
  %v3822 = vmul.f32 %v3631, %v3821
  %v3823 = vlaneseq
  %v3824 = vshrl.u32 %v3823, 7
  %v3825 = vsub.s32 1, %v3824
  %v3826 = vrot.slane %v3815, %v3825
  %v3827 = vadd.f32 %v3822, %v3826
  %v3828 = vld [vmem:[%s2] sm:$0xff]
  %v3829 = vld [vmem:[%s14] sm:$0xff]
  %v3830 = vld [vmem:[%s14 + $0x8] sm:$0xff]
  %v3831 = vld [vmem:[%s14 + $0x10] sm:$0xff]
  %v3832 = vld [vmem:[%s14 + $0x18] sm:$0xff]
  %v3833 = vld [vmem:[%s14 + $0x20] sm:$0xff]
  %v3834 = vld [vmem:[%s14 + $0x28] sm:$0xff]
  %v3835 = vld [vmem:[%s14 + $0x30] sm:$0xff]
  %v3836 = vld [vmem:[%s14 + $0x38] sm:$0xff]
  %v3837 = vld [vmem:[%s14 + $0x40] sm:$0xff]
  %v3838 = vld [vmem:[%s14 + $0x48] sm:$0xff]
  %v3839 = vld [vmem:[%s14 + $0x50] sm:$0xff]
  %v3840 = vld [vmem:[%s14 + $0x58] sm:$0xff]
  %v3841 = vld [vmem:[%s14 + $0x60] sm:$0xff]
  %v3842 = vld [vmem:[%s14 + $0x68] sm:$0xff]
  %v3843 = vld [vmem:[%s14 + $0x70] sm:$0xff]
  %v3844 = vld [vmem:[%s14 + $0x78] sm:$0xff]
  %v3845 = vld [vmem:[%s14 + $0x80] sm:$0xff]
  %v3846 = vld [vmem:[%s14 + $0x88] sm:$0xff]
  %v3847 = vld [vmem:[%s14 + $0x90] sm:$0xff]
  %v3848 = vld [vmem:[%s14 + $0x98] sm:$0xff]
  %v3849 = vld [vmem:[%s14 + $0xa0] sm:$0xff]
  %v3850 = vld [vmem:[%s14 + $0xa8] sm:$0xff]
  %v3851 = vld [vmem:[%s14 + $0xb0] sm:$0xff]
  %v3852 = vld [vmem:[%s14 + $0xb8] sm:$0xff]
  %v3853 = vld [vmem:[%s14 + $0xc0] sm:$0xff]
  %v3854 = vld [vmem:[%s14 + $0xc8] sm:$0xff]
  %v3855 = vld [vmem:[%s14 + $0xd0] sm:$0xff]
  %v3856 = vld [vmem:[%s14 + $0xd8] sm:$0xff]
  %v3857 = vld [vmem:[%s14 + $0xe0] sm:$0xff]
  %v3858 = vld [vmem:[%s14 + $0xe8] sm:$0xff]
  %v3859 = vld [vmem:[%s14 + $0xf0] sm:$0xff]
  %v3860 = vld [vmem:[%s14 + $0xf8] sm:$0xff]
  %v3861 = vld [vmem:[%s14 + $0x100] sm:$0xff]
  %v3862 = vld [vmem:[%s14 + $0x108] sm:$0xff]
  %v3863 = vld [vmem:[%s14 + $0x110] sm:$0xff]
  %v3864 = vld [vmem:[%s14 + $0x118] sm:$0xff]
  %v3865 = vld [vmem:[%s14 + $0x120] sm:$0xff]
  %v3866 = vld [vmem:[%s14 + $0x128] sm:$0xff]
  %v3867 = vld [vmem:[%s14 + $0x130] sm:$0xff]
  %v3868 = vld [vmem:[%s14 + $0x138] sm:$0xff]
  %v3869 = vld [vmem:[%s14 + $0x140] sm:$0xff]
  %v3870 = vld [vmem:[%s14 + $0x148] sm:$0xff]
  %v3871 = vld [vmem:[%s14 + $0x150] sm:$0xff]
  %v3872 = vld [vmem:[%s14 + $0x158] sm:$0xff]
  %v3873 = vld [vmem:[%s14 + $0x160] sm:$0xff]
  %v3874 = vld [vmem:[%s14 + $0x168] sm:$0xff]
  %v3875 = vld [vmem:[%s14 + $0x170] sm:$0xff]
  %v3876 = vld [vmem:[%s14 + $0x178] sm:$0xff]
  %v3877 = vld [vmem:[%s14 + $0x180] sm:$0xff]
  %v3878 = vld [vmem:[%s14 + $0x188] sm:$0xff]
  %v3879 = vld [vmem:[%s14 + $0x190] sm:$0xff]
  %v3880 = vld [vmem:[%s14 + $0x198] sm:$0xff]
  %v3881 = vld [vmem:[%s14 + $0x1a0] sm:$0xff]
  %v3882 = vld [vmem:[%s14 + $0x1a8] sm:$0xff]
  %v3883 = vld [vmem:[%s14 + $0x1b0] sm:$0xff]
  %v3884 = vld [vmem:[%s14 + $0x1b8] sm:$0xff]
  %v3885 = vld [vmem:[%s14 + $0x1c0] sm:$0xff]
  %v3886 = vld [vmem:[%s14 + $0x1c8] sm:$0xff]
  %v3887 = vld [vmem:[%s14 + $0x1d0] sm:$0xff]
  %v3888 = vld [vmem:[%s14 + $0x1d8] sm:$0xff]
  %v3889 = vld [vmem:[%s14 + $0x1e0] sm:$0xff]
  %v3890 = vld [vmem:[%s14 + $0x1e8] sm:$0xff]
  %v3891 = vld [vmem:[%s14 + $0x1f0] sm:$0xff]
  %v3892 = vld [vmem:[%s14 + $0x1f8] sm:$0xff]
  %v3893 = vld [vmem:[%s14 + $0x200] sm:$0xff]
  %v3894 = vld [vmem:[%s14 + $0x208] sm:$0xff]
  %v3895 = vld [vmem:[%s14 + $0x210] sm:$0xff]
  %v3896 = vld [vmem:[%s14 + $0x218] sm:$0xff]
  %v3897 = vld [vmem:[%s14 + $0x220] sm:$0xff]
  %v3898 = vld [vmem:[%s14 + $0x228] sm:$0xff]
  %v3899 = vld [vmem:[%s14 + $0x230] sm:$0xff]
  %v3900 = vld [vmem:[%s14 + $0x238] sm:$0xff]
  %v3901 = vld [vmem:[%s14 + $0x240] sm:$0xff]
  %v3902 = vld [vmem:[%s14 + $0x248] sm:$0xff]
  %v3903 = vld [vmem:[%s14 + $0x250] sm:$0xff]
  %v3904 = vld [vmem:[%s14 + $0x258] sm:$0xff]
  %v3905 = vld [vmem:[%s14 + $0x260] sm:$0xff]
  %v3906 = vld [vmem:[%s14 + $0x268] sm:$0xff]
  %v3907 = vld [vmem:[%s14 + $0x270] sm:$0xff]
  %v3908 = vld [vmem:[%s14 + $0x278] sm:$0xff]
  %v3909 = vld [vmem:[%s14 + $0x280] sm:$0xff]
  %v3910 = vld [vmem:[%s14 + $0x288] sm:$0xff]
  %v3911 = vld [vmem:[%s14 + $0x290] sm:$0xff]
  %v3912 = vld [vmem:[%s14 + $0x298] sm:$0xff]
  %v3913 = vld [vmem:[%s14 + $0x2a0] sm:$0xff]
  %v3914 = vld [vmem:[%s14 + $0x2a8] sm:$0xff]
  %v3915 = vld [vmem:[%s14 + $0x2b0] sm:$0xff]
  %v3916 = vld [vmem:[%s14 + $0x2b8] sm:$0xff]
  %v3917 = vld [vmem:[%s14 + $0x2c0] sm:$0xff]
  %v3918 = vld [vmem:[%s14 + $0x2c8] sm:$0xff]
  %v3919 = vld [vmem:[%s14 + $0x2d0] sm:$0xff]
  %v3920 = vld [vmem:[%s14 + $0x2d8] sm:$0xff]
  %v3921 = vld [vmem:[%s14 + $0x2e0] sm:$0xff]
  %v3922 = vld [vmem:[%s14 + $0x2e8] sm:$0xff]
  %v3923 = vld [vmem:[%s14 + $0x2f0] sm:$0xff]
  %v3924 = vld [vmem:[%s14 + $0x2f8] sm:$0xff]
  %v3925 = vld [vmem:[%s14 + $0x300] sm:$0xff]
  %v3926 = vld [vmem:[%s14 + $0x308] sm:$0xff]
  %v3927 = vld [vmem:[%s14 + $0x310] sm:$0xff]
  %v3928 = vld [vmem:[%s14 + $0x318] sm:$0xff]
  %v3929 = vld [vmem:[%s14 + $0x320] sm:$0xff]
  %v3930 = vld [vmem:[%s14 + $0x328] sm:$0xff]
  %v3931 = vld [vmem:[%s14 + $0x330] sm:$0xff]
  %v3932 = vld [vmem:[%s14 + $0x338] sm:$0xff]
  %v3933 = vld [vmem:[%s14 + $0x340] sm:$0xff]
  %v3934 = vld [vmem:[%s14 + $0x348] sm:$0xff]
  %v3935 = vld [vmem:[%s14 + $0x350] sm:$0xff]
  %v3936 = vld [vmem:[%s14 + $0x358] sm:$0xff]
  %v3938 = vcombine.high %v3828, %v3828
  %v3940 = vunpack.c.l.s4 1983009808
  %v3941 = vunpack.c.0.s8 %v3940
  %v3942 = vlaneseq
  %v3943 = vshrl.u32 %v3942, 7
  %v3944 = vsub.s32 %v3941, %v3943
  %v3945 = vrot.slane %v3828, %v3944
  %v3947 = vunpack.c.l.s4 1983009808
  %v3948 = vunpack.c.0.s8 %v3947
  %v3949 = vlaneseq
  %v3950 = vshrl.u32 %v3949, 7
  %v3951 = vsub.s32 %v3948, %v3950
  %v3952 = vrot.slane %v3938, %v3951
  %v3953 = vcombine.high %v3945, %v3945
  %v3954 = vcombine.high %v3952, %v3952
  %v3958 = vsel %vm1617, %v3954, 0
  %3960 = vmatprep.subr.mxu0 %v3860
  %3961 = vmatpush1.msra.mxu0 %v3859
  %3962 = vmatprep.subr.mxu0 %v3858
  %3963 = vmatpush1.msra.mxu0 %v3857
  %3964 = vmatprep.subr.mxu0 %v3856
  %3965 = vmatpush1.msra.mxu0 %v3855
  %3966 = vmatprep.subr.mxu0 %v3854
  %3967 = vmatpush1.msra.mxu0 %v3853
  %3968 = vmatprep.subr.mxu0 %v3852
  %3969 = vmatpush1.msra.mxu0 %v3851
  %3970 = vmatprep.subr.mxu0 %v3850
  %3971 = vmatpush1.msra.mxu0 %v3849
  %3972 = vmatprep.subr.mxu0 %v3848
  %3973 = vmatpush1.msra.mxu0 %v3847
  %3974 = vmatprep.subr.mxu0 %v3846
  %3975 = vmatpush1.msra.mxu0 %v3845
  %3976 = vmatprep.subr.mxu0 %v3844
  %3977 = vmatpush1.msra.mxu0 %v3843
  %3978 = vmatprep.subr.mxu0 %v3842
  %3979 = vmatpush1.msra.mxu0 %v3841
  %3980 = vmatprep.subr.mxu0 %v3840
  %3981 = vmatpush1.msra.mxu0 %v3839
  %3982 = vmatprep.subr.mxu0 %v3838
  %3983 = vmatpush1.msra.mxu0 %v3837
  %3984 = vmatprep.subr.mxu0 %v3836
  %3985 = vmatpush1.msra.mxu0 %v3835
  %3986 = vmatprep.subr.mxu0 %v3834
  %3987 = vmatpush1.msra.mxu0 %v3833
  %3988 = vmatprep.subr.mxu0 %v3832
  %3989 = vmatpush1.msra.mxu0 %v3831
  %3990 = vmatprep.subr.mxu0 %v3830
  %3991 = vmatpush1.msra.mxu0 %v3829
  %3992 = vmatprep.subr.mxu0 %v3892
  %3993 = vmatpush2.msra.mxu0 %v3891
  %3994 = vmatprep.subr.mxu0 %v3890
  %3995 = vmatpush2.msra.mxu0 %v3889
  %3996 = vmatprep.subr.mxu0 %v3888
  %3997 = vmatpush2.msra.mxu0 %v3887
  %3998 = vmatprep.subr.mxu0 %v3886
  %3999 = vmatpush2.msra.mxu0 %v3885
  %4000 = vmatprep.subr.mxu0 %v3884
  %4001 = vmatpush2.msra.mxu0 %v3883
  %4002 = vmatprep.subr.mxu0 %v3882
  %4003 = vmatpush2.msra.mxu0 %v3881
  %4004 = vmatprep.subr.mxu0 %v3880
  %4005 = vmatpush2.msra.mxu0 %v3879
  %4006 = vmatprep.subr.mxu0 %v3878
  %4007 = vmatpush2.msra.mxu0 %v3877
  %4008 = vmatprep.subr.mxu0 %v3876
  %4009 = vmatpush2.msra.mxu0 %v3875
  %4010 = vmatprep.subr.mxu0 %v3874
  %4011 = vmatpush2.msra.mxu0 %v3873
  %4012 = vmatprep.subr.mxu0 %v3872
  %4013 = vmatpush2.msra.mxu0 %v3871
  %4014 = vmatprep.subr.mxu0 %v3870
  %4015 = vmatpush2.msra.mxu0 %v3869
  %4016 = vmatprep.subr.mxu0 %v3868
  %4017 = vmatpush2.msra.mxu0 %v3867
  %4018 = vmatprep.subr.mxu0 %v3866
  %4019 = vmatpush2.msra.mxu0 %v3865
  %4020 = vmatprep.subr.mxu0 %v3864
  %4021 = vmatpush2.msra.mxu0 %v3863
  %4022 = vmatprep.subr.mxu0 %v3862
  %4023 = vmatpush2.msra.mxu0 %v3861
  %4024 = vmatprep.mubr.f32.mxu0 %v3953
  %4025 = vmatmul.mubr.f32.gmra.mxu0 %v3945
  %v4026 = vpop.f32.mrf.mxu0
  %v4027 = vadd.f32 0.0, %v4026
  %v4028 = vpop.f32.mrf.mxu0
  %v4029 = vadd.f32 0.0, %v4028
  %4030 = vdwg.mxu0
  %4031 = vmatprep.subr.mxu0 %v3924
  %4032 = vmatpush1.msra.mxu0 %v3923
  %4033 = vmatprep.subr.mxu0 %v3922
  %4034 = vmatpush1.msra.mxu0 %v3921
  %4035 = vmatprep.subr.mxu0 %v3920
  %4036 = vmatpush1.msra.mxu0 %v3919
  %4037 = vmatprep.subr.mxu0 %v3918
  %4038 = vmatpush1.msra.mxu0 %v3917
  %4039 = vmatprep.subr.mxu0 %v3916
  %4040 = vmatpush1.msra.mxu0 %v3915
  %4041 = vmatprep.subr.mxu0 %v3914
  %4042 = vmatpush1.msra.mxu0 %v3913
  %4043 = vmatprep.subr.mxu0 %v3912
  %4044 = vmatpush1.msra.mxu0 %v3911
  %4045 = vmatprep.subr.mxu0 %v3910
  %4046 = vmatpush1.msra.mxu0 %v3909
  %4047 = vmatprep.subr.mxu0 %v3908
  %4048 = vmatpush1.msra.mxu0 %v3907
  %4049 = vmatprep.subr.mxu0 %v3906
  %4050 = vmatpush1.msra.mxu0 %v3905
  %4051 = vmatprep.subr.mxu0 %v3904
  %4052 = vmatpush1.msra.mxu0 %v3903
  %4053 = vmatprep.subr.mxu0 %v3902
  %4054 = vmatpush1.msra.mxu0 %v3901
  %4055 = vmatprep.subr.mxu0 %v3900
  %4056 = vmatpush1.msra.mxu0 %v3899
  %4057 = vmatprep.subr.mxu0 %v3898
  %4058 = vmatpush1.msra.mxu0 %v3897
  %4059 = vmatprep.subr.mxu0 %v3896
  %4060 = vmatpush1.msra.mxu0 %v3895
  %4061 = vmatprep.subr.mxu0 %v3894
  %4062 = vmatpush1.msra.mxu0 %v3893
  %4063 = vmatprep.subr.mxu0 0.0
  %4064 = vmatpush2.msra.mxu0 0.0
  %4065 = vmatprep.subr.mxu0 0.0
  %4066 = vmatpush2.msra.mxu0 0.0
  %4067 = vmatprep.subr.mxu0 0.0
  %4068 = vmatpush2.msra.mxu0 0.0
  %4069 = vmatprep.subr.mxu0 0.0
  %4070 = vmatpush2.msra.mxu0 0.0
  %4071 = vmatprep.subr.mxu0 0.0
  %4072 = vmatpush2.msra.mxu0 0.0
  %4073 = vmatprep.subr.mxu0 0.0
  %4074 = vmatpush2.msra.mxu0 0.0
  %4075 = vmatprep.subr.mxu0 0.0
  %4076 = vmatpush2.msra.mxu0 0.0
  %4077 = vmatprep.subr.mxu0 0.0
  %4078 = vmatpush2.msra.mxu0 0.0
  %4079 = vmatprep.subr.mxu0 0.0
  %4080 = vmatpush2.msra.mxu0 0.0
  %4081 = vmatprep.subr.mxu0 0.0
  %4082 = vmatpush2.msra.mxu0 0.0
  %4083 = vmatprep.subr.mxu0 %v3936
  %4084 = vmatpush2.msra.mxu0 %v3935
  %4085 = vmatprep.subr.mxu0 %v3934
  %4086 = vmatpush2.msra.mxu0 %v3933
  %4087 = vmatprep.subr.mxu0 %v3932
  %4088 = vmatpush2.msra.mxu0 %v3931
  %4089 = vmatprep.subr.mxu0 %v3930
  %4090 = vmatpush2.msra.mxu0 %v3929
  %4091 = vmatprep.subr.mxu0 %v3928
  %4092 = vmatpush2.msra.mxu0 %v3927
  %4093 = vmatprep.subr.mxu0 %v3926
  %4094 = vmatpush2.msra.mxu0 %v3925
  %4095 = vmatprep.mubr.f32.mxu0 %v3958
  %4096 = vmatmul.mubr.f32.gmra.mxu0 %v3952
  %v4097 = vpop.f32.mrf.mxu0
  %v4098 = vadd.f32 %v4027, %v4097
  %v4099 = vpop.f32.mrf.mxu0
  %v4100 = vadd.f32 %v4029, %v4099
  %4101 = vdwg.mxu0
  %v4102 = vsel %vm396, %v4098, 0.0
  %v4103 = vrot.slane %v4102, 4
  %v4104 = vadd.f32 %v4102, %v4103
  %v4105 = vrot.slane %v4104, 2
  %v4106 = vadd.f32 %v4104, %v4105
  %v4107 = vrot.slane %v4106, 1
  %v4108 = vadd.f32 %v4106, %v4107
  %v4109 = vsel %vm281, %v4100, 0.0
  %v4110 = vrot.slane %v4109, 4
  %v4111 = vadd.f32 %v4109, %v4110
  %v4112 = vrot.slane %v4111, 2
  %v4113 = vadd.f32 %v4111, %v4112
  %v4114 = vrot.slane %v4113, 1
  %v4115 = vadd.f32 %v4113, %v4114
  %v4116 = vmul.f32 %v4098, %v4098
  %v4117 = vmul.f32 %v4100, %v4100
  %v4118 = vsel %vm396, %v4116, 0.0
  %v4119 = vrot.slane %v4118, 4
  %v4120 = vadd.f32 %v4118, %v4119
  %v4121 = vrot.slane %v4120, 2
  %v4122 = vadd.f32 %v4120, %v4121
  %v4123 = vrot.slane %v4122, 1
  %v4124 = vadd.f32 %v4122, %v4123
  %v4125 = vsel %vm281, %v4117, 0.0
  %v4126 = vrot.slane %v4125, 4
  %v4127 = vadd.f32 %v4125, %v4126
  %v4128 = vrot.slane %v4127, 2
  %v4129 = vadd.f32 %v4127, %v4128
  %v4130 = vrot.slane %v4129, 1
  %v4131 = vadd.f32 %v4129, %v4130
  %v4132 = vsel %vm297, %v4108, %v4124
  %v4133 = vsel %vm297, %v4115, %v4131
  %v4135 = vsel %vm299, %v4133, 0
  %4137 = vmatprep.subr.mxu0 0.0
  %4138 = vmatpush1.msra.mxu0 %v1376
  %4139 = vmatprep.subr.mxu0 0.0
  %4140 = vmatpush1.msra.mxu0 %v1375
  %4141 = vmatprep.subr.mxu0 0.0
  %4142 = vmatpush1.msra.mxu0 %v1374
  %4143 = vmatprep.subr.mxu0 0.0
  %4144 = vmatpush1.msra.mxu0 %v1373
  %4145 = vmatprep.subr.mxu0 0.0
  %4146 = vmatpush1.msra.mxu0 %v1372
  %4147 = vmatprep.subr.mxu0 0.0
  %4148 = vmatpush1.msra.mxu0 %v1371
  %4149 = vmatprep.subr.mxu0 0.0
  %4150 = vmatpush1.msra.mxu0 %v1370
  %4151 = vmatprep.subr.mxu0 0.0
  %4152 = vmatpush1.msra.mxu0 %v1369
  %4153 = vmatprep.subr.mxu0 0.0
  %4154 = vmatpush1.msra.mxu0 %v1368
  %4155 = vmatprep.subr.mxu0 0.0
  %4156 = vmatpush1.msra.mxu0 %v1367
  %4157 = vmatprep.subr.mxu0 0.0
  %4158 = vmatpush1.msra.mxu0 %v1366
  %4159 = vmatprep.subr.mxu0 0.0
  %4160 = vmatpush1.msra.mxu0 %v1365
  %4161 = vmatprep.subr.mxu0 0.0
  %4162 = vmatpush1.msra.mxu0 %v1364
  %4163 = vmatprep.subr.mxu0 0.0
  %4164 = vmatpush1.msra.mxu0 %v1363
  %4165 = vmatprep.subr.mxu0 0.0
  %4166 = vmatpush1.msra.mxu0 %v1362
  %4167 = vmatprep.subr.mxu0 0.0
  %4168 = vmatpush1.msra.mxu0 %v1361
  %4169 = vmatprep.subr.mxu0 0.0
  %4170 = vmatpush2.msra.mxu0 0.0
  %4171 = vmatprep.subr.mxu0 0.0
  %4172 = vmatpush2.msra.mxu0 0.0
  %4173 = vmatprep.subr.mxu0 0.0
  %4174 = vmatpush2.msra.mxu0 0.0
  %4175 = vmatprep.subr.mxu0 0.0
  %4176 = vmatpush2.msra.mxu0 0.0
  %4177 = vmatprep.subr.mxu0 0.0
  %4178 = vmatpush2.msra.mxu0 0.0
  %4179 = vmatprep.subr.mxu0 0.0
  %4180 = vmatpush2.msra.mxu0 0.0
  %4181 = vmatprep.subr.mxu0 0.0
  %4182 = vmatpush2.msra.mxu0 0.0
  %4183 = vmatprep.subr.mxu0 0.0
  %4184 = vmatpush2.msra.mxu0 %v1385
  %4185 = vmatprep.subr.mxu0 0.0
  %4186 = vmatpush2.msra.mxu0 %v1384
  %4187 = vmatprep.subr.mxu0 0.0
  %4188 = vmatpush2.msra.mxu0 %v1383
  %4189 = vmatprep.subr.mxu0 0.0
  %4190 = vmatpush2.msra.mxu0 %v1382
  %4191 = vmatprep.subr.mxu0 0.0
  %4192 = vmatpush2.msra.mxu0 %v1381
  %4193 = vmatprep.subr.mxu0 0.0
  %4194 = vmatpush2.msra.mxu0 %v1380
  %4195 = vmatprep.subr.mxu0 0.0
  %4196 = vmatpush2.msra.mxu0 %v1379
  %4197 = vmatprep.subr.mxu0 0.0
  %4198 = vmatpush2.msra.mxu0 %v1378
  %4199 = vmatprep.subr.mxu0 0.0
  %4200 = vmatpush2.msra.mxu0 %v1377
  %4201 = vmatprep.mubr.f32.mxu0 %v4135
  %4202 = vmatmul.mubr.f32.gmra.mxu0 %v4132
  %v4203 = vpop.f32.mrf.mxu0
  %v4204 = vadd.f32 0.0, %v4203
  %v4205 = vpop.f32.mrf.mxu0
  %4206 = vdwg.mxu0
  %v4207 = vmul.f32 %v4204, %v1867
  %v4208 = vmul.f32 %v4207, %v4207
  %v4210 = vrot.slane %v4208, 7
  %v4212 = vsub.f32 %v4207, %v4210
  %v4213 = vadd.f32 %v4212, 1e-05
  %v4214 = vrsqrt.pop %v4213
  %v4216 = vrot.slane %v4214, 3
  %v4218 = vmul.f32 %v73, %v4216
  %v4220 = vrot.slane %v4218, 6
  %v4222 = vmul.f32 %v4207, %v4220
  %v4224 = vrot.slane %v4222, 1
  %v4226 = vsub.f32 %v73, %v4224
  %v4228 = vrot.slane %v4226, 6
  %v4230 = vsel %vm297, %v4220, %v4228
  %v4232 = vsel %vm392, %v4230, 0
  %4234 = vmatprep.subr.mxu0 0.0
  %4235 = vmatpush1.msra.mxu0 0.0
  %4236 = vmatprep.subr.mxu0 0.0
  %4237 = vmatpush1.msra.mxu0 0.0
  %4238 = vmatprep.subr.mxu0 0.0
  %4239 = vmatpush1.msra.mxu0 0.0
  %4240 = vmatprep.subr.mxu0 0.0
  %4241 = vmatpush1.msra.mxu0 0.0
  %4242 = vmatprep.subr.mxu0 0.0
  %4243 = vmatpush1.msra.mxu0 0.0
  %4244 = vmatprep.subr.mxu0 0.0
  %4245 = vmatpush1.msra.mxu0 0.0
  %4246 = vmatprep.subr.mxu0 0.0
  %4247 = vmatpush1.msra.mxu0 0.0
  %4248 = vmatprep.subr.mxu0 0.0
  %4249 = vmatpush1.msra.mxu0 0.0
  %4250 = vmatprep.subr.mxu0 0.0
  %4251 = vmatpush1.msra.mxu0 0.0
  %4252 = vmatprep.subr.mxu0 0.0
  %4253 = vmatpush1.msra.mxu0 0.0
  %4254 = vmatprep.subr.mxu0 0.0
  %4255 = vmatpush1.msra.mxu0 0.0
  %4256 = vmatprep.subr.mxu0 0.0
  %4257 = vmatpush1.msra.mxu0 0.0
  %4258 = vmatprep.subr.mxu0 0.0
  %4259 = vmatpush1.msra.mxu0 0.0
  %4260 = vmatprep.subr.mxu0 0.0
  %4261 = vmatpush1.msra.mxu0 0.0
  %4262 = vmatprep.subr.mxu0 0.0
  %4263 = vmatpush1.msra.mxu0 0.0
  %4264 = vmatprep.subr.mxu0 %v1893
  %4265 = vmatpush1.msra.mxu0 %v1890
  %4266 = vmatprep.subr.mxu0 0.0
  %4267 = vmatpush2.msra.mxu0 0.0
  %4268 = vmatprep.subr.mxu0 0.0
  %4269 = vmatpush2.msra.mxu0 0.0
  %4270 = vmatprep.subr.mxu0 0.0
  %4271 = vmatpush2.msra.mxu0 0.0
  %4272 = vmatprep.subr.mxu0 0.0
  %4273 = vmatpush2.msra.mxu0 0.0
  %4274 = vmatprep.subr.mxu0 0.0
  %4275 = vmatpush2.msra.mxu0 0.0
  %4276 = vmatprep.subr.mxu0 0.0
  %4277 = vmatpush2.msra.mxu0 0.0
  %4278 = vmatprep.subr.mxu0 0.0
  %4279 = vmatpush2.msra.mxu0 0.0
  %4280 = vmatprep.subr.mxu0 0.0
  %4281 = vmatpush2.msra.mxu0 0.0
  %4282 = vmatprep.subr.mxu0 0.0
  %4283 = vmatpush2.msra.mxu0 0.0
  %4284 = vmatprep.subr.mxu0 0.0
  %4285 = vmatpush2.msra.mxu0 0.0
  %4286 = vmatprep.subr.mxu0 0.0
  %4287 = vmatpush2.msra.mxu0 0.0
  %4288 = vmatprep.subr.mxu0 0.0
  %4289 = vmatpush2.msra.mxu0 0.0
  %4290 = vmatprep.subr.mxu0 0.0
  %4291 = vmatpush2.msra.mxu0 0.0
  %4292 = vmatprep.subr.mxu0 0.0
  %4293 = vmatpush2.msra.mxu0 0.0
  %4294 = vmatprep.subr.mxu0 0.0
  %4295 = vmatpush2.msra.mxu0 0.0
  %4296 = vmatprep.subr.mxu0 0.0
  %4297 = vmatpush2.msra.mxu0 0.0
  %4298 = vmatprep.mubr.f32.mxu0 0.0
  %4299 = vmatmul.mubr.f32.gmra.mxu0 %v4232
  %v4300 = vpop.f32.mrf.mxu0
  %v4301 = vadd.f32 0.0, %v4300
  %v4302 = vpop.f32.mrf.mxu0
  %v4303 = vadd.f32 0.0, %v4302
  %4304 = vdwg.mxu0
  %v4305 = vlaneseq
  %v4306 = vshrl.u32 %v4305, 7
  %v4307 = vsub.s32 0, %v4306
  %v4308 = vrot.slane %v4301, %v4307
  %v4309 = vlaneseq
  %v4310 = vshrl.u32 %v4309, 7
  %v4311 = vsub.s32 0, %v4310
  %v4312 = vrot.slane %v4303, %v4311
  %v4313 = vmul.f32 %v4098, %v4308
  %v4314 = vmul.f32 %v4100, %v4312
  %v4315 = vlaneseq
  %v4316 = vshrl.u32 %v4315, 7
  %v4317 = vsub.s32 1, %v4316
  %v4318 = vrot.slane %v4301, %v4317
  %v4319 = vlaneseq
  %v4320 = vshrl.u32 %v4319, 7
  %v4321 = vsub.s32 1, %v4320
  %v4322 = vrot.slane %v4303, %v4321
  %v4323 = vadd.f32 %v4313, %v4318
  %v4324 = vadd.f32 %v4314, %v4322
  %vm4325 = vcmp.gt.f32.partialorder %v4323, 0.0
  %vm4326 = vcmp.gt.f32.partialorder %v4324, 0.0
  %v4327 = vmul.f32 %v4323, 0.01
  %v4328 = vmul.f32 %v4324, 0.01
  %v4329 = vsel %vm4325, %v4323, %v4327
  %v4330 = vsel %vm4326, %v4324, %v4328
  %v4331 = vld [vmem:[%s15] sm:$0xff]
  %v4332 = vld [vmem:[%s15 + $0x8] sm:$0xff]
  %v4333 = vld [vmem:[%s15 + $0x10] sm:$0xff]
  %v4334 = vld [vmem:[%s15 + $0x18] sm:$0xff]
  %v4335 = vld [vmem:[%s15 + $0x20] sm:$0xff]
  %v4336 = vld [vmem:[%s15 + $0x28] sm:$0xff]
  %v4337 = vld [vmem:[%s15 + $0x30] sm:$0xff]
  %v4338 = vld [vmem:[%s15 + $0x38] sm:$0xff]
  %v4339 = vld [vmem:[%s15 + $0x40] sm:$0xff]
  %v4340 = vld [vmem:[%s15 + $0x48] sm:$0xff]
  %v4341 = vld [vmem:[%s15 + $0x50] sm:$0xff]
  %v4342 = vld [vmem:[%s15 + $0x58] sm:$0xff]
  %v4343 = vld [vmem:[%s15 + $0x60] sm:$0xff]
  %v4344 = vld [vmem:[%s15 + $0x68] sm:$0xff]
  %v4345 = vld [vmem:[%s15 + $0x70] sm:$0xff]
  %v4346 = vld [vmem:[%s15 + $0x78] sm:$0xff]
  %v4347 = vld [vmem:[%s15 + $0x80] sm:$0xff]
  %v4348 = vld [vmem:[%s15 + $0x88] sm:$0xff]
  %v4349 = vld [vmem:[%s15 + $0x90] sm:$0xff]
  %v4350 = vld [vmem:[%s15 + $0x98] sm:$0xff]
  %v4351 = vld [vmem:[%s15 + $0xa0] sm:$0xff]
  %v4352 = vld [vmem:[%s15 + $0xa8] sm:$0xff]
  %v4353 = vld [vmem:[%s15 + $0xb0] sm:$0xff]
  %v4354 = vld [vmem:[%s15 + $0xb8] sm:$0xff]
  %v4355 = vld [vmem:[%s15 + $0xc0] sm:$0xff]
  %v4357 = vsel %vm299, %v4330, 0
  %4359 = vmatprep.subr.mxu0 0.0
  %4360 = vmatpush1.msra.mxu0 %v4346
  %4361 = vmatprep.subr.mxu0 0.0
  %4362 = vmatpush1.msra.mxu0 %v4345
  %4363 = vmatprep.subr.mxu0 0.0
  %4364 = vmatpush1.msra.mxu0 %v4344
  %4365 = vmatprep.subr.mxu0 0.0
  %4366 = vmatpush1.msra.mxu0 %v4343
  %4367 = vmatprep.subr.mxu0 0.0
  %4368 = vmatpush1.msra.mxu0 %v4342
  %4369 = vmatprep.subr.mxu0 0.0
  %4370 = vmatpush1.msra.mxu0 %v4341
  %4371 = vmatprep.subr.mxu0 0.0
  %4372 = vmatpush1.msra.mxu0 %v4340
  %4373 = vmatprep.subr.mxu0 0.0
  %4374 = vmatpush1.msra.mxu0 %v4339
  %4375 = vmatprep.subr.mxu0 0.0
  %4376 = vmatpush1.msra.mxu0 %v4338
  %4377 = vmatprep.subr.mxu0 0.0
  %4378 = vmatpush1.msra.mxu0 %v4337
  %4379 = vmatprep.subr.mxu0 0.0
  %4380 = vmatpush1.msra.mxu0 %v4336
  %4381 = vmatprep.subr.mxu0 0.0
  %4382 = vmatpush1.msra.mxu0 %v4335
  %4383 = vmatprep.subr.mxu0 0.0
  %4384 = vmatpush1.msra.mxu0 %v4334
  %4385 = vmatprep.subr.mxu0 0.0
  %4386 = vmatpush1.msra.mxu0 %v4333
  %4387 = vmatprep.subr.mxu0 0.0
  %4388 = vmatpush1.msra.mxu0 %v4332
  %4389 = vmatprep.subr.mxu0 0.0
  %4390 = vmatpush1.msra.mxu0 %v4331
  %4391 = vmatprep.subr.mxu0 0.0
  %4392 = vmatpush2.msra.mxu0 0.0
  %4393 = vmatprep.subr.mxu0 0.0
  %4394 = vmatpush2.msra.mxu0 0.0
  %4395 = vmatprep.subr.mxu0 0.0
  %4396 = vmatpush2.msra.mxu0 0.0
  %4397 = vmatprep.subr.mxu0 0.0
  %4398 = vmatpush2.msra.mxu0 0.0
  %4399 = vmatprep.subr.mxu0 0.0
  %4400 = vmatpush2.msra.mxu0 0.0
  %4401 = vmatprep.subr.mxu0 0.0
  %4402 = vmatpush2.msra.mxu0 0.0
  %4403 = vmatprep.subr.mxu0 0.0
  %4404 = vmatpush2.msra.mxu0 0.0
  %4405 = vmatprep.subr.mxu0 0.0
  %4406 = vmatpush2.msra.mxu0 %v4355
  %4407 = vmatprep.subr.mxu0 0.0
  %4408 = vmatpush2.msra.mxu0 %v4354
  %4409 = vmatprep.subr.mxu0 0.0
  %4410 = vmatpush2.msra.mxu0 %v4353
  %4411 = vmatprep.subr.mxu0 0.0
  %4412 = vmatpush2.msra.mxu0 %v4352
  %4413 = vmatprep.subr.mxu0 0.0
  %4414 = vmatpush2.msra.mxu0 %v4351
  %4415 = vmatprep.subr.mxu0 0.0
  %4416 = vmatpush2.msra.mxu0 %v4350
  %4417 = vmatprep.subr.mxu0 0.0
  %4418 = vmatpush2.msra.mxu0 %v4349
  %4419 = vmatprep.subr.mxu0 0.0
  %4420 = vmatpush2.msra.mxu0 %v4348
  %4421 = vmatprep.subr.mxu0 0.0
  %4422 = vmatpush2.msra.mxu0 %v4347
  %4423 = vmatprep.mubr.f32.mxu0 %v4357
  %4424 = vmatmul.mubr.f32.gmra.mxu0 %v4329
  %v4425 = vpop.f32.mrf.mxu0
  %v4426 = vadd.f32 0.0, %v4425
  %v4427 = vpop.f32.mrf.mxu0
  %4428 = vdwg.mxu0
  %v4429 = vsel %vm396, %v4426, 0.0
  %v4430 = vrot.slane %v4429, 4
  %v4431 = vadd.f32 %v4429, %v4430
  %v4432 = vrot.slane %v4431, 2
  %v4433 = vadd.f32 %v4431, %v4432
  %v4434 = vrot.slane %v4433, 1
  %v4435 = vadd.f32 %v4433, %v4434
  %v4436 = vmul.f32 %v4426, %v4426
  %v4437 = vsel %vm396, %v4436, 0.0
  %v4438 = vrot.slane %v4437, 4
  %v4439 = vadd.f32 %v4437, %v4438
  %v4440 = vrot.slane %v4439, 2
  %v4441 = vadd.f32 %v4439, %v4440
  %v4442 = vrot.slane %v4441, 1
  %v4443 = vadd.f32 %v4441, %v4442
  %v4444 = vsel %vm297, %v4435, %v4443
  %4445 = vmatprep.subr.mxu0 0.0
  %4446 = vmatpush1.msra.mxu0 %v1480
  %4447 = vmatprep.subr.mxu0 0.0
  %4448 = vmatpush1.msra.mxu0 %v1479
  %4449 = vmatprep.subr.mxu0 0.0
  %4450 = vmatpush1.msra.mxu0 %v1478
  %4451 = vmatprep.subr.mxu0 0.0
  %4452 = vmatpush1.msra.mxu0 %v1477
  %4453 = vmatprep.subr.mxu0 0.0
  %4454 = vmatpush1.msra.mxu0 %v1476
  %4455 = vmatprep.subr.mxu0 0.0
  %4456 = vmatpush1.msra.mxu0 %v1475
  %4457 = vmatprep.subr.mxu0 0.0
  %4458 = vmatpush1.msra.mxu0 %v1474
  %4459 = vmatprep.subr.mxu0 0.0
  %4460 = vmatpush1.msra.mxu0 %v1473
  %4461 = vmatprep.subr.mxu0 0.0
  %4462 = vmatpush1.msra.mxu0 %v1472
  %4463 = vmatprep.subr.mxu0 0.0
  %4464 = vmatpush1.msra.mxu0 %v1471
  %4465 = vmatprep.subr.mxu0 0.0
  %4466 = vmatpush1.msra.mxu0 %v1470
  %4467 = vmatprep.subr.mxu0 0.0
  %4468 = vmatpush1.msra.mxu0 %v1469
  %4469 = vmatprep.subr.mxu0 0.0
  %4470 = vmatpush1.msra.mxu0 %v1468
  %4471 = vmatprep.subr.mxu0 0.0
  %4472 = vmatpush1.msra.mxu0 %v1467
  %4473 = vmatprep.subr.mxu0 0.0
  %4474 = vmatpush1.msra.mxu0 %v1466
  %4475 = vmatprep.subr.mxu0 0.0
  %4476 = vmatpush1.msra.mxu0 %v1465
  %4477 = vmatprep.subr.mxu0 0.0
  %4478 = vmatpush2.msra.mxu0 0.0
  %4479 = vmatprep.subr.mxu0 0.0
  %4480 = vmatpush2.msra.mxu0 0.0
  %4481 = vmatprep.subr.mxu0 0.0
  %4482 = vmatpush2.msra.mxu0 0.0
  %4483 = vmatprep.subr.mxu0 0.0
  %4484 = vmatpush2.msra.mxu0 0.0
  %4485 = vmatprep.subr.mxu0 0.0
  %4486 = vmatpush2.msra.mxu0 0.0
  %4487 = vmatprep.subr.mxu0 0.0
  %4488 = vmatpush2.msra.mxu0 0.0
  %4489 = vmatprep.subr.mxu0 0.0
  %4490 = vmatpush2.msra.mxu0 0.0
  %4491 = vmatprep.subr.mxu0 0.0
  %4492 = vmatpush2.msra.mxu0 0.0
  %4493 = vmatprep.subr.mxu0 0.0
  %4494 = vmatpush2.msra.mxu0 0.0
  %4495 = vmatprep.subr.mxu0 0.0
  %4496 = vmatpush2.msra.mxu0 0.0
  %4497 = vmatprep.subr.mxu0 0.0
  %4498 = vmatpush2.msra.mxu0 0.0
  %4499 = vmatprep.subr.mxu0 0.0
  %4500 = vmatpush2.msra.mxu0 0.0
  %4501 = vmatprep.subr.mxu0 0.0
  %4502 = vmatpush2.msra.mxu0 0.0
  %4503 = vmatprep.subr.mxu0 0.0
  %4504 = vmatpush2.msra.mxu0 0.0
  %4505 = vmatprep.subr.mxu0 0.0
  %4506 = vmatpush2.msra.mxu0 0.0
  %4507 = vmatprep.subr.mxu0 0.0
  %4508 = vmatpush2.msra.mxu0 0.0
  %4509 = vmatprep.mubr.f32.mxu0 0.0
  %4510 = vmatmul.mubr.f32.gmra.mxu0 %v4444
  %v4511 = vpop.f32.mrf.mxu0
  %v4512 = vadd.f32 0.0, %v4511
  %v4513 = vpop.f32.mrf.mxu0
  %4514 = vdwg.mxu0
  %v4515 = vmul.f32 %v4512, %v2176
  %v4516 = vmul.f32 %v4515, %v4515
  %v4518 = vrot.slane %v4516, 7
  %v4520 = vsub.f32 %v4515, %v4518
  %v4521 = vadd.f32 %v4520, 1e-05
  %v4522 = vrsqrt.pop %v4521
  %v4524 = vrot.slane %v4522, 1
  %v4526 = vmul.f32 %v74, %v4524
  %v4527 = vmul.f32 %v4515, %v4526
  %v4529 = vrot.slane %v4527, 7
  %v4531 = vsub.f32 %v74, %v4529
  %v4532 = vsel %vm297, %v4526, %v4531
  %v4534 = vsel %vm392, %v4532, 0
  %4536 = vmatprep.subr.mxu0 0.0
  %4537 = vmatpush1.msra.mxu0 0.0
  %4538 = vmatprep.subr.mxu0 0.0
  %4539 = vmatpush1.msra.mxu0 0.0
  %4540 = vmatprep.subr.mxu0 0.0
  %4541 = vmatpush1.msra.mxu0 0.0
  %4542 = vmatprep.subr.mxu0 0.0
  %4543 = vmatpush1.msra.mxu0 0.0
  %4544 = vmatprep.subr.mxu0 0.0
  %4545 = vmatpush1.msra.mxu0 0.0
  %4546 = vmatprep.subr.mxu0 0.0
  %4547 = vmatpush1.msra.mxu0 0.0
  %4548 = vmatprep.subr.mxu0 0.0
  %4549 = vmatpush1.msra.mxu0 0.0
  %4550 = vmatprep.subr.mxu0 0.0
  %4551 = vmatpush1.msra.mxu0 0.0
  %4552 = vmatprep.subr.mxu0 0.0
  %4553 = vmatpush1.msra.mxu0 0.0
  %4554 = vmatprep.subr.mxu0 0.0
  %4555 = vmatpush1.msra.mxu0 0.0
  %4556 = vmatprep.subr.mxu0 0.0
  %4557 = vmatpush1.msra.mxu0 0.0
  %4558 = vmatprep.subr.mxu0 0.0
  %4559 = vmatpush1.msra.mxu0 0.0
  %4560 = vmatprep.subr.mxu0 0.0
  %4561 = vmatpush1.msra.mxu0 0.0
  %4562 = vmatprep.subr.mxu0 0.0
  %4563 = vmatpush1.msra.mxu0 0.0
  %4564 = vmatprep.subr.mxu0 0.0
  %4565 = vmatpush1.msra.mxu0 0.0
  %4566 = vmatprep.subr.mxu0 0.0
  %4567 = vmatpush1.msra.mxu0 %v2205
  %4568 = vmatprep.subr.mxu0 0.0
  %4569 = vmatpush2.msra.mxu0 0.0
  %4570 = vmatprep.subr.mxu0 0.0
  %4571 = vmatpush2.msra.mxu0 0.0
  %4572 = vmatprep.subr.mxu0 0.0
  %4573 = vmatpush2.msra.mxu0 0.0
  %4574 = vmatprep.subr.mxu0 0.0
  %4575 = vmatpush2.msra.mxu0 0.0
  %4576 = vmatprep.subr.mxu0 0.0
  %4577 = vmatpush2.msra.mxu0 0.0
  %4578 = vmatprep.subr.mxu0 0.0
  %4579 = vmatpush2.msra.mxu0 0.0
  %4580 = vmatprep.subr.mxu0 0.0
  %4581 = vmatpush2.msra.mxu0 0.0
  %4582 = vmatprep.subr.mxu0 0.0
  %4583 = vmatpush2.msra.mxu0 0.0
  %4584 = vmatprep.subr.mxu0 0.0
  %4585 = vmatpush2.msra.mxu0 0.0
  %4586 = vmatprep.subr.mxu0 0.0
  %4587 = vmatpush2.msra.mxu0 0.0
  %4588 = vmatprep.subr.mxu0 0.0
  %4589 = vmatpush2.msra.mxu0 0.0
  %4590 = vmatprep.subr.mxu0 0.0
  %4591 = vmatpush2.msra.mxu0 0.0
  %4592 = vmatprep.subr.mxu0 0.0
  %4593 = vmatpush2.msra.mxu0 0.0
  %4594 = vmatprep.subr.mxu0 0.0
  %4595 = vmatpush2.msra.mxu0 0.0
  %4596 = vmatprep.subr.mxu0 0.0
  %4597 = vmatpush2.msra.mxu0 0.0
  %4598 = vmatprep.subr.mxu0 0.0
  %4599 = vmatpush2.msra.mxu0 0.0
  %4600 = vmatprep.mubr.f32.mxu0 0.0
  %4601 = vmatmul.mubr.f32.gmra.mxu0 %v4534
  %v4602 = vpop.f32.mrf.mxu0
  %v4603 = vadd.f32 0.0, %v4602
  %v4604 = vpop.f32.mrf.mxu0
  %4605 = vdwg.mxu0
  %v4606 = vlaneseq
  %v4607 = vshrl.u32 %v4606, 7
  %v4608 = vsub.s32 0, %v4607
  %v4609 = vrot.slane %v4603, %v4608
  %v4610 = vmul.f32 %v4426, %v4609
  %v4611 = vlaneseq
  %v4612 = vshrl.u32 %v4611, 7
  %v4613 = vsub.s32 1, %v4612
  %v4614 = vrot.slane %v4603, %v4613
  %v4615 = vadd.f32 %v4610, %v4614
  %vm4616 = vcmp.gt.f32.partialorder %v4615, 0.0
  %v4617 = vmul.f32 %v4615, 0.01
  %v4618 = vsel %vm4616, %v4615, %v4617
  %v4619 = vld [vmem:[%s16] sm:$0xff]
  %v4620 = vld [vmem:[%s16 + $0x8] sm:$0xff]
  %v4621 = vld [vmem:[%s16 + $0x10] sm:$0xff]
  %v4622 = vld [vmem:[%s16 + $0x18] sm:$0xff]
  %v4623 = vld [vmem:[%s16 + $0x20] sm:$0xff]
  %v4624 = vld [vmem:[%s16 + $0x28] sm:$0xff]
  %v4625 = vld [vmem:[%s16 + $0x30] sm:$0xff]
  %v4626 = vld [vmem:[%s16 + $0x38] sm:$0xff]
  %v4627 = vld [vmem:[%s16 + $0x40] sm:$0xff]
  %v4628 = vld [vmem:[%s16 + $0x48] sm:$0xff]
  %v4629 = vld [vmem:[%s16 + $0x50] sm:$0xff]
  %v4630 = vld [vmem:[%s16 + $0x58] sm:$0xff]
  %v4631 = vld [vmem:[%s16 + $0x60] sm:$0xff]
  %v4632 = vld [vmem:[%s16 + $0x68] sm:$0xff]
  %v4633 = vld [vmem:[%s16 + $0x70] sm:$0xff]
  %v4634 = vld [vmem:[%s16 + $0x78] sm:$0xff]
  %4635 = vmatprep.subr.mxu0 0.0
  %4636 = vmatpush1.msra.mxu0 %v4634
  %4637 = vmatprep.subr.mxu0 0.0
  %4638 = vmatpush1.msra.mxu0 %v4633
  %4639 = vmatprep.subr.mxu0 0.0
  %4640 = vmatpush1.msra.mxu0 %v4632
  %4641 = vmatprep.subr.mxu0 0.0
  %4642 = vmatpush1.msra.mxu0 %v4631
  %4643 = vmatprep.subr.mxu0 0.0
  %4644 = vmatpush1.msra.mxu0 %v4630
  %4645 = vmatprep.subr.mxu0 0.0
  %4646 = vmatpush1.msra.mxu0 %v4629
  %4647 = vmatprep.subr.mxu0 0.0
  %4648 = vmatpush1.msra.mxu0 %v4628
  %4649 = vmatprep.subr.mxu0 0.0
  %4650 = vmatpush1.msra.mxu0 %v4627
  %4651 = vmatprep.subr.mxu0 0.0
  %4652 = vmatpush1.msra.mxu0 %v4626
  %4653 = vmatprep.subr.mxu0 0.0
  %4654 = vmatpush1.msra.mxu0 %v4625
  %4655 = vmatprep.subr.mxu0 0.0
  %4656 = vmatpush1.msra.mxu0 %v4624
  %4657 = vmatprep.subr.mxu0 0.0
  %4658 = vmatpush1.msra.mxu0 %v4623
  %4659 = vmatprep.subr.mxu0 0.0
  %4660 = vmatpush1.msra.mxu0 %v4622
  %4661 = vmatprep.subr.mxu0 0.0
  %4662 = vmatpush1.msra.mxu0 %v4621
  %4663 = vmatprep.subr.mxu0 0.0
  %4664 = vmatpush1.msra.mxu0 %v4620
  %4665 = vmatprep.subr.mxu0 0.0
  %4666 = vmatpush1.msra.mxu0 %v4619
  %4667 = vmatprep.subr.mxu0 0.0
  %4668 = vmatpush2.msra.mxu0 0.0
  %4669 = vmatprep.subr.mxu0 0.0
  %4670 = vmatpush2.msra.mxu0 0.0
  %4671 = vmatprep.subr.mxu0 0.0
  %4672 = vmatpush2.msra.mxu0 0.0
  %4673 = vmatprep.subr.mxu0 0.0
  %4674 = vmatpush2.msra.mxu0 0.0
  %4675 = vmatprep.subr.mxu0 0.0
  %4676 = vmatpush2.msra.mxu0 0.0
  %4677 = vmatprep.subr.mxu0 0.0
  %4678 = vmatpush2.msra.mxu0 0.0
  %4679 = vmatprep.subr.mxu0 0.0
  %4680 = vmatpush2.msra.mxu0 0.0
  %4681 = vmatprep.subr.mxu0 0.0
  %4682 = vmatpush2.msra.mxu0 0.0
  %4683 = vmatprep.subr.mxu0 0.0
  %4684 = vmatpush2.msra.mxu0 0.0
  %4685 = vmatprep.subr.mxu0 0.0
  %4686 = vmatpush2.msra.mxu0 0.0
  %4687 = vmatprep.subr.mxu0 0.0
  %4688 = vmatpush2.msra.mxu0 0.0
  %4689 = vmatprep.subr.mxu0 0.0
  %4690 = vmatpush2.msra.mxu0 0.0
  %4691 = vmatprep.subr.mxu0 0.0
  %4692 = vmatpush2.msra.mxu0 0.0
  %4693 = vmatprep.subr.mxu0 0.0
  %4694 = vmatpush2.msra.mxu0 0.0
  %4695 = vmatprep.subr.mxu0 0.0
  %4696 = vmatpush2.msra.mxu0 0.0
  %4697 = vmatprep.subr.mxu0 0.0
  %4698 = vmatpush2.msra.mxu0 0.0
  %4699 = vmatprep.mubr.f32.mxu0 0.0
  %4700 = vmatmul.mubr.f32.gmra.mxu0 %v4618
  %v4701 = vpop.f32.mrf.mxu0
  %v4702 = vadd.f32 0.0, %v4701
  %v4703 = vpop.f32.mrf.mxu0
  %4704 = vdwg.mxu0
  %v4705 = vsel %vm396, %v4702, 0.0
  %v4706 = vrot.slane %v4705, 4
  %v4707 = vadd.f32 %v4705, %v4706
  %v4708 = vrot.slane %v4707, 2
  %v4709 = vadd.f32 %v4707, %v4708
  %v4710 = vrot.slane %v4709, 1
  %v4711 = vadd.f32 %v4709, %v4710
  %v4712 = vmul.f32 %v4702, %v4702
  %v4713 = vsel %vm396, %v4712, 0.0
  %v4714 = vrot.slane %v4713, 4
  %v4715 = vadd.f32 %v4713, %v4714
  %v4716 = vrot.slane %v4715, 2
  %v4717 = vadd.f32 %v4715, %v4716
  %v4718 = vrot.slane %v4717, 1
  %v4719 = vadd.f32 %v4717, %v4718
  %v4720 = vsel %vm297, %v4711, %v4719
  %4721 = vmatprep.subr.mxu0 0.0
  %4722 = vmatpush1.msra.mxu0 %v1480
  %4723 = vmatprep.subr.mxu0 0.0
  %4724 = vmatpush1.msra.mxu0 %v1479
  %4725 = vmatprep.subr.mxu0 0.0
  %4726 = vmatpush1.msra.mxu0 %v1478
  %4727 = vmatprep.subr.mxu0 0.0
  %4728 = vmatpush1.msra.mxu0 %v1477
  %4729 = vmatprep.subr.mxu0 0.0
  %4730 = vmatpush1.msra.mxu0 %v1476
  %4731 = vmatprep.subr.mxu0 0.0
  %4732 = vmatpush1.msra.mxu0 %v1475
  %4733 = vmatprep.subr.mxu0 0.0
  %4734 = vmatpush1.msra.mxu0 %v1474
  %4735 = vmatprep.subr.mxu0 0.0
  %4736 = vmatpush1.msra.mxu0 %v1473
  %4737 = vmatprep.subr.mxu0 0.0
  %4738 = vmatpush1.msra.mxu0 %v1472
  %4739 = vmatprep.subr.mxu0 0.0
  %4740 = vmatpush1.msra.mxu0 %v1471
  %4741 = vmatprep.subr.mxu0 0.0
  %4742 = vmatpush1.msra.mxu0 %v1470
  %4743 = vmatprep.subr.mxu0 0.0
  %4744 = vmatpush1.msra.mxu0 %v1469
  %4745 = vmatprep.subr.mxu0 0.0
  %4746 = vmatpush1.msra.mxu0 %v1468
  %4747 = vmatprep.subr.mxu0 0.0
  %4748 = vmatpush1.msra.mxu0 %v1467
  %4749 = vmatprep.subr.mxu0 0.0
  %4750 = vmatpush1.msra.mxu0 %v1466
  %4751 = vmatprep.subr.mxu0 0.0
  %4752 = vmatpush1.msra.mxu0 %v1465
  %4753 = vmatprep.subr.mxu0 0.0
  %4754 = vmatpush2.msra.mxu0 0.0
  %4755 = vmatprep.subr.mxu0 0.0
  %4756 = vmatpush2.msra.mxu0 0.0
  %4757 = vmatprep.subr.mxu0 0.0
  %4758 = vmatpush2.msra.mxu0 0.0
  %4759 = vmatprep.subr.mxu0 0.0
  %4760 = vmatpush2.msra.mxu0 0.0
  %4761 = vmatprep.subr.mxu0 0.0
  %4762 = vmatpush2.msra.mxu0 0.0
  %4763 = vmatprep.subr.mxu0 0.0
  %4764 = vmatpush2.msra.mxu0 0.0
  %4765 = vmatprep.subr.mxu0 0.0
  %4766 = vmatpush2.msra.mxu0 0.0
  %4767 = vmatprep.subr.mxu0 0.0
  %4768 = vmatpush2.msra.mxu0 0.0
  %4769 = vmatprep.subr.mxu0 0.0
  %4770 = vmatpush2.msra.mxu0 0.0
  %4771 = vmatprep.subr.mxu0 0.0
  %4772 = vmatpush2.msra.mxu0 0.0
  %4773 = vmatprep.subr.mxu0 0.0
  %4774 = vmatpush2.msra.mxu0 0.0
  %4775 = vmatprep.subr.mxu0 0.0
  %4776 = vmatpush2.msra.mxu0 0.0
  %4777 = vmatprep.subr.mxu0 0.0
  %4778 = vmatpush2.msra.mxu0 0.0
  %4779 = vmatprep.subr.mxu0 0.0
  %4780 = vmatpush2.msra.mxu0 0.0
  %4781 = vmatprep.subr.mxu0 0.0
  %4782 = vmatpush2.msra.mxu0 0.0
  %4783 = vmatprep.subr.mxu0 0.0
  %4784 = vmatpush2.msra.mxu0 0.0
  %4785 = vmatprep.mubr.f32.mxu0 0.0
  %4786 = vmatmul.mubr.f32.gmra.mxu0 %v4720
  %v4787 = vpop.f32.mrf.mxu0
  %v4788 = vadd.f32 0.0, %v4787
  %v4789 = vpop.f32.mrf.mxu0
  %4790 = vdwg.mxu0
  %v4791 = vmul.f32 %v4788, %v2176
  %v4792 = vmul.f32 %v4791, %v4791
  %v4794 = vrot.slane %v4792, 7
  %v4796 = vsub.f32 %v4791, %v4794
  %v4797 = vadd.f32 %v4796, 1e-05
  %v4798 = vrsqrt.pop %v4797
  %v4800 = vrot.slane %v4798, 7
  %v4802 = vmul.f32 %v74, %v4800
  %v4804 = vrot.slane %v4802, 2
  %v4806 = vmul.f32 %v4791, %v4804
  %v4808 = vrot.slane %v4806, 5
  %v4810 = vsub.f32 %v74, %v4808
  %v4812 = vrot.slane %v4810, 2
  %v4814 = vsel %vm297, %v4804, %v4812
  %v4816 = vsel %vm392, %v4814, 0
  %4818 = vmatprep.subr.mxu0 0.0
  %4819 = vmatpush1.msra.mxu0 0.0
  %4820 = vmatprep.subr.mxu0 0.0
  %4821 = vmatpush1.msra.mxu0 0.0
  %4822 = vmatprep.subr.mxu0 0.0
  %4823 = vmatpush1.msra.mxu0 0.0
  %4824 = vmatprep.subr.mxu0 0.0
  %4825 = vmatpush1.msra.mxu0 0.0
  %4826 = vmatprep.subr.mxu0 0.0
  %4827 = vmatpush1.msra.mxu0 0.0
  %4828 = vmatprep.subr.mxu0 0.0
  %4829 = vmatpush1.msra.mxu0 0.0
  %4830 = vmatprep.subr.mxu0 0.0
  %4831 = vmatpush1.msra.mxu0 0.0
  %4832 = vmatprep.subr.mxu0 0.0
  %4833 = vmatpush1.msra.mxu0 0.0
  %4834 = vmatprep.subr.mxu0 0.0
  %4835 = vmatpush1.msra.mxu0 0.0
  %4836 = vmatprep.subr.mxu0 0.0
  %4837 = vmatpush1.msra.mxu0 0.0
  %4838 = vmatprep.subr.mxu0 0.0
  %4839 = vmatpush1.msra.mxu0 0.0
  %4840 = vmatprep.subr.mxu0 0.0
  %4841 = vmatpush1.msra.mxu0 0.0
  %4842 = vmatprep.subr.mxu0 0.0
  %4843 = vmatpush1.msra.mxu0 0.0
  %4844 = vmatprep.subr.mxu0 0.0
  %4845 = vmatpush1.msra.mxu0 0.0
  %4846 = vmatprep.subr.mxu0 0.0
  %4847 = vmatpush1.msra.mxu0 0.0
  %4848 = vmatprep.subr.mxu0 0.0
  %4849 = vmatpush1.msra.mxu0 %v2205
  %4850 = vmatprep.subr.mxu0 0.0
  %4851 = vmatpush2.msra.mxu0 0.0
  %4852 = vmatprep.subr.mxu0 0.0
  %4853 = vmatpush2.msra.mxu0 0.0
  %4854 = vmatprep.subr.mxu0 0.0
  %4855 = vmatpush2.msra.mxu0 0.0
  %4856 = vmatprep.subr.mxu0 0.0
  %4857 = vmatpush2.msra.mxu0 0.0
  %4858 = vmatprep.subr.mxu0 0.0
  %4859 = vmatpush2.msra.mxu0 0.0
  %4860 = vmatprep.subr.mxu0 0.0
  %4861 = vmatpush2.msra.mxu0 0.0
  %4862 = vmatprep.subr.mxu0 0.0
  %4863 = vmatpush2.msra.mxu0 0.0
  %4864 = vmatprep.subr.mxu0 0.0
  %4865 = vmatpush2.msra.mxu0 0.0
  %4866 = vmatprep.subr.mxu0 0.0
  %4867 = vmatpush2.msra.mxu0 0.0
  %4868 = vmatprep.subr.mxu0 0.0
  %4869 = vmatpush2.msra.mxu0 0.0
  %4870 = vmatprep.subr.mxu0 0.0
  %4871 = vmatpush2.msra.mxu0 0.0
  %4872 = vmatprep.subr.mxu0 0.0
  %4873 = vmatpush2.msra.mxu0 0.0
  %4874 = vmatprep.subr.mxu0 0.0
  %4875 = vmatpush2.msra.mxu0 0.0
  %4876 = vmatprep.subr.mxu0 0.0
  %4877 = vmatpush2.msra.mxu0 0.0
  %4878 = vmatprep.subr.mxu0 0.0
  %4879 = vmatpush2.msra.mxu0 0.0
  %4880 = vmatprep.subr.mxu0 0.0
  %4881 = vmatpush2.msra.mxu0 0.0
  %4882 = vmatprep.mubr.f32.mxu0 0.0
  %4883 = vmatmul.mubr.f32.gmra.mxu0 %v4816
  %v4884 = vpop.f32.mrf.mxu0
  %v4885 = vadd.f32 0.0, %v4884
  %v4886 = vpop.f32.mrf.mxu0
  %4887 = vdwg.mxu0
  %v4888 = vlaneseq
  %v4889 = vshrl.u32 %v4888, 7
  %v4890 = vsub.s32 0, %v4889
  %v4891 = vrot.slane %v4885, %v4890
  %v4892 = vmul.f32 %v4702, %v4891
  %v4893 = vlaneseq
  %v4894 = vshrl.u32 %v4893, 7
  %v4895 = vsub.s32 1, %v4894
  %v4896 = vrot.slane %v4885, %v4895
  %v4897 = vadd.f32 %v4892, %v4896
  %vm4898 = vcmp.gt.f32.partialorder %v4897, 0.0
  %v4899 = vmul.f32 %v4897, 0.01
  %v4900 = vsel %vm4898, %v4897, %v4899
  %v4901 = vld [vmem:[%s17] sm:$0xff]
  %v4902 = vld [vmem:[%s17 + $0x8] sm:$0xff]
  %v4903 = vld [vmem:[%s17 + $0x10] sm:$0xff]
  %v4904 = vld [vmem:[%s17 + $0x18] sm:$0xff]
  %v4905 = vld [vmem:[%s17 + $0x20] sm:$0xff]
  %v4906 = vld [vmem:[%s17 + $0x28] sm:$0xff]
  %v4907 = vld [vmem:[%s17 + $0x30] sm:$0xff]
  %v4908 = vld [vmem:[%s17 + $0x38] sm:$0xff]
  %v4909 = vld [vmem:[%s17 + $0x40] sm:$0xff]
  %v4910 = vld [vmem:[%s17 + $0x48] sm:$0xff]
  %v4911 = vld [vmem:[%s17 + $0x50] sm:$0xff]
  %v4912 = vld [vmem:[%s17 + $0x58] sm:$0xff]
  %v4913 = vld [vmem:[%s17 + $0x60] sm:$0xff]
  %v4914 = vld [vmem:[%s17 + $0x68] sm:$0xff]
  %v4915 = vld [vmem:[%s17 + $0x70] sm:$0xff]
  %v4916 = vld [vmem:[%s17 + $0x78] sm:$0xff]
  %v4917 = vld [vmem:[%s18] sm:$0xff]
  %v4918 = vld [vmem:[%s18 + $0x8] sm:$0xff]
  %v4919 = vld [vmem:[%s18 + $0x10] sm:$0xff]
  %v4920 = vld [vmem:[%s18 + $0x18] sm:$0xff]
  %v4921 = vld [vmem:[%s18 + $0x20] sm:$0xff]
  %v4922 = vld [vmem:[%s18 + $0x28] sm:$0xff]
  %v4923 = vld [vmem:[%s18 + $0x30] sm:$0xff]
  %v4924 = vld [vmem:[%s18 + $0x38] sm:$0xff]
  %v4925 = vld [vmem:[%s18 + $0x40] sm:$0xff]
  %v4926 = vld [vmem:[%s18 + $0x48] sm:$0xff]
  %v4927 = vld [vmem:[%s18 + $0x50] sm:$0xff]
  %v4928 = vld [vmem:[%s18 + $0x58] sm:$0xff]
  %v4929 = vld [vmem:[%s18 + $0x60] sm:$0xff]
  %v4930 = vld [vmem:[%s18 + $0x68] sm:$0xff]
  %v4931 = vld [vmem:[%s18 + $0x70] sm:$0xff]
  %v4932 = vld [vmem:[%s18 + $0x78] sm:$0xff]
  %v4933 = vld [vmem:[%s18 + $0x80] sm:$0xff]
  %v4934 = vld [vmem:[%s18 + $0x88] sm:$0xff]
  %v4935 = vld [vmem:[%s18 + $0x90] sm:$0xff]
  %v4936 = vld [vmem:[%s18 + $0x98] sm:$0xff]
  %v4937 = vld [vmem:[%s18 + $0xa0] sm:$0xff]
  %v4938 = vld [vmem:[%s18 + $0xa8] sm:$0xff]
  %v4939 = vld [vmem:[%s18 + $0xb0] sm:$0xff]
  %v4940 = vld [vmem:[%s18 + $0xb8] sm:$0xff]
  %v4941 = vld [vmem:[%s18 + $0xc0] sm:$0xff]
  %v4942 = vld [vmem:[%s18 + $0xc8] sm:$0xff]
  %v4943 = vld [vmem:[%s18 + $0xd0] sm:$0xff]
  %v4944 = vld [vmem:[%s18 + $0xd8] sm:$0xff]
  %v4945 = vld [vmem:[%s18 + $0xe0] sm:$0xff]
  %v4946 = vld [vmem:[%s18 + $0xe8] sm:$0xff]
  %v4947 = vld [vmem:[%s18 + $0xf0] sm:$0xff]
  %v4948 = vld [vmem:[%s18 + $0xf8] sm:$0xff]
  %4949 = vmatprep.subr.mxu0 %v4948
  %4950 = vmatpush1.msra.mxu0 %v4947
  %4951 = vmatprep.subr.mxu0 %v4946
  %4952 = vmatpush1.msra.mxu0 %v4945
  %4953 = vmatprep.subr.mxu0 %v4944
  %4954 = vmatpush1.msra.mxu0 %v4943
  %4955 = vmatprep.subr.mxu0 %v4942
  %4956 = vmatpush1.msra.mxu0 %v4941
  %4957 = vmatprep.subr.mxu0 %v4940
  %4958 = vmatpush1.msra.mxu0 %v4939
  %4959 = vmatprep.subr.mxu0 %v4938
  %4960 = vmatpush1.msra.mxu0 %v4937
  %4961 = vmatprep.subr.mxu0 %v4936
  %4962 = vmatpush1.msra.mxu0 %v4935
  %4963 = vmatprep.subr.mxu0 %v4934
  %4964 = vmatpush1.msra.mxu0 %v4933
  %4965 = vmatprep.subr.mxu0 %v4932
  %4966 = vmatpush1.msra.mxu0 %v4931
  %4967 = vmatprep.subr.mxu0 %v4930
  %4968 = vmatpush1.msra.mxu0 %v4929
  %4969 = vmatprep.subr.mxu0 %v4928
  %4970 = vmatpush1.msra.mxu0 %v4927
  %4971 = vmatprep.subr.mxu0 %v4926
  %4972 = vmatpush1.msra.mxu0 %v4925
  %4973 = vmatprep.subr.mxu0 %v4924
  %4974 = vmatpush1.msra.mxu0 %v4923
  %4975 = vmatprep.subr.mxu0 %v4922
  %4976 = vmatpush1.msra.mxu0 %v4921
  %4977 = vmatprep.subr.mxu0 %v4920
  %4978 = vmatpush1.msra.mxu0 %v4919
  %4979 = vmatprep.subr.mxu0 %v4918
  %4980 = vmatpush1.msra.mxu0 %v4917
  %4981 = vmatprep.subr.mxu0 0.0
  %4982 = vmatpush2.msra.mxu0 0.0
  %4983 = vmatprep.subr.mxu0 0.0
  %4984 = vmatpush2.msra.mxu0 0.0
  %4985 = vmatprep.subr.mxu0 0.0
  %4986 = vmatpush2.msra.mxu0 0.0
  %4987 = vmatprep.subr.mxu0 0.0
  %4988 = vmatpush2.msra.mxu0 0.0
  %4989 = vmatprep.subr.mxu0 0.0
  %4990 = vmatpush2.msra.mxu0 0.0
  %4991 = vmatprep.subr.mxu0 0.0
  %4992 = vmatpush2.msra.mxu0 0.0
  %4993 = vmatprep.subr.mxu0 0.0
  %4994 = vmatpush2.msra.mxu0 0.0
  %4995 = vmatprep.subr.mxu0 0.0
  %4996 = vmatpush2.msra.mxu0 0.0
  %4997 = vmatprep.subr.mxu0 0.0
  %4998 = vmatpush2.msra.mxu0 0.0
  %4999 = vmatprep.subr.mxu0 0.0
  %5000 = vmatpush2.msra.mxu0 0.0
  %5001 = vmatprep.subr.mxu0 0.0
  %5002 = vmatpush2.msra.mxu0 0.0
  %5003 = vmatprep.subr.mxu0 0.0
  %5004 = vmatpush2.msra.mxu0 0.0
  %5005 = vmatprep.subr.mxu0 0.0
  %5006 = vmatpush2.msra.mxu0 0.0
  %5007 = vmatprep.subr.mxu0 0.0
  %5008 = vmatpush2.msra.mxu0 0.0
  %5009 = vmatprep.subr.mxu0 0.0
  %5010 = vmatpush2.msra.mxu0 0.0
  %5011 = vmatprep.subr.mxu0 0.0
  %5012 = vmatpush2.msra.mxu0 0.0
  %5013 = vmatprep.mubr.f32.mxu0 0.0
  %5014 = vmatmul.mubr.f32.gmra.mxu0 %v4900
  %v5015 = vpop.f32.mrf.mxu0
  %v5016 = vadd.f32 0.0, %v5015
  %v5017 = vpop.f32.mrf.mxu0
  %v5018 = vadd.f32 0.0, %v5017
  %5019 = vdwg.mxu0
  %v5021 = vsel %vm208, %v3827, 0
  %5023 = vmatprep.subr.mxu0 0.0
  %5024 = vmatpush1.msra.mxu0 0.0
  %5025 = vmatprep.subr.mxu0 0.0
  %5026 = vmatpush1.msra.mxu0 0.0
  %5027 = vmatprep.subr.mxu0 0.0
  %5028 = vmatpush1.msra.mxu0 0.0
  %5029 = vmatprep.subr.mxu0 0.0
  %5030 = vmatpush1.msra.mxu0 0.0
  %5031 = vmatprep.subr.mxu0 0.0
  %5032 = vmatpush1.msra.mxu0 0.0
  %5033 = vmatprep.subr.mxu0 0.0
  %5034 = vmatpush1.msra.mxu0 0.0
  %5035 = vmatprep.subr.mxu0 0.0
  %5036 = vmatpush1.msra.mxu0 0.0
  %5037 = vmatprep.subr.mxu0 0.0
  %5038 = vmatpush1.msra.mxu0 0.0
  %5039 = vmatprep.subr.mxu0 %v4916
  %5040 = vmatpush1.msra.mxu0 %v4915
  %5041 = vmatprep.subr.mxu0 %v4914
  %5042 = vmatpush1.msra.mxu0 %v4913
  %5043 = vmatprep.subr.mxu0 %v4912
  %5044 = vmatpush1.msra.mxu0 %v4911
  %5045 = vmatprep.subr.mxu0 %v4910
  %5046 = vmatpush1.msra.mxu0 %v4909
  %5047 = vmatprep.subr.mxu0 %v4908
  %5048 = vmatpush1.msra.mxu0 %v4907
  %5049 = vmatprep.subr.mxu0 %v4906
  %5050 = vmatpush1.msra.mxu0 %v4905
  %5051 = vmatprep.subr.mxu0 %v4904
  %5052 = vmatpush1.msra.mxu0 %v4903
  %5053 = vmatprep.subr.mxu0 %v4902
  %5054 = vmatpush1.msra.mxu0 %v4901
  %5055 = vmatprep.subr.mxu0 0.0
  %5056 = vmatpush2.msra.mxu0 0.0
  %5057 = vmatprep.subr.mxu0 0.0
  %5058 = vmatpush2.msra.mxu0 0.0
  %5059 = vmatprep.subr.mxu0 0.0
  %5060 = vmatpush2.msra.mxu0 0.0
  %5061 = vmatprep.subr.mxu0 0.0
  %5062 = vmatpush2.msra.mxu0 0.0
  %5063 = vmatprep.subr.mxu0 0.0
  %5064 = vmatpush2.msra.mxu0 0.0
  %5065 = vmatprep.subr.mxu0 0.0
  %5066 = vmatpush2.msra.mxu0 0.0
  %5067 = vmatprep.subr.mxu0 0.0
  %5068 = vmatpush2.msra.mxu0 0.0
  %5069 = vmatprep.subr.mxu0 0.0
  %5070 = vmatpush2.msra.mxu0 0.0
  %5071 = vmatprep.subr.mxu0 0.0
  %5072 = vmatpush2.msra.mxu0 0.0
  %5073 = vmatprep.subr.mxu0 0.0
  %5074 = vmatpush2.msra.mxu0 0.0
  %5075 = vmatprep.subr.mxu0 0.0
  %5076 = vmatpush2.msra.mxu0 0.0
  %5077 = vmatprep.subr.mxu0 0.0
  %5078 = vmatpush2.msra.mxu0 0.0
  %5079 = vmatprep.subr.mxu0 0.0
  %5080 = vmatpush2.msra.mxu0 0.0
  %5081 = vmatprep.subr.mxu0 0.0
  %5082 = vmatpush2.msra.mxu0 0.0
  %5083 = vmatprep.subr.mxu0 0.0
  %5084 = vmatpush2.msra.mxu0 0.0
  %5085 = vmatprep.subr.mxu0 0.0
  %5086 = vmatpush2.msra.mxu0 0.0
  %5087 = vmatprep.mubr.f32.mxu0 0.0
  %5088 = vmatmul.mubr.f32.gmra.mxu0 %v5021
  %v5089 = vpop.f32.mrf.mxu0
  %v5090 = vadd.f32 %v5016, %v5089
  %v5091 = vpop.f32.mrf.mxu0
  %v5092 = vadd.f32 %v5018, %v5091
  %5093 = vdwg.mxu0
  %v5094 = vadd.s32 %v78, 200
  %v5095 = vadd.s32 %v78, 208
  %vm5096 = vcmp.ge.s32.totalorder %v1252, %v89
  %vm5097 = vcmp.ge.s32.totalorder %v1253, %v89
  %vm5098 = vcmp.ge.s32.totalorder %v1254, %v89
  %vm5099 = vcmp.ge.s32.totalorder %v1255, %v89
  %vm5100 = vcmp.ge.s32.totalorder %v1256, %v89
  %vm5101 = vcmp.ge.s32.totalorder %v1257, %v89
  %vm5102 = vcmp.ge.s32.totalorder %v1258, %v89
  %vm5103 = vcmp.ge.s32.totalorder %v5094, %v89
  %vm5104 = vcmp.ge.s32.totalorder %v5095, %v89
  %vm5105 = vcmp.lt.s32.totalorder %v1252, %v100
  %vm5106 = vcmp.lt.s32.totalorder %v1253, %v100
  %vm5107 = vcmp.lt.s32.totalorder %v1254, %v100
  %vm5108 = vcmp.lt.s32.totalorder %v1255, %v100
  %vm5109 = vcmp.lt.s32.totalorder %v1256, %v100
  %vm5110 = vcmp.lt.s32.totalorder %v1257, %v100
  %vm5111 = vcmp.lt.s32.totalorder %v1258, %v100
  %vm5112 = vcmp.lt.s32.totalorder %v5094, %v100
  %vm5113 = vcmp.lt.s32.totalorder %v5095, %v100
  %vm5114 = vmand %vm5096, %vm5105
  %vm5115 = vmand %vm5097, %vm5106
  %vm5116 = vmand %vm5098, %vm5107
  %vm5117 = vmand %vm5099, %vm5108
  %vm5118 = vmand %vm5100, %vm5109
  %vm5119 = vmand %vm5101, %vm5110
  %vm5120 = vmand %vm5102, %vm5111
  %vm5121 = vmand %vm5103, %vm5112
  %vm5122 = vmand %vm5104, %vm5113
  %v5123 = vsel %vm5114, 1, 0
  %v5124 = vsel %vm5115, 1, 0
  %v5125 = vsel %vm5116, 1, 0
  %v5126 = vsel %vm5117, 1, 0
  %v5127 = vsel %vm5118, 1, 0
  %v5128 = vsel %vm5119, 1, 0
  %v5129 = vsel %vm5120, 1, 0
  %v5130 = vsel %vm5121, 1, 0
  %v5131 = vsel %vm5122, 1, 0
  %v5132 = vcvt.s32.f32 %v5123
  %v5133 = vcvt.s32.f32 %v5124
  %v5134 = vcvt.s32.f32 %v5125
  %v5135 = vcvt.s32.f32 %v5126
  %v5136 = vcvt.s32.f32 %v5127
  %v5137 = vcvt.s32.f32 %v5128
  %v5138 = vcvt.s32.f32 %v5129
  %v5139 = vcvt.s32.f32 %v5130
  %v5140 = vcvt.s32.f32 %v5131
  %vm5141 = vcmp.ge.s32.totalorder %v86, %v145
  %vm5142 = vcmp.ge.s32.totalorder %v1243, %v145
  %vm5143 = vcmp.ge.s32.totalorder %v1244, %v145
  %vm5144 = vcmp.ge.s32.totalorder %v1245, %v145
  %vm5145 = vcmp.lt.s32.totalorder %v86, %v150
  %vm5146 = vcmp.lt.s32.totalorder %v1243, %v150
  %vm5147 = vcmp.lt.s32.totalorder %v1244, %v150
  %vm5148 = vcmp.lt.s32.totalorder %v1245, %v150
  %vm5149 = vmand %vm5141, %vm5145
  %vm5150 = vmand %vm5142, %vm5146
  %vm5151 = vmand %vm5143, %vm5147
  %vm5152 = vmand %vm5144, %vm5148
  %v5153 = vsel %vm5149, 1, 0
  %v5154 = vsel %vm5150, 1, 0
  %v5155 = vsel %vm5151, 1, 0
  %v5156 = vsel %vm5152, 1, 0
  %v5157 = vcvt.s32.f32 %v5153
  %v5158 = vcvt.s32.f32 %v5154
  %v5159 = vcvt.s32.f32 %v5155
  %v5160 = vcvt.s32.f32 %v5156
  %v5161 = vsel %vm396, %v5090, 0.0
  %v5162 = vrot.slane %v5161, 4
  %v5163 = vadd.f32 %v5161, %v5162
  %v5164 = vrot.slane %v5163, 2
  %v5165 = vadd.f32 %v5163, %v5164
  %v5166 = vrot.slane %v5165, 1
  %v5167 = vadd.f32 %v5165, %v5166
  %vm5168 = vcmask 713728
  %v5169 = vsel %vm5168, %v5092, 0.0
  %v5170 = vrot.slane %v5169, 4
  %v5171 = vadd.f32 %v5169, %v5170
  %v5172 = vrot.slane %v5171, 2
  %v5173 = vadd.f32 %v5171, %v5172
  %v5174 = vrot.slane %v5173, 1
  %v5175 = vadd.f32 %v5173, %v5174
  %v5176 = vmul.f32 %v5090, %v5090
  %v5177 = vmul.f32 %v5092, %v5092
  %v5178 = vsel %vm396, %v5176, 0.0
  %v5179 = vrot.slane %v5178, 4
  %v5180 = vadd.f32 %v5178, %v5179
  %v5181 = vrot.slane %v5180, 2
  %v5182 = vadd.f32 %v5180, %v5181
  %v5183 = vrot.slane %v5182, 1
  %v5184 = vadd.f32 %v5182, %v5183
  %v5185 = vsel %vm5168, %v5177, 0.0
  %v5186 = vrot.slane %v5185, 4
  %v5187 = vadd.f32 %v5185, %v5186
  %v5188 = vrot.slane %v5187, 2
  %v5189 = vadd.f32 %v5187, %v5188
  %v5190 = vrot.slane %v5189, 1
  %v5191 = vadd.f32 %v5189, %v5190
  %v5192 = vsel %vm297, %v5167, %v5184
  %v5193 = vsel %vm297, %v5175, %v5191
  %vm5194 = vcmask 719872
  %v5196 = vsel %vm5194, %v5193, 0
  %5198 = vmatprep.subr.mxu0 0.0
  %5199 = vmatpush1.msra.mxu0 %v2799
  %5200 = vmatprep.subr.mxu0 0.0
  %5201 = vmatpush1.msra.mxu0 %v2798
  %5202 = vmatprep.subr.mxu0 0.0
  %5203 = vmatpush1.msra.mxu0 %v2797
  %5204 = vmatprep.subr.mxu0 0.0
  %5205 = vmatpush1.msra.mxu0 %v2796
  %5206 = vmatprep.subr.mxu0 0.0
  %5207 = vmatpush1.msra.mxu0 %v2795
  %5208 = vmatprep.subr.mxu0 0.0
  %5209 = vmatpush1.msra.mxu0 %v2794
  %5210 = vmatprep.subr.mxu0 0.0
  %5211 = vmatpush1.msra.mxu0 %v2793
  %5212 = vmatprep.subr.mxu0 0.0
  %5213 = vmatpush1.msra.mxu0 %v136
  %5214 = vmatprep.subr.mxu0 0.0
  %5215 = vmatpush1.msra.mxu0 %v135
  %5216 = vmatprep.subr.mxu0 0.0
  %5217 = vmatpush1.msra.mxu0 %v134
  %5218 = vmatprep.subr.mxu0 0.0
  %5219 = vmatpush1.msra.mxu0 %v133
  %5220 = vmatprep.subr.mxu0 0.0
  %5221 = vmatpush1.msra.mxu0 %v132
  %5222 = vmatprep.subr.mxu0 0.0
  %5223 = vmatpush1.msra.mxu0 %v131
  %5224 = vmatprep.subr.mxu0 0.0
  %5225 = vmatpush1.msra.mxu0 %v130
  %5226 = vmatprep.subr.mxu0 0.0
  %5227 = vmatpush1.msra.mxu0 %v129
  %5228 = vmatprep.subr.mxu0 0.0
  %5229 = vmatpush1.msra.mxu0 %v128
  %5230 = vmatprep.subr.mxu0 0.0
  %5231 = vmatpush2.msra.mxu0 0.0
  %5232 = vmatprep.subr.mxu0 0.0
  %5233 = vmatpush2.msra.mxu0 0.0
  %5234 = vmatprep.subr.mxu0 0.0
  %5235 = vmatpush2.msra.mxu0 0.0
  %5236 = vmatprep.subr.mxu0 0.0
  %5237 = vmatpush2.msra.mxu0 0.0
  %5238 = vmatprep.subr.mxu0 0.0
  %5239 = vmatpush2.msra.mxu0 0.0
  %5240 = vmatprep.subr.mxu0 0.0
  %5241 = vmatpush2.msra.mxu0 %v5140
  %5242 = vmatprep.subr.mxu0 0.0
  %5243 = vmatpush2.msra.mxu0 %v5139
  %5244 = vmatprep.subr.mxu0 0.0
  %5245 = vmatpush2.msra.mxu0 %v5138
  %5246 = vmatprep.subr.mxu0 0.0
  %5247 = vmatpush2.msra.mxu0 %v5137
  %5248 = vmatprep.subr.mxu0 0.0
  %5249 = vmatpush2.msra.mxu0 %v5136
  %5250 = vmatprep.subr.mxu0 0.0
  %5251 = vmatpush2.msra.mxu0 %v5135
  %5252 = vmatprep.subr.mxu0 0.0
  %5253 = vmatpush2.msra.mxu0 %v5134
  %5254 = vmatprep.subr.mxu0 0.0
  %5255 = vmatpush2.msra.mxu0 %v5133
  %5256 = vmatprep.subr.mxu0 0.0
  %5257 = vmatpush2.msra.mxu0 %v5132
  %5258 = vmatprep.subr.mxu0 0.0
  %5259 = vmatpush2.msra.mxu0 %v2801
  %5260 = vmatprep.subr.mxu0 0.0
  %5261 = vmatpush2.msra.mxu0 %v2800
  %5262 = vmatprep.mubr.f32.mxu0 %v5196
  %5263 = vmatmul.mubr.f32.gmra.mxu0 %v5192
  %v5264 = vpop.f32.mrf.mxu0
  %v5265 = vadd.f32 0.0, %v5264
  %v5266 = vpop.f32.mrf.mxu0
  %5267 = vdwg.mxu0
  %v5268 = vmul.f32 %v5265, %v373
  %v5269 = vmul.f32 %v5268, %v5268
  %v5271 = vrot.slane %v5269, 7
  %v5273 = vsub.f32 %v5268, %v5271
  %v5274 = vadd.f32 %v5273, 1e-05
  %v5275 = vrsqrt.pop %v5274
  %v5277 = vrot.slane %v5275, 5
  %v5279 = vmul.f32 %v74, %v5277
  %v5281 = vrot.slane %v5279, 4
  %v5283 = vmul.f32 %v5268, %v5281
  %v5285 = vrot.slane %v5283, 3
  %v5287 = vsub.f32 %v74, %v5285
  %v5289 = vrot.slane %v5287, 4
  %v5291 = vsel %vm297, %v5281, %v5289
  %vm5292 = vcmask 48128
  %v5294 = vsel %vm5292, %v5291, 0
  %vm5296 = vcmask 1045504
  %v5297 = vsel %vm5296, %v144, 0
  %v5299 = vsel %vm5296, %v2806, 0
  %5301 = vmatprep.subr.mxu0 0.0
  %5302 = vmatpush1.msra.mxu0 0.0
  %5303 = vmatprep.subr.mxu0 0.0
  %5304 = vmatpush1.msra.mxu0 0.0
  %5305 = vmatprep.subr.mxu0 0.0
  %5306 = vmatpush1.msra.mxu0 0.0
  %5307 = vmatprep.subr.mxu0 0.0
  %5308 = vmatpush1.msra.mxu0 0.0
  %5309 = vmatprep.subr.mxu0 0.0
  %5310 = vmatpush1.msra.mxu0 0.0
  %5311 = vmatprep.subr.mxu0 0.0
  %5312 = vmatpush1.msra.mxu0 0.0
  %5313 = vmatprep.subr.mxu0 0.0
  %5314 = vmatpush1.msra.mxu0 0.0
  %5315 = vmatprep.subr.mxu0 0.0
  %5316 = vmatpush1.msra.mxu0 0.0
  %5317 = vmatprep.subr.mxu0 0.0
  %5318 = vmatpush1.msra.mxu0 0.0
  %5319 = vmatprep.subr.mxu0 0.0
  %5320 = vmatpush1.msra.mxu0 0.0
  %5321 = vmatprep.subr.mxu0 0.0
  %5322 = vmatpush1.msra.mxu0 0.0
  %5323 = vmatprep.subr.mxu0 0.0
  %5324 = vmatpush1.msra.mxu0 0.0
  %5325 = vmatprep.subr.mxu0 0.0
  %5326 = vmatpush1.msra.mxu0 0.0
  %5327 = vmatprep.subr.mxu0 0.0
  %5328 = vmatpush1.msra.mxu0 0.0
  %5329 = vmatprep.subr.mxu0 0.0
  %5330 = vmatpush1.msra.mxu0 0.0
  %5331 = vmatprep.subr.mxu0 %v5299
  %5332 = vmatpush1.msra.mxu0 %v5297
  %5333 = vmatprep.subr.mxu0 0.0
  %5334 = vmatpush2.msra.mxu0 0.0
  %5335 = vmatprep.subr.mxu0 0.0
  %5336 = vmatpush2.msra.mxu0 0.0
  %5337 = vmatprep.subr.mxu0 0.0
  %5338 = vmatpush2.msra.mxu0 0.0
  %5339 = vmatprep.subr.mxu0 0.0
  %5340 = vmatpush2.msra.mxu0 0.0
  %5341 = vmatprep.subr.mxu0 0.0
  %5342 = vmatpush2.msra.mxu0 0.0
  %5343 = vmatprep.subr.mxu0 0.0
  %5344 = vmatpush2.msra.mxu0 0.0
  %5345 = vmatprep.subr.mxu0 0.0
  %5346 = vmatpush2.msra.mxu0 0.0
  %5347 = vmatprep.subr.mxu0 0.0
  %5348 = vmatpush2.msra.mxu0 0.0
  %5349 = vmatprep.subr.mxu0 0.0
  %5350 = vmatpush2.msra.mxu0 0.0
  %5351 = vmatprep.subr.mxu0 0.0
  %5352 = vmatpush2.msra.mxu0 0.0
  %5353 = vmatprep.subr.mxu0 0.0
  %5354 = vmatpush2.msra.mxu0 0.0
  %5355 = vmatprep.subr.mxu0 0.0
  %5356 = vmatpush2.msra.mxu0 0.0
  %5357 = vmatprep.subr.mxu0 0.0
  %5358 = vmatpush2.msra.mxu0 0.0
  %5359 = vmatprep.subr.mxu0 0.0
  %5360 = vmatpush2.msra.mxu0 0.0
  %5361 = vmatprep.subr.mxu0 0.0
  %5362 = vmatpush2.msra.mxu0 0.0
  %5363 = vmatprep.subr.mxu0 0.0
  %5364 = vmatpush2.msra.mxu0 0.0
  %5365 = vmatprep.mubr.f32.mxu0 0.0
  %5366 = vmatmul.mubr.f32.gmra.mxu0 %v5294
  %v5367 = vpop.f32.mrf.mxu0
  %v5368 = vadd.f32 0.0, %v5367
  %v5369 = vpop.f32.mrf.mxu0
  %v5370 = vadd.f32 0.0, %v5369
  %5371 = vdwg.mxu0
  %v5372 = vlaneseq
  %v5373 = vshrl.u32 %v5372, 7
  %v5374 = vsub.s32 0, %v5373
  %v5375 = vrot.slane %v5368, %v5374
  %v5376 = vlaneseq
  %v5377 = vshrl.u32 %v5376, 7
  %v5378 = vsub.s32 0, %v5377
  %v5379 = vrot.slane %v5370, %v5378
  %v5380 = vmul.f32 %v5090, %v5375
  %v5381 = vmul.f32 %v5092, %v5379
  %v5382 = vlaneseq
  %v5383 = vshrl.u32 %v5382, 7
  %v5384 = vsub.s32 1, %v5383
  %v5385 = vrot.slane %v5368, %v5384
  %v5386 = vlaneseq
  %v5387 = vshrl.u32 %v5386, 7
  %v5388 = vsub.s32 1, %v5387
  %v5389 = vrot.slane %v5370, %v5388
  %v5390 = vadd.f32 %v5380, %v5385
  %v5391 = vadd.f32 %v5381, %v5389
  %vm5392 = vcmp.gt.f32.partialorder %v5390, 0.0
  %vm5393 = vcmp.gt.f32.partialorder %v5391, 0.0
  %v5394 = vmul.f32 %v5390, 0.01
  %v5395 = vmul.f32 %v5391, 0.01
  %v5396 = vsel %vm5392, %v5390, %v5394
  %v5397 = vsel %vm5393, %v5391, %v5395
  %v5398 = vld [vmem:[%s19] sm:$0xff]
  %v5399 = vld [vmem:[%s19 + $0x8] sm:$0xff]
  %v5400 = vld [vmem:[%s19 + $0x10] sm:$0xff]
  %v5401 = vld [vmem:[%s19 + $0x18] sm:$0xff]
  %v5402 = vld [vmem:[%s19 + $0x20] sm:$0xff]
  %v5403 = vld [vmem:[%s19 + $0x28] sm:$0xff]
  %v5404 = vld [vmem:[%s19 + $0x30] sm:$0xff]
  %v5405 = vld [vmem:[%s19 + $0x38] sm:$0xff]
  %v5406 = vld [vmem:[%s19 + $0x40] sm:$0xff]
  %v5407 = vld [vmem:[%s19 + $0x48] sm:$0xff]
  %v5408 = vld [vmem:[%s19 + $0x50] sm:$0xff]
  %v5409 = vld [vmem:[%s19 + $0x58] sm:$0xff]
  %v5410 = vld [vmem:[%s19 + $0x60] sm:$0xff]
  %v5411 = vld [vmem:[%s19 + $0x68] sm:$0xff]
  %v5412 = vld [vmem:[%s19 + $0x70] sm:$0xff]
  %v5413 = vld [vmem:[%s19 + $0x78] sm:$0xff]
  %v5414 = vld [vmem:[%s19 + $0x80] sm:$0xff]
  %v5415 = vld [vmem:[%s19 + $0x88] sm:$0xff]
  %v5416 = vld [vmem:[%s19 + $0x90] sm:$0xff]
  %v5417 = vld [vmem:[%s19 + $0x98] sm:$0xff]
  %v5418 = vld [vmem:[%s19 + $0xa0] sm:$0xff]
  %v5419 = vld [vmem:[%s19 + $0xa8] sm:$0xff]
  %v5420 = vld [vmem:[%s19 + $0xb0] sm:$0xff]
  %v5421 = vld [vmem:[%s19 + $0xb8] sm:$0xff]
  %v5422 = vld [vmem:[%s19 + $0xc0] sm:$0xff]
  %v5423 = vld [vmem:[%s19 + $0xc8] sm:$0xff]
  %v5424 = vld [vmem:[%s19 + $0xd0] sm:$0xff]
  %v5426 = vsel %vm5194, %v5397, 0
  %5428 = vmatprep.subr.mxu0 0.0
  %5429 = vmatpush1.msra.mxu0 %v5413
  %5430 = vmatprep.subr.mxu0 0.0
  %5431 = vmatpush1.msra.mxu0 %v5412
  %5432 = vmatprep.subr.mxu0 0.0
  %5433 = vmatpush1.msra.mxu0 %v5411
  %5434 = vmatprep.subr.mxu0 0.0
  %5435 = vmatpush1.msra.mxu0 %v5410
  %5436 = vmatprep.subr.mxu0 0.0
  %5437 = vmatpush1.msra.mxu0 %v5409
  %5438 = vmatprep.subr.mxu0 0.0
  %5439 = vmatpush1.msra.mxu0 %v5408
  %5440 = vmatprep.subr.mxu0 0.0
  %5441 = vmatpush1.msra.mxu0 %v5407
  %5442 = vmatprep.subr.mxu0 0.0
  %5443 = vmatpush1.msra.mxu0 %v5406
  %5444 = vmatprep.subr.mxu0 0.0
  %5445 = vmatpush1.msra.mxu0 %v5405
  %5446 = vmatprep.subr.mxu0 0.0
  %5447 = vmatpush1.msra.mxu0 %v5404
  %5448 = vmatprep.subr.mxu0 0.0
  %5449 = vmatpush1.msra.mxu0 %v5403
  %5450 = vmatprep.subr.mxu0 0.0
  %5451 = vmatpush1.msra.mxu0 %v5402
  %5452 = vmatprep.subr.mxu0 0.0
  %5453 = vmatpush1.msra.mxu0 %v5401
  %5454 = vmatprep.subr.mxu0 0.0
  %5455 = vmatpush1.msra.mxu0 %v5400
  %5456 = vmatprep.subr.mxu0 0.0
  %5457 = vmatpush1.msra.mxu0 %v5399
  %5458 = vmatprep.subr.mxu0 0.0
  %5459 = vmatpush1.msra.mxu0 %v5398
  %5460 = vmatprep.subr.mxu0 0.0
  %5461 = vmatpush2.msra.mxu0 0.0
  %5462 = vmatprep.subr.mxu0 0.0
  %5463 = vmatpush2.msra.mxu0 0.0
  %5464 = vmatprep.subr.mxu0 0.0
  %5465 = vmatpush2.msra.mxu0 0.0
  %5466 = vmatprep.subr.mxu0 0.0
  %5467 = vmatpush2.msra.mxu0 0.0
  %5468 = vmatprep.subr.mxu0 0.0
  %5469 = vmatpush2.msra.mxu0 0.0
  %5470 = vmatprep.subr.mxu0 0.0
  %5471 = vmatpush2.msra.mxu0 %v5424
  %5472 = vmatprep.subr.mxu0 0.0
  %5473 = vmatpush2.msra.mxu0 %v5423
  %5474 = vmatprep.subr.mxu0 0.0
  %5475 = vmatpush2.msra.mxu0 %v5422
  %5476 = vmatprep.subr.mxu0 0.0
  %5477 = vmatpush2.msra.mxu0 %v5421
  %5478 = vmatprep.subr.mxu0 0.0
  %5479 = vmatpush2.msra.mxu0 %v5420
  %5480 = vmatprep.subr.mxu0 0.0
  %5481 = vmatpush2.msra.mxu0 %v5419
  %5482 = vmatprep.subr.mxu0 0.0
  %5483 = vmatpush2.msra.mxu0 %v5418
  %5484 = vmatprep.subr.mxu0 0.0
  %5485 = vmatpush2.msra.mxu0 %v5417
  %5486 = vmatprep.subr.mxu0 0.0
  %5487 = vmatpush2.msra.mxu0 %v5416
  %5488 = vmatprep.subr.mxu0 0.0
  %5489 = vmatpush2.msra.mxu0 %v5415
  %5490 = vmatprep.subr.mxu0 0.0
  %5491 = vmatpush2.msra.mxu0 %v5414
  %5492 = vmatprep.mubr.f32.mxu0 %v5426
  %5493 = vmatmul.mubr.f32.gmra.mxu0 %v5396
  %v5494 = vpop.f32.mrf.mxu0
  %v5495 = vadd.f32 0.0, %v5494
  %v5496 = vpop.f32.mrf.mxu0
  %5497 = vdwg.mxu0
  %vm5498 = vcmask 779264
  %v5499 = vsel %vm5498, %v5495, 0.0
  %v5500 = vrot.slane %v5499, 4
  %v5501 = vadd.f32 %v5499, %v5500
  %v5502 = vrot.slane %v5501, 2
  %v5503 = vadd.f32 %v5501, %v5502
  %v5504 = vrot.slane %v5503, 1
  %v5505 = vadd.f32 %v5503, %v5504
  %v5506 = vmul.f32 %v5495, %v5495
  %v5507 = vsel %vm5498, %v5506, 0.0
  %v5508 = vrot.slane %v5507, 4
  %v5509 = vadd.f32 %v5507, %v5508
  %v5510 = vrot.slane %v5509, 2
  %v5511 = vadd.f32 %v5509, %v5510
  %v5512 = vrot.slane %v5511, 1
  %v5513 = vadd.f32 %v5511, %v5512
  %v5514 = vsel %vm297, %v5505, %v5513
  %vm5515 = vcmask 785408
  %v5517 = vsel %vm5515, %v5514, 0
  %5519 = vmatprep.subr.mxu0 0.0
  %5520 = vmatpush1.msra.mxu0 0.0
  %5521 = vmatprep.subr.mxu0 0.0
  %5522 = vmatpush1.msra.mxu0 0.0
  %5523 = vmatprep.subr.mxu0 0.0
  %5524 = vmatpush1.msra.mxu0 0.0
  %5525 = vmatprep.subr.mxu0 0.0
  %5526 = vmatpush1.msra.mxu0 0.0
  %5527 = vmatprep.subr.mxu0 0.0
  %5528 = vmatpush1.msra.mxu0 %v5160
  %5529 = vmatprep.subr.mxu0 0.0
  %5530 = vmatpush1.msra.mxu0 %v5159
  %5531 = vmatprep.subr.mxu0 0.0
  %5532 = vmatpush1.msra.mxu0 %v5158
  %5533 = vmatprep.subr.mxu0 0.0
  %5534 = vmatpush1.msra.mxu0 %v5157
  %5535 = vmatprep.subr.mxu0 0.0
  %5536 = vmatpush1.msra.mxu0 %v2826
  %5537 = vmatprep.subr.mxu0 0.0
  %5538 = vmatpush1.msra.mxu0 %v2825
  %5539 = vmatprep.subr.mxu0 0.0
  %5540 = vmatpush1.msra.mxu0 %v2824
  %5541 = vmatprep.subr.mxu0 0.0
  %5542 = vmatpush1.msra.mxu0 %v2823
  %5543 = vmatprep.subr.mxu0 0.0
  %5544 = vmatpush1.msra.mxu0 %v166
  %5545 = vmatprep.subr.mxu0 0.0
  %5546 = vmatpush1.msra.mxu0 %v165
  %5547 = vmatprep.subr.mxu0 0.0
  %5548 = vmatpush1.msra.mxu0 %v164
  %5549 = vmatprep.subr.mxu0 0.0
  %5550 = vmatpush1.msra.mxu0 %v163
  %5551 = vmatprep.subr.mxu0 0.0
  %5552 = vmatpush2.msra.mxu0 0.0
  %5553 = vmatprep.subr.mxu0 0.0
  %5554 = vmatpush2.msra.mxu0 0.0
  %5555 = vmatprep.subr.mxu0 0.0
  %5556 = vmatpush2.msra.mxu0 0.0
  %5557 = vmatprep.subr.mxu0 0.0
  %5558 = vmatpush2.msra.mxu0 0.0
  %5559 = vmatprep.subr.mxu0 0.0
  %5560 = vmatpush2.msra.mxu0 0.0
  %5561 = vmatprep.subr.mxu0 0.0
  %5562 = vmatpush2.msra.mxu0 0.0
  %5563 = vmatprep.subr.mxu0 0.0
  %5564 = vmatpush2.msra.mxu0 0.0
  %5565 = vmatprep.subr.mxu0 0.0
  %5566 = vmatpush2.msra.mxu0 0.0
  %5567 = vmatprep.subr.mxu0 0.0
  %5568 = vmatpush2.msra.mxu0 0.0
  %5569 = vmatprep.subr.mxu0 0.0
  %5570 = vmatpush2.msra.mxu0 0.0
  %5571 = vmatprep.subr.mxu0 0.0
  %5572 = vmatpush2.msra.mxu0 0.0
  %5573 = vmatprep.subr.mxu0 0.0
  %5574 = vmatpush2.msra.mxu0 0.0
  %5575 = vmatprep.subr.mxu0 0.0
  %5576 = vmatpush2.msra.mxu0 0.0
  %5577 = vmatprep.subr.mxu0 0.0
  %5578 = vmatpush2.msra.mxu0 0.0
  %5579 = vmatprep.subr.mxu0 0.0
  %5580 = vmatpush2.msra.mxu0 0.0
  %5581 = vmatprep.subr.mxu0 0.0
  %5582 = vmatpush2.msra.mxu0 0.0
  %5583 = vmatprep.mubr.f32.mxu0 0.0
  %5584 = vmatmul.mubr.f32.gmra.mxu0 %v5517
  %v5585 = vpop.f32.mrf.mxu0
  %v5586 = vadd.f32 0.0, %v5585
  %v5587 = vpop.f32.mrf.mxu0
  %5588 = vdwg.mxu0
  %v5589 = vmul.f32 %v5586, %v656
  %v5590 = vmul.f32 %v5589, %v5589
  %v5592 = vrot.slane %v5590, 7
  %v5594 = vsub.f32 %v5589, %v5592
  %v5595 = vadd.f32 %v5594, 1e-05
  %v5596 = vrsqrt.pop %v5595
  %v5598 = vrot.slane %v5596, 3
  %v5600 = vmul.f32 %v74, %v5598
  %v5602 = vrot.slane %v5600, 6
  %v5604 = vmul.f32 %v5589, %v5602
  %v5606 = vrot.slane %v5604, 1
  %v5608 = vsub.f32 %v74, %v5606
  %v5610 = vrot.slane %v5608, 6
  %v5612 = vsel %vm297, %v5602, %v5610
  %v5614 = vsel %vm5292, %v5612, 0
  %v5616 = vsel %vm5296, %v173, 0
  %5618 = vmatprep.subr.mxu0 0.0
  %5619 = vmatpush1.msra.mxu0 0.0
  %5620 = vmatprep.subr.mxu0 0.0
  %5621 = vmatpush1.msra.mxu0 0.0
  %5622 = vmatprep.subr.mxu0 0.0
  %5623 = vmatpush1.msra.mxu0 0.0
  %5624 = vmatprep.subr.mxu0 0.0
  %5625 = vmatpush1.msra.mxu0 0.0
  %5626 = vmatprep.subr.mxu0 0.0
  %5627 = vmatpush1.msra.mxu0 0.0
  %5628 = vmatprep.subr.mxu0 0.0
  %5629 = vmatpush1.msra.mxu0 0.0
  %5630 = vmatprep.subr.mxu0 0.0
  %5631 = vmatpush1.msra.mxu0 0.0
  %5632 = vmatprep.subr.mxu0 0.0
  %5633 = vmatpush1.msra.mxu0 0.0
  %5634 = vmatprep.subr.mxu0 0.0
  %5635 = vmatpush1.msra.mxu0 0.0
  %5636 = vmatprep.subr.mxu0 0.0
  %5637 = vmatpush1.msra.mxu0 0.0
  %5638 = vmatprep.subr.mxu0 0.0
  %5639 = vmatpush1.msra.mxu0 0.0
  %5640 = vmatprep.subr.mxu0 0.0
  %5641 = vmatpush1.msra.mxu0 0.0
  %5642 = vmatprep.subr.mxu0 0.0
  %5643 = vmatpush1.msra.mxu0 0.0
  %5644 = vmatprep.subr.mxu0 0.0
  %5645 = vmatpush1.msra.mxu0 0.0
  %5646 = vmatprep.subr.mxu0 0.0
  %5647 = vmatpush1.msra.mxu0 0.0
  %5648 = vmatprep.subr.mxu0 0.0
  %5649 = vmatpush1.msra.mxu0 %v5616
  %5650 = vmatprep.subr.mxu0 0.0
  %5651 = vmatpush2.msra.mxu0 0.0
  %5652 = vmatprep.subr.mxu0 0.0
  %5653 = vmatpush2.msra.mxu0 0.0
  %5654 = vmatprep.subr.mxu0 0.0
  %5655 = vmatpush2.msra.mxu0 0.0
  %5656 = vmatprep.subr.mxu0 0.0
  %5657 = vmatpush2.msra.mxu0 0.0
  %5658 = vmatprep.subr.mxu0 0.0
  %5659 = vmatpush2.msra.mxu0 0.0
  %5660 = vmatprep.subr.mxu0 0.0
  %5661 = vmatpush2.msra.mxu0 0.0
  %5662 = vmatprep.subr.mxu0 0.0
  %5663 = vmatpush2.msra.mxu0 0.0
  %5664 = vmatprep.subr.mxu0 0.0
  %5665 = vmatpush2.msra.mxu0 0.0
  %5666 = vmatprep.subr.mxu0 0.0
  %5667 = vmatpush2.msra.mxu0 0.0
  %5668 = vmatprep.subr.mxu0 0.0
  %5669 = vmatpush2.msra.mxu0 0.0
  %5670 = vmatprep.subr.mxu0 0.0
  %5671 = vmatpush2.msra.mxu0 0.0
  %5672 = vmatprep.subr.mxu0 0.0
  %5673 = vmatpush2.msra.mxu0 0.0
  %5674 = vmatprep.subr.mxu0 0.0
  %5675 = vmatpush2.msra.mxu0 0.0
  %5676 = vmatprep.subr.mxu0 0.0
  %5677 = vmatpush2.msra.mxu0 0.0
  %5678 = vmatprep.subr.mxu0 0.0
  %5679 = vmatpush2.msra.mxu0 0.0
  %5680 = vmatprep.subr.mxu0 0.0
  %5681 = vmatpush2.msra.mxu0 0.0
  %5682 = vmatprep.mubr.f32.mxu0 0.0
  %5683 = vmatmul.mubr.f32.gmra.mxu0 %v5614
  %v5684 = vpop.f32.mrf.mxu0
  %v5685 = vadd.f32 0.0, %v5684
  %v5686 = vpop.f32.mrf.mxu0
  %5687 = vdwg.mxu0
  %v5688 = vlaneseq
  %v5689 = vshrl.u32 %v5688, 7
  %v5690 = vsub.s32 0, %v5689
  %v5691 = vrot.slane %v5685, %v5690
  %v5692 = vmul.f32 %v5495, %v5691
  %v5693 = vlaneseq
  %v5694 = vshrl.u32 %v5693, 7
  %v5695 = vsub.s32 1, %v5694
  %v5696 = vrot.slane %v5685, %v5695
  %v5697 = vadd.f32 %v5692, %v5696
  %vm5698 = vcmp.gt.f32.partialorder %v5697, 0.0
  %v5699 = vmul.f32 %v5697, 0.01
  %v5700 = vsel %vm5698, %v5697, %v5699
  %v5701 = vld [vmem:[%s20] sm:$0xff]
  %v5702 = vld [vmem:[%s20 + $0x8] sm:$0xff]
  %v5703 = vld [vmem:[%s20 + $0x10] sm:$0xff]
  %v5704 = vld [vmem:[%s20 + $0x18] sm:$0xff]
  %v5705 = vld [vmem:[%s20 + $0x20] sm:$0xff]
  %v5706 = vld [vmem:[%s20 + $0x28] sm:$0xff]
  %v5707 = vld [vmem:[%s20 + $0x30] sm:$0xff]
  %v5708 = vld [vmem:[%s20 + $0x38] sm:$0xff]
  %v5709 = vld [vmem:[%s20 + $0x40] sm:$0xff]
  %v5710 = vld [vmem:[%s20 + $0x48] sm:$0xff]
  %v5711 = vld [vmem:[%s20 + $0x50] sm:$0xff]
  %v5712 = vld [vmem:[%s20 + $0x58] sm:$0xff]
  %v5714 = vsel %vm5515, %v5700, 0
  %5716 = vmatprep.subr.mxu0 0.0
  %5717 = vmatpush1.msra.mxu0 0.0
  %5718 = vmatprep.subr.mxu0 0.0
  %5719 = vmatpush1.msra.mxu0 0.0
  %5720 = vmatprep.subr.mxu0 0.0
  %5721 = vmatpush1.msra.mxu0 0.0
  %5722 = vmatprep.subr.mxu0 0.0
  %5723 = vmatpush1.msra.mxu0 0.0
  %5724 = vmatprep.subr.mxu0 0.0
  %5725 = vmatpush1.msra.mxu0 %v5712
  %5726 = vmatprep.subr.mxu0 0.0
  %5727 = vmatpush1.msra.mxu0 %v5711
  %5728 = vmatprep.subr.mxu0 0.0
  %5729 = vmatpush1.msra.mxu0 %v5710
  %5730 = vmatprep.subr.mxu0 0.0
  %5731 = vmatpush1.msra.mxu0 %v5709
  %5732 = vmatprep.subr.mxu0 0.0
  %5733 = vmatpush1.msra.mxu0 %v5708
  %5734 = vmatprep.subr.mxu0 0.0
  %5735 = vmatpush1.msra.mxu0 %v5707
  %5736 = vmatprep.subr.mxu0 0.0
  %5737 = vmatpush1.msra.mxu0 %v5706
  %5738 = vmatprep.subr.mxu0 0.0
  %5739 = vmatpush1.msra.mxu0 %v5705
  %5740 = vmatprep.subr.mxu0 0.0
  %5741 = vmatpush1.msra.mxu0 %v5704
  %5742 = vmatprep.subr.mxu0 0.0
  %5743 = vmatpush1.msra.mxu0 %v5703
  %5744 = vmatprep.subr.mxu0 0.0
  %5745 = vmatpush1.msra.mxu0 %v5702
  %5746 = vmatprep.subr.mxu0 0.0
  %5747 = vmatpush1.msra.mxu0 %v5701
  %5748 = vmatprep.subr.mxu0 0.0
  %5749 = vmatpush2.msra.mxu0 0.0
  %5750 = vmatprep.subr.mxu0 0.0
  %5751 = vmatpush2.msra.mxu0 0.0
  %5752 = vmatprep.subr.mxu0 0.0
  %5753 = vmatpush2.msra.mxu0 0.0
  %5754 = vmatprep.subr.mxu0 0.0
  %5755 = vmatpush2.msra.mxu0 0.0
  %5756 = vmatprep.subr.mxu0 0.0
  %5757 = vmatpush2.msra.mxu0 0.0
  %5758 = vmatprep.subr.mxu0 0.0
  %5759 = vmatpush2.msra.mxu0 0.0
  %5760 = vmatprep.subr.mxu0 0.0
  %5761 = vmatpush2.msra.mxu0 0.0
  %5762 = vmatprep.subr.mxu0 0.0
  %5763 = vmatpush2.msra.mxu0 0.0
  %5764 = vmatprep.subr.mxu0 0.0
  %5765 = vmatpush2.msra.mxu0 0.0
  %5766 = vmatprep.subr.mxu0 0.0
  %5767 = vmatpush2.msra.mxu0 0.0
  %5768 = vmatprep.subr.mxu0 0.0
  %5769 = vmatpush2.msra.mxu0 0.0
  %5770 = vmatprep.subr.mxu0 0.0
  %5771 = vmatpush2.msra.mxu0 0.0
  %5772 = vmatprep.subr.mxu0 0.0
  %5773 = vmatpush2.msra.mxu0 0.0
  %5774 = vmatprep.subr.mxu0 0.0
  %5775 = vmatpush2.msra.mxu0 0.0
  %5776 = vmatprep.subr.mxu0 0.0
  %5777 = vmatpush2.msra.mxu0 0.0
  %5778 = vmatprep.subr.mxu0 0.0
  %5779 = vmatpush2.msra.mxu0 0.0
  %5780 = vmatprep.mubr.f32.mxu0 0.0
  %5781 = vmatmul.mubr.f32.gmra.mxu0 %v5714
  %v5782 = vpop.f32.mrf.mxu0
  %v5783 = vadd.f32 0.0, %v5782
  %v5784 = vpop.f32.mrf.mxu0
  %5785 = vdwg.mxu0
  %v5786 = vsel %vm5498, %v5783, 0.0
  %v5787 = vrot.slane %v5786, 4
  %v5788 = vadd.f32 %v5786, %v5787
  %v5789 = vrot.slane %v5788, 2
  %v5790 = vadd.f32 %v5788, %v5789
  %v5791 = vrot.slane %v5790, 1
  %v5792 = vadd.f32 %v5790, %v5791
  %v5793 = vmul.f32 %v5783, %v5783
  %v5794 = vsel %vm5498, %v5793, 0.0
  %v5795 = vrot.slane %v5794, 4
  %v5796 = vadd.f32 %v5794, %v5795
  %v5797 = vrot.slane %v5796, 2
  %v5798 = vadd.f32 %v5796, %v5797
  %v5799 = vrot.slane %v5798, 1
  %v5800 = vadd.f32 %v5798, %v5799
  %v5801 = vsel %vm297, %v5792, %v5800
  %v5803 = vsel %vm5515, %v5801, 0
  %5805 = vmatprep.subr.mxu0 0.0
  %5806 = vmatpush1.msra.mxu0 0.0
  %5807 = vmatprep.subr.mxu0 0.0
  %5808 = vmatpush1.msra.mxu0 0.0
  %5809 = vmatprep.subr.mxu0 0.0
  %5810 = vmatpush1.msra.mxu0 0.0
  %5811 = vmatprep.subr.mxu0 0.0
  %5812 = vmatpush1.msra.mxu0 0.0
  %5813 = vmatprep.subr.mxu0 0.0
  %5814 = vmatpush1.msra.mxu0 %v5160
  %5815 = vmatprep.subr.mxu0 0.0
  %5816 = vmatpush1.msra.mxu0 %v5159
  %5817 = vmatprep.subr.mxu0 0.0
  %5818 = vmatpush1.msra.mxu0 %v5158
  %5819 = vmatprep.subr.mxu0 0.0
  %5820 = vmatpush1.msra.mxu0 %v5157
  %5821 = vmatprep.subr.mxu0 0.0
  %5822 = vmatpush1.msra.mxu0 %v2826
  %5823 = vmatprep.subr.mxu0 0.0
  %5824 = vmatpush1.msra.mxu0 %v2825
  %5825 = vmatprep.subr.mxu0 0.0
  %5826 = vmatpush1.msra.mxu0 %v2824
  %5827 = vmatprep.subr.mxu0 0.0
  %5828 = vmatpush1.msra.mxu0 %v2823
  %5829 = vmatprep.subr.mxu0 0.0
  %5830 = vmatpush1.msra.mxu0 %v166
  %5831 = vmatprep.subr.mxu0 0.0
  %5832 = vmatpush1.msra.mxu0 %v165
  %5833 = vmatprep.subr.mxu0 0.0
  %5834 = vmatpush1.msra.mxu0 %v164
  %5835 = vmatprep.subr.mxu0 0.0
  %5836 = vmatpush1.msra.mxu0 %v163
  %5837 = vmatprep.subr.mxu0 0.0
  %5838 = vmatpush2.msra.mxu0 0.0
  %5839 = vmatprep.subr.mxu0 0.0
  %5840 = vmatpush2.msra.mxu0 0.0
  %5841 = vmatprep.subr.mxu0 0.0
  %5842 = vmatpush2.msra.mxu0 0.0
  %5843 = vmatprep.subr.mxu0 0.0
  %5844 = vmatpush2.msra.mxu0 0.0
  %5845 = vmatprep.subr.mxu0 0.0
  %5846 = vmatpush2.msra.mxu0 0.0
  %5847 = vmatprep.subr.mxu0 0.0
  %5848 = vmatpush2.msra.mxu0 0.0
  %5849 = vmatprep.subr.mxu0 0.0
  %5850 = vmatpush2.msra.mxu0 0.0
  %5851 = vmatprep.subr.mxu0 0.0
  %5852 = vmatpush2.msra.mxu0 0.0
  %5853 = vmatprep.subr.mxu0 0.0
  %5854 = vmatpush2.msra.mxu0 0.0
  %5855 = vmatprep.subr.mxu0 0.0
  %5856 = vmatpush2.msra.mxu0 0.0
  %5857 = vmatprep.subr.mxu0 0.0
  %5858 = vmatpush2.msra.mxu0 0.0
  %5859 = vmatprep.subr.mxu0 0.0
  %5860 = vmatpush2.msra.mxu0 0.0
  %5861 = vmatprep.subr.mxu0 0.0
  %5862 = vmatpush2.msra.mxu0 0.0
  %5863 = vmatprep.subr.mxu0 0.0
  %5864 = vmatpush2.msra.mxu0 0.0
  %5865 = vmatprep.subr.mxu0 0.0
  %5866 = vmatpush2.msra.mxu0 0.0
  %5867 = vmatprep.subr.mxu0 0.0
  %5868 = vmatpush2.msra.mxu0 0.0
  %5869 = vmatprep.mubr.f32.mxu0 0.0
  %5870 = vmatmul.mubr.f32.gmra.mxu0 %v5803
  %v5871 = vpop.f32.mrf.mxu0
  %v5872 = vadd.f32 0.0, %v5871
  %v5873 = vpop.f32.mrf.mxu0
  %5874 = vdwg.mxu0
  %v5875 = vmul.f32 %v5872, %v656
  %v5876 = vmul.f32 %v5875, %v5875
  %v5878 = vrot.slane %v5876, 7
  %v5880 = vsub.f32 %v5875, %v5878
  %v5881 = vadd.f32 %v5880, 1e-05
  %v5882 = vrsqrt.pop %v5881
  %v5884 = vrot.slane %v5882, 1
  %v5886 = vmul.f32 %v75, %v5884
  %v5887 = vmul.f32 %v5875, %v5886
  %v5889 = vrot.slane %v5887, 7
  %v5891 = vsub.f32 %v75, %v5889
  %v5892 = vsel %vm297, %v5886, %v5891
  %v5894 = vsel %vm5292, %v5892, 0
  %5896 = vmatprep.subr.mxu0 0.0
  %5897 = vmatpush1.msra.mxu0 0.0
  %5898 = vmatprep.subr.mxu0 0.0
  %5899 = vmatpush1.msra.mxu0 0.0
  %5900 = vmatprep.subr.mxu0 0.0
  %5901 = vmatpush1.msra.mxu0 0.0
  %5902 = vmatprep.subr.mxu0 0.0
  %5903 = vmatpush1.msra.mxu0 0.0
  %5904 = vmatprep.subr.mxu0 0.0
  %5905 = vmatpush1.msra.mxu0 0.0
  %5906 = vmatprep.subr.mxu0 0.0
  %5907 = vmatpush1.msra.mxu0 0.0
  %5908 = vmatprep.subr.mxu0 0.0
  %5909 = vmatpush1.msra.mxu0 0.0
  %5910 = vmatprep.subr.mxu0 0.0
  %5911 = vmatpush1.msra.mxu0 0.0
  %5912 = vmatprep.subr.mxu0 0.0
  %5913 = vmatpush1.msra.mxu0 0.0
  %5914 = vmatprep.subr.mxu0 0.0
  %5915 = vmatpush1.msra.mxu0 0.0
  %5916 = vmatprep.subr.mxu0 0.0
  %5917 = vmatpush1.msra.mxu0 0.0
  %5918 = vmatprep.subr.mxu0 0.0
  %5919 = vmatpush1.msra.mxu0 0.0
  %5920 = vmatprep.subr.mxu0 0.0
  %5921 = vmatpush1.msra.mxu0 0.0
  %5922 = vmatprep.subr.mxu0 0.0
  %5923 = vmatpush1.msra.mxu0 0.0
  %5924 = vmatprep.subr.mxu0 0.0
  %5925 = vmatpush1.msra.mxu0 0.0
  %5926 = vmatprep.subr.mxu0 0.0
  %5927 = vmatpush1.msra.mxu0 %v5616
  %5928 = vmatprep.subr.mxu0 0.0
  %5929 = vmatpush2.msra.mxu0 0.0
  %5930 = vmatprep.subr.mxu0 0.0
  %5931 = vmatpush2.msra.mxu0 0.0
  %5932 = vmatprep.subr.mxu0 0.0
  %5933 = vmatpush2.msra.mxu0 0.0
  %5934 = vmatprep.subr.mxu0 0.0
  %5935 = vmatpush2.msra.mxu0 0.0
  %5936 = vmatprep.subr.mxu0 0.0
  %5937 = vmatpush2.msra.mxu0 0.0
  %5938 = vmatprep.subr.mxu0 0.0
  %5939 = vmatpush2.msra.mxu0 0.0
  %5940 = vmatprep.subr.mxu0 0.0
  %5941 = vmatpush2.msra.mxu0 0.0
  %5942 = vmatprep.subr.mxu0 0.0
  %5943 = vmatpush2.msra.mxu0 0.0
  %5944 = vmatprep.subr.mxu0 0.0
  %5945 = vmatpush2.msra.mxu0 0.0
  %5946 = vmatprep.subr.mxu0 0.0
  %5947 = vmatpush2.msra.mxu0 0.0
  %5948 = vmatprep.subr.mxu0 0.0
  %5949 = vmatpush2.msra.mxu0 0.0
  %5950 = vmatprep.subr.mxu0 0.0
  %5951 = vmatpush2.msra.mxu0 0.0
  %5952 = vmatprep.subr.mxu0 0.0
  %5953 = vmatpush2.msra.mxu0 0.0
  %5954 = vmatprep.subr.mxu0 0.0
  %5955 = vmatpush2.msra.mxu0 0.0
  %5956 = vmatprep.subr.mxu0 0.0
  %5957 = vmatpush2.msra.mxu0 0.0
  %5958 = vmatprep.subr.mxu0 0.0
  %5959 = vmatpush2.msra.mxu0 0.0
  %5960 = vmatprep.mubr.f32.mxu0 0.0
  %5961 = vmatmul.mubr.f32.gmra.mxu0 %v5894
  %v5962 = vpop.f32.mrf.mxu0
  %v5963 = vadd.f32 0.0, %v5962
  %v5964 = vpop.f32.mrf.mxu0
  %5965 = vdwg.mxu0
  %v5966 = vlaneseq
  %v5967 = vshrl.u32 %v5966, 7
  %v5968 = vsub.s32 0, %v5967
  %v5969 = vrot.slane %v5963, %v5968
  %v5970 = vmul.f32 %v5783, %v5969
  %v5971 = vlaneseq
  %v5972 = vshrl.u32 %v5971, 7
  %v5973 = vsub.s32 1, %v5972
  %v5974 = vrot.slane %v5963, %v5973
  %v5975 = vadd.f32 %v5970, %v5974
  %vm5976 = vcmp.gt.f32.partialorder %v5975, 0.0
  %v5977 = vmul.f32 %v5975, 0.01
  %v5978 = vsel %vm5976, %v5975, %v5977
  %v5979 = vld [vmem:[%s21] sm:$0xff]
  %v5980 = vld [vmem:[%s21 + $0x8] sm:$0xff]
  %v5981 = vld [vmem:[%s21 + $0x10] sm:$0xff]
  %v5982 = vld [vmem:[%s21 + $0x18] sm:$0xff]
  %v5983 = vld [vmem:[%s21 + $0x20] sm:$0xff]
  %v5984 = vld [vmem:[%s21 + $0x28] sm:$0xff]
  %v5985 = vld [vmem:[%s21 + $0x30] sm:$0xff]
  %v5986 = vld [vmem:[%s21 + $0x38] sm:$0xff]
  %v5987 = vld [vmem:[%s21 + $0x40] sm:$0xff]
  %v5988 = vld [vmem:[%s21 + $0x48] sm:$0xff]
  %v5989 = vld [vmem:[%s21 + $0x50] sm:$0xff]
  %v5990 = vld [vmem:[%s21 + $0x58] sm:$0xff]
  %v5992 = vsel %vm5515, %v5978, 0
  %5994 = vmatprep.subr.mxu0 0.0
  %5995 = vmatpush1.msra.mxu0 0.0
  %5996 = vmatprep.subr.mxu0 0.0
  %5997 = vmatpush1.msra.mxu0 0.0
  %5998 = vmatprep.subr.mxu0 0.0
  %5999 = vmatpush1.msra.mxu0 0.0
  %6000 = vmatprep.subr.mxu0 0.0
  %6001 = vmatpush1.msra.mxu0 0.0
  %6002 = vmatprep.subr.mxu0 0.0
  %6003 = vmatpush1.msra.mxu0 %v5990
  %6004 = vmatprep.subr.mxu0 0.0
  %6005 = vmatpush1.msra.mxu0 %v5989
  %6006 = vmatprep.subr.mxu0 0.0
  %6007 = vmatpush1.msra.mxu0 %v5988
  %6008 = vmatprep.subr.mxu0 0.0
  %6009 = vmatpush1.msra.mxu0 %v5987
  %6010 = vmatprep.subr.mxu0 0.0
  %6011 = vmatpush1.msra.mxu0 %v5986
  %6012 = vmatprep.subr.mxu0 0.0
  %6013 = vmatpush1.msra.mxu0 %v5985
  %6014 = vmatprep.subr.mxu0 0.0
  %6015 = vmatpush1.msra.mxu0 %v5984
  %6016 = vmatprep.subr.mxu0 0.0
  %6017 = vmatpush1.msra.mxu0 %v5983
  %6018 = vmatprep.subr.mxu0 0.0
  %6019 = vmatpush1.msra.mxu0 %v5982
  %6020 = vmatprep.subr.mxu0 0.0
  %6021 = vmatpush1.msra.mxu0 %v5981
  %6022 = vmatprep.subr.mxu0 0.0
  %6023 = vmatpush1.msra.mxu0 %v5980
  %6024 = vmatprep.subr.mxu0 0.0
  %6025 = vmatpush1.msra.mxu0 %v5979
  %6026 = vmatprep.subr.mxu0 0.0
  %6027 = vmatpush2.msra.mxu0 0.0
  %6028 = vmatprep.subr.mxu0 0.0
  %6029 = vmatpush2.msra.mxu0 0.0
  %6030 = vmatprep.subr.mxu0 0.0
  %6031 = vmatpush2.msra.mxu0 0.0
  %6032 = vmatprep.subr.mxu0 0.0
  %6033 = vmatpush2.msra.mxu0 0.0
  %6034 = vmatprep.subr.mxu0 0.0
  %6035 = vmatpush2.msra.mxu0 0.0
  %6036 = vmatprep.subr.mxu0 0.0
  %6037 = vmatpush2.msra.mxu0 0.0
  %6038 = vmatprep.subr.mxu0 0.0
  %6039 = vmatpush2.msra.mxu0 0.0
  %6040 = vmatprep.subr.mxu0 0.0
  %6041 = vmatpush2.msra.mxu0 0.0
  %6042 = vmatprep.subr.mxu0 0.0
  %6043 = vmatpush2.msra.mxu0 0.0
  %6044 = vmatprep.subr.mxu0 0.0
  %6045 = vmatpush2.msra.mxu0 0.0
  %6046 = vmatprep.subr.mxu0 0.0
  %6047 = vmatpush2.msra.mxu0 0.0
  %6048 = vmatprep.subr.mxu0 0.0
  %6049 = vmatpush2.msra.mxu0 0.0
  %6050 = vmatprep.subr.mxu0 0.0
  %6051 = vmatpush2.msra.mxu0 0.0
  %6052 = vmatprep.subr.mxu0 0.0
  %6053 = vmatpush2.msra.mxu0 0.0
  %6054 = vmatprep.subr.mxu0 0.0
  %6055 = vmatpush2.msra.mxu0 0.0
  %6056 = vmatprep.subr.mxu0 0.0
  %6057 = vmatpush2.msra.mxu0 0.0
  %6058 = vmatprep.mubr.f32.mxu0 0.0
  %6059 = vmatmul.mubr.f32.gmra.mxu0 %v5992
  %v6060 = vpop.f32.mrf.mxu0
  %v6061 = vadd.f32 0.0, %v6060
  %v6062 = vpop.f32.mrf.mxu0
  %6063 = vdwg.mxu0
  %6064 = vst [vmem:[%s22] sm:$0x3] %v6061
  // Predicated region
  $region90: #{forward.1} parent=0 // pred_check
    _
  $region91: #{forward.1} parent=0 // pred_check_branch
    %6066 = sbr.rel (0) target = $region93
  $region92: #{forward.1} parent=0 // pred_region
    _
  $region93: #{forward.1} parent=0 // pred_fallthru
    _
  // Predicated region
  $region94: #{forward.1} parent=0 // pred_check
    _
  $region95: #{forward.1} parent=0 // pred_check_branch
    %6068 = sbr.rel (0) target = $region97
  $region96: #{forward.1} parent=0 // pred_region
    _
  $region97: #{forward.1} parent=0 // pred_fallthru
    _

</llo_original>
